<compile_context>
chip_gen: v6e
topology: v6e:2x2x1
jax: 0.10.0
libtpu: 0.0.40
codegen_flags: <defaults>
</compile_context>

<pallas_src>
import math

import jax
import jax.numpy as jnp
from jax.experimental import pallas as pl
from jax.experimental.pallas import tpu as pltpu

NODE_DIM = 128                      # config.node_encode_dim
REL_DIM = 404                       # relation_dim == HIDDEN_SIZE_GRU
GRU_IN = 3 * NODE_DIM               # 384
FA_IN = NODE_DIM + REL_DIM          # 532
HIDDEN_PAD = 512                    # 404 padded to a 128-lane multiple
FA_PAD = NODE_DIM + HIDDEN_PAD      # 640


# ----------------------------- Pallas kernel ------------------------------ #
def qnet_kernel(query_ref, node_ref, nbr_ref, act_ref,
                w_ih_ref, w_hh_ref, b_ih_ref, b_hh_ref,
                w_fa_ref, b_fa_ref, w_fs_ref, b_fs_ref,
                w_fp1_ref, b_fp1_ref, w_fp2s_ref, w_fp2n_ref, b_fp2_ref,
                out_ref):
    f32, bf16 = jnp.float32, jnp.bfloat16
    Bb = query_ref.shape[0]            # samples in this block (sublane aligned)
    N = act_ref.shape[1]               # neighbors per node
    T = node_ref.shape[0] // Bb        # path length (rows are (t, b) ordered)
    HP = HIDDEN_PAD
    OUT_PAD = out_ref.shape[1]

    # --- FA over every neighbor row of the block: one big MXU pass --------- #
    hnts = jax.nn.relu(
        jnp.dot(nbr_ref[...], w_fa_ref[...], preferred_element_type=f32)
        + b_fa_ref[...])                                   # (T*Bb*N, 128) f32
    hnts = hnts.reshape(T * Bb, N, NODE_DIM)               # rows ordered (t, b)

    # _Max per node (one vectorized reduce) and taken-action rows (VPU select,
    # no K=8 MXU matmuls).
    hAt = jnp.max(hnts, axis=1)                            # (T*Bb, 128)
    act = act_ref[...]                                     # ((T-1)*Bb, N) one-hot
    hat = jnp.sum(act[..., None] * hnts[:(T - 1) * Bb], axis=1)   # ((T-1)*Bb,128)

    # --- hoisted input-gate matmul: gi for every GRU step in one push ------ #
    zero_blk = jnp.zeros((Bb, NODE_DIM), f32)
    x_all = jnp.concatenate(
        [jnp.concatenate([zero_blk, hAt[:(T - 1) * Bb]], axis=0),
         jnp.concatenate([zero_blk, hat], axis=0),
         node_ref[...]], axis=1)                           # (T*Bb, 384)
    gi_all = (jnp.dot(x_all.astype(bf16), w_ih_ref[...],
                      preferred_element_type=f32) + b_ih_ref[...])   # (T*Bb, 3HP)

    # --- serial GRU recurrence: a single MXU push (h @ w_hh) per step ------ #
    w_hh = w_hh_ref[...]                                   # (HP, 3HP) bf16
    b_hh = b_hh_ref[...]                                   # (1, 3HP)  f32
    h = query_ref[...]                                     # (Bb, HP)  f32 state
    for t in range(T):
        gi = gi_all[t * Bb:(t + 1) * Bb]                   # (Bb, 3HP)
        gh = jnp.dot(h.astype(bf16), w_hh, preferred_element_type=f32) + b_hh
        r = jax.nn.sigmoid(gi[:, :HP] + gh[:, :HP])
        z = jax.nn.sigmoid(gi[:, HP:2 * HP] + gh[:, HP:2 * HP])
        n = jnp.tanh(gi[:, 2 * HP:] + r * gh[:, 2 * HP:])
        h = (1.0 - z) * n + z * h                          # padded lanes stay 0

    # --- heads -------------------------------------------------------------- #
    hSt = jax.nn.relu(jnp.dot(h.astype(bf16), w_fs_ref[...],
                              preferred_element_type=f32) + b_fs_ref[...])  # (Bb,128)
    hAt_last = hAt[(T - 1) * Bb:]                          # (Bb, 128)
    hnts_last = hnts[(T - 1) * Bb:]                        # (Bb, N, 128)

    # FP1 / FP2 have a single output feature: VPU multiply + lane reduce
    # (an MXU pass would waste a full systolic cycle for N_out = 1).
    sa = jnp.concatenate([hSt, hAt_last], axis=1)          # (Bb, 256)
    u0 = jax.nn.relu(jnp.sum(sa * w_fp1_ref[...], axis=1, keepdims=True)
                     + b_fp1_ref[...])                     # (Bb, 1)
    s2 = jnp.sum(hSt * w_fp2s_ref[...], axis=1, keepdims=True)        # (Bb, 1)
    an = jnp.sum(hnts_last * w_fp2n_ref[...], axis=-1)     # (Bb, N)
    uks = jax.nn.relu(an + s2 + b_fp2_ref[...])            # (Bb, N)

    # Qsa_value row per sample: [u0 | uks | 0...] -> lane-dense 128-wide store.
    out_ref[...] = jnp.concatenate(
        [u0, uks, jnp.zeros((Bb, OUT_PAD - 1 - N), f32)], axis=1)


# ------------------------------- wrapper ----------------------------------- #
def _default_num_blocks():
    """2 grid steps on v7x (2 TensorCores), otherwise a single grid step."""
    try:
        kind = jax.devices()[0].device_kind.lower()
    except Exception:
        return 1
    return 2 if ("v7" in kind or "7x" in kind) else 1


def qnet_forward(query, node_embs, neighbor_mats, action_onehot, kparams,
                 num_blocks=None):
    """query (B,404) f32, node_embs (B,T,128), neighbor_mats (B,T,N,532),
    action_onehot (B,T-1,N).  Returns Qsa rows (B, 1+N)."""
    B, T, N, _ = neighbor_mats.shape
    HP, FAP = HIDDEN_PAD, FA_PAD
    OUT_PAD = ((1 + N + 127) // 128) * 128

    if num_blocks is None:
        num_blocks = _default_num_blocks()
    num_blocks = max(1, min(num_blocks, B))

    bblk = -(-B // num_blocks)          # samples per grid step
    bblk = -(-bblk // 8) * 8            # sublane-align the batch block
    B_pad = num_blocks * bblk
    pad_b = B_pad - B

    f32, bf16 = jnp.float32, jnp.bfloat16

    # Zero-pad features to 128-lane multiples and zero-pad the batch; per-block
    # data is laid out (t, b)-major so every in-kernel slice is a contiguous,
    # tile-aligned sublane slab.  Neighbor rows go to bf16 (halves the big DMA).
    q_p = jnp.pad(query, ((0, pad_b), (0, HP - REL_DIM))).astype(f32)   # (B_pad, HP)

    node_p = jnp.pad(node_embs, ((0, pad_b), (0, 0), (0, 0)))
    node_b = node_p.reshape(num_blocks, bblk, T, NODE_DIM).transpose(0, 2, 1, 3)
    node_b = node_b.reshape(num_blocks, T * bblk, NODE_DIM)

    nbr_p = jnp.pad(neighbor_mats,
                    ((0, pad_b), (0, 0), (0, 0), (0, FAP - FA_IN))).astype(bf16)
    nbr_b = nbr_p.reshape(num_blocks, bblk, T, N, FAP).transpose(0, 2, 1, 3, 4)
    nbr_b = nbr_b.reshape(num_blocks, T * bblk * N, FAP)

    act_p = jnp.pad(action_onehot, ((0, pad_b), (0, 0), (0, 0)))
    act_b = act_p.reshape(num_blocks, bblk, T - 1, N).transpose(0, 2, 1, 3)
    act_b = act_b.reshape(num_blocks, (T - 1) * bblk, N)
    # TODO(synk): the tiny (.,N=8) one-hot block is the last non-lane-dense
    # input; scalar-prefetched int32 action ids in SMEM would remove it.

    sample_specs = [
        pl.BlockSpec((bblk, HP), lambda g: (g, 0)),
        pl.BlockSpec((None, T * bblk, NODE_DIM), lambda g: (g, 0, 0)),
        pl.BlockSpec((None, T * bblk * N, FAP), lambda g: (g, 0, 0)),
        pl.BlockSpec((None, (T - 1) * bblk, N), lambda g: (g, 0, 0)),
    ]
    # Constant index maps -> weights DMA'd once, VMEM-resident across blocks.
    weight_specs = [pl.BlockSpec(w.shape, lambda g: (0, 0)) for w in kparams]

    out = pl.pallas_call(
        qnet_kernel,
        out_shape=jax.ShapeDtypeStruct((B_pad, OUT_PAD), f32),
        grid=(num_blocks,),
        in_specs=sample_specs + weight_specs,
        out_specs=pl.BlockSpec((bblk, OUT_PAD), lambda g: (g, 0)),
        compiler_params=pltpu.CompilerParams(
            dimension_semantics=("parallel",),   # v7x: 2 blocks -> 2 TCs
            vmem_limit_bytes=16 << 20),          # ~8 MiB worst-case footprint
    )(q_p, node_b, nbr_b, act_b, *kparams)
    return out[:B, :1 + N]


# ------------------------ param preparation -------------------------------- #
def make_params(key):
    """PyTorch-layout f32 parameters (weight shapes = (out_features, in_features))."""
    ks = jax.random.split(key, 12)
    H, I = REL_DIM, GRU_IN
    kg = 1.0 / math.sqrt(H)
    return dict(
        w_ih=jax.random.uniform(ks[0], (3 * H, I), jnp.float32, -kg, kg),
        w_hh=jax.random.uniform(ks[1], (3 * H, H), jnp.float32, -kg, kg),
        b_ih=jax.random.uniform(ks[2], (3 * H,), jnp.float32, -kg, kg),
        b_hh=jax.random.uniform(ks[3], (3 * H,), jnp.float32, -kg, kg),
        fa_w=0.1 * jax.random.normal(ks[4], (NODE_DIM, FA_IN), jnp.float32),
        fa_b=0.01 * jax.random.normal(ks[5], (NODE_DIM,), jnp.float32),
        fs_w=0.1 * jax.random.normal(ks[6], (NODE_DIM, REL_DIM), jnp.float32),
        fs_b=0.01 * jax.random.normal(ks[7], (NODE_DIM,), jnp.float32),
        fp1_w=0.1 * jax.random.normal(ks[8], (1, 2 * NODE_DIM), jnp.float32),
        fp1_b=0.01 * jax.random.normal(ks[9], (1,), jnp.float32),
        fp2_w=0.1 * jax.random.normal(ks[10], (1, 2 * NODE_DIM), jnp.float32),
        fp2_b=0.01 * jax.random.normal(ks[11], (1,), jnp.float32),
    )


def prepare_kernel_params(pt):
    """Fused / transposed / zero-padded kernel layout.  Big weights in bf16."""
    H, HP, I = REL_DIM, HIDDEN_PAD, GRU_IN
    bf = lambda w: w.astype(jnp.bfloat16)

    w_ih_g = pt['w_ih'].reshape(3, H, I)       # gates [r, z, n]
    w_hh_g = pt['w_hh'].reshape(3, H, H)
    w_ih = jnp.concatenate(
        [jnp.pad(w_ih_g[g].T, ((0, 0), (0, HP - H))) for g in range(3)], axis=1)   # (I, 3HP)
    w_hh = jnp.concatenate(
        [jnp.pad(w_hh_g[g].T, ((0, HP - H), (0, HP - H))) for g in range(3)], axis=1)  # (HP, 3HP)

    def pad_gate_bias(b):                      # (3H,) -> (1, 3HP), zero pad per gate
        bg = b.reshape(3, H)
        return jnp.concatenate(
            [jnp.pad(bg[g], (0, HP - H)) for g in range(3)]).reshape(1, 3 * HP)

    b_ih = pad_gate_bias(pt['b_ih'])
    b_hh = pad_gate_bias(pt['b_hh'])

    w_fa = jnp.pad(pt['fa_w'].T, ((0, FA_PAD - FA_IN), (0, 0)))    # (640, 128)
    b_fa = pt['fa_b'].reshape(1, NODE_DIM)
    w_fs = jnp.pad(pt['fs_w'].T, ((0, HP - H), (0, 0)))            # (512, 128)
    b_fs = pt['fs_b'].reshape(1, NODE_DIM)

    w_fp1 = pt['fp1_w']                        # (1, 256) row, kept f32 (tiny)
    b_fp1 = pt['fp1_b'].reshape(1, 1)
    w_fp2_s = pt['fp2_w'][:, :NODE_DIM]        # (1, 128) state half
    w_fp2_n = pt['fp2_w'][:, NODE_DIM:]        # (1, 128) action half
    b_fp2 = pt['fp2_b'].reshape(1, 1)

    return (bf(w_ih), bf(w_hh), b_ih, b_hh,
            bf(w_fa), b_fa, bf(w_fs), b_fs,
            w_fp1, b_fp1, w_fp2_s, w_fp2_n, b_fp2)


# ------------------------- pure-JAX reference ------------------------------ #
def qnet_ref(query, node_embs, neighbor_mats, action_onehot, pt):
    """Mirrors the PyTorch module on the raw (unpadded, PT-layout) parameters.
    Matmul inputs are cast to bf16 with f32 accumulation, matching the kernel's
    precision policy (weights stored bf16, f32 activations / recurrent state)."""
    f32, bf16 = jnp.float32, jnp.bfloat16
    H = REL_DIM
    dn = (((1,), (1,)), ((), ()))

    def lin_bf16(x, w):        # x (m, in), w (out, in)  ->  (m, out), f32 accum
        return jax.lax.dot_general(x.astype(bf16), w.astype(bf16), dn,
                                   preferred_element_type=f32)

    def gru(x, h):
        gi = lin_bf16(x, pt['w_ih']) + pt['b_ih'][None, :]
        gh = lin_bf16(h, pt['w_hh']) + pt['b_hh'][None, :]
        r = jax.nn.sigmoid(gi[:, :H] + gh[:, :H])
        z = jax.nn.sigmoid(gi[:, H:2 * H] + gh[:, H:2 * H])
        n = jnp.tanh(gi[:, 2 * H:] + r * gh[:, 2 * H:])
        return (1.0 - z) * n + z * h

    def fa(nbr):
        return jax.nn.relu(lin_bf16(nbr, pt['fa_w']) + pt['fa_b'][None, :])

    def one_sample(q, nodes, nbrs, act):
        T = nodes.shape[0]
        z128 = jnp.zeros((1, NODE_DIM), f32)
        qt = gru(jnp.concatenate([z128, z128, nodes[0:1]], axis=1), q[None, :])
        for i in range(T - 1):
            hnts = fa(nbrs[i])
            hAt_ = jnp.max(hnts, axis=0, keepdims=True)          # _Max
            hat_ = jnp.dot(act[i:i + 1], hnts, preferred_element_type=f32)
            qt = gru(jnp.concatenate([hAt_, hat_, nodes[i + 1:i + 2]], axis=1), qt)
        hSt = jax.nn.relu(lin_bf16(qt, pt['fs_w']) + pt['fs_b'][None, :])
        hnts = fa(nbrs[T - 1])
        hAt = jnp.max(hnts, axis=0, keepdims=True)
        u0 = jax.nn.relu(jnp.concatenate([hSt, hAt], axis=1) @ pt['fp1_w'].T
                         + pt['fp1_b'])
        hSt_ks = jnp.broadcast_to(hSt, hnts.shape)
        uks = jax.nn.relu(jnp.concatenate([hSt_ks, hnts], axis=1) @ pt['fp2_w'].T
                          + pt['fp2_b'])
        return jnp.concatenate([u0, uks.T], axis=1)[0]           # (1+N,)

    return jnp.stack([one_sample(query[b], node_embs[b], neighbor_mats[b],
                                 action_onehot[b])
                      for b in range(query.shape[0])])


# ------------------------------ setup -------------------------------------- #
if __name__ == "__main__":
    key = jax.random.PRNGKey(0)
    kp, kq, kn, km, ka = jax.random.split(key, 5)

    B = 4   # batch of (query, path) samples evaluated in one pallas_call
    T = 3   # path length (nodes in the state tuple after the query relation)
    N = 8   # neighbors per node (fixed fan-out for the synthetic graph)

    pt = make_params(kp)
    kparams = prepare_kernel_params(pt)

    query = jax.random.normal(kq, (B, REL_DIM), jnp.float32)
    node_embs = jax.random.normal(kn, (B, T, NODE_DIM), jnp.float32)
    neighbor_mats = jax.random.normal(km, (B, T, N, FA_IN), jnp.float32)
    action_ids = jax.random.randint(ka, (B, T - 1), 0, N)       # local neighbor taken
    action_onehot = jax.nn.one_hot(action_ids, N, dtype=jnp.float32)

    qsa = qnet_forward(query, node_embs, neighbor_mats, action_onehot, kparams)
    qsa = jax.block_until_ready(qsa)

    qsa_ref = qnet_ref(query, node_embs, neighbor_mats, action_onehot, pt)
    assert qsa.shape == (B, 1 + N), qsa.shape
    assert jnp.allclose(qsa, qsa_ref, rtol=1e-2, atol=1e-2), (qsa, qsa_ref)

    # TODO(synk): analysis_state() graph walking, ragged per-node neighbor lists and
    # the action_candidate bookkeeping are host-side Python; they are regularized
    # here to a fixed (T, N) neighbor tensor plus one-hot action rows.
    print("KERNEL_OK")
</pallas_src>

<mosaic_0001>
module attributes {stable_mosaic.version = 11 : i64} {
  func.func @qnet_kernel(%arg0: i32, %arg1: memref<8x512xf32, #tpu.memory_space<vmem>>, %arg2: memref<1x24x128xf32, #tpu.memory_space<vmem>>, %arg3: memref<1x192x640xbf16, #tpu.memory_space<vmem>>, %arg4: memref<1x16x8xf32, #tpu.memory_space<vmem>>, %arg5: memref<384x1536xbf16, #tpu.memory_space<vmem>>, %arg6: memref<512x1536xbf16, #tpu.memory_space<vmem>>, %arg7: memref<1x1536xf32, #tpu.memory_space<vmem>>, %arg8: memref<1x1536xf32, #tpu.memory_space<vmem>>, %arg9: memref<640x128xbf16, #tpu.memory_space<vmem>>, %arg10: memref<1x128xf32, #tpu.memory_space<vmem>>, %arg11: memref<512x128xbf16, #tpu.memory_space<vmem>>, %arg12: memref<1x128xf32, #tpu.memory_space<vmem>>, %arg13: memref<1x256xf32, #tpu.memory_space<vmem>>, %arg14: memref<1x1xf32, #tpu.memory_space<vmem>>, %arg15: memref<1x128xf32, #tpu.memory_space<vmem>>, %arg16: memref<1x128xf32, #tpu.memory_space<vmem>>, %arg17: memref<1x1xf32, #tpu.memory_space<vmem>>, %arg18: memref<8x128xf32, #tpu.memory_space<vmem>>) attributes {dimension_semantics = [#tpu.dimension_semantics<parallel>], iteration_bounds = array<i64: 1>, scalar_prefetch = 0 : i64, scratch_operands = 0 : i64, tpu.core_type = #tpu.core_type<tc>, window_params = [{transform_indices = @transform_0, window_bounds = array<i64: 8, 512>}, {transform_indices = @transform_1, window_bounds = array<i64: 1, 24, 128>}, {transform_indices = @transform_2, window_bounds = array<i64: 1, 192, 640>}, {transform_indices = @transform_3, window_bounds = array<i64: 1, 16, 8>}, {pipeline_mode = #tpu.pipeline_mode<synchronous>, transform_indices = @transform_4, window_bounds = array<i64: 384, 1536>}, {pipeline_mode = #tpu.pipeline_mode<synchronous>, transform_indices = @transform_5, window_bounds = array<i64: 512, 1536>}, {pipeline_mode = #tpu.pipeline_mode<synchronous>, transform_indices = @transform_6, window_bounds = array<i64: 1, 1536>}, {pipeline_mode = #tpu.pipeline_mode<synchronous>, transform_indices = @transform_7, window_bounds = array<i64: 1, 1536>}, {pipeline_mode = #tpu.pipeline_mode<synchronous>, transform_indices = @transform_8, window_bounds = array<i64: 640, 128>}, {pipeline_mode = #tpu.pipeline_mode<synchronous>, transform_indices = @transform_9, window_bounds = array<i64: 1, 128>}, {pipeline_mode = #tpu.pipeline_mode<synchronous>, transform_indices = @transform_10, window_bounds = array<i64: 512, 128>}, {pipeline_mode = #tpu.pipeline_mode<synchronous>, transform_indices = @transform_11, window_bounds = array<i64: 1, 128>}, {pipeline_mode = #tpu.pipeline_mode<synchronous>, transform_indices = @transform_12, window_bounds = array<i64: 1, 256>}, {pipeline_mode = #tpu.pipeline_mode<synchronous>, transform_indices = @transform_13, window_bounds = array<i64: 1, 1>}, {pipeline_mode = #tpu.pipeline_mode<synchronous>, transform_indices = @transform_14, window_bounds = array<i64: 1, 128>}, {pipeline_mode = #tpu.pipeline_mode<synchronous>, transform_indices = @transform_15, window_bounds = array<i64: 1, 128>}, {pipeline_mode = #tpu.pipeline_mode<synchronous>, transform_indices = @transform_16, window_bounds = array<i64: 1, 1>}, {transform_indices = @transform_17, window_bounds = array<i64: 8, 128>}]} {
    %c0 = arith.constant 0 : index
    %c0_0 = arith.constant 0 : index
    %c0_1 = arith.constant 0 : index
    %0 = vector.load %arg3[%c0, %c0_0, %c0_1] : memref<1x192x640xbf16, #tpu.memory_space<vmem>>, vector<1x192x640xbf16>
    %1 = vector.shape_cast %0 : vector<1x192x640xbf16> to vector<192x640xbf16>
    %c0_2 = arith.constant 0 : index
    %c0_3 = arith.constant 0 : index
    %2 = vector.load %arg9[%c0_2, %c0_3] : memref<640x128xbf16, #tpu.memory_space<vmem>>, vector<640x128xbf16>
    %cst = arith.constant dense<0.000000e+00> : vector<192x128xf32>
    %3 = tpu.matmul %1, %2, %cst {dimension_numbers = #tpu.dot_dimension_numbers<[1], [0], [0], [1], [0, 0, 1, 1], [], []>} : vector<192x640xbf16>, vector<640x128xbf16>, vector<192x128xf32> -> vector<192x128xf32>
    %c0_4 = arith.constant 0 : index
    %c0_5 = arith.constant 0 : index
    %4 = vector.load %arg10[%c0_4, %c0_5] : memref<1x128xf32, #tpu.memory_space<vmem>>, vector<1x128xf32>
    %5 = vector.broadcast %4 : vector<1x128xf32> to vector<192x128xf32>
    %6 = arith.addf %3, %5 : vector<192x128xf32>
    %cst_6 = arith.constant 0.000000e+00 : f32
    %7 = vector.broadcast %cst_6 : f32 to vector<192x128xf32>
    %8 = arith.maximumf %6, %7 : vector<192x128xf32>
    %9 = vector.shape_cast %8 : vector<192x128xf32> to vector<24x8x128xf32>
    %cst_7 = arith.constant dense<0xFF800000> : vector<24x128xf32>
    %10 = vector.multi_reduction <maximumf>, %9, %cst_7 [1] : vector<24x8x128xf32> to vector<24x128xf32>
    %c0_8 = arith.constant 0 : index
    %c0_9 = arith.constant 0 : index
    %c0_10 = arith.constant 0 : index
    %11 = vector.load %arg4[%c0_8, %c0_9, %c0_10] : memref<1x16x8xf32, #tpu.memory_space<vmem>>, vector<1x16x8xf32>
    %12 = vector.shape_cast %11 : vector<1x16x8xf32> to vector<16x8xf32>
    %13 = vector.shape_cast %12 : vector<16x8xf32> to vector<16x8x1xf32>
    %14 = vector.extract_strided_slice %9 {offsets = [0, 0, 0], sizes = [16, 8, 128], strides = [1, 1, 1]} : vector<24x8x128xf32> to vector<16x8x128xf32>
    %15 = vector.broadcast %13 : vector<16x8x1xf32> to vector<16x8x128xf32>
    %16 = arith.mulf %15, %14 : vector<16x8x128xf32>
    %cst_11 = arith.constant dense<0.000000e+00> : vector<16x128xf32>
    %17 = vector.multi_reduction <add>, %16, %cst_11 [1] : vector<16x8x128xf32> to vector<16x128xf32>
    %cst_12 = arith.constant 0.000000e+00 : f32
    %18 = vector.broadcast %cst_12 : f32 to vector<8x128xf32>
    %19 = vector.extract_strided_slice %10 {offsets = [0, 0], sizes = [16, 128], strides = [1, 1]} : vector<24x128xf32> to vector<16x128xf32>
    %20 = tpu.concatenate %18, %19 in 0 : vector<8x128xf32>, vector<16x128xf32> -> vector<24x128xf32>
    %21 = tpu.concatenate %18, %17 in 0 : vector<8x128xf32>, vector<16x128xf32> -> vector<24x128xf32>
    %c0_13 = arith.constant 0 : index
    %c0_14 = arith.constant 0 : index
    %c0_15 = arith.constant 0 : index
    %22 = vector.load %arg2[%c0_13, %c0_14, %c0_15] : memref<1x24x128xf32, #tpu.memory_space<vmem>>, vector<1x24x128xf32>
    %23 = vector.shape_cast %22 : vector<1x24x128xf32> to vector<24x128xf32>
    %24 = tpu.concatenate %20, %21, %23 in 1 : vector<24x128xf32>, vector<24x128xf32>, vector<24x128xf32> -> vector<24x384xf32>
    %25 = arith.truncf %24 : vector<24x384xf32> to vector<24x384xbf16>
    %c0_16 = arith.constant 0 : index
    %c0_17 = arith.constant 0 : index
    %26 = vector.load %arg5[%c0_16, %c0_17] : memref<384x1536xbf16, #tpu.memory_space<vmem>>, vector<384x1536xbf16>
    %cst_18 = arith.constant dense<0.000000e+00> : vector<24x1536xf32>
    %27 = tpu.matmul %25, %26, %cst_18 {dimension_numbers = #tpu.dot_dimension_numbers<[1], [0], [0], [1], [0, 0, 1, 1], [], []>} : vector<24x384xbf16>, vector<384x1536xbf16>, vector<24x1536xf32> -> vector<24x1536xf32>
    %c0_19 = arith.constant 0 : index
    %c0_20 = arith.constant 0 : index
    %28 = vector.load %arg7[%c0_19, %c0_20] : memref<1x1536xf32, #tpu.memory_space<vmem>>, vector<1x1536xf32>
    %29 = vector.broadcast %28 : vector<1x1536xf32> to vector<24x1536xf32>
    %30 = arith.addf %27, %29 : vector<24x1536xf32>
    %c0_21 = arith.constant 0 : index
    %c0_22 = arith.constant 0 : index
    %31 = vector.load %arg6[%c0_21, %c0_22] : memref<512x1536xbf16, #tpu.memory_space<vmem>>, vector<512x1536xbf16>
    %c0_23 = arith.constant 0 : index
    %c0_24 = arith.constant 0 : index
    %32 = vector.load %arg8[%c0_23, %c0_24] : memref<1x1536xf32, #tpu.memory_space<vmem>>, vector<1x1536xf32>
    %c0_25 = arith.constant 0 : index
    %c0_26 = arith.constant 0 : index
    %33 = vector.load %arg1[%c0_25, %c0_26] : memref<8x512xf32, #tpu.memory_space<vmem>>, vector<8x512xf32>
    %34 = vector.extract_strided_slice %30 {offsets = [0, 0], sizes = [8, 1536], strides = [1, 1]} : vector<24x1536xf32> to vector<8x1536xf32>
    %35 = arith.truncf %33 : vector<8x512xf32> to vector<8x512xbf16>
    %cst_27 = arith.constant dense<0.000000e+00> : vector<8x1536xf32>
    %36 = tpu.matmul %35, %31, %cst_27 {dimension_numbers = #tpu.dot_dimension_numbers<[1], [0], [0], [1], [0, 0, 1, 1], [], []>} : vector<8x512xbf16>, vector<512x1536xbf16>, vector<8x1536xf32> -> vector<8x1536xf32>
    %37 = vector.broadcast %32 : vector<1x1536xf32> to vector<8x1536xf32>
    %38 = arith.addf %36, %37 : vector<8x1536xf32>
    %39 = vector.extract_strided_slice %34 {offsets = [0, 0], sizes = [8, 512], strides = [1, 1]} : vector<8x1536xf32> to vector<8x512xf32>
    %40 = vector.extract_strided_slice %38 {offsets = [0, 0], sizes = [8, 512], strides = [1, 1]} : vector<8x1536xf32> to vector<8x512xf32>
    %41 = arith.addf %39, %40 : vector<8x512xf32>
    %42 = arith.negf %41 : vector<8x512xf32>
    %43 = math.exp %42 : vector<8x512xf32>
    %cst_28 = arith.constant 1.000000e+00 : f32
    %44 = vector.broadcast %cst_28 : f32 to vector<8x512xf32>
    %45 = arith.addf %44, %43 : vector<8x512xf32>
    %46 = arith.divf %44, %45 : vector<8x512xf32>
    %47 = vector.extract_strided_slice %34 {offsets = [0, 512], sizes = [8, 512], strides = [1, 1]} : vector<8x1536xf32> to vector<8x512xf32>
    %48 = vector.extract_strided_slice %38 {offsets = [0, 512], sizes = [8, 512], strides = [1, 1]} : vector<8x1536xf32> to vector<8x512xf32>
    %49 = arith.addf %47, %48 : vector<8x512xf32>
    %50 = arith.negf %49 : vector<8x512xf32>
    %51 = math.exp %50 : vector<8x512xf32>
    %cst_29 = arith.constant 1.000000e+00 : f32
    %52 = vector.broadcast %cst_29 : f32 to vector<8x512xf32>
    %53 = arith.addf %52, %51 : vector<8x512xf32>
    %54 = arith.divf %52, %53 : vector<8x512xf32>
    %55 = vector.extract_strided_slice %34 {offsets = [0, 1024], sizes = [8, 512], strides = [1, 1]} : vector<8x1536xf32> to vector<8x512xf32>
    %56 = vector.extract_strided_slice %38 {offsets = [0, 1024], sizes = [8, 512], strides = [1, 1]} : vector<8x1536xf32> to vector<8x512xf32>
    %57 = arith.mulf %46, %56 : vector<8x512xf32>
    %58 = arith.addf %55, %57 : vector<8x512xf32>
    %59 = math.tanh %58 : vector<8x512xf32>
    %cst_30 = arith.constant 1.000000e+00 : f32
    %60 = vector.broadcast %cst_30 : f32 to vector<8x512xf32>
    %61 = arith.subf %60, %54 : vector<8x512xf32>
    %62 = arith.mulf %61, %59 : vector<8x512xf32>
    %63 = arith.mulf %54, %33 : vector<8x512xf32>
    %64 = arith.addf %62, %63 : vector<8x512xf32>
    %65 = vector.extract_strided_slice %30 {offsets = [8, 0], sizes = [8, 1536], strides = [1, 1]} : vector<24x1536xf32> to vector<8x1536xf32>
    %66 = arith.truncf %64 : vector<8x512xf32> to vector<8x512xbf16>
    %cst_31 = arith.constant dense<0.000000e+00> : vector<8x1536xf32>
    %67 = tpu.matmul %66, %31, %cst_31 {dimension_numbers = #tpu.dot_dimension_numbers<[1], [0], [0], [1], [0, 0, 1, 1], [], []>} : vector<8x512xbf16>, vector<512x1536xbf16>, vector<8x1536xf32> -> vector<8x1536xf32>
    %68 = vector.broadcast %32 : vector<1x1536xf32> to vector<8x1536xf32>
    %69 = arith.addf %67, %68 : vector<8x1536xf32>
    %70 = vector.extract_strided_slice %65 {offsets = [0, 0], sizes = [8, 512], strides = [1, 1]} : vector<8x1536xf32> to vector<8x512xf32>
    %71 = vector.extract_strided_slice %69 {offsets = [0, 0], sizes = [8, 512], strides = [1, 1]} : vector<8x1536xf32> to vector<8x512xf32>
    %72 = arith.addf %70, %71 : vector<8x512xf32>
    %73 = arith.negf %72 : vector<8x512xf32>
    %74 = math.exp %73 : vector<8x512xf32>
    %cst_32 = arith.constant 1.000000e+00 : f32
    %75 = vector.broadcast %cst_32 : f32 to vector<8x512xf32>
    %76 = arith.addf %75, %74 : vector<8x512xf32>
    %77 = arith.divf %75, %76 : vector<8x512xf32>
    %78 = vector.extract_strided_slice %65 {offsets = [0, 512], sizes = [8, 512], strides = [1, 1]} : vector<8x1536xf32> to vector<8x512xf32>
    %79 = vector.extract_strided_slice %69 {offsets = [0, 512], sizes = [8, 512], strides = [1, 1]} : vector<8x1536xf32> to vector<8x512xf32>
    %80 = arith.addf %78, %79 : vector<8x512xf32>
    %81 = arith.negf %80 : vector<8x512xf32>
    %82 = math.exp %81 : vector<8x512xf32>
    %cst_33 = arith.constant 1.000000e+00 : f32
    %83 = vector.broadcast %cst_33 : f32 to vector<8x512xf32>
    %84 = arith.addf %83, %82 : vector<8x512xf32>
    %85 = arith.divf %83, %84 : vector<8x512xf32>
    %86 = vector.extract_strided_slice %65 {offsets = [0, 1024], sizes = [8, 512], strides = [1, 1]} : vector<8x1536xf32> to vector<8x512xf32>
    %87 = vector.extract_strided_slice %69 {offsets = [0, 1024], sizes = [8, 512], strides = [1, 1]} : vector<8x1536xf32> to vector<8x512xf32>
    %88 = arith.mulf %77, %87 : vector<8x512xf32>
    %89 = arith.addf %86, %88 : vector<8x512xf32>
    %90 = math.tanh %89 : vector<8x512xf32>
    %cst_34 = arith.constant 1.000000e+00 : f32
    %91 = vector.broadcast %cst_34 : f32 to vector<8x512xf32>
    %92 = arith.subf %91, %85 : vector<8x512xf32>
    %93 = arith.mulf %92, %90 : vector<8x512xf32>
    %94 = arith.mulf %85, %64 : vector<8x512xf32>
    %95 = arith.addf %93, %94 : vector<8x512xf32>
    %96 = vector.extract_strided_slice %30 {offsets = [16, 0], sizes = [8, 1536], strides = [1, 1]} : vector<24x1536xf32> to vector<8x1536xf32>
    %97 = arith.truncf %95 : vector<8x512xf32> to vector<8x512xbf16>
    %cst_35 = arith.constant dense<0.000000e+00> : vector<8x1536xf32>
    %98 = tpu.matmul %97, %31, %cst_35 {dimension_numbers = #tpu.dot_dimension_numbers<[1], [0], [0], [1], [0, 0, 1, 1], [], []>} : vector<8x512xbf16>, vector<512x1536xbf16>, vector<8x1536xf32> -> vector<8x1536xf32>
    %99 = vector.broadcast %32 : vector<1x1536xf32> to vector<8x1536xf32>
    %100 = arith.addf %98, %99 : vector<8x1536xf32>
    %101 = vector.extract_strided_slice %96 {offsets = [0, 0], sizes = [8, 512], strides = [1, 1]} : vector<8x1536xf32> to vector<8x512xf32>
    %102 = vector.extract_strided_slice %100 {offsets = [0, 0], sizes = [8, 512], strides = [1, 1]} : vector<8x1536xf32> to vector<8x512xf32>
    %103 = arith.addf %101, %102 : vector<8x512xf32>
    %104 = arith.negf %103 : vector<8x512xf32>
    %105 = math.exp %104 : vector<8x512xf32>
    %cst_36 = arith.constant 1.000000e+00 : f32
    %106 = vector.broadcast %cst_36 : f32 to vector<8x512xf32>
    %107 = arith.addf %106, %105 : vector<8x512xf32>
    %108 = arith.divf %106, %107 : vector<8x512xf32>
    %109 = vector.extract_strided_slice %96 {offsets = [0, 512], sizes = [8, 512], strides = [1, 1]} : vector<8x1536xf32> to vector<8x512xf32>
    %110 = vector.extract_strided_slice %100 {offsets = [0, 512], sizes = [8, 512], strides = [1, 1]} : vector<8x1536xf32> to vector<8x512xf32>
    %111 = arith.addf %109, %110 : vector<8x512xf32>
    %112 = arith.negf %111 : vector<8x512xf32>
    %113 = math.exp %112 : vector<8x512xf32>
    %cst_37 = arith.constant 1.000000e+00 : f32
    %114 = vector.broadcast %cst_37 : f32 to vector<8x512xf32>
    %115 = arith.addf %114, %113 : vector<8x512xf32>
    %116 = arith.divf %114, %115 : vector<8x512xf32>
    %117 = vector.extract_strided_slice %96 {offsets = [0, 1024], sizes = [8, 512], strides = [1, 1]} : vector<8x1536xf32> to vector<8x512xf32>
    %118 = vector.extract_strided_slice %100 {offsets = [0, 1024], sizes = [8, 512], strides = [1, 1]} : vector<8x1536xf32> to vector<8x512xf32>
    %119 = arith.mulf %108, %118 : vector<8x512xf32>
    %120 = arith.addf %117, %119 : vector<8x512xf32>
    %121 = math.tanh %120 : vector<8x512xf32>
    %cst_38 = arith.constant 1.000000e+00 : f32
    %122 = vector.broadcast %cst_38 : f32 to vector<8x512xf32>
    %123 = arith.subf %122, %116 : vector<8x512xf32>
    %124 = arith.mulf %123, %121 : vector<8x512xf32>
    %125 = arith.mulf %116, %95 : vector<8x512xf32>
    %126 = arith.addf %124, %125 : vector<8x512xf32>
    %127 = arith.truncf %126 : vector<8x512xf32> to vector<8x512xbf16>
    %c0_39 = arith.constant 0 : index
    %c0_40 = arith.constant 0 : index
    %128 = vector.load %arg11[%c0_39, %c0_40] : memref<512x128xbf16, #tpu.memory_space<vmem>>, vector<512x128xbf16>
    %cst_41 = arith.constant dense<0.000000e+00> : vector<8x128xf32>
    %129 = tpu.matmul %127, %128, %cst_41 {dimension_numbers = #tpu.dot_dimension_numbers<[1], [0], [0], [1], [0, 0, 1, 1], [], []>} : vector<8x512xbf16>, vector<512x128xbf16>, vector<8x128xf32> -> vector<8x128xf32>
    %c0_42 = arith.constant 0 : index
    %c0_43 = arith.constant 0 : index
    %130 = vector.load %arg12[%c0_42, %c0_43] : memref<1x128xf32, #tpu.memory_space<vmem>>, vector<1x128xf32>
    %131 = vector.broadcast %130 : vector<1x128xf32> to vector<8x128xf32>
    %132 = arith.addf %129, %131 : vector<8x128xf32>
    %cst_44 = arith.constant 0.000000e+00 : f32
    %133 = vector.broadcast %cst_44 : f32 to vector<8x128xf32>
    %134 = arith.maximumf %132, %133 : vector<8x128xf32>
    %135 = vector.extract_strided_slice %10 {offsets = [16, 0], sizes = [8, 128], strides = [1, 1]} : vector<24x128xf32> to vector<8x128xf32>
    %136 = vector.extract_strided_slice %9 {offsets = [16, 0, 0], sizes = [8, 8, 128], strides = [1, 1, 1]} : vector<24x8x128xf32> to vector<8x8x128xf32>
    %137 = tpu.concatenate %134, %135 in 1 : vector<8x128xf32>, vector<8x128xf32> -> vector<8x256xf32>
    %c0_45 = arith.constant 0 : index
    %c0_46 = arith.constant 0 : index
    %138 = vector.load %arg13[%c0_45, %c0_46] : memref<1x256xf32, #tpu.memory_space<vmem>>, vector<1x256xf32>
    %139 = vector.broadcast %138 : vector<1x256xf32> to vector<8x256xf32>
    %140 = arith.mulf %137, %139 : vector<8x256xf32>
    %cst_47 = arith.constant dense<0.000000e+00> : vector<8xf32>
    %141 = vector.multi_reduction <add>, %140, %cst_47 [1] : vector<8x256xf32> to vector<8xf32>
    %142 = vector.shape_cast %141 : vector<8xf32> to vector<8x1xf32>
    %c0_48 = arith.constant 0 : index
    %c0_49 = arith.constant 0 : index
    %143 = vector.load %arg14[%c0_48, %c0_49] : memref<1x1xf32, #tpu.memory_space<vmem>>, vector<1x1xf32>
    %144 = vector.broadcast %143 : vector<1x1xf32> to vector<8x1xf32>
    %145 = arith.addf %142, %144 : vector<8x1xf32>
    %cst_50 = arith.constant 0.000000e+00 : f32
    %146 = vector.broadcast %cst_50 : f32 to vector<8x1xf32>
    %147 = arith.maximumf %145, %146 : vector<8x1xf32>
    %c0_51 = arith.constant 0 : index
    %c0_52 = arith.constant 0 : index
    %148 = vector.load %arg15[%c0_51, %c0_52] : memref<1x128xf32, #tpu.memory_space<vmem>>, vector<1x128xf32>
    %149 = vector.broadcast %148 : vector<1x128xf32> to vector<8x128xf32>
    %150 = arith.mulf %134, %149 : vector<8x128xf32>
    %cst_53 = arith.constant dense<0.000000e+00> : vector<8xf32>
    %151 = vector.multi_reduction <add>, %150, %cst_53 [1] : vector<8x128xf32> to vector<8xf32>
    %152 = vector.shape_cast %151 : vector<8xf32> to vector<8x1xf32>
    %c0_54 = arith.constant 0 : index
    %c0_55 = arith.constant 0 : index
    %153 = vector.load %arg16[%c0_54, %c0_55] : memref<1x128xf32, #tpu.memory_space<vmem>>, vector<1x128xf32>
    %154 = vector.shape_cast %153 : vector<1x128xf32> to vector<1x1x128xf32>
    %155 = vector.broadcast %154 : vector<1x1x128xf32> to vector<8x8x128xf32>
    %156 = arith.mulf %136, %155 : vector<8x8x128xf32>
    %cst_56 = arith.constant dense<0.000000e+00> : vector<8x8xf32>
    %157 = vector.multi_reduction <add>, %156, %cst_56 [2] : vector<8x8x128xf32> to vector<8x8xf32>
    %158 = vector.broadcast %152 : vector<8x1xf32> to vector<8x8xf32>
    %159 = arith.addf %157, %158 : vector<8x8xf32>
    %c0_57 = arith.constant 0 : index
    %c0_58 = arith.constant 0 : index
    %160 = vector.load %arg17[%c0_57, %c0_58] : memref<1x1xf32, #tpu.memory_space<vmem>>, vector<1x1xf32>
    %161 = vector.broadcast %160 : vector<1x1xf32> to vector<8x8xf32>
    %162 = arith.addf %159, %161 : vector<8x8xf32>
    %cst_59 = arith.constant 0.000000e+00 : f32
    %163 = vector.broadcast %cst_59 : f32 to vector<8x8xf32>
    %164 = arith.maximumf %162, %163 : vector<8x8xf32>
    %cst_60 = arith.constant 0.000000e+00 : f32
    %165 = vector.broadcast %cst_60 : f32 to vector<8x119xf32>
    %166 = tpu.concatenate %147, %164, %165 in 1 : vector<8x1xf32>, vector<8x8xf32>, vector<8x119xf32> -> vector<8x128xf32>
    %c0_61 = arith.constant 0 : index
    %c0_62 = arith.constant 0 : index
    %167 = vector.load %arg18[%c0_61, %c0_62] : memref<8x128xf32, #tpu.memory_space<vmem>>, vector<8x128xf32>
    tpu.vector_store %arg18[%c0_61, %c0_62], %166 {strides = array<i32>} : memref<8x128xf32, #tpu.memory_space<vmem>>, vector<8x128xf32>,
    return
  }
  func.func @transform_0(%arg0: i32) -> (i32, i32) {
    %c0_i32 = arith.constant 0 : i32
    %c0_i32_0 = arith.constant 0 : i32
    return %arg0, %c0_i32 : i32, i32
  }
  func.func @transform_1(%arg0: i32) -> (i32, i32, i32) {
    %c0_i32 = arith.constant 0 : i32
    %c0_i32_0 = arith.constant 0 : i32
    %c0_i32_1 = arith.constant 0 : i32
    return %arg0, %c0_i32, %c0_i32_0 : i32, i32, i32
  }
  func.func @transform_2(%arg0: i32) -> (i32, i32, i32) {
    %c0_i32 = arith.constant 0 : i32
    %c0_i32_0 = arith.constant 0 : i32
    %c0_i32_1 = arith.constant 0 : i32
    return %arg0, %c0_i32, %c0_i32_0 : i32, i32, i32
  }
  func.func @transform_3(%arg0: i32) -> (i32, i32, i32) {
    %c0_i32 = arith.constant 0 : i32
    %c0_i32_0 = arith.constant 0 : i32
    %c0_i32_1 = arith.constant 0 : i32
    return %arg0, %c0_i32, %c0_i32_0 : i32, i32, i32
  }
  func.func @transform_4(%arg0: i32) -> (i32, i32) {
    %c0_i32 = arith.constant 0 : i32
    %c0_i32_0 = arith.constant 0 : i32
    %c0_i32_1 = arith.constant 0 : i32
    return %c0_i32, %c0_i32_0 : i32, i32
  }
  func.func @transform_5(%arg0: i32) -> (i32, i32) {
    %c0_i32 = arith.constant 0 : i32
    %c0_i32_0 = arith.constant 0 : i32
    %c0_i32_1 = arith.constant 0 : i32
    return %c0_i32, %c0_i32_0 : i32, i32
  }
  func.func @transform_6(%arg0: i32) -> (i32, i32) {
    %c0_i32 = arith.constant 0 : i32
    %c0_i32_0 = arith.constant 0 : i32
    %c0_i32_1 = arith.constant 0 : i32
    return %c0_i32, %c0_i32_0 : i32, i32
  }
  func.func @transform_7(%arg0: i32) -> (i32, i32) {
    %c0_i32 = arith.constant 0 : i32
    %c0_i32_0 = arith.constant 0 : i32
    %c0_i32_1 = arith.constant 0 : i32
    return %c0_i32, %c0_i32_0 : i32, i32
  }
  func.func @transform_8(%arg0: i32) -> (i32, i32) {
    %c0_i32 = arith.constant 0 : i32
    %c0_i32_0 = arith.constant 0 : i32
    %c0_i32_1 = arith.constant 0 : i32
    return %c0_i32, %c0_i32_0 : i32, i32
  }
  func.func @transform_9(%arg0: i32) -> (i32, i32) {
    %c0_i32 = arith.constant 0 : i32
    %c0_i32_0 = arith.constant 0 : i32
    %c0_i32_1 = arith.constant 0 : i32
    return %c0_i32, %c0_i32_0 : i32, i32
  }
  func.func @transform_10(%arg0: i32) -> (i32, i32) {
    %c0_i32 = arith.constant 0 : i32
    %c0_i32_0 = arith.constant 0 : i32
    %c0_i32_1 = arith.constant 0 : i32
    return %c0_i32, %c0_i32_0 : i32, i32
  }
  func.func @transform_11(%arg0: i32) -> (i32, i32) {
    %c0_i32 = arith.constant 0 : i32
    %c0_i32_0 = arith.constant 0 : i32
    %c0_i32_1 = arith.constant 0 : i32
    return %c0_i32, %c0_i32_0 : i32, i32
  }
  func.func @transform_12(%arg0: i32) -> (i32, i32) {
    %c0_i32 = arith.constant 0 : i32
    %c0_i32_0 = arith.constant 0 : i32
    %c0_i32_1 = arith.constant 0 : i32
    return %c0_i32, %c0_i32_0 : i32, i32
  }
  func.func @transform_13(%arg0: i32) -> (i32, i32) {
    %c0_i32 = arith.constant 0 : i32
    %c0_i32_0 = arith.constant 0 : i32
    %c0_i32_1 = arith.constant 0 : i32
    return %c0_i32, %c0_i32_0 : i32, i32
  }
  func.func @transform_14(%arg0: i32) -> (i32, i32) {
    %c0_i32 = arith.constant 0 : i32
    %c0_i32_0 = arith.constant 0 : i32
    %c0_i32_1 = arith.constant 0 : i32
    return %c0_i32, %c0_i32_0 : i32, i32
  }
  func.func @transform_15(%arg0: i32) -> (i32, i32) {
    %c0_i32 = arith.constant 0 : i32
    %c0_i32_0 = arith.constant 0 : i32
    %c0_i32_1 = arith.constant 0 : i32
    return %c0_i32, %c0_i32_0 : i32, i32
  }
  func.func @transform_16(%arg0: i32) -> (i32, i32) {
    %c0_i32 = arith.constant 0 : i32
    %c0_i32_0 = arith.constant 0 : i32
    %c0_i32_1 = arith.constant 0 : i32
    return %c0_i32, %c0_i32_0 : i32, i32
  }
  func.func @transform_17(%arg0: i32) -> (i32, i32) {
    %c0_i32 = arith.constant 0 : i32
    %c0_i32_0 = arith.constant 0 : i32
    return %arg0, %c0_i32 : i32, i32
  }
}

</mosaic_0001>

<llo_original>
// kernel: tpu_custom_call.1
$region0: #{tpu_custom_call.1}
  #allocation0 [shape = 'u32[]', space=smem, size = 0x4, offset = 0x4, fixed_abs, tag = 'smem constant byte address 0x4 - core index']
  #allocation1 [shape = 'u32[144,128]{1,0:T(1,128)}', space=vmem, size = 0x12000, scoped, tag = 'internal scratch']
  #allocation2 [shape = 'f32[1,1]{1,0:T(1,128)S(1)}', space=vmem, size = 0x200, scoped, tag = 'scoped memory for tpu_custom_call.1']
  #allocation3 [shape = 'f32[1,1]{1,0:T(1,128)S(1)}', space=vmem, size = 0x200, scoped, tag = 'scoped memory for tpu_custom_call.1']
  %s0 = inlined_call_operand.hbm [shape: f32[8,512], index: 0, kind: input, shape index: {}]
  %s1 = inlined_call_operand.hbm [shape: f32[1,24,128], index: 1, kind: input, shape index: {}]
  %s2 = inlined_call_operand.hbm [shape: bf16[1,192,640], index: 2, kind: input, shape index: {}]
  %s3 = inlined_call_operand.vmem [shape: f32[1,16,8], index: 3, kind: input, shape index: {}]
  %s4 = inlined_call_operand.hbm [shape: bf16[384,1536], index: 4, kind: input, shape index: {}]
  %s5 = inlined_call_operand.hbm [shape: bf16[512,1536], index: 5, kind: input, shape index: {}]
  %s6 = inlined_call_operand.hbm [shape: f32[1,1536], index: 6, kind: input, shape index: {}]
  %s7 = inlined_call_operand.hbm [shape: f32[1,1536], index: 7, kind: input, shape index: {}]
  %s8 = inlined_call_operand.hbm [shape: bf16[640,128], index: 8, kind: input, shape index: {}]
  %s9 = inlined_call_operand.hbm [shape: f32[1,128], index: 9, kind: input, shape index: {}]
  %s10 = inlined_call_operand.hbm [shape: bf16[512,128], index: 10, kind: input, shape index: {}]
  %s11 = inlined_call_operand.hbm [shape: f32[1,128], index: 11, kind: input, shape index: {}]
  %s12 = inlined_call_operand.hbm [shape: f32[1,256], index: 12, kind: input, shape index: {}]
  %s13 = inlined_call_operand.<no memory space> [shape: f32[1,1], index: 13, kind: input, shape index: {}]
  %s14 = inlined_call_operand.hbm [shape: f32[1,128], index: 14, kind: input, shape index: {}]
  %s15 = inlined_call_operand.hbm [shape: f32[1,128], index: 15, kind: input, shape index: {}]
  %s16 = inlined_call_operand.<no memory space> [shape: f32[1,1], index: 16, kind: input, shape index: {}]
  %s17 = inlined_call_operand.hbm [shape: f32[8,128], index: 17, kind: output, shape index: {}]
  %s18 = sld [smem:[#allocation0]]
  $region134: #{tpu_custom_call.1} parent=0
    _
  %s20 = ssub.s32 1, %s18
  %s21 = scalar_select 0, %s20, %s18
  %v22 = vstv %s13
  %23 = vst [vmem:[#allocation2] sm:$0x1] %v22
  %v24 = vstv %s16
  %25 = vst [vmem:[#allocation3] sm:$0x1] %v24
  $region1: #{tpu_custom_call.1} parent=0
    #allocation4 [shape = 'u8[16384]{0}', space=vmem, size = 0x4000, scoped, tag = 'input window, operand 0, single buffered']
    #allocation5 [shape = 's32[1]{0}', space=sflag, size = 0x4, scoped, tag = 'scoped memory for tpu_custom_call.1']
    #allocation6 [shape = 's32[1]{0}', space=sflag, size = 0x4, scoped, tag = 'scoped memory for tpu_custom_call.1']
    #allocation7 [shape = 'u8[12288]{0}', space=vmem, size = 0x3000, scoped, tag = 'input window, operand 1, single buffered']
    #allocation8 [shape = 's32[1]{0}', space=sflag, size = 0x4, scoped, tag = 'scoped memory for tpu_custom_call.1']
    #allocation9 [shape = 'u8[245760]{0}', space=vmem, size = 0x3c000, scoped, tag = 'input window, operand 2, single buffered']
    #allocation10 [shape = 'u8[1179648]{0}', space=vmem, size = 0x120000, scoped, tag = 'input window, operand 4, single buffered']
    #allocation11 [shape = 's32[1]{0}', space=sflag, size = 0x4, scoped, tag = 'scoped memory for tpu_custom_call.1']
    #allocation12 [shape = 'u8[1572864]{0}', space=vmem, size = 0x180000, scoped, tag = 'input window, operand 5, single buffered']
    #allocation13 [shape = 'u8[6144]{0}', space=vmem, size = 0x1800, scoped, tag = 'input window, operand 6, single buffered']
    #allocation14 [shape = 's32[1]{0}', space=sflag, size = 0x4, scoped, tag = 'scoped memory for tpu_custom_call.1']
    #allocation15 [shape = 'u8[6144]{0}', space=vmem, size = 0x1800, scoped, tag = 'input window, operand 7, single buffered']
    #allocation16 [shape = 'u8[163840]{0}', space=vmem, size = 0x28000, scoped, tag = 'input window, operand 8, single buffered']
    #allocation17 [shape = 's32[1]{0}', space=sflag, size = 0x4, scoped, tag = 'scoped memory for tpu_custom_call.1']
    #allocation18 [shape = 'u8[512]{0}', space=vmem, size = 0x400, scoped, tag = 'input window, operand 9, single buffered']
    #allocation19 [shape = 'u8[131072]{0}', space=vmem, size = 0x20000, scoped, tag = 'input window, operand 10, single buffered']
    #allocation20 [shape = 's32[1]{0}', space=sflag, size = 0x4, scoped, tag = 'scoped memory for tpu_custom_call.1']
    #allocation21 [shape = 'u8[512]{0}', space=vmem, size = 0x400, scoped, tag = 'input window, operand 11, single buffered']
    #allocation22 [shape = 'u8[1024]{0}', space=vmem, size = 0x400, scoped, tag = 'input window, operand 12, single buffered']
    #allocation23 [shape = 's32[1]{0}', space=sflag, size = 0x4, scoped, tag = 'scoped memory for tpu_custom_call.1']
    #allocation24 [shape = 'u8[512]{0}', space=vmem, size = 0x400, scoped, tag = 'input window, operand 14, single buffered']
    #allocation25 [shape = 'u8[512]{0}', space=vmem, size = 0x400, scoped, tag = 'input window, operand 15, single buffered']
    #allocation26 [shape = 's32[1]{0}', space=sflag, size = 0x4, scoped, tag = 'scoped memory for tpu_custom_call.1']
    #allocation27 [shape = 'u8[4096]{0}', space=vmem, size = 0x1000, scoped, tag = 'output window, operand 0, single buffered']
    %26 = vsyncpa [#allocation5], 0
    %27 = vsyncpa [#allocation8], 0
    %28 = vsyncpa [#allocation11], 0
    %29 = vsyncpa [#allocation14], 0
    %30 = vsyncpa [#allocation17], 0
    %31 = vsyncpa [#allocation20], 0
    %32 = vsyncpa [#allocation23], 0
    %33 = vsyncpa [#allocation26], 0
    %34 = vsyncpa [#allocation6], 0
    // Predicated region
    $region2: #{tpu_custom_call.1} parent=1 // pred_check
      _
    $region3: #{tpu_custom_call.1} parent=1 // pred_check_branch
      %36 = sbr.rel (0) target = $region5
    $region4: #{tpu_custom_call.1} parent=1 // pred_region
      %s38 = ssub.s32 512, 512
      %39 = vsyncadd [#allocation5], %s38
      %s41 = sshll.u32 [#allocation4], 4
      %s42 = int_to_ptr.vmem [resolvable:$true] %s41
      %44 = dma.hbm_to_vmem [thread:$0]  %s0, 512, %s42, [#allocation5]
    $region5: #{tpu_custom_call.1} parent=1 // pred_fallthru
      _
    // Predicated region
    $region6: #{tpu_custom_call.1} parent=1 // pred_check
      _
    $region7: #{tpu_custom_call.1} parent=1 // pred_check_branch
      %46 = sbr.rel (0) target = $region9
    $region8: #{tpu_custom_call.1} parent=1 // pred_region
      %s48 = ssub.s32 384, 384
      %49 = vsyncadd [#allocation8], %s48
      %s50 = sshll.u32 [#allocation7], 4
      %s51 = int_to_ptr.vmem [resolvable:$true] %s50
      %56 = dma.hbm_to_vmem [thread:$0]  %s1, 384, %s51, [#allocation8], 128, 128, 8
    $region9: #{tpu_custom_call.1} parent=1 // pred_fallthru
      _
    // Predicated region
    $region10: #{tpu_custom_call.1} parent=1 // pred_check
      _
    $region11: #{tpu_custom_call.1} parent=1 // pred_check_branch
      %58 = sbr.rel (0) target = $region13
    $region12: #{tpu_custom_call.1} parent=1 // pred_region
      %s60 = ssub.s32 7680, 7680
      %61 = vsyncadd [#allocation8], %s60
      %s62 = sshll.u32 [#allocation9], 4
      %s63 = int_to_ptr.vmem [resolvable:$true] %s62
      %68 = dma.hbm_to_vmem [thread:$0]  %s2, 7680, %s63, [#allocation8], 320, 320, 20
    $region13: #{tpu_custom_call.1} parent=1 // pred_fallthru
      _
    // Predicated region
    $region14: #{tpu_custom_call.1} parent=1 // pred_check
      _
    $region15: #{tpu_custom_call.1} parent=1 // pred_check_branch
      %70 = sbr.rel (0) target = $region17
    $region16: #{tpu_custom_call.1} parent=1 // pred_region
      _
    $region17: #{tpu_custom_call.1} parent=1 // pred_fallthru
      _
    // Predicated region
    $region18: #{tpu_custom_call.1} parent=1 // pred_check
      _
    $region19: #{tpu_custom_call.1} parent=1 // pred_check_branch
      %72 = sbr.rel (0) target = $region21
    $region20: #{tpu_custom_call.1} parent=1 // pred_region
      %s74 = ssub.s32 36864, 36864
      %75 = vsyncadd [#allocation11], %s74
      %s76 = sshll.u32 [#allocation10], 4
      %s77 = int_to_ptr.vmem [resolvable:$true] %s76
      %82 = dma.hbm_to_vmem [thread:$0]  %s4, 36864, %s77, [#allocation11], 768, 768, 48
    $region21: #{tpu_custom_call.1} parent=1 // pred_fallthru
      _
    // Predicated region
    $region22: #{tpu_custom_call.1} parent=1 // pred_check
      _
    $region23: #{tpu_custom_call.1} parent=1 // pred_check_branch
      %84 = sbr.rel (0) target = $region25
    $region24: #{tpu_custom_call.1} parent=1 // pred_region
      %s86 = ssub.s32 49152, 49152
      %87 = vsyncadd [#allocation11], %s86
      %s88 = sshll.u32 [#allocation12], 4
      %s89 = int_to_ptr.vmem [resolvable:$true] %s88
      %94 = dma.hbm_to_vmem [thread:$0]  %s5, 49152, %s89, [#allocation11], 768, 768, 48
    $region25: #{tpu_custom_call.1} parent=1 // pred_fallthru
      _
    // Predicated region
    $region26: #{tpu_custom_call.1} parent=1 // pred_check
      _
    $region27: #{tpu_custom_call.1} parent=1 // pred_check_branch
      %96 = sbr.rel (0) target = $region29
    $region28: #{tpu_custom_call.1} parent=1 // pred_region
      %s98 = ssub.s32 192, 192
      %99 = vsyncadd [#allocation14], %s98
      %s101 = sshll.u32 [#allocation13], 4
      %s102 = int_to_ptr.vmem [resolvable:$true] %s101
      %104 = dma.hbm_to_vmem [thread:$0]  %s6, 192, %s102, [#allocation14]
    $region29: #{tpu_custom_call.1} parent=1 // pred_fallthru
      _
    // Predicated region
    $region30: #{tpu_custom_call.1} parent=1 // pred_check
      _
    $region31: #{tpu_custom_call.1} parent=1 // pred_check_branch
      %106 = sbr.rel (0) target = $region33
    $region32: #{tpu_custom_call.1} parent=1 // pred_region
      %s108 = ssub.s32 192, 192
      %109 = vsyncadd [#allocation14], %s108
      %s111 = sshll.u32 [#allocation15], 4
      %s112 = int_to_ptr.vmem [resolvable:$true] %s111
      %114 = dma.hbm_to_vmem [thread:$0]  %s7, 192, %s112, [#allocation14]
    $region33: #{tpu_custom_call.1} parent=1 // pred_fallthru
      _
    // Predicated region
    $region34: #{tpu_custom_call.1} parent=1 // pred_check
      _
    $region35: #{tpu_custom_call.1} parent=1 // pred_check_branch
      %116 = sbr.rel (0) target = $region37
    $region36: #{tpu_custom_call.1} parent=1 // pred_region
      %s118 = ssub.s32 5120, 5120
      %119 = vsyncadd [#allocation17], %s118
      %s120 = sshll.u32 [#allocation16], 4
      %s121 = int_to_ptr.vmem [resolvable:$true] %s120
      %126 = dma.hbm_to_vmem [thread:$0]  %s8, 5120, %s121, [#allocation17], 64, 64, 4
    $region37: #{tpu_custom_call.1} parent=1 // pred_fallthru
      _
    // Predicated region
    $region38: #{tpu_custom_call.1} parent=1 // pred_check
      _
    $region39: #{tpu_custom_call.1} parent=1 // pred_check_branch
      %128 = sbr.rel (0) target = $region41
    $region40: #{tpu_custom_call.1} parent=1 // pred_region
      %s130 = ssub.s32 16, 16
      %131 = vsyncadd [#allocation17], %s130
      %s133 = sshll.u32 [#allocation18], 4
      %s134 = int_to_ptr.vmem [resolvable:$true] %s133
      %136 = dma.hbm_to_vmem [thread:$0]  %s9, 16, %s134, [#allocation17]
    $region41: #{tpu_custom_call.1} parent=1 // pred_fallthru
      _
    // Predicated region
    $region42: #{tpu_custom_call.1} parent=1 // pred_check
      _
    $region43: #{tpu_custom_call.1} parent=1 // pred_check_branch
      %138 = sbr.rel (0) target = $region45
    $region44: #{tpu_custom_call.1} parent=1 // pred_region
      %s140 = ssub.s32 4096, 4096
      %141 = vsyncadd [#allocation20], %s140
      %s142 = sshll.u32 [#allocation19], 4
      %s143 = int_to_ptr.vmem [resolvable:$true] %s142
      %148 = dma.hbm_to_vmem [thread:$0]  %s10, 4096, %s143, [#allocation20], 64, 64, 4
    $region45: #{tpu_custom_call.1} parent=1 // pred_fallthru
      _
    // Predicated region
    $region46: #{tpu_custom_call.1} parent=1 // pred_check
      _
    $region47: #{tpu_custom_call.1} parent=1 // pred_check_branch
      %150 = sbr.rel (0) target = $region49
    $region48: #{tpu_custom_call.1} parent=1 // pred_region
      %s152 = ssub.s32 16, 16
      %153 = vsyncadd [#allocation20], %s152
      %s155 = sshll.u32 [#allocation21], 4
      %s156 = int_to_ptr.vmem [resolvable:$true] %s155
      %158 = dma.hbm_to_vmem [thread:$0]  %s11, 16, %s156, [#allocation20]
    $region49: #{tpu_custom_call.1} parent=1 // pred_fallthru
      _
    // Predicated region
    $region50: #{tpu_custom_call.1} parent=1 // pred_check
      _
    $region51: #{tpu_custom_call.1} parent=1 // pred_check_branch
      %160 = sbr.rel (0) target = $region53
    $region52: #{tpu_custom_call.1} parent=1 // pred_region
      %s162 = ssub.s32 32, 32
      %163 = vsyncadd [#allocation23], %s162
      %s165 = sshll.u32 [#allocation22], 4
      %s166 = int_to_ptr.vmem [resolvable:$true] %s165
      %168 = dma.hbm_to_vmem [thread:$0]  %s12, 32, %s166, [#allocation23]
    $region53: #{tpu_custom_call.1} parent=1 // pred_fallthru
      _
    // Predicated region
    $region54: #{tpu_custom_call.1} parent=1 // pred_check
      _
    $region55: #{tpu_custom_call.1} parent=1 // pred_check_branch
      %170 = sbr.rel (0) target = $region57
    $region56: #{tpu_custom_call.1} parent=1 // pred_region
      _
    $region57: #{tpu_custom_call.1} parent=1 // pred_fallthru
      _
    // Predicated region
    $region58: #{tpu_custom_call.1} parent=1 // pred_check
      _
    $region59: #{tpu_custom_call.1} parent=1 // pred_check_branch
      %172 = sbr.rel (0) target = $region61
    $region60: #{tpu_custom_call.1} parent=1 // pred_region
      %s174 = ssub.s32 16, 16
      %175 = vsyncadd [#allocation23], %s174
      %s177 = sshll.u32 [#allocation24], 4
      %s178 = int_to_ptr.vmem [resolvable:$true] %s177
      %180 = dma.hbm_to_vmem [thread:$0]  %s14, 16, %s178, [#allocation23]
    $region61: #{tpu_custom_call.1} parent=1 // pred_fallthru
      _
    // Predicated region
    $region62: #{tpu_custom_call.1} parent=1 // pred_check
      _
    $region63: #{tpu_custom_call.1} parent=1 // pred_check_branch
      %182 = sbr.rel (0) target = $region65
    $region64: #{tpu_custom_call.1} parent=1 // pred_region
      %s184 = ssub.s32 16, 16
      %185 = vsyncadd [#allocation26], %s184
      %s187 = sshll.u32 [#allocation25], 4
      %s188 = int_to_ptr.vmem [resolvable:$true] %s187
      %190 = dma.hbm_to_vmem [thread:$0]  %s15, 16, %s188, [#allocation26]
    $region65: #{tpu_custom_call.1} parent=1 // pred_fallthru
      _
    // Predicated region
    $region66: #{tpu_custom_call.1} parent=1 // pred_check
      _
    $region67: #{tpu_custom_call.1} parent=1 // pred_check_branch
      %192 = sbr.rel (0) target = $region69
    $region68: #{tpu_custom_call.1} parent=1 // pred_region
      _
    $region69: #{tpu_custom_call.1} parent=1 // pred_fallthru
      _
    // Predicated region
    $region70: #{tpu_custom_call.1} parent=1 // pred_check
      _
    $region71: #{tpu_custom_call.1} parent=1 // pred_check_branch
      %194 = sbr.rel (0) target = $region73
    $region72: #{tpu_custom_call.1} parent=1 // pred_region
      %195 = dma.done [#allocation5], 512
    $region73: #{tpu_custom_call.1} parent=1 // pred_fallthru
      _
    // Predicated region
    $region74: #{tpu_custom_call.1} parent=1 // pred_check
      _
    $region75: #{tpu_custom_call.1} parent=1 // pred_check_branch
      %197 = sbr.rel (0) target = $region77
    $region76: #{tpu_custom_call.1} parent=1 // pred_region
      %198 = dma.done [#allocation8], 384
    $region77: #{tpu_custom_call.1} parent=1 // pred_fallthru
      _
    // Predicated region
    $region78: #{tpu_custom_call.1} parent=1 // pred_check
      _
    $region79: #{tpu_custom_call.1} parent=1 // pred_check_branch
      %200 = sbr.rel (0) target = $region81
    $region80: #{tpu_custom_call.1} parent=1 // pred_region
      %201 = dma.done [#allocation8], 7680
    $region81: #{tpu_custom_call.1} parent=1 // pred_fallthru
      _
    // Predicated region
    $region82: #{tpu_custom_call.1} parent=1 // pred_check
      _
    $region83: #{tpu_custom_call.1} parent=1 // pred_check_branch
      %203 = sbr.rel (0) target = $region85
    $region84: #{tpu_custom_call.1} parent=1 // pred_region
      %204 = dma.done [#allocation11], 36864
    $region85: #{tpu_custom_call.1} parent=1 // pred_fallthru
      _
    // Predicated region
    $region86: #{tpu_custom_call.1} parent=1 // pred_check
      _
    $region87: #{tpu_custom_call.1} parent=1 // pred_check_branch
      %206 = sbr.rel (0) target = $region89
    $region88: #{tpu_custom_call.1} parent=1 // pred_region
      %207 = dma.done [#allocation11], 49152
    $region89: #{tpu_custom_call.1} parent=1 // pred_fallthru
      _
    // Predicated region
    $region90: #{tpu_custom_call.1} parent=1 // pred_check
      _
    $region91: #{tpu_custom_call.1} parent=1 // pred_check_branch
      %209 = sbr.rel (0) target = $region93
    $region92: #{tpu_custom_call.1} parent=1 // pred_region
      %210 = dma.done [#allocation14], 192
    $region93: #{tpu_custom_call.1} parent=1 // pred_fallthru
      _
    // Predicated region
    $region94: #{tpu_custom_call.1} parent=1 // pred_check
      _
    $region95: #{tpu_custom_call.1} parent=1 // pred_check_branch
      %212 = sbr.rel (0) target = $region97
    $region96: #{tpu_custom_call.1} parent=1 // pred_region
      %213 = dma.done [#allocation14], 192
    $region97: #{tpu_custom_call.1} parent=1 // pred_fallthru
      _
    // Predicated region
    $region98: #{tpu_custom_call.1} parent=1 // pred_check
      _
    $region99: #{tpu_custom_call.1} parent=1 // pred_check_branch
      %215 = sbr.rel (0) target = $region101
    $region100: #{tpu_custom_call.1} parent=1 // pred_region
      %216 = dma.done [#allocation17], 5120
    $region101: #{tpu_custom_call.1} parent=1 // pred_fallthru
      _
    // Predicated region
    $region102: #{tpu_custom_call.1} parent=1 // pred_check
      _
    $region103: #{tpu_custom_call.1} parent=1 // pred_check_branch
      %218 = sbr.rel (0) target = $region105
    $region104: #{tpu_custom_call.1} parent=1 // pred_region
      %219 = dma.done [#allocation17], 16
    $region105: #{tpu_custom_call.1} parent=1 // pred_fallthru
      _
    // Predicated region
    $region106: #{tpu_custom_call.1} parent=1 // pred_check
      _
    $region107: #{tpu_custom_call.1} parent=1 // pred_check_branch
      %221 = sbr.rel (0) target = $region109
    $region108: #{tpu_custom_call.1} parent=1 // pred_region
      %222 = dma.done [#allocation20], 4096
    $region109: #{tpu_custom_call.1} parent=1 // pred_fallthru
      _
    // Predicated region
    $region110: #{tpu_custom_call.1} parent=1 // pred_check
      _
    $region111: #{tpu_custom_call.1} parent=1 // pred_check_branch
      %224 = sbr.rel (0) target = $region113
    $region112: #{tpu_custom_call.1} parent=1 // pred_region
      %225 = dma.done [#allocation20], 16
    $region113: #{tpu_custom_call.1} parent=1 // pred_fallthru
      _
    // Predicated region
    $region114: #{tpu_custom_call.1} parent=1 // pred_check
      _
    $region115: #{tpu_custom_call.1} parent=1 // pred_check_branch
      %227 = sbr.rel (0) target = $region117
    $region116: #{tpu_custom_call.1} parent=1 // pred_region
      %228 = dma.done [#allocation23], 32
    $region117: #{tpu_custom_call.1} parent=1 // pred_fallthru
      _
    // Predicated region
    $region118: #{tpu_custom_call.1} parent=1 // pred_check
      _
    $region119: #{tpu_custom_call.1} parent=1 // pred_check_branch
      %230 = sbr.rel (0) target = $region121
    $region120: #{tpu_custom_call.1} parent=1 // pred_region
      %231 = dma.done [#allocation23], 16
    $region121: #{tpu_custom_call.1} parent=1 // pred_fallthru
      _
    // Predicated region
    $region122: #{tpu_custom_call.1} parent=1 // pred_check
      _
    $region123: #{tpu_custom_call.1} parent=1 // pred_check_branch
      %233 = sbr.rel (0) target = $region125
    $region124: #{tpu_custom_call.1} parent=1 // pred_region
      %234 = dma.done [#allocation26], 16
    $region125: #{tpu_custom_call.1} parent=1 // pred_fallthru
      _
    %v236 = vld [vmem:[#allocation9] sm:$0xff]
    %v237 = vld [vmem:[#allocation9 + $0x8] sm:$0xff]
    %v238 = vld [vmem:[#allocation9 + $0x10] sm:$0xf]
    %v239 = vld [vmem:[#allocation9 + $0x14] sm:$0xff]
    %v240 = vld [vmem:[#allocation9 + $0x1c] sm:$0xff]
    %v241 = vld [vmem:[#allocation9 + $0x24] sm:$0xf]
    %v242 = vld [vmem:[#allocation9 + $0x28] sm:$0xff]
    %v243 = vld [vmem:[#allocation9 + $0x30] sm:$0xff]
    %v244 = vld [vmem:[#allocation9 + $0x38] sm:$0xf]
    %v245 = vld [vmem:[#allocation9 + $0x3c] sm:$0xff]
    %v246 = vld [vmem:[#allocation9 + $0x44] sm:$0xff]
    %v247 = vld [vmem:[#allocation9 + $0x4c] sm:$0xf]
    %v248 = vld [vmem:[#allocation9 + $0x50] sm:$0xff]
    %v249 = vld [vmem:[#allocation9 + $0x58] sm:$0xff]
    %v250 = vld [vmem:[#allocation9 + $0x60] sm:$0xf]
    %v251 = vld [vmem:[#allocation9 + $0x64] sm:$0xff]
    %v252 = vld [vmem:[#allocation9 + $0x6c] sm:$0xff]
    %v253 = vld [vmem:[#allocation9 + $0x74] sm:$0xf]
    %v254 = vld [vmem:[#allocation9 + $0x78] sm:$0xff]
    %v255 = vld [vmem:[#allocation9 + $0x80] sm:$0xff]
    %v256 = vld [vmem:[#allocation9 + $0x88] sm:$0xf]
    %v257 = vld [vmem:[#allocation9 + $0x8c] sm:$0xff]
    %v258 = vld [vmem:[#allocation9 + $0x94] sm:$0xff]
    %v259 = vld [vmem:[#allocation9 + $0x9c] sm:$0xf]
    %v260 = vld [vmem:[#allocation9 + $0xa0] sm:$0xff]
    %v261 = vld [vmem:[#allocation9 + $0xa8] sm:$0xff]
    %v262 = vld [vmem:[#allocation9 + $0xb0] sm:$0xf]
    %v263 = vld [vmem:[#allocation9 + $0xb4] sm:$0xff]
    %v264 = vld [vmem:[#allocation9 + $0xbc] sm:$0xff]
    %v265 = vld [vmem:[#allocation9 + $0xc4] sm:$0xf]
    %v266 = vld [vmem:[#allocation9 + $0xc8] sm:$0xff]
    %v267 = vld [vmem:[#allocation9 + $0xd0] sm:$0xff]
    %v268 = vld [vmem:[#allocation9 + $0xd8] sm:$0xf]
    %v269 = vld [vmem:[#allocation9 + $0xdc] sm:$0xff]
    %v270 = vld [vmem:[#allocation9 + $0xe4] sm:$0xff]
    %v271 = vld [vmem:[#allocation9 + $0xec] sm:$0xf]
    %v272 = vld [vmem:[#allocation9 + $0xf0] sm:$0xff]
    %v273 = vld [vmem:[#allocation9 + $0xf8] sm:$0xff]
    %v274 = vld [vmem:[#allocation9 + $0x100] sm:$0xf]
    %v275 = vld [vmem:[#allocation9 + $0x104] sm:$0xff]
    %v276 = vld [vmem:[#allocation9 + $0x10c] sm:$0xff]
    %v277 = vld [vmem:[#allocation9 + $0x114] sm:$0xf]
    %v278 = vld [vmem:[#allocation9 + $0x118] sm:$0xff]
    %v279 = vld [vmem:[#allocation9 + $0x120] sm:$0xff]
    %v280 = vld [vmem:[#allocation9 + $0x128] sm:$0xf]
    %v281 = vld [vmem:[#allocation9 + $0x12c] sm:$0xff]
    %v282 = vld [vmem:[#allocation9 + $0x134] sm:$0xff]
    %v283 = vld [vmem:[#allocation9 + $0x13c] sm:$0xf]
    %v284 = vld [vmem:[#allocation9 + $0x140] sm:$0xff]
    %v285 = vld [vmem:[#allocation9 + $0x148] sm:$0xff]
    %v286 = vld [vmem:[#allocation9 + $0x150] sm:$0xf]
    %v287 = vld [vmem:[#allocation9 + $0x154] sm:$0xff]
    %v288 = vld [vmem:[#allocation9 + $0x15c] sm:$0xff]
    %v289 = vld [vmem:[#allocation9 + $0x164] sm:$0xf]
    %v290 = vld [vmem:[#allocation9 + $0x168] sm:$0xff]
    %v291 = vld [vmem:[#allocation9 + $0x170] sm:$0xff]
    %v292 = vld [vmem:[#allocation9 + $0x178] sm:$0xf]
    %v293 = vld [vmem:[#allocation9 + $0x17c] sm:$0xff]
    %v294 = vld [vmem:[#allocation9 + $0x184] sm:$0xff]
    %v295 = vld [vmem:[#allocation9 + $0x18c] sm:$0xf]
    %v296 = vld [vmem:[#allocation9 + $0x190] sm:$0xff]
    %v297 = vld [vmem:[#allocation9 + $0x198] sm:$0xff]
    %v298 = vld [vmem:[#allocation9 + $0x1a0] sm:$0xf]
    %v299 = vld [vmem:[#allocation9 + $0x1a4] sm:$0xff]
    %v300 = vld [vmem:[#allocation9 + $0x1ac] sm:$0xff]
    %v301 = vld [vmem:[#allocation9 + $0x1b4] sm:$0xf]
    %v302 = vld [vmem:[#allocation9 + $0x1b8] sm:$0xff]
    %v303 = vld [vmem:[#allocation9 + $0x1c0] sm:$0xff]
    %v304 = vld [vmem:[#allocation9 + $0x1c8] sm:$0xf]
    %v305 = vld [vmem:[#allocation9 + $0x1cc] sm:$0xff]
    %v306 = vld [vmem:[#allocation9 + $0x1d4] sm:$0xff]
    %v307 = vld [vmem:[#allocation9 + $0x1dc] sm:$0xf]
    %v308 = vld [vmem:[#allocation16] sm:$0xf]
    %v309 = vld [vmem:[#allocation16 + $0x4] sm:$0xf]
    %v310 = vld [vmem:[#allocation16 + $0x8] sm:$0xf]
    %v311 = vld [vmem:[#allocation16 + $0xc] sm:$0xf]
    %v312 = vld [vmem:[#allocation16 + $0x10] sm:$0xf]
    %v313 = vld [vmem:[#allocation16 + $0x14] sm:$0xf]
    %v314 = vld [vmem:[#allocation16 + $0x18] sm:$0xf]
    %v315 = vld [vmem:[#allocation16 + $0x1c] sm:$0xf]
    %v316 = vld [vmem:[#allocation16 + $0x20] sm:$0xf]
    %v317 = vld [vmem:[#allocation16 + $0x24] sm:$0xf]
    %v318 = vld [vmem:[#allocation16 + $0x28] sm:$0xf]
    %v319 = vld [vmem:[#allocation16 + $0x2c] sm:$0xf]
    %v320 = vld [vmem:[#allocation16 + $0x30] sm:$0xf]
    %v321 = vld [vmem:[#allocation16 + $0x34] sm:$0xf]
    %v322 = vld [vmem:[#allocation16 + $0x38] sm:$0xf]
    %v323 = vld [vmem:[#allocation16 + $0x3c] sm:$0xf]
    %v324 = vld [vmem:[#allocation16 + $0x40] sm:$0xf]
    %v325 = vld [vmem:[#allocation16 + $0x44] sm:$0xf]
    %v326 = vld [vmem:[#allocation16 + $0x48] sm:$0xf]
    %v327 = vld [vmem:[#allocation16 + $0x4c] sm:$0xf]
    %v328 = vld [vmem:[#allocation16 + $0x50] sm:$0xf]
    %v329 = vld [vmem:[#allocation16 + $0x54] sm:$0xf]
    %v330 = vld [vmem:[#allocation16 + $0x58] sm:$0xf]
    %v331 = vld [vmem:[#allocation16 + $0x5c] sm:$0xf]
    %v332 = vld [vmem:[#allocation16 + $0x60] sm:$0xf]
    %v333 = vld [vmem:[#allocation16 + $0x64] sm:$0xf]
    %v334 = vld [vmem:[#allocation16 + $0x68] sm:$0xf]
    %v335 = vld [vmem:[#allocation16 + $0x6c] sm:$0xf]
    %v336 = vld [vmem:[#allocation16 + $0x70] sm:$0xf]
    %v337 = vld [vmem:[#allocation16 + $0x74] sm:$0xf]
    %v338 = vld [vmem:[#allocation16 + $0x78] sm:$0xf]
    %v339 = vld [vmem:[#allocation16 + $0x7c] sm:$0xf]
    %v340 = vld [vmem:[#allocation16 + $0x80] sm:$0xf]
    %v341 = vld [vmem:[#allocation16 + $0x84] sm:$0xf]
    %v342 = vld [vmem:[#allocation16 + $0x88] sm:$0xf]
    %v343 = vld [vmem:[#allocation16 + $0x8c] sm:$0xf]
    %v344 = vld [vmem:[#allocation16 + $0x90] sm:$0xf]
    %v345 = vld [vmem:[#allocation16 + $0x94] sm:$0xf]
    %v346 = vld [vmem:[#allocation16 + $0x98] sm:$0xf]
    %v347 = vld [vmem:[#allocation16 + $0x9c] sm:$0xf]
    %v348 = vld [vmem:[#allocation16 + $0xa0] sm:$0xf]
    %v349 = vld [vmem:[#allocation16 + $0xa4] sm:$0xf]
    %v350 = vld [vmem:[#allocation16 + $0xa8] sm:$0xf]
    %v351 = vld [vmem:[#allocation16 + $0xac] sm:$0xf]
    %v352 = vld [vmem:[#allocation16 + $0xb0] sm:$0xf]
    %v353 = vld [vmem:[#allocation16 + $0xb4] sm:$0xf]
    %v354 = vld [vmem:[#allocation16 + $0xb8] sm:$0xf]
    %v355 = vld [vmem:[#allocation16 + $0xbc] sm:$0xf]
    %v356 = vld [vmem:[#allocation16 + $0xc0] sm:$0xf]
    %v357 = vld [vmem:[#allocation16 + $0xc4] sm:$0xf]
    %v358 = vld [vmem:[#allocation16 + $0xc8] sm:$0xf]
    %v359 = vld [vmem:[#allocation16 + $0xcc] sm:$0xf]
    %v360 = vld [vmem:[#allocation16 + $0xd0] sm:$0xf]
    %v361 = vld [vmem:[#allocation16 + $0xd4] sm:$0xf]
    %v362 = vld [vmem:[#allocation16 + $0xd8] sm:$0xf]
    %v363 = vld [vmem:[#allocation16 + $0xdc] sm:$0xf]
    %v364 = vld [vmem:[#allocation16 + $0xe0] sm:$0xf]
    %v365 = vld [vmem:[#allocation16 + $0xe4] sm:$0xf]
    %v366 = vld [vmem:[#allocation16 + $0xe8] sm:$0xf]
    %v367 = vld [vmem:[#allocation16 + $0xec] sm:$0xf]
    %v368 = vld [vmem:[#allocation16 + $0xf0] sm:$0xf]
    %v369 = vld [vmem:[#allocation16 + $0xf4] sm:$0xf]
    %v370 = vld [vmem:[#allocation16 + $0xf8] sm:$0xf]
    %v371 = vld [vmem:[#allocation16 + $0xfc] sm:$0xf]
    %v372 = vld [vmem:[#allocation16 + $0x100] sm:$0xf]
    %v373 = vld [vmem:[#allocation16 + $0x104] sm:$0xf]
    %v374 = vld [vmem:[#allocation16 + $0x108] sm:$0xf]
    %v375 = vld [vmem:[#allocation16 + $0x10c] sm:$0xf]
    %v376 = vld [vmem:[#allocation16 + $0x110] sm:$0xf]
    %v377 = vld [vmem:[#allocation16 + $0x114] sm:$0xf]
    %v378 = vld [vmem:[#allocation16 + $0x118] sm:$0xf]
    %v379 = vld [vmem:[#allocation16 + $0x11c] sm:$0xf]
    %v380 = vld [vmem:[#allocation16 + $0x120] sm:$0xf]
    %v381 = vld [vmem:[#allocation16 + $0x124] sm:$0xf]
    %v382 = vld [vmem:[#allocation16 + $0x128] sm:$0xf]
    %v383 = vld [vmem:[#allocation16 + $0x12c] sm:$0xf]
    %v384 = vld [vmem:[#allocation16 + $0x130] sm:$0xf]
    %v385 = vld [vmem:[#allocation16 + $0x134] sm:$0xf]
    %v386 = vld [vmem:[#allocation16 + $0x138] sm:$0xf]
    %v387 = vld [vmem:[#allocation16 + $0x13c] sm:$0xf]
    %v388 = vld [vmem:[#allocation18] sm:$0x1]
    %v390 = vlaneseq
    %v391 = vshrl.u32 %v390, 7
    %v392 = vsub.s32 0, %v391
    %v393 = vrot.slane %v388, %v392
    %v467 = vunpack.c.l.b16 %v236
    %v468 = vunpack.c.h.b16 %v236
    %v469 = vunpack.c.l.b16 %v237
    %v470 = vunpack.c.h.b16 %v237
    %v471 = vunpack.c.l.b16 %v238
    %v472 = vunpack.c.l.b16 %v239
    %v473 = vunpack.c.h.b16 %v239
    %v474 = vunpack.c.l.b16 %v240
    %v475 = vunpack.c.h.b16 %v240
    %v476 = vunpack.c.l.b16 %v241
    %v477 = vunpack.c.l.b16 %v242
    %v478 = vunpack.c.h.b16 %v242
    %v479 = vunpack.c.l.b16 %v243
    %v480 = vunpack.c.h.b16 %v243
    %v481 = vunpack.c.l.b16 %v244
    %v482 = vunpack.c.l.b16 %v245
    %v483 = vunpack.c.h.b16 %v245
    %v484 = vunpack.c.l.b16 %v246
    %v485 = vunpack.c.h.b16 %v246
    %v486 = vunpack.c.l.b16 %v247
    %v487 = vunpack.c.l.b16 %v248
    %v488 = vunpack.c.h.b16 %v248
    %v489 = vunpack.c.l.b16 %v249
    %v490 = vunpack.c.h.b16 %v249
    %v491 = vunpack.c.l.b16 %v250
    %v492 = vunpack.c.l.b16 %v251
    %v493 = vunpack.c.h.b16 %v251
    %v494 = vunpack.c.l.b16 %v252
    %v495 = vunpack.c.h.b16 %v252
    %v496 = vunpack.c.l.b16 %v253
    %v497 = vunpack.c.l.b16 %v254
    %v498 = vunpack.c.h.b16 %v254
    %v499 = vunpack.c.l.b16 %v255
    %v500 = vunpack.c.h.b16 %v255
    %v501 = vunpack.c.l.b16 %v256
    %v502 = vunpack.c.l.b16 %v257
    %v503 = vunpack.c.h.b16 %v257
    %v504 = vunpack.c.l.b16 %v258
    %v505 = vunpack.c.h.b16 %v258
    %v506 = vunpack.c.l.b16 %v259
    %v507 = vunpack.c.l.b16 %v260
    %v508 = vunpack.c.h.b16 %v260
    %v509 = vunpack.c.l.b16 %v261
    %v510 = vunpack.c.h.b16 %v261
    %v511 = vunpack.c.l.b16 %v262
    %v512 = vunpack.c.l.b16 %v263
    %v513 = vunpack.c.h.b16 %v263
    %v514 = vunpack.c.l.b16 %v264
    %v515 = vunpack.c.h.b16 %v264
    %v516 = vunpack.c.l.b16 %v265
    %v517 = vunpack.c.l.b16 %v266
    %v518 = vunpack.c.h.b16 %v266
    %v519 = vunpack.c.l.b16 %v267
    %v520 = vunpack.c.h.b16 %v267
    %v521 = vunpack.c.l.b16 %v268
    %v522 = vunpack.c.l.b16 %v269
    %v523 = vunpack.c.h.b16 %v269
    %v524 = vunpack.c.l.b16 %v270
    %v525 = vunpack.c.h.b16 %v270
    %v526 = vunpack.c.l.b16 %v271
    %v527 = vunpack.c.l.b16 %v272
    %v528 = vunpack.c.h.b16 %v272
    %v529 = vunpack.c.l.b16 %v273
    %v530 = vunpack.c.h.b16 %v273
    %v531 = vunpack.c.l.b16 %v274
    %v532 = vunpack.c.l.b16 %v275
    %v533 = vunpack.c.h.b16 %v275
    %v534 = vunpack.c.l.b16 %v276
    %v535 = vunpack.c.h.b16 %v276
    %v536 = vunpack.c.l.b16 %v277
    %v537 = vunpack.c.l.b16 %v278
    %v538 = vunpack.c.h.b16 %v278
    %v539 = vunpack.c.l.b16 %v279
    %v540 = vunpack.c.h.b16 %v279
    %v541 = vunpack.c.l.b16 %v280
    %v542 = vunpack.c.l.b16 %v281
    %v543 = vunpack.c.h.b16 %v281
    %v544 = vunpack.c.l.b16 %v282
    %v545 = vunpack.c.h.b16 %v282
    %v546 = vunpack.c.l.b16 %v283
    %v547 = vunpack.c.l.b16 %v284
    %v548 = vunpack.c.h.b16 %v284
    %v549 = vunpack.c.l.b16 %v285
    %v550 = vunpack.c.h.b16 %v285
    %v551 = vunpack.c.l.b16 %v286
    %v552 = vunpack.c.l.b16 %v287
    %v553 = vunpack.c.h.b16 %v287
    %v554 = vunpack.c.l.b16 %v288
    %v555 = vunpack.c.h.b16 %v288
    %v556 = vunpack.c.l.b16 %v289
    %v557 = vunpack.c.l.b16 %v290
    %v558 = vunpack.c.h.b16 %v290
    %v559 = vunpack.c.l.b16 %v291
    %v560 = vunpack.c.h.b16 %v291
    %v561 = vunpack.c.l.b16 %v292
    %v562 = vunpack.c.l.b16 %v293
    %v563 = vunpack.c.h.b16 %v293
    %v564 = vunpack.c.l.b16 %v294
    %v565 = vunpack.c.h.b16 %v294
    %v566 = vunpack.c.l.b16 %v295
    %v567 = vunpack.c.l.b16 %v296
    %v568 = vunpack.c.h.b16 %v296
    %v569 = vunpack.c.l.b16 %v297
    %v570 = vunpack.c.h.b16 %v297
    %v571 = vunpack.c.l.b16 %v298
    %v572 = vunpack.c.l.b16 %v299
    %v573 = vunpack.c.h.b16 %v299
    %v574 = vunpack.c.l.b16 %v300
    %v575 = vunpack.c.h.b16 %v300
    %v576 = vunpack.c.l.b16 %v301
    %v577 = vunpack.c.l.b16 %v302
    %v578 = vunpack.c.h.b16 %v302
    %v579 = vunpack.c.l.b16 %v303
    %v580 = vunpack.c.h.b16 %v303
    %v581 = vunpack.c.l.b16 %v304
    %v582 = vunpack.c.l.b16 %v305
    %v583 = vunpack.c.h.b16 %v305
    %v584 = vunpack.c.l.b16 %v306
    %v585 = vunpack.c.h.b16 %v306
    %v586 = vunpack.c.l.b16 %v307
    %v587 = vpack.c.b16 %v472, %v467
    %v588 = vpack.c.b16 %v473, %v468
    %v589 = vpack.c.b16 %v474, %v469
    %v590 = vpack.c.b16 %v475, %v470
    %v591 = vpack.c.b16 %v476, %v471
    %v592 = vpack.c.b16 %v482, %v477
    %v593 = vpack.c.b16 %v483, %v478
    %v594 = vpack.c.b16 %v484, %v479
    %v595 = vpack.c.b16 %v485, %v480
    %v596 = vpack.c.b16 %v486, %v481
    %v597 = vpack.c.b16 %v492, %v487
    %v598 = vpack.c.b16 %v493, %v488
    %v599 = vpack.c.b16 %v494, %v489
    %v600 = vpack.c.b16 %v495, %v490
    %v601 = vpack.c.b16 %v496, %v491
    %v602 = vpack.c.b16 %v502, %v497
    %v603 = vpack.c.b16 %v503, %v498
    %v604 = vpack.c.b16 %v504, %v499
    %v605 = vpack.c.b16 %v505, %v500
    %v606 = vpack.c.b16 %v506, %v501
    %v607 = vpack.c.b16 %v512, %v507
    %v608 = vpack.c.b16 %v513, %v508
    %v609 = vpack.c.b16 %v514, %v509
    %v610 = vpack.c.b16 %v515, %v510
    %v611 = vpack.c.b16 %v516, %v511
    %v612 = vpack.c.b16 %v522, %v517
    %v613 = vpack.c.b16 %v523, %v518
    %v614 = vpack.c.b16 %v524, %v519
    %v615 = vpack.c.b16 %v525, %v520
    %v616 = vpack.c.b16 %v526, %v521
    %v617 = vpack.c.b16 %v532, %v527
    %v618 = vpack.c.b16 %v533, %v528
    %v619 = vpack.c.b16 %v534, %v529
    %v620 = vpack.c.b16 %v535, %v530
    %v621 = vpack.c.b16 %v536, %v531
    %v622 = vpack.c.b16 %v542, %v537
    %v623 = vpack.c.b16 %v543, %v538
    %v624 = vpack.c.b16 %v544, %v539
    %v625 = vpack.c.b16 %v545, %v540
    %v626 = vpack.c.b16 %v546, %v541
    %v627 = vpack.c.b16 %v552, %v547
    %v628 = vpack.c.b16 %v553, %v548
    %v629 = vpack.c.b16 %v554, %v549
    %v630 = vpack.c.b16 %v555, %v550
    %v631 = vpack.c.b16 %v556, %v551
    %v632 = vpack.c.b16 %v562, %v557
    %v633 = vpack.c.b16 %v563, %v558
    %v634 = vpack.c.b16 %v564, %v559
    %v635 = vpack.c.b16 %v565, %v560
    %v636 = vpack.c.b16 %v566, %v561
    %v637 = vpack.c.b16 %v572, %v567
    %v638 = vpack.c.b16 %v573, %v568
    %v639 = vpack.c.b16 %v574, %v569
    %v640 = vpack.c.b16 %v575, %v570
    %v641 = vpack.c.b16 %v576, %v571
    %v642 = vpack.c.b16 %v582, %v577
    %v643 = vpack.c.b16 %v583, %v578
    %v644 = vpack.c.b16 %v584, %v579
    %v645 = vpack.c.b16 %v585, %v580
    %v646 = vpack.c.b16 %v586, %v581
    %v787 = vunpack.c.l.b16 %v308
    %v788 = vunpack.c.l.b16 %v309
    %v789 = vunpack.c.l.b16 %v310
    %v790 = vunpack.c.l.b16 %v311
    %v791 = vunpack.c.l.b16 %v312
    %v792 = vunpack.c.l.b16 %v313
    %v793 = vunpack.c.l.b16 %v314
    %v794 = vunpack.c.l.b16 %v315
    %v795 = vunpack.c.l.b16 %v316
    %v796 = vunpack.c.l.b16 %v317
    %v797 = vunpack.c.l.b16 %v318
    %v798 = vunpack.c.l.b16 %v319
    %v799 = vunpack.c.l.b16 %v320
    %v800 = vunpack.c.l.b16 %v321
    %v801 = vunpack.c.l.b16 %v322
    %v802 = vunpack.c.l.b16 %v323
    %v803 = vunpack.c.l.b16 %v324
    %v804 = vunpack.c.l.b16 %v325
    %v805 = vunpack.c.l.b16 %v326
    %v806 = vunpack.c.l.b16 %v327
    %v807 = vunpack.c.l.b16 %v328
    %v808 = vunpack.c.l.b16 %v329
    %v809 = vunpack.c.l.b16 %v330
    %v810 = vunpack.c.l.b16 %v331
    %v811 = vunpack.c.l.b16 %v332
    %v812 = vunpack.c.l.b16 %v333
    %v813 = vunpack.c.l.b16 %v334
    %v814 = vunpack.c.l.b16 %v335
    %v815 = vunpack.c.l.b16 %v336
    %v816 = vunpack.c.l.b16 %v337
    %v817 = vunpack.c.l.b16 %v338
    %v818 = vunpack.c.l.b16 %v339
    %v819 = vunpack.c.l.b16 %v340
    %v820 = vunpack.c.l.b16 %v341
    %v821 = vunpack.c.l.b16 %v342
    %v822 = vunpack.c.l.b16 %v343
    %v823 = vunpack.c.l.b16 %v344
    %v824 = vunpack.c.l.b16 %v345
    %v825 = vunpack.c.l.b16 %v346
    %v826 = vunpack.c.l.b16 %v347
    %v827 = vunpack.c.l.b16 %v348
    %v828 = vunpack.c.l.b16 %v349
    %v829 = vunpack.c.l.b16 %v350
    %v830 = vunpack.c.l.b16 %v351
    %v831 = vunpack.c.l.b16 %v352
    %v832 = vunpack.c.l.b16 %v353
    %v833 = vunpack.c.l.b16 %v354
    %v834 = vunpack.c.l.b16 %v355
    %v835 = vunpack.c.l.b16 %v356
    %v836 = vunpack.c.l.b16 %v357
    %v837 = vunpack.c.l.b16 %v358
    %v838 = vunpack.c.l.b16 %v359
    %v839 = vunpack.c.l.b16 %v360
    %v840 = vunpack.c.l.b16 %v361
    %v841 = vunpack.c.l.b16 %v362
    %v842 = vunpack.c.l.b16 %v363
    %v843 = vunpack.c.l.b16 %v364
    %v844 = vunpack.c.l.b16 %v365
    %v845 = vunpack.c.l.b16 %v366
    %v846 = vunpack.c.l.b16 %v367
    %v847 = vunpack.c.l.b16 %v368
    %v848 = vunpack.c.l.b16 %v369
    %v849 = vunpack.c.l.b16 %v370
    %v850 = vunpack.c.l.b16 %v371
    %v851 = vunpack.c.l.b16 %v372
    %v852 = vunpack.c.l.b16 %v373
    %v853 = vunpack.c.l.b16 %v374
    %v854 = vunpack.c.l.b16 %v375
    %v855 = vunpack.c.l.b16 %v376
    %v856 = vunpack.c.l.b16 %v377
    %v857 = vunpack.c.l.b16 %v378
    %v858 = vunpack.c.l.b16 %v379
    %v859 = vunpack.c.l.b16 %v380
    %v860 = vunpack.c.l.b16 %v381
    %v861 = vunpack.c.l.b16 %v382
    %v862 = vunpack.c.l.b16 %v383
    %v863 = vunpack.c.l.b16 %v384
    %v864 = vunpack.c.l.b16 %v385
    %v865 = vunpack.c.l.b16 %v386
    %v866 = vunpack.c.l.b16 %v387
    %v867 = vpack.c.b16 %v788, %v787
    %v868 = vpack.c.b16 %v790, %v789
    %v869 = vpack.c.b16 %v792, %v791
    %v870 = vpack.c.b16 %v794, %v793
    %v871 = vpack.c.b16 %v796, %v795
    %v872 = vpack.c.b16 %v798, %v797
    %v873 = vpack.c.b16 %v800, %v799
    %v874 = vpack.c.b16 %v802, %v801
    %v875 = vpack.c.b16 %v804, %v803
    %v876 = vpack.c.b16 %v806, %v805
    %v877 = vpack.c.b16 %v808, %v807
    %v878 = vpack.c.b16 %v810, %v809
    %v879 = vpack.c.b16 %v812, %v811
    %v880 = vpack.c.b16 %v814, %v813
    %v881 = vpack.c.b16 %v816, %v815
    %v882 = vpack.c.b16 %v818, %v817
    %v883 = vpack.c.b16 %v820, %v819
    %v884 = vpack.c.b16 %v822, %v821
    %v885 = vpack.c.b16 %v824, %v823
    %v886 = vpack.c.b16 %v826, %v825
    %v887 = vpack.c.b16 %v828, %v827
    %v888 = vpack.c.b16 %v830, %v829
    %v889 = vpack.c.b16 %v832, %v831
    %v890 = vpack.c.b16 %v834, %v833
    %v891 = vpack.c.b16 %v836, %v835
    %v892 = vpack.c.b16 %v838, %v837
    %v893 = vpack.c.b16 %v840, %v839
    %v894 = vpack.c.b16 %v842, %v841
    %v895 = vpack.c.b16 %v844, %v843
    %v896 = vpack.c.b16 %v846, %v845
    %v897 = vpack.c.b16 %v848, %v847
    %v898 = vpack.c.b16 %v850, %v849
    %v899 = vpack.c.b16 %v852, %v851
    %v900 = vpack.c.b16 %v854, %v853
    %v901 = vpack.c.b16 %v856, %v855
    %v902 = vpack.c.b16 %v858, %v857
    %v903 = vpack.c.b16 %v860, %v859
    %v904 = vpack.c.b16 %v862, %v861
    %v905 = vpack.c.b16 %v864, %v863
    %v906 = vpack.c.b16 %v866, %v865
    %947 = vmatprep.subr.bf16.mxu0 0
    %948 = vmatpush1.bf16.msra.mxu0 %v874
    %949 = vmatprep.subr.bf16.mxu0 0
    %950 = vmatpush1.bf16.msra.mxu0 %v873
    %951 = vmatprep.subr.bf16.mxu0 0
    %952 = vmatpush1.bf16.msra.mxu0 %v872
    %953 = vmatprep.subr.bf16.mxu0 0
    %954 = vmatpush1.bf16.msra.mxu0 %v871
    %955 = vmatprep.subr.bf16.mxu0 0
    %956 = vmatpush1.bf16.msra.mxu0 %v870
    %957 = vmatprep.subr.bf16.mxu0 0
    %958 = vmatpush1.bf16.msra.mxu0 %v869
    %959 = vmatprep.subr.bf16.mxu0 0
    %960 = vmatpush1.bf16.msra.mxu0 %v868
    %961 = vmatprep.subr.bf16.mxu0 0
    %962 = vmatpush1.bf16.msra.mxu0 %v867
    %963 = vmatprep.subr.bf16.mxu0 0
    %964 = vmatpush2.bf16.msra.mxu0 %v882
    %965 = vmatprep.subr.bf16.mxu0 0
    %966 = vmatpush2.bf16.msra.mxu0 %v881
    %967 = vmatprep.subr.bf16.mxu0 0
    %968 = vmatpush2.bf16.msra.mxu0 %v880
    %969 = vmatprep.subr.bf16.mxu0 0
    %970 = vmatpush2.bf16.msra.mxu0 %v879
    %971 = vmatprep.subr.bf16.mxu0 0
    %972 = vmatpush2.bf16.msra.mxu0 %v878
    %973 = vmatprep.subr.bf16.mxu0 0
    %974 = vmatpush2.bf16.msra.mxu0 %v877
    %975 = vmatprep.subr.bf16.mxu0 0
    %976 = vmatpush2.bf16.msra.mxu0 %v876
    %977 = vmatprep.subr.bf16.mxu0 0
    %978 = vmatpush2.bf16.msra.mxu0 %v875
    %979 = vmatprep.mubr.bf16.mxu0 %v588
    %980 = vmatmul.mubr.bf16.gmra.mxu0 %v587
    %v981 = vpop.f32.mrf.mxu0
    %v982 = vadd.f32 %v393, %v981
    %v983 = vpop.f32.mrf.mxu0
    %v984 = vpop.f32.mrf.mxu0
    %v985 = vadd.f32 %v393, %v984
    %v986 = vpop.f32.mrf.mxu0
    %987 = vmatprep.mubr.bf16.mxu0 %v593
    %988 = vmatmul.mubr.bf16.gmra.mxu0 %v592
    %v989 = vpop.f32.mrf.mxu0
    %v990 = vadd.f32 %v393, %v989
    %v991 = vpop.f32.mrf.mxu0
    %v992 = vpop.f32.mrf.mxu0
    %v993 = vadd.f32 %v393, %v992
    %v994 = vpop.f32.mrf.mxu0
    %995 = vmatprep.mubr.bf16.mxu0 %v598
    %996 = vmatmul.mubr.bf16.gmra.mxu0 %v597
    %v997 = vpop.f32.mrf.mxu0
    %v998 = vadd.f32 %v393, %v997
    %v999 = vpop.f32.mrf.mxu0
    %v1000 = vpop.f32.mrf.mxu0
    %v1001 = vadd.f32 %v393, %v1000
    %v1002 = vpop.f32.mrf.mxu0
    %1003 = vmatprep.mubr.bf16.mxu0 %v603
    %1004 = vmatmul.mubr.bf16.gmra.mxu0 %v602
    %v1005 = vpop.f32.mrf.mxu0
    %v1006 = vadd.f32 %v393, %v1005
    %v1007 = vpop.f32.mrf.mxu0
    %v1008 = vpop.f32.mrf.mxu0
    %v1009 = vadd.f32 %v393, %v1008
    %v1010 = vpop.f32.mrf.mxu0
    %1011 = vmatprep.mubr.bf16.mxu0 %v608
    %1012 = vmatmul.mubr.bf16.gmra.mxu0 %v607
    %v1013 = vpop.f32.mrf.mxu0
    %v1014 = vadd.f32 %v393, %v1013
    %v1015 = vpop.f32.mrf.mxu0
    %v1016 = vpop.f32.mrf.mxu0
    %v1017 = vadd.f32 %v393, %v1016
    %v1018 = vpop.f32.mrf.mxu0
    %1019 = vmatprep.mubr.bf16.mxu0 %v613
    %1020 = vmatmul.mubr.bf16.gmra.mxu0 %v612
    %v1021 = vpop.f32.mrf.mxu0
    %v1022 = vadd.f32 %v393, %v1021
    %v1023 = vpop.f32.mrf.mxu0
    %v1024 = vpop.f32.mrf.mxu0
    %v1025 = vadd.f32 %v393, %v1024
    %v1026 = vpop.f32.mrf.mxu0
    %1027 = vmatprep.mubr.bf16.mxu0 %v618
    %1028 = vmatmul.mubr.bf16.gmra.mxu0 %v617
    %v1029 = vpop.f32.mrf.mxu0
    %v1030 = vadd.f32 %v393, %v1029
    %v1031 = vpop.f32.mrf.mxu0
    %v1032 = vpop.f32.mrf.mxu0
    %v1033 = vadd.f32 %v393, %v1032
    %v1034 = vpop.f32.mrf.mxu0
    %1035 = vmatprep.mubr.bf16.mxu0 %v623
    %1036 = vmatmul.mubr.bf16.gmra.mxu0 %v622
    %v1037 = vpop.f32.mrf.mxu0
    %v1038 = vadd.f32 %v393, %v1037
    %v1039 = vpop.f32.mrf.mxu0
    %v1040 = vpop.f32.mrf.mxu0
    %v1041 = vadd.f32 %v393, %v1040
    %v1042 = vpop.f32.mrf.mxu0
    %1043 = vmatprep.mubr.bf16.mxu0 %v628
    %1044 = vmatmul.mubr.bf16.gmra.mxu0 %v627
    %v1045 = vpop.f32.mrf.mxu0
    %v1046 = vadd.f32 %v393, %v1045
    %v1047 = vpop.f32.mrf.mxu0
    %v1048 = vpop.f32.mrf.mxu0
    %v1049 = vadd.f32 %v393, %v1048
    %v1050 = vpop.f32.mrf.mxu0
    %1051 = vmatprep.mubr.bf16.mxu0 %v633
    %1052 = vmatmul.mubr.bf16.gmra.mxu0 %v632
    %v1053 = vpop.f32.mrf.mxu0
    %v1054 = vadd.f32 %v393, %v1053
    %v1055 = vpop.f32.mrf.mxu0
    %v1056 = vpop.f32.mrf.mxu0
    %v1057 = vadd.f32 %v393, %v1056
    %v1058 = vpop.f32.mrf.mxu0
    %1059 = vmatprep.mubr.bf16.mxu0 %v638
    %1060 = vmatmul.mubr.bf16.gmra.mxu0 %v637
    %v1061 = vpop.f32.mrf.mxu0
    %v1062 = vadd.f32 %v393, %v1061
    %v1063 = vpop.f32.mrf.mxu0
    %v1064 = vpop.f32.mrf.mxu0
    %v1065 = vadd.f32 %v393, %v1064
    %v1066 = vpop.f32.mrf.mxu0
    %1067 = vmatprep.mubr.bf16.mxu0 %v643
    %1068 = vmatmul.mubr.bf16.gmra.mxu0 %v642
    %v1069 = vpop.f32.mrf.mxu0
    %v1070 = vadd.f32 %v393, %v1069
    %v1071 = vpop.f32.mrf.mxu0
    %v1072 = vpop.f32.mrf.mxu0
    %v1073 = vadd.f32 %v393, %v1072
    %v1074 = vpop.f32.mrf.mxu0
    %1075 = vdwg.mxu0
    %1076 = vmatprep.subr.bf16.mxu0 0
    %1077 = vmatpush1.bf16.msra.mxu0 %v890
    %1078 = vmatprep.subr.bf16.mxu0 0
    %1079 = vmatpush1.bf16.msra.mxu0 %v889
    %1080 = vmatprep.subr.bf16.mxu0 0
    %1081 = vmatpush1.bf16.msra.mxu0 %v888
    %1082 = vmatprep.subr.bf16.mxu0 0
    %1083 = vmatpush1.bf16.msra.mxu0 %v887
    %1084 = vmatprep.subr.bf16.mxu0 0
    %1085 = vmatpush1.bf16.msra.mxu0 %v886
    %1086 = vmatprep.subr.bf16.mxu0 0
    %1087 = vmatpush1.bf16.msra.mxu0 %v885
    %1088 = vmatprep.subr.bf16.mxu0 0
    %1089 = vmatpush1.bf16.msra.mxu0 %v884
    %1090 = vmatprep.subr.bf16.mxu0 0
    %1091 = vmatpush1.bf16.msra.mxu0 %v883
    %1092 = vmatprep.subr.bf16.mxu0 0
    %1093 = vmatpush2.bf16.msra.mxu0 %v898
    %1094 = vmatprep.subr.bf16.mxu0 0
    %1095 = vmatpush2.bf16.msra.mxu0 %v897
    %1096 = vmatprep.subr.bf16.mxu0 0
    %1097 = vmatpush2.bf16.msra.mxu0 %v896
    %1098 = vmatprep.subr.bf16.mxu0 0
    %1099 = vmatpush2.bf16.msra.mxu0 %v895
    %1100 = vmatprep.subr.bf16.mxu0 0
    %1101 = vmatpush2.bf16.msra.mxu0 %v894
    %1102 = vmatprep.subr.bf16.mxu0 0
    %1103 = vmatpush2.bf16.msra.mxu0 %v893
    %1104 = vmatprep.subr.bf16.mxu0 0
    %1105 = vmatpush2.bf16.msra.mxu0 %v892
    %1106 = vmatprep.subr.bf16.mxu0 0
    %1107 = vmatpush2.bf16.msra.mxu0 %v891
    %1108 = vmatprep.mubr.bf16.mxu0 %v590
    %1109 = vmatmul.mubr.bf16.gmra.mxu0 %v589
    %v1110 = vpop.f32.mrf.mxu0
    %v1111 = vadd.f32 %v982, %v1110
    %v1112 = vpop.f32.mrf.mxu0
    %v1113 = vpop.f32.mrf.mxu0
    %v1114 = vadd.f32 %v985, %v1113
    %v1115 = vpop.f32.mrf.mxu0
    %1116 = vmatprep.mubr.bf16.mxu0 %v595
    %1117 = vmatmul.mubr.bf16.gmra.mxu0 %v594
    %v1118 = vpop.f32.mrf.mxu0
    %v1119 = vadd.f32 %v990, %v1118
    %v1120 = vpop.f32.mrf.mxu0
    %v1121 = vpop.f32.mrf.mxu0
    %v1122 = vadd.f32 %v993, %v1121
    %v1123 = vpop.f32.mrf.mxu0
    %1124 = vmatprep.mubr.bf16.mxu0 %v600
    %1125 = vmatmul.mubr.bf16.gmra.mxu0 %v599
    %v1126 = vpop.f32.mrf.mxu0
    %v1127 = vadd.f32 %v998, %v1126
    %v1128 = vpop.f32.mrf.mxu0
    %v1129 = vpop.f32.mrf.mxu0
    %v1130 = vadd.f32 %v1001, %v1129
    %v1131 = vpop.f32.mrf.mxu0
    %1132 = vmatprep.mubr.bf16.mxu0 %v605
    %1133 = vmatmul.mubr.bf16.gmra.mxu0 %v604
    %v1134 = vpop.f32.mrf.mxu0
    %v1135 = vadd.f32 %v1006, %v1134
    %v1136 = vpop.f32.mrf.mxu0
    %v1137 = vpop.f32.mrf.mxu0
    %v1138 = vadd.f32 %v1009, %v1137
    %v1139 = vpop.f32.mrf.mxu0
    %1140 = vmatprep.mubr.bf16.mxu0 %v610
    %1141 = vmatmul.mubr.bf16.gmra.mxu0 %v609
    %v1142 = vpop.f32.mrf.mxu0
    %v1143 = vadd.f32 %v1014, %v1142
    %v1144 = vpop.f32.mrf.mxu0
    %v1145 = vpop.f32.mrf.mxu0
    %v1146 = vadd.f32 %v1017, %v1145
    %v1147 = vpop.f32.mrf.mxu0
    %1148 = vmatprep.mubr.bf16.mxu0 %v615
    %1149 = vmatmul.mubr.bf16.gmra.mxu0 %v614
    %v1150 = vpop.f32.mrf.mxu0
    %v1151 = vadd.f32 %v1022, %v1150
    %v1152 = vpop.f32.mrf.mxu0
    %v1153 = vpop.f32.mrf.mxu0
    %v1154 = vadd.f32 %v1025, %v1153
    %v1155 = vpop.f32.mrf.mxu0
    %1156 = vmatprep.mubr.bf16.mxu0 %v620
    %1157 = vmatmul.mubr.bf16.gmra.mxu0 %v619
    %v1158 = vpop.f32.mrf.mxu0
    %v1159 = vadd.f32 %v1030, %v1158
    %v1160 = vpop.f32.mrf.mxu0
    %v1161 = vpop.f32.mrf.mxu0
    %v1162 = vadd.f32 %v1033, %v1161
    %v1163 = vpop.f32.mrf.mxu0
    %1164 = vmatprep.mubr.bf16.mxu0 %v625
    %1165 = vmatmul.mubr.bf16.gmra.mxu0 %v624
    %v1166 = vpop.f32.mrf.mxu0
    %v1167 = vadd.f32 %v1038, %v1166
    %v1168 = vpop.f32.mrf.mxu0
    %v1169 = vpop.f32.mrf.mxu0
    %v1170 = vadd.f32 %v1041, %v1169
    %v1171 = vpop.f32.mrf.mxu0
    %1172 = vmatprep.mubr.bf16.mxu0 %v630
    %1173 = vmatmul.mubr.bf16.gmra.mxu0 %v629
    %v1174 = vpop.f32.mrf.mxu0
    %v1175 = vadd.f32 %v1046, %v1174
    %v1176 = vpop.f32.mrf.mxu0
    %v1177 = vpop.f32.mrf.mxu0
    %v1178 = vadd.f32 %v1049, %v1177
    %v1179 = vpop.f32.mrf.mxu0
    %1180 = vmatprep.mubr.bf16.mxu0 %v635
    %1181 = vmatmul.mubr.bf16.gmra.mxu0 %v634
    %v1182 = vpop.f32.mrf.mxu0
    %v1183 = vadd.f32 %v1054, %v1182
    %v1184 = vpop.f32.mrf.mxu0
    %v1185 = vpop.f32.mrf.mxu0
    %v1186 = vadd.f32 %v1057, %v1185
    %v1187 = vpop.f32.mrf.mxu0
    %1188 = vmatprep.mubr.bf16.mxu0 %v640
    %1189 = vmatmul.mubr.bf16.gmra.mxu0 %v639
    %v1190 = vpop.f32.mrf.mxu0
    %v1191 = vadd.f32 %v1062, %v1190
    %v1192 = vpop.f32.mrf.mxu0
    %v1193 = vpop.f32.mrf.mxu0
    %v1194 = vadd.f32 %v1065, %v1193
    %v1195 = vpop.f32.mrf.mxu0
    %1196 = vmatprep.mubr.bf16.mxu0 %v645
    %1197 = vmatmul.mubr.bf16.gmra.mxu0 %v644
    %v1198 = vpop.f32.mrf.mxu0
    %v1199 = vadd.f32 %v1070, %v1198
    %v1200 = vpop.f32.mrf.mxu0
    %v1201 = vpop.f32.mrf.mxu0
    %v1202 = vadd.f32 %v1073, %v1201
    %v1203 = vpop.f32.mrf.mxu0
    %1204 = vdwg.mxu0
    %1205 = vmatprep.subr.bf16.mxu0 0
    %1206 = vmatpush1.bf16.msra.mxu0 %v906
    %1207 = vmatprep.subr.bf16.mxu0 0
    %1208 = vmatpush1.bf16.msra.mxu0 %v905
    %1209 = vmatprep.subr.bf16.mxu0 0
    %1210 = vmatpush1.bf16.msra.mxu0 %v904
    %1211 = vmatprep.subr.bf16.mxu0 0
    %1212 = vmatpush1.bf16.msra.mxu0 %v903
    %1213 = vmatprep.subr.bf16.mxu0 0
    %1214 = vmatpush1.bf16.msra.mxu0 %v902
    %1215 = vmatprep.subr.bf16.mxu0 0
    %1216 = vmatpush1.bf16.msra.mxu0 %v901
    %1217 = vmatprep.subr.bf16.mxu0 0
    %1218 = vmatpush1.bf16.msra.mxu0 %v900
    %1219 = vmatprep.subr.bf16.mxu0 0
    %1220 = vmatpush1.bf16.msra.mxu0 %v899
    %1221 = vmatprep.subr.bf16.mxu0 0
    %1222 = vmatpush2.bf16.msra.mxu0 0
    %1223 = vmatprep.subr.bf16.mxu0 0
    %1224 = vmatpush2.bf16.msra.mxu0 0
    %1225 = vmatprep.subr.bf16.mxu0 0
    %1226 = vmatpush2.bf16.msra.mxu0 0
    %1227 = vmatprep.subr.bf16.mxu0 0
    %1228 = vmatpush2.bf16.msra.mxu0 0
    %1229 = vmatprep.subr.bf16.mxu0 0
    %1230 = vmatpush2.bf16.msra.mxu0 0
    %1231 = vmatprep.subr.bf16.mxu0 0
    %1232 = vmatpush2.bf16.msra.mxu0 0
    %1233 = vmatprep.subr.bf16.mxu0 0
    %1234 = vmatpush2.bf16.msra.mxu0 0
    %1235 = vmatprep.subr.bf16.mxu0 0
    %1236 = vmatpush2.bf16.msra.mxu0 0
    %1237 = vmatprep.mubr.bf16.mxu0 0
    %1238 = vmatmul.mubr.bf16.gmra.mxu0 %v591
    %v1239 = vpop.f32.mrf.mxu0
    %v1240 = vadd.f32 %v1111, %v1239
    %v1241 = vpop.f32.mrf.mxu0
    %v1242 = vpop.f32.mrf.mxu0
    %v1243 = vadd.f32 %v1114, %v1242
    %v1244 = vpop.f32.mrf.mxu0
    %1245 = vmatprep.mubr.bf16.mxu0 0
    %1246 = vmatmul.mubr.bf16.gmra.mxu0 %v596
    %v1247 = vpop.f32.mrf.mxu0
    %v1248 = vadd.f32 %v1119, %v1247
    %v1249 = vpop.f32.mrf.mxu0
    %v1250 = vpop.f32.mrf.mxu0
    %v1251 = vadd.f32 %v1122, %v1250
    %v1252 = vpop.f32.mrf.mxu0
    %1253 = vmatprep.mubr.bf16.mxu0 0
    %1254 = vmatmul.mubr.bf16.gmra.mxu0 %v601
    %v1255 = vpop.f32.mrf.mxu0
    %v1256 = vadd.f32 %v1127, %v1255
    %v1257 = vpop.f32.mrf.mxu0
    %v1258 = vpop.f32.mrf.mxu0
    %v1259 = vadd.f32 %v1130, %v1258
    %v1260 = vpop.f32.mrf.mxu0
    %1261 = vmatprep.mubr.bf16.mxu0 0
    %1262 = vmatmul.mubr.bf16.gmra.mxu0 %v606
    %v1263 = vpop.f32.mrf.mxu0
    %v1264 = vadd.f32 %v1135, %v1263
    %v1265 = vpop.f32.mrf.mxu0
    %v1266 = vpop.f32.mrf.mxu0
    %v1267 = vadd.f32 %v1138, %v1266
    %v1268 = vpop.f32.mrf.mxu0
    %1269 = vmatprep.mubr.bf16.mxu0 0
    %1270 = vmatmul.mubr.bf16.gmra.mxu0 %v611
    %v1271 = vpop.f32.mrf.mxu0
    %v1272 = vadd.f32 %v1143, %v1271
    %v1273 = vpop.f32.mrf.mxu0
    %v1274 = vpop.f32.mrf.mxu0
    %v1275 = vadd.f32 %v1146, %v1274
    %v1276 = vpop.f32.mrf.mxu0
    %1277 = vmatprep.mubr.bf16.mxu0 0
    %1278 = vmatmul.mubr.bf16.gmra.mxu0 %v616
    %v1279 = vpop.f32.mrf.mxu0
    %v1280 = vadd.f32 %v1151, %v1279
    %v1281 = vpop.f32.mrf.mxu0
    %v1282 = vpop.f32.mrf.mxu0
    %v1283 = vadd.f32 %v1154, %v1282
    %v1284 = vpop.f32.mrf.mxu0
    %1285 = vmatprep.mubr.bf16.mxu0 0
    %1286 = vmatmul.mubr.bf16.gmra.mxu0 %v621
    %v1287 = vpop.f32.mrf.mxu0
    %v1288 = vadd.f32 %v1159, %v1287
    %v1289 = vpop.f32.mrf.mxu0
    %v1290 = vpop.f32.mrf.mxu0
    %v1291 = vadd.f32 %v1162, %v1290
    %v1292 = vpop.f32.mrf.mxu0
    %1293 = vmatprep.mubr.bf16.mxu0 0
    %1294 = vmatmul.mubr.bf16.gmra.mxu0 %v626
    %v1295 = vpop.f32.mrf.mxu0
    %v1296 = vadd.f32 %v1167, %v1295
    %v1297 = vpop.f32.mrf.mxu0
    %v1298 = vpop.f32.mrf.mxu0
    %v1299 = vadd.f32 %v1170, %v1298
    %v1300 = vpop.f32.mrf.mxu0
    %1301 = vmatprep.mubr.bf16.mxu0 0
    %1302 = vmatmul.mubr.bf16.gmra.mxu0 %v631
    %v1303 = vpop.f32.mrf.mxu0
    %v1304 = vadd.f32 %v1175, %v1303
    %v1305 = vpop.f32.mrf.mxu0
    %v1306 = vpop.f32.mrf.mxu0
    %v1307 = vadd.f32 %v1178, %v1306
    %v1308 = vpop.f32.mrf.mxu0
    %1309 = vmatprep.mubr.bf16.mxu0 0
    %1310 = vmatmul.mubr.bf16.gmra.mxu0 %v636
    %v1311 = vpop.f32.mrf.mxu0
    %v1312 = vadd.f32 %v1183, %v1311
    %v1313 = vpop.f32.mrf.mxu0
    %v1314 = vpop.f32.mrf.mxu0
    %v1315 = vadd.f32 %v1186, %v1314
    %v1316 = vpop.f32.mrf.mxu0
    %1317 = vmatprep.mubr.bf16.mxu0 0
    %1318 = vmatmul.mubr.bf16.gmra.mxu0 %v641
    %v1319 = vpop.f32.mrf.mxu0
    %v1320 = vadd.f32 %v1191, %v1319
    %v1321 = vpop.f32.mrf.mxu0
    %v1322 = vpop.f32.mrf.mxu0
    %v1323 = vadd.f32 %v1194, %v1322
    %v1324 = vpop.f32.mrf.mxu0
    %1325 = vmatprep.mubr.bf16.mxu0 0
    %1326 = vmatmul.mubr.bf16.gmra.mxu0 %v646
    %v1327 = vpop.f32.mrf.mxu0
    %v1328 = vadd.f32 %v1199, %v1327
    %v1329 = vpop.f32.mrf.mxu0
    %v1330 = vpop.f32.mrf.mxu0
    %v1331 = vadd.f32 %v1202, %v1330
    %v1332 = vpop.f32.mrf.mxu0
    %1333 = vdwg.mxu0
    %v1334 = vmax.f32 %v1240, 0.0
    %v1335 = vmax.f32 %v1243, 0.0
    %v1336 = vmax.f32 %v1248, 0.0
    %v1337 = vmax.f32 %v1251, 0.0
    %v1338 = vmax.f32 %v1256, 0.0
    %v1339 = vmax.f32 %v1259, 0.0
    %v1340 = vmax.f32 %v1264, 0.0
    %v1341 = vmax.f32 %v1267, 0.0
    %v1342 = vmax.f32 %v1272, 0.0
    %v1343 = vmax.f32 %v1275, 0.0
    %v1344 = vmax.f32 %v1280, 0.0
    %v1345 = vmax.f32 %v1283, 0.0
    %v1346 = vmax.f32 %v1288, 0.0
    %v1347 = vmax.f32 %v1291, 0.0
    %v1348 = vmax.f32 %v1296, 0.0
    %v1349 = vmax.f32 %v1299, 0.0
    %v1350 = vmax.f32 %v1304, 0.0
    %v1351 = vmax.f32 %v1307, 0.0
    %v1352 = vmax.f32 %v1312, 0.0
    %v1353 = vmax.f32 %v1315, 0.0
    %v1354 = vmax.f32 %v1320, 0.0
    %v1355 = vmax.f32 %v1323, 0.0
    %v1356 = vmax.f32 %v1328, 0.0
    %v1357 = vmax.f32 %v1331, 0.0
    %v1358 = vrot.slane %v1334, 4
    %v1359 = vmax.f32 %v1334, %v1358
    %v1360 = vrot.slane %v1359, 2
    %v1361 = vmax.f32 %v1359, %v1360
    %v1362 = vrot.slane %v1361, 1
    %v1363 = vmax.f32 %v1361, %v1362
    %v1364 = vrot.slane %v1335, 4
    %v1365 = vmax.f32 %v1335, %v1364
    %v1366 = vrot.slane %v1365, 2
    %v1367 = vmax.f32 %v1365, %v1366
    %v1368 = vrot.slane %v1367, 1
    %v1369 = vmax.f32 %v1367, %v1368
    %v1370 = vrot.slane %v1336, 4
    %v1371 = vmax.f32 %v1336, %v1370
    %v1372 = vrot.slane %v1371, 2
    %v1373 = vmax.f32 %v1371, %v1372
    %v1374 = vrot.slane %v1373, 1
    %v1375 = vmax.f32 %v1373, %v1374
    %v1376 = vrot.slane %v1337, 4
    %v1377 = vmax.f32 %v1337, %v1376
    %v1378 = vrot.slane %v1377, 2
    %v1379 = vmax.f32 %v1377, %v1378
    %v1380 = vrot.slane %v1379, 1
    %v1381 = vmax.f32 %v1379, %v1380
    %v1382 = vrot.slane %v1338, 4
    %v1383 = vmax.f32 %v1338, %v1382
    %v1384 = vrot.slane %v1383, 2
    %v1385 = vmax.f32 %v1383, %v1384
    %v1386 = vrot.slane %v1385, 1
    %v1387 = vmax.f32 %v1385, %v1386
    %v1388 = vrot.slane %v1339, 4
    %v1389 = vmax.f32 %v1339, %v1388
    %v1390 = vrot.slane %v1389, 2
    %v1391 = vmax.f32 %v1389, %v1390
    %v1392 = vrot.slane %v1391, 1
    %v1393 = vmax.f32 %v1391, %v1392
    %v1394 = vrot.slane %v1340, 4
    %v1395 = vmax.f32 %v1340, %v1394
    %v1396 = vrot.slane %v1395, 2
    %v1397 = vmax.f32 %v1395, %v1396
    %v1398 = vrot.slane %v1397, 1
    %v1399 = vmax.f32 %v1397, %v1398
    %v1400 = vrot.slane %v1341, 4
    %v1401 = vmax.f32 %v1341, %v1400
    %v1402 = vrot.slane %v1401, 2
    %v1403 = vmax.f32 %v1401, %v1402
    %v1404 = vrot.slane %v1403, 1
    %v1405 = vmax.f32 %v1403, %v1404
    %v1406 = vrot.slane %v1342, 4
    %v1407 = vmax.f32 %v1342, %v1406
    %v1408 = vrot.slane %v1407, 2
    %v1409 = vmax.f32 %v1407, %v1408
    %v1410 = vrot.slane %v1409, 1
    %v1411 = vmax.f32 %v1409, %v1410
    %v1412 = vrot.slane %v1343, 4
    %v1413 = vmax.f32 %v1343, %v1412
    %v1414 = vrot.slane %v1413, 2
    %v1415 = vmax.f32 %v1413, %v1414
    %v1416 = vrot.slane %v1415, 1
    %v1417 = vmax.f32 %v1415, %v1416
    %v1418 = vrot.slane %v1344, 4
    %v1419 = vmax.f32 %v1344, %v1418
    %v1420 = vrot.slane %v1419, 2
    %v1421 = vmax.f32 %v1419, %v1420
    %v1422 = vrot.slane %v1421, 1
    %v1423 = vmax.f32 %v1421, %v1422
    %v1424 = vrot.slane %v1345, 4
    %v1425 = vmax.f32 %v1345, %v1424
    %v1426 = vrot.slane %v1425, 2
    %v1427 = vmax.f32 %v1425, %v1426
    %v1428 = vrot.slane %v1427, 1
    %v1429 = vmax.f32 %v1427, %v1428
    %v1430 = vrot.slane %v1346, 4
    %v1431 = vmax.f32 %v1346, %v1430
    %v1432 = vrot.slane %v1431, 2
    %v1433 = vmax.f32 %v1431, %v1432
    %v1434 = vrot.slane %v1433, 1
    %v1435 = vmax.f32 %v1433, %v1434
    %v1436 = vrot.slane %v1347, 4
    %v1437 = vmax.f32 %v1347, %v1436
    %v1438 = vrot.slane %v1437, 2
    %v1439 = vmax.f32 %v1437, %v1438
    %v1440 = vrot.slane %v1439, 1
    %v1441 = vmax.f32 %v1439, %v1440
    %v1442 = vrot.slane %v1348, 4
    %v1443 = vmax.f32 %v1348, %v1442
    %v1444 = vrot.slane %v1443, 2
    %v1445 = vmax.f32 %v1443, %v1444
    %v1446 = vrot.slane %v1445, 1
    %v1447 = vmax.f32 %v1445, %v1446
    %v1448 = vrot.slane %v1349, 4
    %v1449 = vmax.f32 %v1349, %v1448
    %v1450 = vrot.slane %v1449, 2
    %v1451 = vmax.f32 %v1449, %v1450
    %v1452 = vrot.slane %v1451, 1
    %v1453 = vmax.f32 %v1451, %v1452
    %v1454 = vrot.slane %v1350, 4
    %v1455 = vmax.f32 %v1350, %v1454
    %v1456 = vrot.slane %v1455, 2
    %v1457 = vmax.f32 %v1455, %v1456
    %v1458 = vrot.slane %v1457, 1
    %v1459 = vmax.f32 %v1457, %v1458
    %v1460 = vrot.slane %v1351, 4
    %v1461 = vmax.f32 %v1351, %v1460
    %v1462 = vrot.slane %v1461, 2
    %v1463 = vmax.f32 %v1461, %v1462
    %v1464 = vrot.slane %v1463, 1
    %v1465 = vmax.f32 %v1463, %v1464
    %v1466 = vrot.slane %v1352, 4
    %v1467 = vmax.f32 %v1352, %v1466
    %v1468 = vrot.slane %v1467, 2
    %v1469 = vmax.f32 %v1467, %v1468
    %v1470 = vrot.slane %v1469, 1
    %v1471 = vmax.f32 %v1469, %v1470
    %v1472 = vrot.slane %v1353, 4
    %v1473 = vmax.f32 %v1353, %v1472
    %v1474 = vrot.slane %v1473, 2
    %v1475 = vmax.f32 %v1473, %v1474
    %v1476 = vrot.slane %v1475, 1
    %v1477 = vmax.f32 %v1475, %v1476
    %v1478 = vrot.slane %v1354, 4
    %v1479 = vmax.f32 %v1354, %v1478
    %v1480 = vrot.slane %v1479, 2
    %v1481 = vmax.f32 %v1479, %v1480
    %v1482 = vrot.slane %v1481, 1
    %v1483 = vmax.f32 %v1481, %v1482
    %v1484 = vrot.slane %v1355, 4
    %v1485 = vmax.f32 %v1355, %v1484
    %v1486 = vrot.slane %v1485, 2
    %v1487 = vmax.f32 %v1485, %v1486
    %v1488 = vrot.slane %v1487, 1
    %v1489 = vmax.f32 %v1487, %v1488
    %v1490 = vrot.slane %v1356, 4
    %v1491 = vmax.f32 %v1356, %v1490
    %v1492 = vrot.slane %v1491, 2
    %v1493 = vmax.f32 %v1491, %v1492
    %v1494 = vrot.slane %v1493, 1
    %v1495 = vmax.f32 %v1493, %v1494
    %v1496 = vrot.slane %v1357, 4
    %v1497 = vmax.f32 %v1357, %v1496
    %v1498 = vrot.slane %v1497, 2
    %v1499 = vmax.f32 %v1497, %v1498
    %v1500 = vrot.slane %v1499, 1
    %v1501 = vmax.f32 %v1499, %v1500
    %v1502 = vld [vmem:[%s3] sm:$0xff]
    %v1503 = vld [vmem:[%s3 + $0x8] sm:$0xff]
    %v1504 = vlaneseq
    %v1505 = vshrl.u32 %v1504, 7
    %v1506 = vsub.s32 0, %v1505
    %v1507 = vrot.slane %v1502, %v1506
    %1509 = vbcast.lane.b32.xlu0 %v1507, 256
    %v1510 = vpop.permute.xlu0 %1509
    %v1511 = vlaneseq
    %v1512 = vshrl.u32 %v1511, 7
    %v1513 = vsub.s32 1, %v1512
    %v1514 = vrot.slane %v1502, %v1513
    %1516 = vbcast.lane.b32.xlu0 %v1514, 256
    %v1517 = vpop.permute.xlu0 %1516
    %v1518 = vlaneseq
    %v1519 = vshrl.u32 %v1518, 7
    %v1520 = vsub.s32 2, %v1519
    %v1521 = vrot.slane %v1502, %v1520
    %1523 = vbcast.lane.b32.xlu0 %v1521, 256
    %v1524 = vpop.permute.xlu0 %1523
    %v1525 = vlaneseq
    %v1526 = vshrl.u32 %v1525, 7
    %v1527 = vsub.s32 3, %v1526
    %v1528 = vrot.slane %v1502, %v1527
    %1530 = vbcast.lane.b32.xlu0 %v1528, 256
    %v1531 = vpop.permute.xlu0 %1530
    %v1532 = vlaneseq
    %v1533 = vshrl.u32 %v1532, 7
    %v1534 = vsub.s32 4, %v1533
    %v1535 = vrot.slane %v1502, %v1534
    %1537 = vbcast.lane.b32.xlu0 %v1535, 256
    %v1538 = vpop.permute.xlu0 %1537
    %v1539 = vlaneseq
    %v1540 = vshrl.u32 %v1539, 7
    %v1541 = vsub.s32 5, %v1540
    %v1542 = vrot.slane %v1502, %v1541
    %1544 = vbcast.lane.b32.xlu0 %v1542, 256
    %v1545 = vpop.permute.xlu0 %1544
    %v1546 = vlaneseq
    %v1547 = vshrl.u32 %v1546, 7
    %v1548 = vsub.s32 6, %v1547
    %v1549 = vrot.slane %v1502, %v1548
    %1551 = vbcast.lane.b32.xlu0 %v1549, 256
    %v1552 = vpop.permute.xlu0 %1551
    %v1553 = vlaneseq
    %v1554 = vshrl.u32 %v1553, 7
    %v1555 = vsub.s32 7, %v1554
    %v1556 = vrot.slane %v1502, %v1555
    %1558 = vbcast.lane.b32.xlu0 %v1556, 256
    %v1559 = vpop.permute.xlu0 %1558
    %v1560 = vlaneseq
    %v1561 = vshrl.u32 %v1560, 7
    %v1562 = vsub.s32 0, %v1561
    %v1563 = vrot.slane %v1503, %v1562
    %1565 = vbcast.lane.b32.xlu0 %v1563, 256
    %v1566 = vpop.permute.xlu0 %1565
    %v1567 = vlaneseq
    %v1568 = vshrl.u32 %v1567, 7
    %v1569 = vsub.s32 1, %v1568
    %v1570 = vrot.slane %v1503, %v1569
    %1572 = vbcast.lane.b32.xlu0 %v1570, 256
    %v1573 = vpop.permute.xlu0 %1572
    %v1574 = vlaneseq
    %v1575 = vshrl.u32 %v1574, 7
    %v1576 = vsub.s32 2, %v1575
    %v1577 = vrot.slane %v1503, %v1576
    %1579 = vbcast.lane.b32.xlu0 %v1577, 256
    %v1580 = vpop.permute.xlu0 %1579
    %v1581 = vlaneseq
    %v1582 = vshrl.u32 %v1581, 7
    %v1583 = vsub.s32 3, %v1582
    %v1584 = vrot.slane %v1503, %v1583
    %1586 = vbcast.lane.b32.xlu0 %v1584, 256
    %v1587 = vpop.permute.xlu0 %1586
    %v1588 = vlaneseq
    %v1589 = vshrl.u32 %v1588, 7
    %v1590 = vsub.s32 4, %v1589
    %v1591 = vrot.slane %v1503, %v1590
    %1593 = vbcast.lane.b32.xlu0 %v1591, 256
    %v1594 = vpop.permute.xlu0 %1593
    %v1595 = vlaneseq
    %v1596 = vshrl.u32 %v1595, 7
    %v1597 = vsub.s32 5, %v1596
    %v1598 = vrot.slane %v1503, %v1597
    %1600 = vbcast.lane.b32.xlu0 %v1598, 256
    %v1601 = vpop.permute.xlu0 %1600
    %v1602 = vlaneseq
    %v1603 = vshrl.u32 %v1602, 7
    %v1604 = vsub.s32 6, %v1603
    %v1605 = vrot.slane %v1503, %v1604
    %1607 = vbcast.lane.b32.xlu0 %v1605, 256
    %v1608 = vpop.permute.xlu0 %1607
    %v1609 = vlaneseq
    %v1610 = vshrl.u32 %v1609, 7
    %v1611 = vsub.s32 7, %v1610
    %v1612 = vrot.slane %v1503, %v1611
    %1614 = vbcast.lane.b32.xlu0 %v1612, 256
    %v1615 = vpop.permute.xlu0 %1614
    %v1616 = vmul.f32 %v1510, %v1334
    %v1617 = vmul.f32 %v1517, %v1335
    %v1618 = vmul.f32 %v1524, %v1336
    %v1619 = vmul.f32 %v1531, %v1337
    %v1620 = vmul.f32 %v1538, %v1338
    %v1621 = vmul.f32 %v1545, %v1339
    %v1622 = vmul.f32 %v1552, %v1340
    %v1623 = vmul.f32 %v1559, %v1341
    %v1624 = vmul.f32 %v1566, %v1342
    %v1625 = vmul.f32 %v1573, %v1343
    %v1626 = vmul.f32 %v1580, %v1344
    %v1627 = vmul.f32 %v1587, %v1345
    %v1628 = vmul.f32 %v1594, %v1346
    %v1629 = vmul.f32 %v1601, %v1347
    %v1630 = vmul.f32 %v1608, %v1348
    %v1631 = vmul.f32 %v1615, %v1349
    %v1632 = vrot.slane %v1616, 4
    %v1633 = vadd.f32 %v1616, %v1632
    %v1634 = vrot.slane %v1633, 2
    %v1635 = vadd.f32 %v1633, %v1634
    %v1636 = vrot.slane %v1635, 1
    %v1637 = vadd.f32 %v1635, %v1636
    %v1638 = vrot.slane %v1617, 4
    %v1639 = vadd.f32 %v1617, %v1638
    %v1640 = vrot.slane %v1639, 2
    %v1641 = vadd.f32 %v1639, %v1640
    %v1642 = vrot.slane %v1641, 1
    %v1643 = vadd.f32 %v1641, %v1642
    %v1644 = vrot.slane %v1618, 4
    %v1645 = vadd.f32 %v1618, %v1644
    %v1646 = vrot.slane %v1645, 2
    %v1647 = vadd.f32 %v1645, %v1646
    %v1648 = vrot.slane %v1647, 1
    %v1649 = vadd.f32 %v1647, %v1648
    %v1650 = vrot.slane %v1619, 4
    %v1651 = vadd.f32 %v1619, %v1650
    %v1652 = vrot.slane %v1651, 2
    %v1653 = vadd.f32 %v1651, %v1652
    %v1654 = vrot.slane %v1653, 1
    %v1655 = vadd.f32 %v1653, %v1654
    %v1656 = vrot.slane %v1620, 4
    %v1657 = vadd.f32 %v1620, %v1656
    %v1658 = vrot.slane %v1657, 2
    %v1659 = vadd.f32 %v1657, %v1658
    %v1660 = vrot.slane %v1659, 1
    %v1661 = vadd.f32 %v1659, %v1660
    %v1662 = vrot.slane %v1621, 4
    %v1663 = vadd.f32 %v1621, %v1662
    %v1664 = vrot.slane %v1663, 2
    %v1665 = vadd.f32 %v1663, %v1664
    %v1666 = vrot.slane %v1665, 1
    %v1667 = vadd.f32 %v1665, %v1666
    %v1668 = vrot.slane %v1622, 4
    %v1669 = vadd.f32 %v1622, %v1668
    %v1670 = vrot.slane %v1669, 2
    %v1671 = vadd.f32 %v1669, %v1670
    %v1672 = vrot.slane %v1671, 1
    %v1673 = vadd.f32 %v1671, %v1672
    %v1674 = vrot.slane %v1623, 4
    %v1675 = vadd.f32 %v1623, %v1674
    %v1676 = vrot.slane %v1675, 2
    %v1677 = vadd.f32 %v1675, %v1676
    %v1678 = vrot.slane %v1677, 1
    %v1679 = vadd.f32 %v1677, %v1678
    %v1680 = vrot.slane %v1624, 4
    %v1681 = vadd.f32 %v1624, %v1680
    %v1682 = vrot.slane %v1681, 2
    %v1683 = vadd.f32 %v1681, %v1682
    %v1684 = vrot.slane %v1683, 1
    %v1685 = vadd.f32 %v1683, %v1684
    %v1686 = vrot.slane %v1625, 4
    %v1687 = vadd.f32 %v1625, %v1686
    %v1688 = vrot.slane %v1687, 2
    %v1689 = vadd.f32 %v1687, %v1688
    %v1690 = vrot.slane %v1689, 1
    %v1691 = vadd.f32 %v1689, %v1690
    %v1692 = vrot.slane %v1626, 4
    %v1693 = vadd.f32 %v1626, %v1692
    %v1694 = vrot.slane %v1693, 2
    %v1695 = vadd.f32 %v1693, %v1694
    %v1696 = vrot.slane %v1695, 1
    %v1697 = vadd.f32 %v1695, %v1696
    %v1698 = vrot.slane %v1627, 4
    %v1699 = vadd.f32 %v1627, %v1698
    %v1700 = vrot.slane %v1699, 2
    %v1701 = vadd.f32 %v1699, %v1700
    %v1702 = vrot.slane %v1701, 1
    %v1703 = vadd.f32 %v1701, %v1702
    %v1704 = vrot.slane %v1628, 4
    %v1705 = vadd.f32 %v1628, %v1704
    %v1706 = vrot.slane %v1705, 2
    %v1707 = vadd.f32 %v1705, %v1706
    %v1708 = vrot.slane %v1707, 1
    %v1709 = vadd.f32 %v1707, %v1708
    %v1710 = vrot.slane %v1629, 4
    %v1711 = vadd.f32 %v1629, %v1710
    %v1712 = vrot.slane %v1711, 2
    %v1713 = vadd.f32 %v1711, %v1712
    %v1714 = vrot.slane %v1713, 1
    %v1715 = vadd.f32 %v1713, %v1714
    %v1716 = vrot.slane %v1630, 4
    %v1717 = vadd.f32 %v1630, %v1716
    %v1718 = vrot.slane %v1717, 2
    %v1719 = vadd.f32 %v1717, %v1718
    %v1720 = vrot.slane %v1719, 1
    %v1721 = vadd.f32 %v1719, %v1720
    %v1722 = vrot.slane %v1631, 4
    %v1723 = vadd.f32 %v1631, %v1722
    %v1724 = vrot.slane %v1723, 2
    %v1725 = vadd.f32 %v1723, %v1724
    %v1726 = vrot.slane %v1725, 1
    %v1727 = vadd.f32 %v1725, %v1726
    %vm1744 = vcmask 1041409
    %v1745 = vsel %vm1744, %v1369, %v1363
    %vm1746 = vcmask 1042434
    %v1747 = vsel %vm1746, %v1375, %v1745
    %vm1748 = vcmask 1043459
    %v1749 = vsel %vm1748, %v1381, %v1747
    %vm1750 = vcmask 1044484
    %v1751 = vsel %vm1750, %v1387, %v1749
    %vm1752 = vcmask 1045509
    %v1753 = vsel %vm1752, %v1393, %v1751
    %vm1754 = vcmask 1046534
    %v1755 = vsel %vm1754, %v1399, %v1753
    %vm1756 = vcmask 1047559
    %v1757 = vsel %vm1756, %v1405, %v1755
    %v1758 = vsel %vm1744, %v1417, %v1411
    %v1759 = vsel %vm1746, %v1423, %v1758
    %v1760 = vsel %vm1748, %v1429, %v1759
    %v1761 = vsel %vm1750, %v1435, %v1760
    %v1762 = vsel %vm1752, %v1441, %v1761
    %v1763 = vsel %vm1754, %v1447, %v1762
    %v1764 = vsel %vm1756, %v1453, %v1763
    %v1783 = vsel %vm1744, %v1643, %v1637
    %v1784 = vsel %vm1746, %v1649, %v1783
    %v1785 = vsel %vm1748, %v1655, %v1784
    %v1786 = vsel %vm1750, %v1661, %v1785
    %v1787 = vsel %vm1752, %v1667, %v1786
    %v1788 = vsel %vm1754, %v1673, %v1787
    %v1789 = vsel %vm1756, %v1679, %v1788
    %v1790 = vsel %vm1744, %v1691, %v1685
    %v1791 = vsel %vm1746, %v1697, %v1790
    %v1792 = vsel %vm1748, %v1703, %v1791
    %v1793 = vsel %vm1750, %v1709, %v1792
    %v1794 = vsel %vm1752, %v1715, %v1793
    %v1795 = vsel %vm1754, %v1721, %v1794
    %v1796 = vsel %vm1756, %v1727, %v1795
    %v1799 = vld [vmem:[#allocation7] sm:$0xff]
    %v1800 = vld [vmem:[#allocation7 + $0x8] sm:$0xff]
    %v1801 = vld [vmem:[#allocation7 + $0x10] sm:$0xff]
    %v1802 = vpack.c.bf16 %v1757, 0.0
    %v1803 = vpack.c.bf16 %v1789, 0.0
    %v1804 = vpack.c.bf16 %v1800, %v1799
    %v1805 = vpack.c.bf16 %v1764, %v1764
    %v1806 = vpack.c.bf16 %v1796, %v1796
    %v1807 = vpack.c.bf16 %v1801, %v1801
    %v1808 = vld [vmem:[#allocation10] sm:$0xff]
    %v1809 = vld [vmem:[#allocation10 + $0x8] sm:$0xff]
    %v1810 = vld [vmem:[#allocation10 + $0x10] sm:$0xff]
    %v1811 = vld [vmem:[#allocation10 + $0x18] sm:$0xff]
    %v1812 = vld [vmem:[#allocation10 + $0x20] sm:$0xff]
    %v1813 = vld [vmem:[#allocation10 + $0x28] sm:$0xff]
    %v1814 = vld [vmem:[#allocation10 + $0x30] sm:$0xff]
    %v1815 = vld [vmem:[#allocation10 + $0x38] sm:$0xff]
    %v1816 = vld [vmem:[#allocation10 + $0x40] sm:$0xff]
    %v1817 = vld [vmem:[#allocation10 + $0x48] sm:$0xff]
    %v1818 = vld [vmem:[#allocation10 + $0x50] sm:$0xff]
    %v1819 = vld [vmem:[#allocation10 + $0x58] sm:$0xff]
    %v1820 = vld [vmem:[#allocation10 + $0x60] sm:$0xff]
    %v1821 = vld [vmem:[#allocation10 + $0x68] sm:$0xff]
    %v1822 = vld [vmem:[#allocation10 + $0x70] sm:$0xff]
    %v1823 = vld [vmem:[#allocation10 + $0x78] sm:$0xff]
    %v1824 = vld [vmem:[#allocation10 + $0x80] sm:$0xff]
    %v1825 = vld [vmem:[#allocation10 + $0x88] sm:$0xff]
    %v1826 = vld [vmem:[#allocation10 + $0x90] sm:$0xff]
    %v1827 = vld [vmem:[#allocation10 + $0x98] sm:$0xff]
    %v1828 = vld [vmem:[#allocation10 + $0xa0] sm:$0xff]
    %v1829 = vld [vmem:[#allocation10 + $0xa8] sm:$0xff]
    %v1830 = vld [vmem:[#allocation10 + $0xb0] sm:$0xff]
    %v1831 = vld [vmem:[#allocation10 + $0xb8] sm:$0xff]
    %v1832 = vld [vmem:[#allocation10 + $0xc0] sm:$0xff]
    %v1833 = vld [vmem:[#allocation10 + $0xc8] sm:$0xff]
    %v1834 = vld [vmem:[#allocation10 + $0xd0] sm:$0xff]
    %v1835 = vld [vmem:[#allocation10 + $0xd8] sm:$0xff]
    %v1836 = vld [vmem:[#allocation10 + $0xe0] sm:$0xff]
    %v1837 = vld [vmem:[#allocation10 + $0xe8] sm:$0xff]
    %v1838 = vld [vmem:[#allocation10 + $0xf0] sm:$0xff]
    %v1839 = vld [vmem:[#allocation10 + $0xf8] sm:$0xff]
    %v1840 = vld [vmem:[#allocation10 + $0x100] sm:$0xff]
    %v1841 = vld [vmem:[#allocation10 + $0x108] sm:$0xff]
    %v1842 = vld [vmem:[#allocation10 + $0x110] sm:$0xff]
    %v1843 = vld [vmem:[#allocation10 + $0x118] sm:$0xff]
    %v1844 = vld [vmem:[#allocation10 + $0x120] sm:$0xff]
    %v1845 = vld [vmem:[#allocation10 + $0x128] sm:$0xff]
    %v1846 = vld [vmem:[#allocation10 + $0x130] sm:$0xff]
    %v1847 = vld [vmem:[#allocation10 + $0x138] sm:$0xff]
    %v1848 = vld [vmem:[#allocation10 + $0x140] sm:$0xff]
    %v1849 = vld [vmem:[#allocation10 + $0x148] sm:$0xff]
    %v1850 = vld [vmem:[#allocation10 + $0x150] sm:$0xff]
    %v1851 = vld [vmem:[#allocation10 + $0x158] sm:$0xff]
    %v1852 = vld [vmem:[#allocation10 + $0x160] sm:$0xff]
    %v1853 = vld [vmem:[#allocation10 + $0x168] sm:$0xff]
    %v1854 = vld [vmem:[#allocation10 + $0x170] sm:$0xff]
    %v1855 = vld [vmem:[#allocation10 + $0x178] sm:$0xff]
    %v1856 = vld [vmem:[#allocation10 + $0x180] sm:$0xff]
    %v1857 = vld [vmem:[#allocation10 + $0x188] sm:$0xff]
    %v1858 = vld [vmem:[#allocation10 + $0x190] sm:$0xff]
    %v1859 = vld [vmem:[#allocation10 + $0x198] sm:$0xff]
    %v1860 = vld [vmem:[#allocation10 + $0x1a0] sm:$0xff]
    %v1861 = vld [vmem:[#allocation10 + $0x1a8] sm:$0xff]
    %v1862 = vld [vmem:[#allocation10 + $0x1b0] sm:$0xff]
    %v1863 = vld [vmem:[#allocation10 + $0x1b8] sm:$0xff]
    %v1864 = vld [vmem:[#allocation10 + $0x1c0] sm:$0xff]
    %v1865 = vld [vmem:[#allocation10 + $0x1c8] sm:$0xff]
    %v1866 = vld [vmem:[#allocation10 + $0x1d0] sm:$0xff]
    %v1867 = vld [vmem:[#allocation10 + $0x1d8] sm:$0xff]
    %v1868 = vld [vmem:[#allocation10 + $0x1e0] sm:$0xff]
    %v1869 = vld [vmem:[#allocation10 + $0x1e8] sm:$0xff]
    %v1870 = vld [vmem:[#allocation10 + $0x1f0] sm:$0xff]
    %v1871 = vld [vmem:[#allocation10 + $0x1f8] sm:$0xff]
    %v1872 = vld [vmem:[#allocation10 + $0x200] sm:$0xff]
    %v1873 = vld [vmem:[#allocation10 + $0x208] sm:$0xff]
    %v1874 = vld [vmem:[#allocation10 + $0x210] sm:$0xff]
    %v1875 = vld [vmem:[#allocation10 + $0x218] sm:$0xff]
    %v1876 = vld [vmem:[#allocation10 + $0x220] sm:$0xff]
    %v1877 = vld [vmem:[#allocation10 + $0x228] sm:$0xff]
    %v1878 = vld [vmem:[#allocation10 + $0x230] sm:$0xff]
    %v1879 = vld [vmem:[#allocation10 + $0x238] sm:$0xff]
    %v1880 = vld [vmem:[#allocation10 + $0x240] sm:$0xff]
    %v1881 = vld [vmem:[#allocation10 + $0x248] sm:$0xff]
    %v1882 = vld [vmem:[#allocation10 + $0x250] sm:$0xff]
    %v1883 = vld [vmem:[#allocation10 + $0x258] sm:$0xff]
    %v1884 = vld [vmem:[#allocation10 + $0x260] sm:$0xff]
    %v1885 = vld [vmem:[#allocation10 + $0x268] sm:$0xff]
    %v1886 = vld [vmem:[#allocation10 + $0x270] sm:$0xff]
    %v1887 = vld [vmem:[#allocation10 + $0x278] sm:$0xff]
    %v1888 = vld [vmem:[#allocation10 + $0x280] sm:$0xff]
    %v1889 = vld [vmem:[#allocation10 + $0x288] sm:$0xff]
    %v1890 = vld [vmem:[#allocation10 + $0x290] sm:$0xff]
    %v1891 = vld [vmem:[#allocation10 + $0x298] sm:$0xff]
    %v1892 = vld [vmem:[#allocation10 + $0x2a0] sm:$0xff]
    %v1893 = vld [vmem:[#allocation10 + $0x2a8] sm:$0xff]
    %v1894 = vld [vmem:[#allocation10 + $0x2b0] sm:$0xff]
    %v1895 = vld [vmem:[#allocation10 + $0x2b8] sm:$0xff]
    %v1896 = vld [vmem:[#allocation10 + $0x2c0] sm:$0xff]
    %v1897 = vld [vmem:[#allocation10 + $0x2c8] sm:$0xff]
    %v1898 = vld [vmem:[#allocation10 + $0x2d0] sm:$0xff]
    %v1899 = vld [vmem:[#allocation10 + $0x2d8] sm:$0xff]
    %v1900 = vld [vmem:[#allocation10 + $0x2e0] sm:$0xff]
    %v1901 = vld [vmem:[#allocation10 + $0x2e8] sm:$0xff]
    %v1902 = vld [vmem:[#allocation10 + $0x2f0] sm:$0xff]
    %v1903 = vld [vmem:[#allocation10 + $0x2f8] sm:$0xff]
    %v1904 = vld [vmem:[#allocation10 + $0x300] sm:$0xff]
    %v1905 = vld [vmem:[#allocation10 + $0x308] sm:$0xff]
    %v1906 = vld [vmem:[#allocation10 + $0x310] sm:$0xff]
    %v1907 = vld [vmem:[#allocation10 + $0x318] sm:$0xff]
    %v1908 = vld [vmem:[#allocation10 + $0x320] sm:$0xff]
    %v1909 = vld [vmem:[#allocation10 + $0x328] sm:$0xff]
    %v1910 = vld [vmem:[#allocation10 + $0x330] sm:$0xff]
    %v1911 = vld [vmem:[#allocation10 + $0x338] sm:$0xff]
    %v1912 = vld [vmem:[#allocation10 + $0x340] sm:$0xff]
    %v1913 = vld [vmem:[#allocation10 + $0x348] sm:$0xff]
    %v1914 = vld [vmem:[#allocation10 + $0x350] sm:$0xff]
    %v1915 = vld [vmem:[#allocation10 + $0x358] sm:$0xff]
    %v1916 = vld [vmem:[#allocation10 + $0x360] sm:$0xff]
    %v1917 = vld [vmem:[#allocation10 + $0x368] sm:$0xff]
    %v1918 = vld [vmem:[#allocation10 + $0x370] sm:$0xff]
    %v1919 = vld [vmem:[#allocation10 + $0x378] sm:$0xff]
    %v1920 = vld [vmem:[#allocation10 + $0x380] sm:$0xff]
    %v1921 = vld [vmem:[#allocation10 + $0x388] sm:$0xff]
    %v1922 = vld [vmem:[#allocation10 + $0x390] sm:$0xff]
    %v1923 = vld [vmem:[#allocation10 + $0x398] sm:$0xff]
    %v1924 = vld [vmem:[#allocation10 + $0x3a0] sm:$0xff]
    %v1925 = vld [vmem:[#allocation10 + $0x3a8] sm:$0xff]
    %v1926 = vld [vmem:[#allocation10 + $0x3b0] sm:$0xff]
    %v1927 = vld [vmem:[#allocation10 + $0x3b8] sm:$0xff]
    %v1928 = vld [vmem:[#allocation10 + $0x3c0] sm:$0xff]
    %v1929 = vld [vmem:[#allocation10 + $0x3c8] sm:$0xff]
    %v1930 = vld [vmem:[#allocation10 + $0x3d0] sm:$0xff]
    %v1931 = vld [vmem:[#allocation10 + $0x3d8] sm:$0xff]
    %v1932 = vld [vmem:[#allocation10 + $0x3e0] sm:$0xff]
    %v1933 = vld [vmem:[#allocation10 + $0x3e8] sm:$0xff]
    %v1934 = vld [vmem:[#allocation10 + $0x3f0] sm:$0xff]
    %v1935 = vld [vmem:[#allocation10 + $0x3f8] sm:$0xff]
    %v1936 = vld [vmem:[#allocation10 + $0x400] sm:$0xff]
    %v1937 = vld [vmem:[#allocation10 + $0x408] sm:$0xff]
    %v1938 = vld [vmem:[#allocation10 + $0x410] sm:$0xff]
    %v1939 = vld [vmem:[#allocation10 + $0x418] sm:$0xff]
    %v1940 = vld [vmem:[#allocation10 + $0x420] sm:$0xff]
    %v1941 = vld [vmem:[#allocation10 + $0x428] sm:$0xff]
    %v1942 = vld [vmem:[#allocation10 + $0x430] sm:$0xff]
    %v1943 = vld [vmem:[#allocation10 + $0x438] sm:$0xff]
    %v1944 = vld [vmem:[#allocation10 + $0x440] sm:$0xff]
    %v1945 = vld [vmem:[#allocation10 + $0x448] sm:$0xff]
    %v1946 = vld [vmem:[#allocation10 + $0x450] sm:$0xff]
    %v1947 = vld [vmem:[#allocation10 + $0x458] sm:$0xff]
    %v1948 = vld [vmem:[#allocation10 + $0x460] sm:$0xff]
    %v1949 = vld [vmem:[#allocation10 + $0x468] sm:$0xff]
    %v1950 = vld [vmem:[#allocation10 + $0x470] sm:$0xff]
    %v1951 = vld [vmem:[#allocation10 + $0x478] sm:$0xff]
    %v1952 = vld [vmem:[#allocation10 + $0x480] sm:$0xff]
    %v1953 = vld [vmem:[#allocation10 + $0x488] sm:$0xff]
    %v1954 = vld [vmem:[#allocation10 + $0x490] sm:$0xff]
    %v1955 = vld [vmem:[#allocation10 + $0x498] sm:$0xff]
    %v1956 = vld [vmem:[#allocation10 + $0x4a0] sm:$0xff]
    %v1957 = vld [vmem:[#allocation10 + $0x4a8] sm:$0xff]
    %v1958 = vld [vmem:[#allocation10 + $0x4b0] sm:$0xff]
    %v1959 = vld [vmem:[#allocation10 + $0x4b8] sm:$0xff]
    %v1960 = vld [vmem:[#allocation10 + $0x4c0] sm:$0xff]
    %v1961 = vld [vmem:[#allocation10 + $0x4c8] sm:$0xff]
    %v1962 = vld [vmem:[#allocation10 + $0x4d0] sm:$0xff]
    %v1963 = vld [vmem:[#allocation10 + $0x4d8] sm:$0xff]
    %v1964 = vld [vmem:[#allocation10 + $0x4e0] sm:$0xff]
    %v1965 = vld [vmem:[#allocation10 + $0x4e8] sm:$0xff]
    %v1966 = vld [vmem:[#allocation10 + $0x4f0] sm:$0xff]
    %v1967 = vld [vmem:[#allocation10 + $0x4f8] sm:$0xff]
    %v1968 = vld [vmem:[#allocation10 + $0x500] sm:$0xff]
    %v1969 = vld [vmem:[#allocation10 + $0x508] sm:$0xff]
    %v1970 = vld [vmem:[#allocation10 + $0x510] sm:$0xff]
    %v1971 = vld [vmem:[#allocation10 + $0x518] sm:$0xff]
    %v1972 = vld [vmem:[#allocation10 + $0x520] sm:$0xff]
    %v1973 = vld [vmem:[#allocation10 + $0x528] sm:$0xff]
    %v1974 = vld [vmem:[#allocation10 + $0x530] sm:$0xff]
    %v1975 = vld [vmem:[#allocation10 + $0x538] sm:$0xff]
    %v1976 = vld [vmem:[#allocation10 + $0x540] sm:$0xff]
    %v1977 = vld [vmem:[#allocation10 + $0x548] sm:$0xff]
    %v1978 = vld [vmem:[#allocation10 + $0x550] sm:$0xff]
    %v1979 = vld [vmem:[#allocation10 + $0x558] sm:$0xff]
    %v1980 = vld [vmem:[#allocation10 + $0x560] sm:$0xff]
    %v1981 = vld [vmem:[#allocation10 + $0x568] sm:$0xff]
    %v1982 = vld [vmem:[#allocation10 + $0x570] sm:$0xff]
    %v1983 = vld [vmem:[#allocation10 + $0x578] sm:$0xff]
    %v1984 = vld [vmem:[#allocation10 + $0x580] sm:$0xff]
    %v1985 = vld [vmem:[#allocation10 + $0x588] sm:$0xff]
    %v1986 = vld [vmem:[#allocation10 + $0x590] sm:$0xff]
    %v1987 = vld [vmem:[#allocation10 + $0x598] sm:$0xff]
    %v1988 = vld [vmem:[#allocation10 + $0x5a0] sm:$0xff]
    %v1989 = vld [vmem:[#allocation10 + $0x5a8] sm:$0xff]
    %v1990 = vld [vmem:[#allocation10 + $0x5b0] sm:$0xff]
    %v1991 = vld [vmem:[#allocation10 + $0x5b8] sm:$0xff]
    %v1992 = vld [vmem:[#allocation10 + $0x5c0] sm:$0xff]
    %v1993 = vld [vmem:[#allocation10 + $0x5c8] sm:$0xff]
    %v1994 = vld [vmem:[#allocation10 + $0x5d0] sm:$0xff]
    %v1995 = vld [vmem:[#allocation10 + $0x5d8] sm:$0xff]
    %v1996 = vld [vmem:[#allocation10 + $0x5e0] sm:$0xff]
    %v1997 = vld [vmem:[#allocation10 + $0x5e8] sm:$0xff]
    %v1998 = vld [vmem:[#allocation10 + $0x5f0] sm:$0xff]
    %v1999 = vld [vmem:[#allocation10 + $0x5f8] sm:$0xff]
    %v2000 = vld [vmem:[#allocation10 + $0x600] sm:$0xff]
    %v2001 = vld [vmem:[#allocation10 + $0x608] sm:$0xff]
    %v2002 = vld [vmem:[#allocation10 + $0x610] sm:$0xff]
    %v2003 = vld [vmem:[#allocation10 + $0x618] sm:$0xff]
    %v2004 = vld [vmem:[#allocation10 + $0x620] sm:$0xff]
    %v2005 = vld [vmem:[#allocation10 + $0x628] sm:$0xff]
    %v2006 = vld [vmem:[#allocation10 + $0x630] sm:$0xff]
    %v2007 = vld [vmem:[#allocation10 + $0x638] sm:$0xff]
    %v2008 = vld [vmem:[#allocation10 + $0x640] sm:$0xff]
    %v2009 = vld [vmem:[#allocation10 + $0x648] sm:$0xff]
    %v2010 = vld [vmem:[#allocation10 + $0x650] sm:$0xff]
    %v2011 = vld [vmem:[#allocation10 + $0x658] sm:$0xff]
    %v2012 = vld [vmem:[#allocation10 + $0x660] sm:$0xff]
    %v2013 = vld [vmem:[#allocation10 + $0x668] sm:$0xff]
    %v2014 = vld [vmem:[#allocation10 + $0x670] sm:$0xff]
    %v2015 = vld [vmem:[#allocation10 + $0x678] sm:$0xff]
    %v2016 = vld [vmem:[#allocation10 + $0x680] sm:$0xff]
    %v2017 = vld [vmem:[#allocation10 + $0x688] sm:$0xff]
    %v2018 = vld [vmem:[#allocation10 + $0x690] sm:$0xff]
    %v2019 = vld [vmem:[#allocation10 + $0x698] sm:$0xff]
    %v2020 = vld [vmem:[#allocation10 + $0x6a0] sm:$0xff]
    %v2021 = vld [vmem:[#allocation10 + $0x6a8] sm:$0xff]
    %v2022 = vld [vmem:[#allocation10 + $0x6b0] sm:$0xff]
    %v2023 = vld [vmem:[#allocation10 + $0x6b8] sm:$0xff]
    %v2024 = vld [vmem:[#allocation10 + $0x6c0] sm:$0xff]
    %v2025 = vld [vmem:[#allocation10 + $0x6c8] sm:$0xff]
    %v2026 = vld [vmem:[#allocation10 + $0x6d0] sm:$0xff]
    %v2027 = vld [vmem:[#allocation10 + $0x6d8] sm:$0xff]
    %v2028 = vld [vmem:[#allocation10 + $0x6e0] sm:$0xff]
    %v2029 = vld [vmem:[#allocation10 + $0x6e8] sm:$0xff]
    %v2030 = vld [vmem:[#allocation10 + $0x6f0] sm:$0xff]
    %v2031 = vld [vmem:[#allocation10 + $0x6f8] sm:$0xff]
    %v2032 = vld [vmem:[#allocation10 + $0x700] sm:$0xff]
    %v2033 = vld [vmem:[#allocation10 + $0x708] sm:$0xff]
    %v2034 = vld [vmem:[#allocation10 + $0x710] sm:$0xff]
    %v2035 = vld [vmem:[#allocation10 + $0x718] sm:$0xff]
    %v2036 = vld [vmem:[#allocation10 + $0x720] sm:$0xff]
    %v2037 = vld [vmem:[#allocation10 + $0x728] sm:$0xff]
    %v2038 = vld [vmem:[#allocation10 + $0x730] sm:$0xff]
    %v2039 = vld [vmem:[#allocation10 + $0x738] sm:$0xff]
    %v2040 = vld [vmem:[#allocation10 + $0x740] sm:$0xff]
    %v2041 = vld [vmem:[#allocation10 + $0x748] sm:$0xff]
    %v2042 = vld [vmem:[#allocation10 + $0x750] sm:$0xff]
    %v2043 = vld [vmem:[#allocation10 + $0x758] sm:$0xff]
    %v2044 = vld [vmem:[#allocation10 + $0x760] sm:$0xff]
    %v2045 = vld [vmem:[#allocation10 + $0x768] sm:$0xff]
    %v2046 = vld [vmem:[#allocation10 + $0x770] sm:$0xff]
    %v2047 = vld [vmem:[#allocation10 + $0x778] sm:$0xff]
    %v2048 = vld [vmem:[#allocation10 + $0x780] sm:$0xff]
    %v2049 = vld [vmem:[#allocation10 + $0x788] sm:$0xff]
    %v2050 = vld [vmem:[#allocation10 + $0x790] sm:$0xff]
    %v2051 = vld [vmem:[#allocation10 + $0x798] sm:$0xff]
    %v2052 = vld [vmem:[#allocation10 + $0x7a0] sm:$0xff]
    %v2053 = vld [vmem:[#allocation10 + $0x7a8] sm:$0xff]
    %v2054 = vld [vmem:[#allocation10 + $0x7b0] sm:$0xff]
    %v2055 = vld [vmem:[#allocation10 + $0x7b8] sm:$0xff]
    %v2056 = vld [vmem:[#allocation10 + $0x7c0] sm:$0xff]
    %v2057 = vld [vmem:[#allocation10 + $0x7c8] sm:$0xff]
    %v2058 = vld [vmem:[#allocation10 + $0x7d0] sm:$0xff]
    %v2059 = vld [vmem:[#allocation10 + $0x7d8] sm:$0xff]
    %v2060 = vld [vmem:[#allocation10 + $0x7e0] sm:$0xff]
    %v2061 = vld [vmem:[#allocation10 + $0x7e8] sm:$0xff]
    %v2062 = vld [vmem:[#allocation10 + $0x7f0] sm:$0xff]
    %v2063 = vld [vmem:[#allocation10 + $0x7f8] sm:$0xff]
    %v2064 = vld [vmem:[#allocation10 + $0x800] sm:$0xff]
    %v2065 = vld [vmem:[#allocation10 + $0x808] sm:$0xff]
    %v2066 = vld [vmem:[#allocation10 + $0x810] sm:$0xff]
    %v2067 = vld [vmem:[#allocation10 + $0x818] sm:$0xff]
    %v2068 = vld [vmem:[#allocation10 + $0x820] sm:$0xff]
    %v2069 = vld [vmem:[#allocation10 + $0x828] sm:$0xff]
    %v2070 = vld [vmem:[#allocation10 + $0x830] sm:$0xff]
    %v2071 = vld [vmem:[#allocation10 + $0x838] sm:$0xff]
    %v2072 = vld [vmem:[#allocation10 + $0x840] sm:$0xff]
    %v2073 = vld [vmem:[#allocation10 + $0x848] sm:$0xff]
    %v2074 = vld [vmem:[#allocation10 + $0x850] sm:$0xff]
    %v2075 = vld [vmem:[#allocation10 + $0x858] sm:$0xff]
    %v2076 = vld [vmem:[#allocation10 + $0x860] sm:$0xff]
    %v2077 = vld [vmem:[#allocation10 + $0x868] sm:$0xff]
    %v2078 = vld [vmem:[#allocation10 + $0x870] sm:$0xff]
    %v2079 = vld [vmem:[#allocation10 + $0x878] sm:$0xff]
    %v2080 = vld [vmem:[#allocation10 + $0x880] sm:$0xff]
    %v2081 = vld [vmem:[#allocation10 + $0x888] sm:$0xff]
    %v2082 = vld [vmem:[#allocation10 + $0x890] sm:$0xff]
    %v2083 = vld [vmem:[#allocation10 + $0x898] sm:$0xff]
    %v2084 = vld [vmem:[#allocation10 + $0x8a0] sm:$0xff]
    %v2085 = vld [vmem:[#allocation10 + $0x8a8] sm:$0xff]
    %v2086 = vld [vmem:[#allocation10 + $0x8b0] sm:$0xff]
    %v2087 = vld [vmem:[#allocation10 + $0x8b8] sm:$0xff]
    %v2088 = vld [vmem:[#allocation10 + $0x8c0] sm:$0xff]
    %v2089 = vld [vmem:[#allocation10 + $0x8c8] sm:$0xff]
    %v2090 = vld [vmem:[#allocation10 + $0x8d0] sm:$0xff]
    %v2091 = vld [vmem:[#allocation10 + $0x8d8] sm:$0xff]
    %v2092 = vld [vmem:[#allocation10 + $0x8e0] sm:$0xff]
    %v2093 = vld [vmem:[#allocation10 + $0x8e8] sm:$0xff]
    %v2094 = vld [vmem:[#allocation10 + $0x8f0] sm:$0xff]
    %v2095 = vld [vmem:[#allocation10 + $0x8f8] sm:$0xff]
    %v2096 = vld [vmem:[#allocation13] sm:$0xff]
    %v2097 = vld [vmem:[#allocation13 + $0x8] sm:$0xf]
    %v2100 = vlaneseq
    %v2101 = vshrl.u32 %v2100, 7
    %v2102 = vsub.s32 0, %v2101
    %v2103 = vrot.slane %v2096, %v2102
    %v2104 = vlaneseq
    %v2105 = vshrl.u32 %v2104, 7
    %v2106 = vsub.s32 1, %v2105
    %v2107 = vrot.slane %v2096, %v2106
    %v2108 = vlaneseq
    %v2109 = vshrl.u32 %v2108, 7
    %v2110 = vsub.s32 2, %v2109
    %v2111 = vrot.slane %v2096, %v2110
    %v2112 = vlaneseq
    %v2113 = vshrl.u32 %v2112, 7
    %v2114 = vsub.s32 3, %v2113
    %v2115 = vrot.slane %v2096, %v2114
    %v2116 = vlaneseq
    %v2117 = vshrl.u32 %v2116, 7
    %v2118 = vsub.s32 4, %v2117
    %v2119 = vrot.slane %v2096, %v2118
    %v2120 = vlaneseq
    %v2121 = vshrl.u32 %v2120, 7
    %v2122 = vsub.s32 5, %v2121
    %v2123 = vrot.slane %v2096, %v2122
    %v2124 = vlaneseq
    %v2125 = vshrl.u32 %v2124, 7
    %v2126 = vsub.s32 6, %v2125
    %v2127 = vrot.slane %v2096, %v2126
    %v2128 = vlaneseq
    %v2129 = vshrl.u32 %v2128, 7
    %v2130 = vsub.s32 7, %v2129
    %v2131 = vrot.slane %v2096, %v2130
    %v2132 = vlaneseq
    %v2133 = vshrl.u32 %v2132, 7
    %v2134 = vsub.s32 0, %v2133
    %v2135 = vrot.slane %v2097, %v2134
    %v2136 = vlaneseq
    %v2137 = vshrl.u32 %v2136, 7
    %v2138 = vsub.s32 1, %v2137
    %v2139 = vrot.slane %v2097, %v2138
    %v2140 = vlaneseq
    %v2141 = vshrl.u32 %v2140, 7
    %v2142 = vsub.s32 2, %v2141
    %v2143 = vrot.slane %v2097, %v2142
    %v2144 = vlaneseq
    %v2145 = vshrl.u32 %v2144, 7
    %v2146 = vsub.s32 3, %v2145
    %v2147 = vrot.slane %v2097, %v2146
    %v2448 = vunpack.c.l.b16 %v1808
    %v2449 = vunpack.c.h.b16 %v1808
    %v2450 = vunpack.c.l.b16 %v1809
    %v2451 = vunpack.c.h.b16 %v1809
    %v2452 = vunpack.c.l.b16 %v1810
    %v2453 = vunpack.c.h.b16 %v1810
    %v2454 = vunpack.c.l.b16 %v1811
    %v2455 = vunpack.c.h.b16 %v1811
    %v2456 = vunpack.c.l.b16 %v1812
    %v2457 = vunpack.c.h.b16 %v1812
    %v2458 = vunpack.c.l.b16 %v1813
    %v2459 = vunpack.c.h.b16 %v1813
    %v2460 = vunpack.c.l.b16 %v1814
    %v2461 = vunpack.c.h.b16 %v1814
    %v2462 = vunpack.c.l.b16 %v1815
    %v2463 = vunpack.c.h.b16 %v1815
    %v2464 = vunpack.c.l.b16 %v1816
    %v2465 = vunpack.c.h.b16 %v1816
    %v2466 = vunpack.c.l.b16 %v1817
    %v2467 = vunpack.c.h.b16 %v1817
    %v2468 = vunpack.c.l.b16 %v1818
    %v2469 = vunpack.c.h.b16 %v1818
    %v2470 = vunpack.c.l.b16 %v1819
    %v2471 = vunpack.c.h.b16 %v1819
    %v2472 = vunpack.c.l.b16 %v1820
    %v2473 = vunpack.c.h.b16 %v1820
    %v2474 = vunpack.c.l.b16 %v1821
    %v2475 = vunpack.c.h.b16 %v1821
    %v2476 = vunpack.c.l.b16 %v1822
    %v2477 = vunpack.c.h.b16 %v1822
    %v2478 = vunpack.c.l.b16 %v1823
    %v2479 = vunpack.c.h.b16 %v1823
    %v2480 = vunpack.c.l.b16 %v1824
    %v2481 = vunpack.c.h.b16 %v1824
    %v2482 = vunpack.c.l.b16 %v1825
    %v2483 = vunpack.c.h.b16 %v1825
    %v2484 = vunpack.c.l.b16 %v1826
    %v2485 = vunpack.c.h.b16 %v1826
    %v2486 = vunpack.c.l.b16 %v1827
    %v2487 = vunpack.c.h.b16 %v1827
    %v2488 = vunpack.c.l.b16 %v1828
    %v2489 = vunpack.c.h.b16 %v1828
    %v2490 = vunpack.c.l.b16 %v1829
    %v2491 = vunpack.c.h.b16 %v1829
    %v2492 = vunpack.c.l.b16 %v1830
    %v2493 = vunpack.c.h.b16 %v1830
    %v2494 = vunpack.c.l.b16 %v1831
    %v2495 = vunpack.c.h.b16 %v1831
    %v2496 = vunpack.c.l.b16 %v1832
    %v2497 = vunpack.c.h.b16 %v1832
    %v2498 = vunpack.c.l.b16 %v1833
    %v2499 = vunpack.c.h.b16 %v1833
    %v2500 = vunpack.c.l.b16 %v1834
    %v2501 = vunpack.c.h.b16 %v1834
    %v2502 = vunpack.c.l.b16 %v1835
    %v2503 = vunpack.c.h.b16 %v1835
    %v2504 = vunpack.c.l.b16 %v1836
    %v2505 = vunpack.c.h.b16 %v1836
    %v2506 = vunpack.c.l.b16 %v1837
    %v2507 = vunpack.c.h.b16 %v1837
    %v2508 = vunpack.c.l.b16 %v1838
    %v2509 = vunpack.c.h.b16 %v1838
    %v2510 = vunpack.c.l.b16 %v1839
    %v2511 = vunpack.c.h.b16 %v1839
    %v2512 = vunpack.c.l.b16 %v1840
    %v2513 = vunpack.c.h.b16 %v1840
    %v2514 = vunpack.c.l.b16 %v1841
    %v2515 = vunpack.c.h.b16 %v1841
    %v2516 = vunpack.c.l.b16 %v1842
    %v2517 = vunpack.c.h.b16 %v1842
    %v2518 = vunpack.c.l.b16 %v1843
    %v2519 = vunpack.c.h.b16 %v1843
    %v2520 = vunpack.c.l.b16 %v1844
    %v2521 = vunpack.c.h.b16 %v1844
    %v2522 = vunpack.c.l.b16 %v1845
    %v2523 = vunpack.c.h.b16 %v1845
    %v2524 = vunpack.c.l.b16 %v1846
    %v2525 = vunpack.c.h.b16 %v1846
    %v2526 = vunpack.c.l.b16 %v1847
    %v2527 = vunpack.c.h.b16 %v1847
    %v2528 = vunpack.c.l.b16 %v1848
    %v2529 = vunpack.c.h.b16 %v1848
    %v2530 = vunpack.c.l.b16 %v1849
    %v2531 = vunpack.c.h.b16 %v1849
    %v2532 = vunpack.c.l.b16 %v1850
    %v2533 = vunpack.c.h.b16 %v1850
    %v2534 = vunpack.c.l.b16 %v1851
    %v2535 = vunpack.c.h.b16 %v1851
    %v2536 = vunpack.c.l.b16 %v1852
    %v2537 = vunpack.c.h.b16 %v1852
    %v2538 = vunpack.c.l.b16 %v1853
    %v2539 = vunpack.c.h.b16 %v1853
    %v2540 = vunpack.c.l.b16 %v1854
    %v2541 = vunpack.c.h.b16 %v1854
    %v2542 = vunpack.c.l.b16 %v1855
    %v2543 = vunpack.c.h.b16 %v1855
    %v2544 = vunpack.c.l.b16 %v1856
    %v2545 = vunpack.c.h.b16 %v1856
    %v2546 = vunpack.c.l.b16 %v1857
    %v2547 = vunpack.c.h.b16 %v1857
    %v2548 = vunpack.c.l.b16 %v1858
    %v2549 = vunpack.c.h.b16 %v1858
    %v2550 = vunpack.c.l.b16 %v1859
    %v2551 = vunpack.c.h.b16 %v1859
    %v2552 = vunpack.c.l.b16 %v1860
    %v2553 = vunpack.c.h.b16 %v1860
    %v2554 = vunpack.c.l.b16 %v1861
    %v2555 = vunpack.c.h.b16 %v1861
    %v2556 = vunpack.c.l.b16 %v1862
    %v2557 = vunpack.c.h.b16 %v1862
    %v2558 = vunpack.c.l.b16 %v1863
    %v2559 = vunpack.c.h.b16 %v1863
    %v2560 = vunpack.c.l.b16 %v1864
    %v2561 = vunpack.c.h.b16 %v1864
    %v2562 = vunpack.c.l.b16 %v1865
    %v2563 = vunpack.c.h.b16 %v1865
    %v2564 = vunpack.c.l.b16 %v1866
    %v2565 = vunpack.c.h.b16 %v1866
    %v2566 = vunpack.c.l.b16 %v1867
    %v2567 = vunpack.c.h.b16 %v1867
    %v2568 = vunpack.c.l.b16 %v1868
    %v2569 = vunpack.c.h.b16 %v1868
    %v2570 = vunpack.c.l.b16 %v1869
    %v2571 = vunpack.c.h.b16 %v1869
    %v2572 = vunpack.c.l.b16 %v1870
    %v2573 = vunpack.c.h.b16 %v1870
    %v2574 = vunpack.c.l.b16 %v1871
    %v2575 = vunpack.c.h.b16 %v1871
    %v2576 = vunpack.c.l.b16 %v1872
    %v2577 = vunpack.c.h.b16 %v1872
    %v2578 = vunpack.c.l.b16 %v1873
    %v2579 = vunpack.c.h.b16 %v1873
    %v2580 = vunpack.c.l.b16 %v1874
    %v2581 = vunpack.c.h.b16 %v1874
    %v2582 = vunpack.c.l.b16 %v1875
    %v2583 = vunpack.c.h.b16 %v1875
    %v2584 = vunpack.c.l.b16 %v1876
    %v2585 = vunpack.c.h.b16 %v1876
    %v2586 = vunpack.c.l.b16 %v1877
    %v2587 = vunpack.c.h.b16 %v1877
    %v2588 = vunpack.c.l.b16 %v1878
    %v2589 = vunpack.c.h.b16 %v1878
    %v2590 = vunpack.c.l.b16 %v1879
    %v2591 = vunpack.c.h.b16 %v1879
    %v2592 = vunpack.c.l.b16 %v1880
    %v2593 = vunpack.c.h.b16 %v1880
    %v2594 = vunpack.c.l.b16 %v1881
    %v2595 = vunpack.c.h.b16 %v1881
    %v2596 = vunpack.c.l.b16 %v1882
    %v2597 = vunpack.c.h.b16 %v1882
    %v2598 = vunpack.c.l.b16 %v1883
    %v2599 = vunpack.c.h.b16 %v1883
    %v2600 = vunpack.c.l.b16 %v1884
    %v2601 = vunpack.c.h.b16 %v1884
    %v2602 = vunpack.c.l.b16 %v1885
    %v2603 = vunpack.c.h.b16 %v1885
    %v2604 = vunpack.c.l.b16 %v1886
    %v2605 = vunpack.c.h.b16 %v1886
    %v2606 = vunpack.c.l.b16 %v1887
    %v2607 = vunpack.c.h.b16 %v1887
    %v2608 = vunpack.c.l.b16 %v1888
    %v2609 = vunpack.c.h.b16 %v1888
    %v2610 = vunpack.c.l.b16 %v1889
    %v2611 = vunpack.c.h.b16 %v1889
    %v2612 = vunpack.c.l.b16 %v1890
    %v2613 = vunpack.c.h.b16 %v1890
    %v2614 = vunpack.c.l.b16 %v1891
    %v2615 = vunpack.c.h.b16 %v1891
    %v2616 = vunpack.c.l.b16 %v1892
    %v2617 = vunpack.c.h.b16 %v1892
    %v2618 = vunpack.c.l.b16 %v1893
    %v2619 = vunpack.c.h.b16 %v1893
    %v2620 = vunpack.c.l.b16 %v1894
    %v2621 = vunpack.c.h.b16 %v1894
    %v2622 = vunpack.c.l.b16 %v1895
    %v2623 = vunpack.c.h.b16 %v1895
    %v2624 = vunpack.c.l.b16 %v1896
    %v2625 = vunpack.c.h.b16 %v1896
    %v2626 = vunpack.c.l.b16 %v1897
    %v2627 = vunpack.c.h.b16 %v1897
    %v2628 = vunpack.c.l.b16 %v1898
    %v2629 = vunpack.c.h.b16 %v1898
    %v2630 = vunpack.c.l.b16 %v1899
    %v2631 = vunpack.c.h.b16 %v1899
    %v2632 = vunpack.c.l.b16 %v1900
    %v2633 = vunpack.c.h.b16 %v1900
    %v2634 = vunpack.c.l.b16 %v1901
    %v2635 = vunpack.c.h.b16 %v1901
    %v2636 = vunpack.c.l.b16 %v1902
    %v2637 = vunpack.c.h.b16 %v1902
    %v2638 = vunpack.c.l.b16 %v1903
    %v2639 = vunpack.c.h.b16 %v1903
    %v2640 = vunpack.c.l.b16 %v1904
    %v2641 = vunpack.c.h.b16 %v1904
    %v2642 = vunpack.c.l.b16 %v1905
    %v2643 = vunpack.c.h.b16 %v1905
    %v2644 = vunpack.c.l.b16 %v1906
    %v2645 = vunpack.c.h.b16 %v1906
    %v2646 = vunpack.c.l.b16 %v1907
    %v2647 = vunpack.c.h.b16 %v1907
    %v2648 = vunpack.c.l.b16 %v1908
    %v2649 = vunpack.c.h.b16 %v1908
    %v2650 = vunpack.c.l.b16 %v1909
    %v2651 = vunpack.c.h.b16 %v1909
    %v2652 = vunpack.c.l.b16 %v1910
    %v2653 = vunpack.c.h.b16 %v1910
    %v2654 = vunpack.c.l.b16 %v1911
    %v2655 = vunpack.c.h.b16 %v1911
    %v2656 = vunpack.c.l.b16 %v1912
    %v2657 = vunpack.c.h.b16 %v1912
    %v2658 = vunpack.c.l.b16 %v1913
    %v2659 = vunpack.c.h.b16 %v1913
    %v2660 = vunpack.c.l.b16 %v1914
    %v2661 = vunpack.c.h.b16 %v1914
    %v2662 = vunpack.c.l.b16 %v1915
    %v2663 = vunpack.c.h.b16 %v1915
    %v2664 = vunpack.c.l.b16 %v1916
    %v2665 = vunpack.c.h.b16 %v1916
    %v2666 = vunpack.c.l.b16 %v1917
    %v2667 = vunpack.c.h.b16 %v1917
    %v2668 = vunpack.c.l.b16 %v1918
    %v2669 = vunpack.c.h.b16 %v1918
    %v2670 = vunpack.c.l.b16 %v1919
    %v2671 = vunpack.c.h.b16 %v1919
    %v2672 = vunpack.c.l.b16 %v1920
    %v2673 = vunpack.c.h.b16 %v1920
    %v2674 = vunpack.c.l.b16 %v1921
    %v2675 = vunpack.c.h.b16 %v1921
    %v2676 = vunpack.c.l.b16 %v1922
    %v2677 = vunpack.c.h.b16 %v1922
    %v2678 = vunpack.c.l.b16 %v1923
    %v2679 = vunpack.c.h.b16 %v1923
    %v2680 = vunpack.c.l.b16 %v1924
    %v2681 = vunpack.c.h.b16 %v1924
    %v2682 = vunpack.c.l.b16 %v1925
    %v2683 = vunpack.c.h.b16 %v1925
    %v2684 = vunpack.c.l.b16 %v1926
    %v2685 = vunpack.c.h.b16 %v1926
    %v2686 = vunpack.c.l.b16 %v1927
    %v2687 = vunpack.c.h.b16 %v1927
    %v2688 = vunpack.c.l.b16 %v1928
    %v2689 = vunpack.c.h.b16 %v1928
    %v2690 = vunpack.c.l.b16 %v1929
    %v2691 = vunpack.c.h.b16 %v1929
    %v2692 = vunpack.c.l.b16 %v1930
    %v2693 = vunpack.c.h.b16 %v1930
    %v2694 = vunpack.c.l.b16 %v1931
    %v2695 = vunpack.c.h.b16 %v1931
    %v2696 = vunpack.c.l.b16 %v1932
    %v2697 = vunpack.c.h.b16 %v1932
    %v2698 = vunpack.c.l.b16 %v1933
    %v2699 = vunpack.c.h.b16 %v1933
    %v2700 = vunpack.c.l.b16 %v1934
    %v2701 = vunpack.c.h.b16 %v1934
    %v2702 = vunpack.c.l.b16 %v1935
    %v2703 = vunpack.c.h.b16 %v1935
    %v2704 = vunpack.c.l.b16 %v1936
    %v2705 = vunpack.c.h.b16 %v1936
    %v2706 = vunpack.c.l.b16 %v1937
    %v2707 = vunpack.c.h.b16 %v1937
    %v2708 = vunpack.c.l.b16 %v1938
    %v2709 = vunpack.c.h.b16 %v1938
    %v2710 = vunpack.c.l.b16 %v1939
    %v2711 = vunpack.c.h.b16 %v1939
    %v2712 = vunpack.c.l.b16 %v1940
    %v2713 = vunpack.c.h.b16 %v1940
    %v2714 = vunpack.c.l.b16 %v1941
    %v2715 = vunpack.c.h.b16 %v1941
    %v2716 = vunpack.c.l.b16 %v1942
    %v2717 = vunpack.c.h.b16 %v1942
    %v2718 = vunpack.c.l.b16 %v1943
    %v2719 = vunpack.c.h.b16 %v1943
    %v2720 = vunpack.c.l.b16 %v1944
    %v2721 = vunpack.c.h.b16 %v1944
    %v2722 = vunpack.c.l.b16 %v1945
    %v2723 = vunpack.c.h.b16 %v1945
    %v2724 = vunpack.c.l.b16 %v1946
    %v2725 = vunpack.c.h.b16 %v1946
    %v2726 = vunpack.c.l.b16 %v1947
    %v2727 = vunpack.c.h.b16 %v1947
    %v2728 = vunpack.c.l.b16 %v1948
    %v2729 = vunpack.c.h.b16 %v1948
    %v2730 = vunpack.c.l.b16 %v1949
    %v2731 = vunpack.c.h.b16 %v1949
    %v2732 = vunpack.c.l.b16 %v1950
    %v2733 = vunpack.c.h.b16 %v1950
    %v2734 = vunpack.c.l.b16 %v1951
    %v2735 = vunpack.c.h.b16 %v1951
    %v2736 = vunpack.c.l.b16 %v1952
    %v2737 = vunpack.c.h.b16 %v1952
    %v2738 = vunpack.c.l.b16 %v1953
    %v2739 = vunpack.c.h.b16 %v1953
    %v2740 = vunpack.c.l.b16 %v1954
    %v2741 = vunpack.c.h.b16 %v1954
    %v2742 = vunpack.c.l.b16 %v1955
    %v2743 = vunpack.c.h.b16 %v1955
    %v2744 = vunpack.c.l.b16 %v1956
    %v2745 = vunpack.c.h.b16 %v1956
    %v2746 = vunpack.c.l.b16 %v1957
    %v2747 = vunpack.c.h.b16 %v1957
    %v2748 = vunpack.c.l.b16 %v1958
    %v2749 = vunpack.c.h.b16 %v1958
    %v2750 = vunpack.c.l.b16 %v1959
    %v2751 = vunpack.c.h.b16 %v1959
    %v2752 = vunpack.c.l.b16 %v1960
    %v2753 = vunpack.c.h.b16 %v1960
    %v2754 = vunpack.c.l.b16 %v1961
    %v2755 = vunpack.c.h.b16 %v1961
    %v2756 = vunpack.c.l.b16 %v1962
    %v2757 = vunpack.c.h.b16 %v1962
    %v2758 = vunpack.c.l.b16 %v1963
    %v2759 = vunpack.c.h.b16 %v1963
    %v2760 = vunpack.c.l.b16 %v1964
    %v2761 = vunpack.c.h.b16 %v1964
    %v2762 = vunpack.c.l.b16 %v1965
    %v2763 = vunpack.c.h.b16 %v1965
    %v2764 = vunpack.c.l.b16 %v1966
    %v2765 = vunpack.c.h.b16 %v1966
    %v2766 = vunpack.c.l.b16 %v1967
    %v2767 = vunpack.c.h.b16 %v1967
    %v2768 = vunpack.c.l.b16 %v1968
    %v2769 = vunpack.c.h.b16 %v1968
    %v2770 = vunpack.c.l.b16 %v1969
    %v2771 = vunpack.c.h.b16 %v1969
    %v2772 = vunpack.c.l.b16 %v1970
    %v2773 = vunpack.c.h.b16 %v1970
    %v2774 = vunpack.c.l.b16 %v1971
    %v2775 = vunpack.c.h.b16 %v1971
    %v2776 = vunpack.c.l.b16 %v1972
    %v2777 = vunpack.c.h.b16 %v1972
    %v2778 = vunpack.c.l.b16 %v1973
    %v2779 = vunpack.c.h.b16 %v1973
    %v2780 = vunpack.c.l.b16 %v1974
    %v2781 = vunpack.c.h.b16 %v1974
    %v2782 = vunpack.c.l.b16 %v1975
    %v2783 = vunpack.c.h.b16 %v1975
    %v2784 = vunpack.c.l.b16 %v1976
    %v2785 = vunpack.c.h.b16 %v1976
    %v2786 = vunpack.c.l.b16 %v1977
    %v2787 = vunpack.c.h.b16 %v1977
    %v2788 = vunpack.c.l.b16 %v1978
    %v2789 = vunpack.c.h.b16 %v1978
    %v2790 = vunpack.c.l.b16 %v1979
    %v2791 = vunpack.c.h.b16 %v1979
    %v2792 = vunpack.c.l.b16 %v1980
    %v2793 = vunpack.c.h.b16 %v1980
    %v2794 = vunpack.c.l.b16 %v1981
    %v2795 = vunpack.c.h.b16 %v1981
    %v2796 = vunpack.c.l.b16 %v1982
    %v2797 = vunpack.c.h.b16 %v1982
    %v2798 = vunpack.c.l.b16 %v1983
    %v2799 = vunpack.c.h.b16 %v1983
    %v2800 = vunpack.c.l.b16 %v1984
    %v2801 = vunpack.c.h.b16 %v1984
    %v2802 = vunpack.c.l.b16 %v1985
    %v2803 = vunpack.c.h.b16 %v1985
    %v2804 = vunpack.c.l.b16 %v1986
    %v2805 = vunpack.c.h.b16 %v1986
    %v2806 = vunpack.c.l.b16 %v1987
    %v2807 = vunpack.c.h.b16 %v1987
    %v2808 = vunpack.c.l.b16 %v1988
    %v2809 = vunpack.c.h.b16 %v1988
    %v2810 = vunpack.c.l.b16 %v1989
    %v2811 = vunpack.c.h.b16 %v1989
    %v2812 = vunpack.c.l.b16 %v1990
    %v2813 = vunpack.c.h.b16 %v1990
    %v2814 = vunpack.c.l.b16 %v1991
    %v2815 = vunpack.c.h.b16 %v1991
    %v2816 = vunpack.c.l.b16 %v1992
    %v2817 = vunpack.c.h.b16 %v1992
    %v2818 = vunpack.c.l.b16 %v1993
    %v2819 = vunpack.c.h.b16 %v1993
    %v2820 = vunpack.c.l.b16 %v1994
    %v2821 = vunpack.c.h.b16 %v1994
    %v2822 = vunpack.c.l.b16 %v1995
    %v2823 = vunpack.c.h.b16 %v1995
    %v2824 = vunpack.c.l.b16 %v1996
    %v2825 = vunpack.c.h.b16 %v1996
    %v2826 = vunpack.c.l.b16 %v1997
    %v2827 = vunpack.c.h.b16 %v1997
    %v2828 = vunpack.c.l.b16 %v1998
    %v2829 = vunpack.c.h.b16 %v1998
    %v2830 = vunpack.c.l.b16 %v1999
    %v2831 = vunpack.c.h.b16 %v1999
    %v2832 = vunpack.c.l.b16 %v2000
    %v2833 = vunpack.c.h.b16 %v2000
    %v2834 = vunpack.c.l.b16 %v2001
    %v2835 = vunpack.c.h.b16 %v2001
    %v2836 = vunpack.c.l.b16 %v2002
    %v2837 = vunpack.c.h.b16 %v2002
    %v2838 = vunpack.c.l.b16 %v2003
    %v2839 = vunpack.c.h.b16 %v2003
    %v2840 = vunpack.c.l.b16 %v2004
    %v2841 = vunpack.c.h.b16 %v2004
    %v2842 = vunpack.c.l.b16 %v2005
    %v2843 = vunpack.c.h.b16 %v2005
    %v2844 = vunpack.c.l.b16 %v2006
    %v2845 = vunpack.c.h.b16 %v2006
    %v2846 = vunpack.c.l.b16 %v2007
    %v2847 = vunpack.c.h.b16 %v2007
    %v2848 = vunpack.c.l.b16 %v2008
    %v2849 = vunpack.c.h.b16 %v2008
    %v2850 = vunpack.c.l.b16 %v2009
    %v2851 = vunpack.c.h.b16 %v2009
    %v2852 = vunpack.c.l.b16 %v2010
    %v2853 = vunpack.c.h.b16 %v2010
    %v2854 = vunpack.c.l.b16 %v2011
    %v2855 = vunpack.c.h.b16 %v2011
    %v2856 = vunpack.c.l.b16 %v2012
    %v2857 = vunpack.c.h.b16 %v2012
    %v2858 = vunpack.c.l.b16 %v2013
    %v2859 = vunpack.c.h.b16 %v2013
    %v2860 = vunpack.c.l.b16 %v2014
    %v2861 = vunpack.c.h.b16 %v2014
    %v2862 = vunpack.c.l.b16 %v2015
    %v2863 = vunpack.c.h.b16 %v2015
    %v2864 = vunpack.c.l.b16 %v2016
    %v2865 = vunpack.c.h.b16 %v2016
    %v2866 = vunpack.c.l.b16 %v2017
    %v2867 = vunpack.c.h.b16 %v2017
    %v2868 = vunpack.c.l.b16 %v2018
    %v2869 = vunpack.c.h.b16 %v2018
    %v2870 = vunpack.c.l.b16 %v2019
    %v2871 = vunpack.c.h.b16 %v2019
    %v2872 = vunpack.c.l.b16 %v2020
    %v2873 = vunpack.c.h.b16 %v2020
    %v2874 = vunpack.c.l.b16 %v2021
    %v2875 = vunpack.c.h.b16 %v2021
    %v2876 = vunpack.c.l.b16 %v2022
    %v2877 = vunpack.c.h.b16 %v2022
    %v2878 = vunpack.c.l.b16 %v2023
    %v2879 = vunpack.c.h.b16 %v2023
    %v2880 = vunpack.c.l.b16 %v2024
    %v2881 = vunpack.c.h.b16 %v2024
    %v2882 = vunpack.c.l.b16 %v2025
    %v2883 = vunpack.c.h.b16 %v2025
    %v2884 = vunpack.c.l.b16 %v2026
    %v2885 = vunpack.c.h.b16 %v2026
    %v2886 = vunpack.c.l.b16 %v2027
    %v2887 = vunpack.c.h.b16 %v2027
    %v2888 = vunpack.c.l.b16 %v2028
    %v2889 = vunpack.c.h.b16 %v2028
    %v2890 = vunpack.c.l.b16 %v2029
    %v2891 = vunpack.c.h.b16 %v2029
    %v2892 = vunpack.c.l.b16 %v2030
    %v2893 = vunpack.c.h.b16 %v2030
    %v2894 = vunpack.c.l.b16 %v2031
    %v2895 = vunpack.c.h.b16 %v2031
    %v2896 = vunpack.c.l.b16 %v2032
    %v2897 = vunpack.c.h.b16 %v2032
    %v2898 = vunpack.c.l.b16 %v2033
    %v2899 = vunpack.c.h.b16 %v2033
    %v2900 = vunpack.c.l.b16 %v2034
    %v2901 = vunpack.c.h.b16 %v2034
    %v2902 = vunpack.c.l.b16 %v2035
    %v2903 = vunpack.c.h.b16 %v2035
    %v2904 = vunpack.c.l.b16 %v2036
    %v2905 = vunpack.c.h.b16 %v2036
    %v2906 = vunpack.c.l.b16 %v2037
    %v2907 = vunpack.c.h.b16 %v2037
    %v2908 = vunpack.c.l.b16 %v2038
    %v2909 = vunpack.c.h.b16 %v2038
    %v2910 = vunpack.c.l.b16 %v2039
    %v2911 = vunpack.c.h.b16 %v2039
    %v2912 = vunpack.c.l.b16 %v2040
    %v2913 = vunpack.c.h.b16 %v2040
    %v2914 = vunpack.c.l.b16 %v2041
    %v2915 = vunpack.c.h.b16 %v2041
    %v2916 = vunpack.c.l.b16 %v2042
    %v2917 = vunpack.c.h.b16 %v2042
    %v2918 = vunpack.c.l.b16 %v2043
    %v2919 = vunpack.c.h.b16 %v2043
    %v2920 = vunpack.c.l.b16 %v2044
    %v2921 = vunpack.c.h.b16 %v2044
    %v2922 = vunpack.c.l.b16 %v2045
    %v2923 = vunpack.c.h.b16 %v2045
    %v2924 = vunpack.c.l.b16 %v2046
    %v2925 = vunpack.c.h.b16 %v2046
    %v2926 = vunpack.c.l.b16 %v2047
    %v2927 = vunpack.c.h.b16 %v2047
    %v2928 = vunpack.c.l.b16 %v2048
    %v2929 = vunpack.c.h.b16 %v2048
    %v2930 = vunpack.c.l.b16 %v2049
    %v2931 = vunpack.c.h.b16 %v2049
    %v2932 = vunpack.c.l.b16 %v2050
    %v2933 = vunpack.c.h.b16 %v2050
    %v2934 = vunpack.c.l.b16 %v2051
    %v2935 = vunpack.c.h.b16 %v2051
    %v2936 = vunpack.c.l.b16 %v2052
    %v2937 = vunpack.c.h.b16 %v2052
    %v2938 = vunpack.c.l.b16 %v2053
    %v2939 = vunpack.c.h.b16 %v2053
    %v2940 = vunpack.c.l.b16 %v2054
    %v2941 = vunpack.c.h.b16 %v2054
    %v2942 = vunpack.c.l.b16 %v2055
    %v2943 = vunpack.c.h.b16 %v2055
    %v2944 = vunpack.c.l.b16 %v2056
    %v2945 = vunpack.c.h.b16 %v2056
    %v2946 = vunpack.c.l.b16 %v2057
    %v2947 = vunpack.c.h.b16 %v2057
    %v2948 = vunpack.c.l.b16 %v2058
    %v2949 = vunpack.c.h.b16 %v2058
    %v2950 = vunpack.c.l.b16 %v2059
    %v2951 = vunpack.c.h.b16 %v2059
    %v2952 = vunpack.c.l.b16 %v2060
    %v2953 = vunpack.c.h.b16 %v2060
    %v2954 = vunpack.c.l.b16 %v2061
    %v2955 = vunpack.c.h.b16 %v2061
    %v2956 = vunpack.c.l.b16 %v2062
    %v2957 = vunpack.c.h.b16 %v2062
    %v2958 = vunpack.c.l.b16 %v2063
    %v2959 = vunpack.c.h.b16 %v2063
    %v2960 = vunpack.c.l.b16 %v2064
    %v2961 = vunpack.c.h.b16 %v2064
    %v2962 = vunpack.c.l.b16 %v2065
    %v2963 = vunpack.c.h.b16 %v2065
    %v2964 = vunpack.c.l.b16 %v2066
    %v2965 = vunpack.c.h.b16 %v2066
    %v2966 = vunpack.c.l.b16 %v2067
    %v2967 = vunpack.c.h.b16 %v2067
    %v2968 = vunpack.c.l.b16 %v2068
    %v2969 = vunpack.c.h.b16 %v2068
    %v2970 = vunpack.c.l.b16 %v2069
    %v2971 = vunpack.c.h.b16 %v2069
    %v2972 = vunpack.c.l.b16 %v2070
    %v2973 = vunpack.c.h.b16 %v2070
    %v2974 = vunpack.c.l.b16 %v2071
    %v2975 = vunpack.c.h.b16 %v2071
    %v2976 = vunpack.c.l.b16 %v2072
    %v2977 = vunpack.c.h.b16 %v2072
    %v2978 = vunpack.c.l.b16 %v2073
    %v2979 = vunpack.c.h.b16 %v2073
    %v2980 = vunpack.c.l.b16 %v2074
    %v2981 = vunpack.c.h.b16 %v2074
    %v2982 = vunpack.c.l.b16 %v2075
    %v2983 = vunpack.c.h.b16 %v2075
    %v2984 = vunpack.c.l.b16 %v2076
    %v2985 = vunpack.c.h.b16 %v2076
    %v2986 = vunpack.c.l.b16 %v2077
    %v2987 = vunpack.c.h.b16 %v2077
    %v2988 = vunpack.c.l.b16 %v2078
    %v2989 = vunpack.c.h.b16 %v2078
    %v2990 = vunpack.c.l.b16 %v2079
    %v2991 = vunpack.c.h.b16 %v2079
    %v2992 = vunpack.c.l.b16 %v2080
    %v2993 = vunpack.c.h.b16 %v2080
    %v2994 = vunpack.c.l.b16 %v2081
    %v2995 = vunpack.c.h.b16 %v2081
    %v2996 = vunpack.c.l.b16 %v2082
    %v2997 = vunpack.c.h.b16 %v2082
    %v2998 = vunpack.c.l.b16 %v2083
    %v2999 = vunpack.c.h.b16 %v2083
    %v3000 = vunpack.c.l.b16 %v2084
    %v3001 = vunpack.c.h.b16 %v2084
    %v3002 = vunpack.c.l.b16 %v2085
    %v3003 = vunpack.c.h.b16 %v2085
    %v3004 = vunpack.c.l.b16 %v2086
    %v3005 = vunpack.c.h.b16 %v2086
    %v3006 = vunpack.c.l.b16 %v2087
    %v3007 = vunpack.c.h.b16 %v2087
    %v3008 = vunpack.c.l.b16 %v2088
    %v3009 = vunpack.c.h.b16 %v2088
    %v3010 = vunpack.c.l.b16 %v2089
    %v3011 = vunpack.c.h.b16 %v2089
    %v3012 = vunpack.c.l.b16 %v2090
    %v3013 = vunpack.c.h.b16 %v2090
    %v3014 = vunpack.c.l.b16 %v2091
    %v3015 = vunpack.c.h.b16 %v2091
    %v3016 = vunpack.c.l.b16 %v2092
    %v3017 = vunpack.c.h.b16 %v2092
    %v3018 = vunpack.c.l.b16 %v2093
    %v3019 = vunpack.c.h.b16 %v2093
    %v3020 = vunpack.c.l.b16 %v2094
    %v3021 = vunpack.c.h.b16 %v2094
    %v3022 = vunpack.c.l.b16 %v2095
    %v3023 = vunpack.c.h.b16 %v2095
    %v3024 = vpack.c.b16 %v2460, %v2448
    %v3025 = vpack.c.b16 %v2461, %v2449
    %v3026 = vpack.c.b16 %v2462, %v2450
    %v3027 = vpack.c.b16 %v2463, %v2451
    %v3028 = vpack.c.b16 %v2464, %v2452
    %v3029 = vpack.c.b16 %v2465, %v2453
    %v3030 = vpack.c.b16 %v2466, %v2454
    %v3031 = vpack.c.b16 %v2467, %v2455
    %v3032 = vpack.c.b16 %v2468, %v2456
    %v3033 = vpack.c.b16 %v2469, %v2457
    %v3034 = vpack.c.b16 %v2470, %v2458
    %v3035 = vpack.c.b16 %v2471, %v2459
    %v3036 = vpack.c.b16 %v2484, %v2472
    %v3037 = vpack.c.b16 %v2485, %v2473
    %v3038 = vpack.c.b16 %v2486, %v2474
    %v3039 = vpack.c.b16 %v2487, %v2475
    %v3040 = vpack.c.b16 %v2488, %v2476
    %v3041 = vpack.c.b16 %v2489, %v2477
    %v3042 = vpack.c.b16 %v2490, %v2478
    %v3043 = vpack.c.b16 %v2491, %v2479
    %v3044 = vpack.c.b16 %v2492, %v2480
    %v3045 = vpack.c.b16 %v2493, %v2481
    %v3046 = vpack.c.b16 %v2494, %v2482
    %v3047 = vpack.c.b16 %v2495, %v2483
    %v3048 = vpack.c.b16 %v2508, %v2496
    %v3049 = vpack.c.b16 %v2509, %v2497
    %v3050 = vpack.c.b16 %v2510, %v2498
    %v3051 = vpack.c.b16 %v2511, %v2499
    %v3052 = vpack.c.b16 %v2512, %v2500
    %v3053 = vpack.c.b16 %v2513, %v2501
    %v3054 = vpack.c.b16 %v2514, %v2502
    %v3055 = vpack.c.b16 %v2515, %v2503
    %v3056 = vpack.c.b16 %v2516, %v2504
    %v3057 = vpack.c.b16 %v2517, %v2505
    %v3058 = vpack.c.b16 %v2518, %v2506
    %v3059 = vpack.c.b16 %v2519, %v2507
    %v3060 = vpack.c.b16 %v2532, %v2520
    %v3061 = vpack.c.b16 %v2533, %v2521
    %v3062 = vpack.c.b16 %v2534, %v2522
    %v3063 = vpack.c.b16 %v2535, %v2523
    %v3064 = vpack.c.b16 %v2536, %v2524
    %v3065 = vpack.c.b16 %v2537, %v2525
    %v3066 = vpack.c.b16 %v2538, %v2526
    %v3067 = vpack.c.b16 %v2539, %v2527
    %v3068 = vpack.c.b16 %v2540, %v2528
    %v3069 = vpack.c.b16 %v2541, %v2529
    %v3070 = vpack.c.b16 %v2542, %v2530
    %v3071 = vpack.c.b16 %v2543, %v2531
    %v3072 = vpack.c.b16 %v2556, %v2544
    %v3073 = vpack.c.b16 %v2557, %v2545
    %v3074 = vpack.c.b16 %v2558, %v2546
    %v3075 = vpack.c.b16 %v2559, %v2547
    %v3076 = vpack.c.b16 %v2560, %v2548
    %v3077 = vpack.c.b16 %v2561, %v2549
    %v3078 = vpack.c.b16 %v2562, %v2550
    %v3079 = vpack.c.b16 %v2563, %v2551
    %v3080 = vpack.c.b16 %v2564, %v2552
    %v3081 = vpack.c.b16 %v2565, %v2553
    %v3082 = vpack.c.b16 %v2566, %v2554
    %v3083 = vpack.c.b16 %v2567, %v2555
    %v3084 = vpack.c.b16 %v2580, %v2568
    %v3085 = vpack.c.b16 %v2581, %v2569
    %v3086 = vpack.c.b16 %v2582, %v2570
    %v3087 = vpack.c.b16 %v2583, %v2571
    %v3088 = vpack.c.b16 %v2584, %v2572
    %v3089 = vpack.c.b16 %v2585, %v2573
    %v3090 = vpack.c.b16 %v2586, %v2574
    %v3091 = vpack.c.b16 %v2587, %v2575
    %v3092 = vpack.c.b16 %v2588, %v2576
    %v3093 = vpack.c.b16 %v2589, %v2577
    %v3094 = vpack.c.b16 %v2590, %v2578
    %v3095 = vpack.c.b16 %v2591, %v2579
    %v3096 = vpack.c.b16 %v2604, %v2592
    %v3097 = vpack.c.b16 %v2605, %v2593
    %v3098 = vpack.c.b16 %v2606, %v2594
    %v3099 = vpack.c.b16 %v2607, %v2595
    %v3100 = vpack.c.b16 %v2608, %v2596
    %v3101 = vpack.c.b16 %v2609, %v2597
    %v3102 = vpack.c.b16 %v2610, %v2598
    %v3103 = vpack.c.b16 %v2611, %v2599
    %v3104 = vpack.c.b16 %v2612, %v2600
    %v3105 = vpack.c.b16 %v2613, %v2601
    %v3106 = vpack.c.b16 %v2614, %v2602
    %v3107 = vpack.c.b16 %v2615, %v2603
    %v3108 = vpack.c.b16 %v2628, %v2616
    %v3109 = vpack.c.b16 %v2629, %v2617
    %v3110 = vpack.c.b16 %v2630, %v2618
    %v3111 = vpack.c.b16 %v2631, %v2619
    %v3112 = vpack.c.b16 %v2632, %v2620
    %v3113 = vpack.c.b16 %v2633, %v2621
    %v3114 = vpack.c.b16 %v2634, %v2622
    %v3115 = vpack.c.b16 %v2635, %v2623
    %v3116 = vpack.c.b16 %v2636, %v2624
    %v3117 = vpack.c.b16 %v2637, %v2625
    %v3118 = vpack.c.b16 %v2638, %v2626
    %v3119 = vpack.c.b16 %v2639, %v2627
    %v3120 = vpack.c.b16 %v2652, %v2640
    %v3121 = vpack.c.b16 %v2653, %v2641
    %v3122 = vpack.c.b16 %v2654, %v2642
    %v3123 = vpack.c.b16 %v2655, %v2643
    %v3124 = vpack.c.b16 %v2656, %v2644
    %v3125 = vpack.c.b16 %v2657, %v2645
    %v3126 = vpack.c.b16 %v2658, %v2646
    %v3127 = vpack.c.b16 %v2659, %v2647
    %v3128 = vpack.c.b16 %v2660, %v2648
    %v3129 = vpack.c.b16 %v2661, %v2649
    %v3130 = vpack.c.b16 %v2662, %v2650
    %v3131 = vpack.c.b16 %v2663, %v2651
    %v3132 = vpack.c.b16 %v2676, %v2664
    %v3133 = vpack.c.b16 %v2677, %v2665
    %v3134 = vpack.c.b16 %v2678, %v2666
    %v3135 = vpack.c.b16 %v2679, %v2667
    %v3136 = vpack.c.b16 %v2680, %v2668
    %v3137 = vpack.c.b16 %v2681, %v2669
    %v3138 = vpack.c.b16 %v2682, %v2670
    %v3139 = vpack.c.b16 %v2683, %v2671
    %v3140 = vpack.c.b16 %v2684, %v2672
    %v3141 = vpack.c.b16 %v2685, %v2673
    %v3142 = vpack.c.b16 %v2686, %v2674
    %v3143 = vpack.c.b16 %v2687, %v2675
    %v3144 = vpack.c.b16 %v2700, %v2688
    %v3145 = vpack.c.b16 %v2701, %v2689
    %v3146 = vpack.c.b16 %v2702, %v2690
    %v3147 = vpack.c.b16 %v2703, %v2691
    %v3148 = vpack.c.b16 %v2704, %v2692
    %v3149 = vpack.c.b16 %v2705, %v2693
    %v3150 = vpack.c.b16 %v2706, %v2694
    %v3151 = vpack.c.b16 %v2707, %v2695
    %v3152 = vpack.c.b16 %v2708, %v2696
    %v3153 = vpack.c.b16 %v2709, %v2697
    %v3154 = vpack.c.b16 %v2710, %v2698
    %v3155 = vpack.c.b16 %v2711, %v2699
    %v3156 = vpack.c.b16 %v2724, %v2712
    %v3157 = vpack.c.b16 %v2725, %v2713
    %v3158 = vpack.c.b16 %v2726, %v2714
    %v3159 = vpack.c.b16 %v2727, %v2715
    %v3160 = vpack.c.b16 %v2728, %v2716
    %v3161 = vpack.c.b16 %v2729, %v2717
    %v3162 = vpack.c.b16 %v2730, %v2718
    %v3163 = vpack.c.b16 %v2731, %v2719
    %v3164 = vpack.c.b16 %v2732, %v2720
    %v3165 = vpack.c.b16 %v2733, %v2721
    %v3166 = vpack.c.b16 %v2734, %v2722
    %v3167 = vpack.c.b16 %v2735, %v2723
    %v3168 = vpack.c.b16 %v2748, %v2736
    %v3169 = vpack.c.b16 %v2749, %v2737
    %v3170 = vpack.c.b16 %v2750, %v2738
    %v3171 = vpack.c.b16 %v2751, %v2739
    %v3172 = vpack.c.b16 %v2752, %v2740
    %v3173 = vpack.c.b16 %v2753, %v2741
    %v3174 = vpack.c.b16 %v2754, %v2742
    %v3175 = vpack.c.b16 %v2755, %v2743
    %v3176 = vpack.c.b16 %v2756, %v2744
    %v3177 = vpack.c.b16 %v2757, %v2745
    %v3178 = vpack.c.b16 %v2758, %v2746
    %v3179 = vpack.c.b16 %v2759, %v2747
    %v3180 = vpack.c.b16 %v2772, %v2760
    %v3181 = vpack.c.b16 %v2773, %v2761
    %v3182 = vpack.c.b16 %v2774, %v2762
    %v3183 = vpack.c.b16 %v2775, %v2763
    %v3184 = vpack.c.b16 %v2776, %v2764
    %v3185 = vpack.c.b16 %v2777, %v2765
    %v3186 = vpack.c.b16 %v2778, %v2766
    %v3187 = vpack.c.b16 %v2779, %v2767
    %v3188 = vpack.c.b16 %v2780, %v2768
    %v3189 = vpack.c.b16 %v2781, %v2769
    %v3190 = vpack.c.b16 %v2782, %v2770
    %v3191 = vpack.c.b16 %v2783, %v2771
    %v3192 = vpack.c.b16 %v2796, %v2784
    %v3193 = vpack.c.b16 %v2797, %v2785
    %v3194 = vpack.c.b16 %v2798, %v2786
    %v3195 = vpack.c.b16 %v2799, %v2787
    %v3196 = vpack.c.b16 %v2800, %v2788
    %v3197 = vpack.c.b16 %v2801, %v2789
    %v3198 = vpack.c.b16 %v2802, %v2790
    %v3199 = vpack.c.b16 %v2803, %v2791
    %v3200 = vpack.c.b16 %v2804, %v2792
    %v3201 = vpack.c.b16 %v2805, %v2793
    %v3202 = vpack.c.b16 %v2806, %v2794
    %v3203 = vpack.c.b16 %v2807, %v2795
    %v3204 = vpack.c.b16 %v2820, %v2808
    %v3205 = vpack.c.b16 %v2821, %v2809
    %v3206 = vpack.c.b16 %v2822, %v2810
    %v3207 = vpack.c.b16 %v2823, %v2811
    %v3208 = vpack.c.b16 %v2824, %v2812
    %v3209 = vpack.c.b16 %v2825, %v2813
    %v3210 = vpack.c.b16 %v2826, %v2814
    %v3211 = vpack.c.b16 %v2827, %v2815
    %v3212 = vpack.c.b16 %v2828, %v2816
    %v3213 = vpack.c.b16 %v2829, %v2817
    %v3214 = vpack.c.b16 %v2830, %v2818
    %v3215 = vpack.c.b16 %v2831, %v2819
    %v3216 = vpack.c.b16 %v2844, %v2832
    %v3217 = vpack.c.b16 %v2845, %v2833
    %v3218 = vpack.c.b16 %v2846, %v2834
    %v3219 = vpack.c.b16 %v2847, %v2835
    %v3220 = vpack.c.b16 %v2848, %v2836
    %v3221 = vpack.c.b16 %v2849, %v2837
    %v3222 = vpack.c.b16 %v2850, %v2838
    %v3223 = vpack.c.b16 %v2851, %v2839
    %v3224 = vpack.c.b16 %v2852, %v2840
    %v3225 = vpack.c.b16 %v2853, %v2841
    %v3226 = vpack.c.b16 %v2854, %v2842
    %v3227 = vpack.c.b16 %v2855, %v2843
    %v3228 = vpack.c.b16 %v2868, %v2856
    %v3229 = vpack.c.b16 %v2869, %v2857
    %v3230 = vpack.c.b16 %v2870, %v2858
    %v3231 = vpack.c.b16 %v2871, %v2859
    %v3232 = vpack.c.b16 %v2872, %v2860
    %v3233 = vpack.c.b16 %v2873, %v2861
    %v3234 = vpack.c.b16 %v2874, %v2862
    %v3235 = vpack.c.b16 %v2875, %v2863
    %v3236 = vpack.c.b16 %v2876, %v2864
    %v3237 = vpack.c.b16 %v2877, %v2865
    %v3238 = vpack.c.b16 %v2878, %v2866
    %v3239 = vpack.c.b16 %v2879, %v2867
    %v3240 = vpack.c.b16 %v2892, %v2880
    %v3241 = vpack.c.b16 %v2893, %v2881
    %v3242 = vpack.c.b16 %v2894, %v2882
    %v3243 = vpack.c.b16 %v2895, %v2883
    %v3244 = vpack.c.b16 %v2896, %v2884
    %v3245 = vpack.c.b16 %v2897, %v2885
    %v3246 = vpack.c.b16 %v2898, %v2886
    %v3247 = vpack.c.b16 %v2899, %v2887
    %v3248 = vpack.c.b16 %v2900, %v2888
    %v3249 = vpack.c.b16 %v2901, %v2889
    %v3250 = vpack.c.b16 %v2902, %v2890
    %v3251 = vpack.c.b16 %v2903, %v2891
    %v3252 = vpack.c.b16 %v2916, %v2904
    %v3253 = vpack.c.b16 %v2917, %v2905
    %v3254 = vpack.c.b16 %v2918, %v2906
    %v3255 = vpack.c.b16 %v2919, %v2907
    %v3256 = vpack.c.b16 %v2920, %v2908
    %v3257 = vpack.c.b16 %v2921, %v2909
    %v3258 = vpack.c.b16 %v2922, %v2910
    %v3259 = vpack.c.b16 %v2923, %v2911
    %v3260 = vpack.c.b16 %v2924, %v2912
    %v3261 = vpack.c.b16 %v2925, %v2913
    %v3262 = vpack.c.b16 %v2926, %v2914
    %v3263 = vpack.c.b16 %v2927, %v2915
    %v3264 = vpack.c.b16 %v2940, %v2928
    %v3265 = vpack.c.b16 %v2941, %v2929
    %v3266 = vpack.c.b16 %v2942, %v2930
    %v3267 = vpack.c.b16 %v2943, %v2931
    %v3268 = vpack.c.b16 %v2944, %v2932
    %v3269 = vpack.c.b16 %v2945, %v2933
    %v3270 = vpack.c.b16 %v2946, %v2934
    %v3271 = vpack.c.b16 %v2947, %v2935
    %v3272 = vpack.c.b16 %v2948, %v2936
    %v3273 = vpack.c.b16 %v2949, %v2937
    %v3274 = vpack.c.b16 %v2950, %v2938
    %v3275 = vpack.c.b16 %v2951, %v2939
    %v3276 = vpack.c.b16 %v2964, %v2952
    %v3277 = vpack.c.b16 %v2965, %v2953
    %v3278 = vpack.c.b16 %v2966, %v2954
    %v3279 = vpack.c.b16 %v2967, %v2955
    %v3280 = vpack.c.b16 %v2968, %v2956
    %v3281 = vpack.c.b16 %v2969, %v2957
    %v3282 = vpack.c.b16 %v2970, %v2958
    %v3283 = vpack.c.b16 %v2971, %v2959
    %v3284 = vpack.c.b16 %v2972, %v2960
    %v3285 = vpack.c.b16 %v2973, %v2961
    %v3286 = vpack.c.b16 %v2974, %v2962
    %v3287 = vpack.c.b16 %v2975, %v2963
    %v3288 = vpack.c.b16 %v2988, %v2976
    %v3289 = vpack.c.b16 %v2989, %v2977
    %v3290 = vpack.c.b16 %v2990, %v2978
    %v3291 = vpack.c.b16 %v2991, %v2979
    %v3292 = vpack.c.b16 %v2992, %v2980
    %v3293 = vpack.c.b16 %v2993, %v2981
    %v3294 = vpack.c.b16 %v2994, %v2982
    %v3295 = vpack.c.b16 %v2995, %v2983
    %v3296 = vpack.c.b16 %v2996, %v2984
    %v3297 = vpack.c.b16 %v2997, %v2985
    %v3298 = vpack.c.b16 %v2998, %v2986
    %v3299 = vpack.c.b16 %v2999, %v2987
    %v3300 = vpack.c.b16 %v3012, %v3000
    %v3301 = vpack.c.b16 %v3013, %v3001
    %v3302 = vpack.c.b16 %v3014, %v3002
    %v3303 = vpack.c.b16 %v3015, %v3003
    %v3304 = vpack.c.b16 %v3016, %v3004
    %v3305 = vpack.c.b16 %v3017, %v3005
    %v3306 = vpack.c.b16 %v3018, %v3006
    %v3307 = vpack.c.b16 %v3019, %v3007
    %v3308 = vpack.c.b16 %v3020, %v3008
    %v3309 = vpack.c.b16 %v3021, %v3009
    %v3310 = vpack.c.b16 %v3022, %v3010
    %v3311 = vpack.c.b16 %v3023, %v3011
    %3600 = vmatprep.subr.bf16.mxu0 %v3109
    %3601 = vmatpush1.bf16.msra.mxu0 %v3108
    %3602 = vmatprep.subr.bf16.mxu0 %v3097
    %3603 = vmatpush1.bf16.msra.mxu0 %v3096
    %3604 = vmatprep.subr.bf16.mxu0 %v3085
    %3605 = vmatpush1.bf16.msra.mxu0 %v3084
    %3606 = vmatprep.subr.bf16.mxu0 %v3073
    %3607 = vmatpush1.bf16.msra.mxu0 %v3072
    %3608 = vmatprep.subr.bf16.mxu0 %v3061
    %3609 = vmatpush1.bf16.msra.mxu0 %v3060
    %3610 = vmatprep.subr.bf16.mxu0 %v3049
    %3611 = vmatpush1.bf16.msra.mxu0 %v3048
    %3612 = vmatprep.subr.bf16.mxu0 %v3037
    %3613 = vmatpush1.bf16.msra.mxu0 %v3036
    %3614 = vmatprep.subr.bf16.mxu0 %v3025
    %3615 = vmatpush1.bf16.msra.mxu0 %v3024
    %3616 = vmatprep.subr.bf16.mxu0 %v3205
    %3617 = vmatpush2.bf16.msra.mxu0 %v3204
    %3618 = vmatprep.subr.bf16.mxu0 %v3193
    %3619 = vmatpush2.bf16.msra.mxu0 %v3192
    %3620 = vmatprep.subr.bf16.mxu0 %v3181
    %3621 = vmatpush2.bf16.msra.mxu0 %v3180
    %3622 = vmatprep.subr.bf16.mxu0 %v3169
    %3623 = vmatpush2.bf16.msra.mxu0 %v3168
    %3624 = vmatprep.subr.bf16.mxu0 %v3157
    %3625 = vmatpush2.bf16.msra.mxu0 %v3156
    %3626 = vmatprep.subr.bf16.mxu0 %v3145
    %3627 = vmatpush2.bf16.msra.mxu0 %v3144
    %3628 = vmatprep.subr.bf16.mxu0 %v3133
    %3629 = vmatpush2.bf16.msra.mxu0 %v3132
    %3630 = vmatprep.subr.bf16.mxu0 %v3121
    %3631 = vmatpush2.bf16.msra.mxu0 %v3120
    %3632 = vmatprep.mubr.bf16.mxu0 %v1803
    %3633 = vmatmul.mubr.bf16.gmra.mxu0 %v1802
    %v3634 = vpop.f32.mrf.mxu0
    %v3635 = vadd.f32 %v2103, %v3634
    %v3636 = vpop.f32.mrf.mxu0
    %v3637 = vadd.f32 %v2107, %v3636
    %v3638 = vpop.f32.mrf.mxu0
    %v3639 = vadd.f32 %v2103, %v3638
    %v3640 = vpop.f32.mrf.mxu0
    %v3641 = vadd.f32 %v2107, %v3640
    %3642 = vmatprep.mubr.bf16.mxu0 %v1806
    %3643 = vmatmul.mubr.bf16.gmra.mxu0 %v1805
    %v3644 = vpop.f32.mrf.mxu0
    %v3645 = vadd.f32 %v2103, %v3644
    %v3646 = vpop.f32.mrf.mxu0
    %v3647 = vadd.f32 %v2107, %v3646
    %v3648 = vpop.f32.mrf.mxu0
    %v3649 = vpop.f32.mrf.mxu0
    %3650 = vdwg.mxu0
    %3651 = vmatprep.subr.bf16.mxu0 %v3301
    %3652 = vmatpush1.bf16.msra.mxu0 %v3300
    %3653 = vmatprep.subr.bf16.mxu0 %v3289
    %3654 = vmatpush1.bf16.msra.mxu0 %v3288
    %3655 = vmatprep.subr.bf16.mxu0 %v3277
    %3656 = vmatpush1.bf16.msra.mxu0 %v3276
    %3657 = vmatprep.subr.bf16.mxu0 %v3265
    %3658 = vmatpush1.bf16.msra.mxu0 %v3264
    %3659 = vmatprep.subr.bf16.mxu0 %v3253
    %3660 = vmatpush1.bf16.msra.mxu0 %v3252
    %3661 = vmatprep.subr.bf16.mxu0 %v3241
    %3662 = vmatpush1.bf16.msra.mxu0 %v3240
    %3663 = vmatprep.subr.bf16.mxu0 %v3229
    %3664 = vmatpush1.bf16.msra.mxu0 %v3228
    %3665 = vmatprep.subr.bf16.mxu0 %v3217
    %3666 = vmatpush1.bf16.msra.mxu0 %v3216
    %3667 = vmatprep.subr.bf16.mxu0 0
    %3668 = vmatpush2.bf16.msra.mxu0 0
    %3669 = vmatprep.subr.bf16.mxu0 0
    %3670 = vmatpush2.bf16.msra.mxu0 0
    %3671 = vmatprep.subr.bf16.mxu0 0
    %3672 = vmatpush2.bf16.msra.mxu0 0
    %3673 = vmatprep.subr.bf16.mxu0 0
    %3674 = vmatpush2.bf16.msra.mxu0 0
    %3675 = vmatprep.subr.bf16.mxu0 0
    %3676 = vmatpush2.bf16.msra.mxu0 0
    %3677 = vmatprep.subr.bf16.mxu0 0
    %3678 = vmatpush2.bf16.msra.mxu0 0
    %3679 = vmatprep.subr.bf16.mxu0 0
    %3680 = vmatpush2.bf16.msra.mxu0 0
    %3681 = vmatprep.subr.bf16.mxu0 0
    %3682 = vmatpush2.bf16.msra.mxu0 0
    %3683 = vmatprep.mubr.bf16.mxu0 0
    %3684 = vmatmul.mubr.bf16.gmra.mxu0 %v1804
    %v3685 = vpop.f32.mrf.mxu0
    %v3686 = vadd.f32 %v3635, %v3685
    %v3687 = vpop.f32.mrf.mxu0
    %v3688 = vadd.f32 %v3637, %v3687
    %v3689 = vpop.f32.mrf.mxu0
    %v3690 = vadd.f32 %v3639, %v3689
    %v3691 = vpop.f32.mrf.mxu0
    %v3692 = vadd.f32 %v3641, %v3691
    %3693 = vmatprep.mubr.bf16.mxu0 0
    %3694 = vmatmul.mubr.bf16.gmra.mxu0 %v1807
    %v3695 = vpop.f32.mrf.mxu0
    %v3696 = vadd.f32 %v3645, %v3695
    %v3697 = vpop.f32.mrf.mxu0
    %v3698 = vadd.f32 %v3647, %v3697
    %v3699 = vpop.f32.mrf.mxu0
    %v3700 = vpop.f32.mrf.mxu0
    %3701 = vdwg.mxu0
    %3702 = vmatprep.subr.bf16.mxu0 %v3111
    %3703 = vmatpush1.bf16.msra.mxu0 %v3110
    %3704 = vmatprep.subr.bf16.mxu0 %v3099
    %3705 = vmatpush1.bf16.msra.mxu0 %v3098
    %3706 = vmatprep.subr.bf16.mxu0 %v3087
    %3707 = vmatpush1.bf16.msra.mxu0 %v3086
    %3708 = vmatprep.subr.bf16.mxu0 %v3075
    %3709 = vmatpush1.bf16.msra.mxu0 %v3074
    %3710 = vmatprep.subr.bf16.mxu0 %v3063
    %3711 = vmatpush1.bf16.msra.mxu0 %v3062
    %3712 = vmatprep.subr.bf16.mxu0 %v3051
    %3713 = vmatpush1.bf16.msra.mxu0 %v3050
    %3714 = vmatprep.subr.bf16.mxu0 %v3039
    %3715 = vmatpush1.bf16.msra.mxu0 %v3038
    %3716 = vmatprep.subr.bf16.mxu0 %v3027
    %3717 = vmatpush1.bf16.msra.mxu0 %v3026
    %3718 = vmatprep.subr.bf16.mxu0 %v3207
    %3719 = vmatpush2.bf16.msra.mxu0 %v3206
    %3720 = vmatprep.subr.bf16.mxu0 %v3195
    %3721 = vmatpush2.bf16.msra.mxu0 %v3194
    %3722 = vmatprep.subr.bf16.mxu0 %v3183
    %3723 = vmatpush2.bf16.msra.mxu0 %v3182
    %3724 = vmatprep.subr.bf16.mxu0 %v3171
    %3725 = vmatpush2.bf16.msra.mxu0 %v3170
    %3726 = vmatprep.subr.bf16.mxu0 %v3159
    %3727 = vmatpush2.bf16.msra.mxu0 %v3158
    %3728 = vmatprep.subr.bf16.mxu0 %v3147
    %3729 = vmatpush2.bf16.msra.mxu0 %v3146
    %3730 = vmatprep.subr.bf16.mxu0 %v3135
    %3731 = vmatpush2.bf16.msra.mxu0 %v3134
    %3732 = vmatprep.subr.bf16.mxu0 %v3123
    %3733 = vmatpush2.bf16.msra.mxu0 %v3122
    %3734 = vmatprep.mubr.bf16.mxu0 %v1803
    %3735 = vmatmul.mubr.bf16.gmra.mxu0 %v1802
    %v3736 = vpop.f32.mrf.mxu0
    %v3737 = vadd.f32 %v2111, %v3736
    %v3738 = vpop.f32.mrf.mxu0
    %v3739 = vadd.f32 %v2115, %v3738
    %v3740 = vpop.f32.mrf.mxu0
    %v3741 = vadd.f32 %v2111, %v3740
    %v3742 = vpop.f32.mrf.mxu0
    %v3743 = vadd.f32 %v2115, %v3742
    %3744 = vmatprep.mubr.bf16.mxu0 %v1806
    %3745 = vmatmul.mubr.bf16.gmra.mxu0 %v1805
    %v3746 = vpop.f32.mrf.mxu0
    %v3747 = vadd.f32 %v2111, %v3746
    %v3748 = vpop.f32.mrf.mxu0
    %v3749 = vadd.f32 %v2115, %v3748
    %v3750 = vpop.f32.mrf.mxu0
    %v3751 = vpop.f32.mrf.mxu0
    %3752 = vdwg.mxu0
    %3753 = vmatprep.subr.bf16.mxu0 %v3303
    %3754 = vmatpush1.bf16.msra.mxu0 %v3302
    %3755 = vmatprep.subr.bf16.mxu0 %v3291
    %3756 = vmatpush1.bf16.msra.mxu0 %v3290
    %3757 = vmatprep.subr.bf16.mxu0 %v3279
    %3758 = vmatpush1.bf16.msra.mxu0 %v3278
    %3759 = vmatprep.subr.bf16.mxu0 %v3267
    %3760 = vmatpush1.bf16.msra.mxu0 %v3266
    %3761 = vmatprep.subr.bf16.mxu0 %v3255
    %3762 = vmatpush1.bf16.msra.mxu0 %v3254
    %3763 = vmatprep.subr.bf16.mxu0 %v3243
    %3764 = vmatpush1.bf16.msra.mxu0 %v3242
    %3765 = vmatprep.subr.bf16.mxu0 %v3231
    %3766 = vmatpush1.bf16.msra.mxu0 %v3230
    %3767 = vmatprep.subr.bf16.mxu0 %v3219
    %3768 = vmatpush1.bf16.msra.mxu0 %v3218
    %3769 = vmatprep.subr.bf16.mxu0 0
    %3770 = vmatpush2.bf16.msra.mxu0 0
    %3771 = vmatprep.subr.bf16.mxu0 0
    %3772 = vmatpush2.bf16.msra.mxu0 0
    %3773 = vmatprep.subr.bf16.mxu0 0
    %3774 = vmatpush2.bf16.msra.mxu0 0
    %3775 = vmatprep.subr.bf16.mxu0 0
    %3776 = vmatpush2.bf16.msra.mxu0 0
    %3777 = vmatprep.subr.bf16.mxu0 0
    %3778 = vmatpush2.bf16.msra.mxu0 0
    %3779 = vmatprep.subr.bf16.mxu0 0
    %3780 = vmatpush2.bf16.msra.mxu0 0
    %3781 = vmatprep.subr.bf16.mxu0 0
    %3782 = vmatpush2.bf16.msra.mxu0 0
    %3783 = vmatprep.subr.bf16.mxu0 0
    %3784 = vmatpush2.bf16.msra.mxu0 0
    %3785 = vmatprep.mubr.bf16.mxu0 0
    %3786 = vmatmul.mubr.bf16.gmra.mxu0 %v1804
    %v3787 = vpop.f32.mrf.mxu0
    %v3788 = vadd.f32 %v3737, %v3787
    %v3789 = vpop.f32.mrf.mxu0
    %v3790 = vadd.f32 %v3739, %v3789
    %v3791 = vpop.f32.mrf.mxu0
    %v3792 = vadd.f32 %v3741, %v3791
    %v3793 = vpop.f32.mrf.mxu0
    %v3794 = vadd.f32 %v3743, %v3793
    %3795 = vmatprep.mubr.bf16.mxu0 0
    %3796 = vmatmul.mubr.bf16.gmra.mxu0 %v1807
    %v3797 = vpop.f32.mrf.mxu0
    %v3798 = vadd.f32 %v3747, %v3797
    %v3799 = vpop.f32.mrf.mxu0
    %v3800 = vadd.f32 %v3749, %v3799
    %v3801 = vpop.f32.mrf.mxu0
    %v3802 = vpop.f32.mrf.mxu0
    %3803 = vdwg.mxu0
    %3804 = vmatprep.subr.bf16.mxu0 %v3113
    %3805 = vmatpush1.bf16.msra.mxu0 %v3112
    %3806 = vmatprep.subr.bf16.mxu0 %v3101
    %3807 = vmatpush1.bf16.msra.mxu0 %v3100
    %3808 = vmatprep.subr.bf16.mxu0 %v3089
    %3809 = vmatpush1.bf16.msra.mxu0 %v3088
    %3810 = vmatprep.subr.bf16.mxu0 %v3077
    %3811 = vmatpush1.bf16.msra.mxu0 %v3076
    %3812 = vmatprep.subr.bf16.mxu0 %v3065
    %3813 = vmatpush1.bf16.msra.mxu0 %v3064
    %3814 = vmatprep.subr.bf16.mxu0 %v3053
    %3815 = vmatpush1.bf16.msra.mxu0 %v3052
    %3816 = vmatprep.subr.bf16.mxu0 %v3041
    %3817 = vmatpush1.bf16.msra.mxu0 %v3040
    %3818 = vmatprep.subr.bf16.mxu0 %v3029
    %3819 = vmatpush1.bf16.msra.mxu0 %v3028
    %3820 = vmatprep.subr.bf16.mxu0 %v3209
    %3821 = vmatpush2.bf16.msra.mxu0 %v3208
    %3822 = vmatprep.subr.bf16.mxu0 %v3197
    %3823 = vmatpush2.bf16.msra.mxu0 %v3196
    %3824 = vmatprep.subr.bf16.mxu0 %v3185
    %3825 = vmatpush2.bf16.msra.mxu0 %v3184
    %3826 = vmatprep.subr.bf16.mxu0 %v3173
    %3827 = vmatpush2.bf16.msra.mxu0 %v3172
    %3828 = vmatprep.subr.bf16.mxu0 %v3161
    %3829 = vmatpush2.bf16.msra.mxu0 %v3160
    %3830 = vmatprep.subr.bf16.mxu0 %v3149
    %3831 = vmatpush2.bf16.msra.mxu0 %v3148
    %3832 = vmatprep.subr.bf16.mxu0 %v3137
    %3833 = vmatpush2.bf16.msra.mxu0 %v3136
    %3834 = vmatprep.subr.bf16.mxu0 %v3125
    %3835 = vmatpush2.bf16.msra.mxu0 %v3124
    %3836 = vmatprep.mubr.bf16.mxu0 %v1803
    %3837 = vmatmul.mubr.bf16.gmra.mxu0 %v1802
    %v3838 = vpop.f32.mrf.mxu0
    %v3839 = vadd.f32 %v2119, %v3838
    %v3840 = vpop.f32.mrf.mxu0
    %v3841 = vadd.f32 %v2123, %v3840
    %v3842 = vpop.f32.mrf.mxu0
    %v3843 = vadd.f32 %v2119, %v3842
    %v3844 = vpop.f32.mrf.mxu0
    %v3845 = vadd.f32 %v2123, %v3844
    %3846 = vmatprep.mubr.bf16.mxu0 %v1806
    %3847 = vmatmul.mubr.bf16.gmra.mxu0 %v1805
    %v3848 = vpop.f32.mrf.mxu0
    %v3849 = vadd.f32 %v2119, %v3848
    %v3850 = vpop.f32.mrf.mxu0
    %v3851 = vadd.f32 %v2123, %v3850
    %v3852 = vpop.f32.mrf.mxu0
    %v3853 = vpop.f32.mrf.mxu0
    %3854 = vdwg.mxu0
    %3855 = vmatprep.subr.bf16.mxu0 %v3305
    %3856 = vmatpush1.bf16.msra.mxu0 %v3304
    %3857 = vmatprep.subr.bf16.mxu0 %v3293
    %3858 = vmatpush1.bf16.msra.mxu0 %v3292
    %3859 = vmatprep.subr.bf16.mxu0 %v3281
    %3860 = vmatpush1.bf16.msra.mxu0 %v3280
    %3861 = vmatprep.subr.bf16.mxu0 %v3269
    %3862 = vmatpush1.bf16.msra.mxu0 %v3268
    %3863 = vmatprep.subr.bf16.mxu0 %v3257
    %3864 = vmatpush1.bf16.msra.mxu0 %v3256
    %3865 = vmatprep.subr.bf16.mxu0 %v3245
    %3866 = vmatpush1.bf16.msra.mxu0 %v3244
    %3867 = vmatprep.subr.bf16.mxu0 %v3233
    %3868 = vmatpush1.bf16.msra.mxu0 %v3232
    %3869 = vmatprep.subr.bf16.mxu0 %v3221
    %3870 = vmatpush1.bf16.msra.mxu0 %v3220
    %3871 = vmatprep.subr.bf16.mxu0 0
    %3872 = vmatpush2.bf16.msra.mxu0 0
    %3873 = vmatprep.subr.bf16.mxu0 0
    %3874 = vmatpush2.bf16.msra.mxu0 0
    %3875 = vmatprep.subr.bf16.mxu0 0
    %3876 = vmatpush2.bf16.msra.mxu0 0
    %3877 = vmatprep.subr.bf16.mxu0 0
    %3878 = vmatpush2.bf16.msra.mxu0 0
    %3879 = vmatprep.subr.bf16.mxu0 0
    %3880 = vmatpush2.bf16.msra.mxu0 0
    %3881 = vmatprep.subr.bf16.mxu0 0
    %3882 = vmatpush2.bf16.msra.mxu0 0
    %3883 = vmatprep.subr.bf16.mxu0 0
    %3884 = vmatpush2.bf16.msra.mxu0 0
    %3885 = vmatprep.subr.bf16.mxu0 0
    %3886 = vmatpush2.bf16.msra.mxu0 0
    %3887 = vmatprep.mubr.bf16.mxu0 0
    %3888 = vmatmul.mubr.bf16.gmra.mxu0 %v1804
    %v3889 = vpop.f32.mrf.mxu0
    %v3890 = vadd.f32 %v3839, %v3889
    %v3891 = vpop.f32.mrf.mxu0
    %v3892 = vadd.f32 %v3841, %v3891
    %v3893 = vpop.f32.mrf.mxu0
    %v3894 = vadd.f32 %v3843, %v3893
    %v3895 = vpop.f32.mrf.mxu0
    %v3896 = vadd.f32 %v3845, %v3895
    %3897 = vmatprep.mubr.bf16.mxu0 0
    %3898 = vmatmul.mubr.bf16.gmra.mxu0 %v1807
    %v3899 = vpop.f32.mrf.mxu0
    %v3900 = vadd.f32 %v3849, %v3899
    %v3901 = vpop.f32.mrf.mxu0
    %v3902 = vadd.f32 %v3851, %v3901
    %v3903 = vpop.f32.mrf.mxu0
    %v3904 = vpop.f32.mrf.mxu0
    %3905 = vdwg.mxu0
    %3906 = vmatprep.subr.bf16.mxu0 %v3115
    %3907 = vmatpush1.bf16.msra.mxu0 %v3114
    %3908 = vmatprep.subr.bf16.mxu0 %v3103
    %3909 = vmatpush1.bf16.msra.mxu0 %v3102
    %3910 = vmatprep.subr.bf16.mxu0 %v3091
    %3911 = vmatpush1.bf16.msra.mxu0 %v3090
    %3912 = vmatprep.subr.bf16.mxu0 %v3079
    %3913 = vmatpush1.bf16.msra.mxu0 %v3078
    %3914 = vmatprep.subr.bf16.mxu0 %v3067
    %3915 = vmatpush1.bf16.msra.mxu0 %v3066
    %3916 = vmatprep.subr.bf16.mxu0 %v3055
    %3917 = vmatpush1.bf16.msra.mxu0 %v3054
    %3918 = vmatprep.subr.bf16.mxu0 %v3043
    %3919 = vmatpush1.bf16.msra.mxu0 %v3042
    %3920 = vmatprep.subr.bf16.mxu0 %v3031
    %3921 = vmatpush1.bf16.msra.mxu0 %v3030
    %3922 = vmatprep.subr.bf16.mxu0 %v3211
    %3923 = vmatpush2.bf16.msra.mxu0 %v3210
    %3924 = vmatprep.subr.bf16.mxu0 %v3199
    %3925 = vmatpush2.bf16.msra.mxu0 %v3198
    %3926 = vmatprep.subr.bf16.mxu0 %v3187
    %3927 = vmatpush2.bf16.msra.mxu0 %v3186
    %3928 = vmatprep.subr.bf16.mxu0 %v3175
    %3929 = vmatpush2.bf16.msra.mxu0 %v3174
    %3930 = vmatprep.subr.bf16.mxu0 %v3163
    %3931 = vmatpush2.bf16.msra.mxu0 %v3162
    %3932 = vmatprep.subr.bf16.mxu0 %v3151
    %3933 = vmatpush2.bf16.msra.mxu0 %v3150
    %3934 = vmatprep.subr.bf16.mxu0 %v3139
    %3935 = vmatpush2.bf16.msra.mxu0 %v3138
    %3936 = vmatprep.subr.bf16.mxu0 %v3127
    %3937 = vmatpush2.bf16.msra.mxu0 %v3126
    %3938 = vmatprep.mubr.bf16.mxu0 %v1803
    %3939 = vmatmul.mubr.bf16.gmra.mxu0 %v1802
    %v3940 = vpop.f32.mrf.mxu0
    %v3941 = vadd.f32 %v2127, %v3940
    %v3942 = vpop.f32.mrf.mxu0
    %v3943 = vadd.f32 %v2131, %v3942
    %v3944 = vpop.f32.mrf.mxu0
    %v3945 = vadd.f32 %v2127, %v3944
    %v3946 = vpop.f32.mrf.mxu0
    %v3947 = vadd.f32 %v2131, %v3946
    %3948 = vmatprep.mubr.bf16.mxu0 %v1806
    %3949 = vmatmul.mubr.bf16.gmra.mxu0 %v1805
    %v3950 = vpop.f32.mrf.mxu0
    %v3951 = vadd.f32 %v2127, %v3950
    %v3952 = vpop.f32.mrf.mxu0
    %v3953 = vadd.f32 %v2131, %v3952
    %v3954 = vpop.f32.mrf.mxu0
    %v3955 = vpop.f32.mrf.mxu0
    %3956 = vdwg.mxu0
    %3957 = vmatprep.subr.bf16.mxu0 %v3307
    %3958 = vmatpush1.bf16.msra.mxu0 %v3306
    %3959 = vmatprep.subr.bf16.mxu0 %v3295
    %3960 = vmatpush1.bf16.msra.mxu0 %v3294
    %3961 = vmatprep.subr.bf16.mxu0 %v3283
    %3962 = vmatpush1.bf16.msra.mxu0 %v3282
    %3963 = vmatprep.subr.bf16.mxu0 %v3271
    %3964 = vmatpush1.bf16.msra.mxu0 %v3270
    %3965 = vmatprep.subr.bf16.mxu0 %v3259
    %3966 = vmatpush1.bf16.msra.mxu0 %v3258
    %3967 = vmatprep.subr.bf16.mxu0 %v3247
    %3968 = vmatpush1.bf16.msra.mxu0 %v3246
    %3969 = vmatprep.subr.bf16.mxu0 %v3235
    %3970 = vmatpush1.bf16.msra.mxu0 %v3234
    %3971 = vmatprep.subr.bf16.mxu0 %v3223
    %3972 = vmatpush1.bf16.msra.mxu0 %v3222
    %3973 = vmatprep.subr.bf16.mxu0 0
    %3974 = vmatpush2.bf16.msra.mxu0 0
    %3975 = vmatprep.subr.bf16.mxu0 0
    %3976 = vmatpush2.bf16.msra.mxu0 0
    %3977 = vmatprep.subr.bf16.mxu0 0
    %3978 = vmatpush2.bf16.msra.mxu0 0
    %3979 = vmatprep.subr.bf16.mxu0 0
    %3980 = vmatpush2.bf16.msra.mxu0 0
    %3981 = vmatprep.subr.bf16.mxu0 0
    %3982 = vmatpush2.bf16.msra.mxu0 0
    %3983 = vmatprep.subr.bf16.mxu0 0
    %3984 = vmatpush2.bf16.msra.mxu0 0
    %3985 = vmatprep.subr.bf16.mxu0 0
    %3986 = vmatpush2.bf16.msra.mxu0 0
    %3987 = vmatprep.subr.bf16.mxu0 0
    %3988 = vmatpush2.bf16.msra.mxu0 0
    %3989 = vmatprep.mubr.bf16.mxu0 0
    %3990 = vmatmul.mubr.bf16.gmra.mxu0 %v1804
    %v3991 = vpop.f32.mrf.mxu0
    %v3992 = vadd.f32 %v3941, %v3991
    %v3993 = vpop.f32.mrf.mxu0
    %v3994 = vadd.f32 %v3943, %v3993
    %v3995 = vpop.f32.mrf.mxu0
    %v3996 = vadd.f32 %v3945, %v3995
    %v3997 = vpop.f32.mrf.mxu0
    %v3998 = vadd.f32 %v3947, %v3997
    %3999 = vmatprep.mubr.bf16.mxu0 0
    %4000 = vmatmul.mubr.bf16.gmra.mxu0 %v1807
    %v4001 = vpop.f32.mrf.mxu0
    %v4002 = vadd.f32 %v3951, %v4001
    %v4003 = vpop.f32.mrf.mxu0
    %v4004 = vadd.f32 %v3953, %v4003
    %v4005 = vpop.f32.mrf.mxu0
    %v4006 = vpop.f32.mrf.mxu0
    %4007 = vdwg.mxu0
    %4008 = vmatprep.subr.bf16.mxu0 %v3117
    %4009 = vmatpush1.bf16.msra.mxu0 %v3116
    %4010 = vmatprep.subr.bf16.mxu0 %v3105
    %4011 = vmatpush1.bf16.msra.mxu0 %v3104
    %4012 = vmatprep.subr.bf16.mxu0 %v3093
    %4013 = vmatpush1.bf16.msra.mxu0 %v3092
    %4014 = vmatprep.subr.bf16.mxu0 %v3081
    %4015 = vmatpush1.bf16.msra.mxu0 %v3080
    %4016 = vmatprep.subr.bf16.mxu0 %v3069
    %4017 = vmatpush1.bf16.msra.mxu0 %v3068
    %4018 = vmatprep.subr.bf16.mxu0 %v3057
    %4019 = vmatpush1.bf16.msra.mxu0 %v3056
    %4020 = vmatprep.subr.bf16.mxu0 %v3045
    %4021 = vmatpush1.bf16.msra.mxu0 %v3044
    %4022 = vmatprep.subr.bf16.mxu0 %v3033
    %4023 = vmatpush1.bf16.msra.mxu0 %v3032
    %4024 = vmatprep.subr.bf16.mxu0 %v3213
    %4025 = vmatpush2.bf16.msra.mxu0 %v3212
    %4026 = vmatprep.subr.bf16.mxu0 %v3201
    %4027 = vmatpush2.bf16.msra.mxu0 %v3200
    %4028 = vmatprep.subr.bf16.mxu0 %v3189
    %4029 = vmatpush2.bf16.msra.mxu0 %v3188
    %4030 = vmatprep.subr.bf16.mxu0 %v3177
    %4031 = vmatpush2.bf16.msra.mxu0 %v3176
    %4032 = vmatprep.subr.bf16.mxu0 %v3165
    %4033 = vmatpush2.bf16.msra.mxu0 %v3164
    %4034 = vmatprep.subr.bf16.mxu0 %v3153
    %4035 = vmatpush2.bf16.msra.mxu0 %v3152
    %4036 = vmatprep.subr.bf16.mxu0 %v3141
    %4037 = vmatpush2.bf16.msra.mxu0 %v3140
    %4038 = vmatprep.subr.bf16.mxu0 %v3129
    %4039 = vmatpush2.bf16.msra.mxu0 %v3128
    %4040 = vmatprep.mubr.bf16.mxu0 %v1803
    %4041 = vmatmul.mubr.bf16.gmra.mxu0 %v1802
    %v4042 = vpop.f32.mrf.mxu0
    %v4043 = vadd.f32 %v2135, %v4042
    %v4044 = vpop.f32.mrf.mxu0
    %v4045 = vadd.f32 %v2139, %v4044
    %v4046 = vpop.f32.mrf.mxu0
    %v4047 = vadd.f32 %v2135, %v4046
    %v4048 = vpop.f32.mrf.mxu0
    %v4049 = vadd.f32 %v2139, %v4048
    %4050 = vmatprep.mubr.bf16.mxu0 %v1806
    %4051 = vmatmul.mubr.bf16.gmra.mxu0 %v1805
    %v4052 = vpop.f32.mrf.mxu0
    %v4053 = vadd.f32 %v2135, %v4052
    %v4054 = vpop.f32.mrf.mxu0
    %v4055 = vadd.f32 %v2139, %v4054
    %v4056 = vpop.f32.mrf.mxu0
    %v4057 = vpop.f32.mrf.mxu0
    %4058 = vdwg.mxu0
    %4059 = vmatprep.subr.bf16.mxu0 %v3309
    %4060 = vmatpush1.bf16.msra.mxu0 %v3308
    %4061 = vmatprep.subr.bf16.mxu0 %v3297
    %4062 = vmatpush1.bf16.msra.mxu0 %v3296
    %4063 = vmatprep.subr.bf16.mxu0 %v3285
    %4064 = vmatpush1.bf16.msra.mxu0 %v3284
    %4065 = vmatprep.subr.bf16.mxu0 %v3273
    %4066 = vmatpush1.bf16.msra.mxu0 %v3272
    %4067 = vmatprep.subr.bf16.mxu0 %v3261
    %4068 = vmatpush1.bf16.msra.mxu0 %v3260
    %4069 = vmatprep.subr.bf16.mxu0 %v3249
    %4070 = vmatpush1.bf16.msra.mxu0 %v3248
    %4071 = vmatprep.subr.bf16.mxu0 %v3237
    %4072 = vmatpush1.bf16.msra.mxu0 %v3236
    %4073 = vmatprep.subr.bf16.mxu0 %v3225
    %4074 = vmatpush1.bf16.msra.mxu0 %v3224
    %4075 = vmatprep.subr.bf16.mxu0 0
    %4076 = vmatpush2.bf16.msra.mxu0 0
    %4077 = vmatprep.subr.bf16.mxu0 0
    %4078 = vmatpush2.bf16.msra.mxu0 0
    %4079 = vmatprep.subr.bf16.mxu0 0
    %4080 = vmatpush2.bf16.msra.mxu0 0
    %4081 = vmatprep.subr.bf16.mxu0 0
    %4082 = vmatpush2.bf16.msra.mxu0 0
    %4083 = vmatprep.subr.bf16.mxu0 0
    %4084 = vmatpush2.bf16.msra.mxu0 0
    %4085 = vmatprep.subr.bf16.mxu0 0
    %4086 = vmatpush2.bf16.msra.mxu0 0
    %4087 = vmatprep.subr.bf16.mxu0 0
    %4088 = vmatpush2.bf16.msra.mxu0 0
    %4089 = vmatprep.subr.bf16.mxu0 0
    %4090 = vmatpush2.bf16.msra.mxu0 0
    %4091 = vmatprep.mubr.bf16.mxu0 0
    %4092 = vmatmul.mubr.bf16.gmra.mxu0 %v1804
    %v4093 = vpop.f32.mrf.mxu0
    %v4094 = vadd.f32 %v4043, %v4093
    %v4095 = vpop.f32.mrf.mxu0
    %v4096 = vadd.f32 %v4045, %v4095
    %v4097 = vpop.f32.mrf.mxu0
    %v4098 = vadd.f32 %v4047, %v4097
    %v4099 = vpop.f32.mrf.mxu0
    %v4100 = vadd.f32 %v4049, %v4099
    %4101 = vmatprep.mubr.bf16.mxu0 0
    %4102 = vmatmul.mubr.bf16.gmra.mxu0 %v1807
    %v4103 = vpop.f32.mrf.mxu0
    %v4104 = vadd.f32 %v4053, %v4103
    %v4105 = vpop.f32.mrf.mxu0
    %v4106 = vadd.f32 %v4055, %v4105
    %v4107 = vpop.f32.mrf.mxu0
    %v4108 = vpop.f32.mrf.mxu0
    %4109 = vdwg.mxu0
    %4110 = vmatprep.subr.bf16.mxu0 %v3119
    %4111 = vmatpush1.bf16.msra.mxu0 %v3118
    %4112 = vmatprep.subr.bf16.mxu0 %v3107
    %4113 = vmatpush1.bf16.msra.mxu0 %v3106
    %4114 = vmatprep.subr.bf16.mxu0 %v3095
    %4115 = vmatpush1.bf16.msra.mxu0 %v3094
    %4116 = vmatprep.subr.bf16.mxu0 %v3083
    %4117 = vmatpush1.bf16.msra.mxu0 %v3082
    %4118 = vmatprep.subr.bf16.mxu0 %v3071
    %4119 = vmatpush1.bf16.msra.mxu0 %v3070
    %4120 = vmatprep.subr.bf16.mxu0 %v3059
    %4121 = vmatpush1.bf16.msra.mxu0 %v3058
    %4122 = vmatprep.subr.bf16.mxu0 %v3047
    %4123 = vmatpush1.bf16.msra.mxu0 %v3046
    %4124 = vmatprep.subr.bf16.mxu0 %v3035
    %4125 = vmatpush1.bf16.msra.mxu0 %v3034
    %4126 = vmatprep.subr.bf16.mxu0 %v3215
    %4127 = vmatpush2.bf16.msra.mxu0 %v3214
    %4128 = vmatprep.subr.bf16.mxu0 %v3203
    %4129 = vmatpush2.bf16.msra.mxu0 %v3202
    %4130 = vmatprep.subr.bf16.mxu0 %v3191
    %4131 = vmatpush2.bf16.msra.mxu0 %v3190
    %4132 = vmatprep.subr.bf16.mxu0 %v3179
    %4133 = vmatpush2.bf16.msra.mxu0 %v3178
    %4134 = vmatprep.subr.bf16.mxu0 %v3167
    %4135 = vmatpush2.bf16.msra.mxu0 %v3166
    %4136 = vmatprep.subr.bf16.mxu0 %v3155
    %4137 = vmatpush2.bf16.msra.mxu0 %v3154
    %4138 = vmatprep.subr.bf16.mxu0 %v3143
    %4139 = vmatpush2.bf16.msra.mxu0 %v3142
    %4140 = vmatprep.subr.bf16.mxu0 %v3131
    %4141 = vmatpush2.bf16.msra.mxu0 %v3130
    %4142 = vmatprep.mubr.bf16.mxu0 %v1803
    %4143 = vmatmul.mubr.bf16.gmra.mxu0 %v1802
    %v4144 = vpop.f32.mrf.mxu0
    %v4145 = vadd.f32 %v2143, %v4144
    %v4146 = vpop.f32.mrf.mxu0
    %v4147 = vadd.f32 %v2147, %v4146
    %v4148 = vpop.f32.mrf.mxu0
    %v4149 = vadd.f32 %v2143, %v4148
    %v4150 = vpop.f32.mrf.mxu0
    %v4151 = vadd.f32 %v2147, %v4150
    %4152 = vmatprep.mubr.bf16.mxu0 %v1806
    %4153 = vmatmul.mubr.bf16.gmra.mxu0 %v1805
    %v4154 = vpop.f32.mrf.mxu0
    %v4155 = vadd.f32 %v2143, %v4154
    %v4156 = vpop.f32.mrf.mxu0
    %v4157 = vadd.f32 %v2147, %v4156
    %v4158 = vpop.f32.mrf.mxu0
    %v4159 = vpop.f32.mrf.mxu0
    %4160 = vdwg.mxu0
    %4161 = vmatprep.subr.bf16.mxu0 %v3311
    %4162 = vmatpush1.bf16.msra.mxu0 %v3310
    %4163 = vmatprep.subr.bf16.mxu0 %v3299
    %4164 = vmatpush1.bf16.msra.mxu0 %v3298
    %4165 = vmatprep.subr.bf16.mxu0 %v3287
    %4166 = vmatpush1.bf16.msra.mxu0 %v3286
    %4167 = vmatprep.subr.bf16.mxu0 %v3275
    %4168 = vmatpush1.bf16.msra.mxu0 %v3274
    %4169 = vmatprep.subr.bf16.mxu0 %v3263
    %4170 = vmatpush1.bf16.msra.mxu0 %v3262
    %4171 = vmatprep.subr.bf16.mxu0 %v3251
    %4172 = vmatpush1.bf16.msra.mxu0 %v3250
    %4173 = vmatprep.subr.bf16.mxu0 %v3239
    %4174 = vmatpush1.bf16.msra.mxu0 %v3238
    %4175 = vmatprep.subr.bf16.mxu0 %v3227
    %4176 = vmatpush1.bf16.msra.mxu0 %v3226
    %4177 = vmatprep.subr.bf16.mxu0 0
    %4178 = vmatpush2.bf16.msra.mxu0 0
    %4179 = vmatprep.subr.bf16.mxu0 0
    %4180 = vmatpush2.bf16.msra.mxu0 0
    %4181 = vmatprep.subr.bf16.mxu0 0
    %4182 = vmatpush2.bf16.msra.mxu0 0
    %4183 = vmatprep.subr.bf16.mxu0 0
    %4184 = vmatpush2.bf16.msra.mxu0 0
    %4185 = vmatprep.subr.bf16.mxu0 0
    %4186 = vmatpush2.bf16.msra.mxu0 0
    %4187 = vmatprep.subr.bf16.mxu0 0
    %4188 = vmatpush2.bf16.msra.mxu0 0
    %4189 = vmatprep.subr.bf16.mxu0 0
    %4190 = vmatpush2.bf16.msra.mxu0 0
    %4191 = vmatprep.subr.bf16.mxu0 0
    %4192 = vmatpush2.bf16.msra.mxu0 0
    %4193 = vmatprep.mubr.bf16.mxu0 0
    %4194 = vmatmul.mubr.bf16.gmra.mxu0 %v1804
    %v4195 = vpop.f32.mrf.mxu0
    %v4196 = vadd.f32 %v4145, %v4195
    %v4197 = vpop.f32.mrf.mxu0
    %v4198 = vadd.f32 %v4147, %v4197
    %v4199 = vpop.f32.mrf.mxu0
    %v4200 = vadd.f32 %v4149, %v4199
    %v4201 = vpop.f32.mrf.mxu0
    %v4202 = vadd.f32 %v4151, %v4201
    %4203 = vmatprep.mubr.bf16.mxu0 0
    %4204 = vmatmul.mubr.bf16.gmra.mxu0 %v1807
    %v4205 = vpop.f32.mrf.mxu0
    %v4206 = vadd.f32 %v4155, %v4205
    %v4207 = vpop.f32.mrf.mxu0
    %v4208 = vadd.f32 %v4157, %v4207
    %v4209 = vpop.f32.mrf.mxu0
    %v4210 = vpop.f32.mrf.mxu0
    %4211 = vdwg.mxu0
    %v4212 = vld [vmem:[#allocation12] sm:$0xff]
    %v4213 = vld [vmem:[#allocation12 + $0x8] sm:$0xff]
    %v4214 = vld [vmem:[#allocation12 + $0x10] sm:$0xff]
    %v4215 = vld [vmem:[#allocation12 + $0x18] sm:$0xff]
    %v4216 = vld [vmem:[#allocation12 + $0x20] sm:$0xff]
    %v4217 = vld [vmem:[#allocation12 + $0x28] sm:$0xff]
    %v4218 = vld [vmem:[#allocation12 + $0x30] sm:$0xff]
    %v4219 = vld [vmem:[#allocation12 + $0x38] sm:$0xff]
    %v4220 = vld [vmem:[#allocation12 + $0x40] sm:$0xff]
    %v4221 = vld [vmem:[#allocation12 + $0x48] sm:$0xff]
    %v4222 = vld [vmem:[#allocation12 + $0x50] sm:$0xff]
    %v4223 = vld [vmem:[#allocation12 + $0x58] sm:$0xff]
    %v4224 = vld [vmem:[#allocation12 + $0x60] sm:$0xff]
    %v4225 = vld [vmem:[#allocation12 + $0x68] sm:$0xff]
    %v4226 = vld [vmem:[#allocation12 + $0x70] sm:$0xff]
    %v4227 = vld [vmem:[#allocation12 + $0x78] sm:$0xff]
    %v4228 = vld [vmem:[#allocation12 + $0x80] sm:$0xff]
    %v4229 = vld [vmem:[#allocation12 + $0x88] sm:$0xff]
    %v4230 = vld [vmem:[#allocation12 + $0x90] sm:$0xff]
    %v4231 = vld [vmem:[#allocation12 + $0x98] sm:$0xff]
    %v4232 = vld [vmem:[#allocation12 + $0xa0] sm:$0xff]
    %v4233 = vld [vmem:[#allocation12 + $0xa8] sm:$0xff]
    %v4234 = vld [vmem:[#allocation12 + $0xb0] sm:$0xff]
    %v4235 = vld [vmem:[#allocation12 + $0xb8] sm:$0xff]
    %v4236 = vld [vmem:[#allocation12 + $0xc0] sm:$0xff]
    %v4237 = vld [vmem:[#allocation12 + $0xc8] sm:$0xff]
    %v4238 = vld [vmem:[#allocation12 + $0xd0] sm:$0xff]
    %v4239 = vld [vmem:[#allocation12 + $0xd8] sm:$0xff]
    %v4240 = vld [vmem:[#allocation12 + $0xe0] sm:$0xff]
    %v4241 = vld [vmem:[#allocation12 + $0xe8] sm:$0xff]
    %v4242 = vld [vmem:[#allocation12 + $0xf0] sm:$0xff]
    %v4243 = vld [vmem:[#allocation12 + $0xf8] sm:$0xff]
    %v4244 = vld [vmem:[#allocation12 + $0x100] sm:$0xff]
    %v4245 = vld [vmem:[#allocation12 + $0x108] sm:$0xff]
    %v4246 = vld [vmem:[#allocation12 + $0x110] sm:$0xff]
    %v4247 = vld [vmem:[#allocation12 + $0x118] sm:$0xff]
    %v4248 = vld [vmem:[#allocation12 + $0x120] sm:$0xff]
    %v4249 = vld [vmem:[#allocation12 + $0x128] sm:$0xff]
    %v4250 = vld [vmem:[#allocation12 + $0x130] sm:$0xff]
    %v4251 = vld [vmem:[#allocation12 + $0x138] sm:$0xff]
    %v4252 = vld [vmem:[#allocation12 + $0x140] sm:$0xff]
    %v4253 = vld [vmem:[#allocation12 + $0x148] sm:$0xff]
    %v4254 = vld [vmem:[#allocation12 + $0x150] sm:$0xff]
    %v4255 = vld [vmem:[#allocation12 + $0x158] sm:$0xff]
    %v4256 = vld [vmem:[#allocation12 + $0x160] sm:$0xff]
    %v4257 = vld [vmem:[#allocation12 + $0x168] sm:$0xff]
    %v4258 = vld [vmem:[#allocation12 + $0x170] sm:$0xff]
    %v4259 = vld [vmem:[#allocation12 + $0x178] sm:$0xff]
    %v4260 = vld [vmem:[#allocation12 + $0x180] sm:$0xff]
    %v4261 = vld [vmem:[#allocation12 + $0x188] sm:$0xff]
    %v4262 = vld [vmem:[#allocation12 + $0x190] sm:$0xff]
    %v4263 = vld [vmem:[#allocation12 + $0x198] sm:$0xff]
    %v4264 = vld [vmem:[#allocation12 + $0x1a0] sm:$0xff]
    %v4265 = vld [vmem:[#allocation12 + $0x1a8] sm:$0xff]
    %v4266 = vld [vmem:[#allocation12 + $0x1b0] sm:$0xff]
    %v4267 = vld [vmem:[#allocation12 + $0x1b8] sm:$0xff]
    %v4268 = vld [vmem:[#allocation12 + $0x1c0] sm:$0xff]
    %v4269 = vld [vmem:[#allocation12 + $0x1c8] sm:$0xff]
    %v4270 = vld [vmem:[#allocation12 + $0x1d0] sm:$0xff]
    %v4271 = vld [vmem:[#allocation12 + $0x1d8] sm:$0xff]
    %v4272 = vld [vmem:[#allocation12 + $0x1e0] sm:$0xff]
    %v4273 = vld [vmem:[#allocation12 + $0x1e8] sm:$0xff]
    %v4274 = vld [vmem:[#allocation12 + $0x1f0] sm:$0xff]
    %v4275 = vld [vmem:[#allocation12 + $0x1f8] sm:$0xff]
    %v4276 = vld [vmem:[#allocation12 + $0x200] sm:$0xff]
    %v4277 = vld [vmem:[#allocation12 + $0x208] sm:$0xff]
    %v4278 = vld [vmem:[#allocation12 + $0x210] sm:$0xff]
    %v4279 = vld [vmem:[#allocation12 + $0x218] sm:$0xff]
    %v4280 = vld [vmem:[#allocation12 + $0x220] sm:$0xff]
    %v4281 = vld [vmem:[#allocation12 + $0x228] sm:$0xff]
    %v4282 = vld [vmem:[#allocation12 + $0x230] sm:$0xff]
    %v4283 = vld [vmem:[#allocation12 + $0x238] sm:$0xff]
    %v4284 = vld [vmem:[#allocation12 + $0x240] sm:$0xff]
    %v4285 = vld [vmem:[#allocation12 + $0x248] sm:$0xff]
    %v4286 = vld [vmem:[#allocation12 + $0x250] sm:$0xff]
    %v4287 = vld [vmem:[#allocation12 + $0x258] sm:$0xff]
    %v4288 = vld [vmem:[#allocation12 + $0x260] sm:$0xff]
    %v4289 = vld [vmem:[#allocation12 + $0x268] sm:$0xff]
    %v4290 = vld [vmem:[#allocation12 + $0x270] sm:$0xff]
    %v4291 = vld [vmem:[#allocation12 + $0x278] sm:$0xff]
    %v4292 = vld [vmem:[#allocation12 + $0x280] sm:$0xff]
    %v4293 = vld [vmem:[#allocation12 + $0x288] sm:$0xff]
    %v4294 = vld [vmem:[#allocation12 + $0x290] sm:$0xff]
    %v4295 = vld [vmem:[#allocation12 + $0x298] sm:$0xff]
    %v4296 = vld [vmem:[#allocation12 + $0x2a0] sm:$0xff]
    %v4297 = vld [vmem:[#allocation12 + $0x2a8] sm:$0xff]
    %v4298 = vld [vmem:[#allocation12 + $0x2b0] sm:$0xff]
    %v4299 = vld [vmem:[#allocation12 + $0x2b8] sm:$0xff]
    %v4300 = vld [vmem:[#allocation12 + $0x2c0] sm:$0xff]
    %v4301 = vld [vmem:[#allocation12 + $0x2c8] sm:$0xff]
    %v4302 = vld [vmem:[#allocation12 + $0x2d0] sm:$0xff]
    %v4303 = vld [vmem:[#allocation12 + $0x2d8] sm:$0xff]
    %v4304 = vld [vmem:[#allocation12 + $0x2e0] sm:$0xff]
    %v4305 = vld [vmem:[#allocation12 + $0x2e8] sm:$0xff]
    %v4306 = vld [vmem:[#allocation12 + $0x2f0] sm:$0xff]
    %v4307 = vld [vmem:[#allocation12 + $0x2f8] sm:$0xff]
    %v4308 = vld [vmem:[#allocation12 + $0x300] sm:$0xff]
    %v4309 = vld [vmem:[#allocation12 + $0x308] sm:$0xff]
    %v4310 = vld [vmem:[#allocation12 + $0x310] sm:$0xff]
    %v4311 = vld [vmem:[#allocation12 + $0x318] sm:$0xff]
    %v4312 = vld [vmem:[#allocation12 + $0x320] sm:$0xff]
    %v4313 = vld [vmem:[#allocation12 + $0x328] sm:$0xff]
    %v4314 = vld [vmem:[#allocation12 + $0x330] sm:$0xff]
    %v4315 = vld [vmem:[#allocation12 + $0x338] sm:$0xff]
    %v4316 = vld [vmem:[#allocation12 + $0x340] sm:$0xff]
    %v4317 = vld [vmem:[#allocation12 + $0x348] sm:$0xff]
    %v4318 = vld [vmem:[#allocation12 + $0x350] sm:$0xff]
    %v4319 = vld [vmem:[#allocation12 + $0x358] sm:$0xff]
    %v4320 = vld [vmem:[#allocation12 + $0x360] sm:$0xff]
    %v4321 = vld [vmem:[#allocation12 + $0x368] sm:$0xff]
    %v4322 = vld [vmem:[#allocation12 + $0x370] sm:$0xff]
    %v4323 = vld [vmem:[#allocation12 + $0x378] sm:$0xff]
    %v4324 = vld [vmem:[#allocation12 + $0x380] sm:$0xff]
    %v4325 = vld [vmem:[#allocation12 + $0x388] sm:$0xff]
    %v4326 = vld [vmem:[#allocation12 + $0x390] sm:$0xff]
    %v4327 = vld [vmem:[#allocation12 + $0x398] sm:$0xff]
    %v4328 = vld [vmem:[#allocation12 + $0x3a0] sm:$0xff]
    %v4329 = vld [vmem:[#allocation12 + $0x3a8] sm:$0xff]
    %v4330 = vld [vmem:[#allocation12 + $0x3b0] sm:$0xff]
    %v4331 = vld [vmem:[#allocation12 + $0x3b8] sm:$0xff]
    %v4332 = vld [vmem:[#allocation12 + $0x3c0] sm:$0xff]
    %v4333 = vld [vmem:[#allocation12 + $0x3c8] sm:$0xff]
    %v4334 = vld [vmem:[#allocation12 + $0x3d0] sm:$0xff]
    %v4335 = vld [vmem:[#allocation12 + $0x3d8] sm:$0xff]
    %v4336 = vld [vmem:[#allocation12 + $0x3e0] sm:$0xff]
    %v4337 = vld [vmem:[#allocation12 + $0x3e8] sm:$0xff]
    %v4338 = vld [vmem:[#allocation12 + $0x3f0] sm:$0xff]
    %v4339 = vld [vmem:[#allocation12 + $0x3f8] sm:$0xff]
    %v4340 = vld [vmem:[#allocation12 + $0x400] sm:$0xff]
    %v4341 = vld [vmem:[#allocation12 + $0x408] sm:$0xff]
    %v4342 = vld [vmem:[#allocation12 + $0x410] sm:$0xff]
    %v4343 = vld [vmem:[#allocation12 + $0x418] sm:$0xff]
    %v4344 = vld [vmem:[#allocation12 + $0x420] sm:$0xff]
    %v4345 = vld [vmem:[#allocation12 + $0x428] sm:$0xff]
    %v4346 = vld [vmem:[#allocation12 + $0x430] sm:$0xff]
    %v4347 = vld [vmem:[#allocation12 + $0x438] sm:$0xff]
    %v4348 = vld [vmem:[#allocation12 + $0x440] sm:$0xff]
    %v4349 = vld [vmem:[#allocation12 + $0x448] sm:$0xff]
    %v4350 = vld [vmem:[#allocation12 + $0x450] sm:$0xff]
    %v4351 = vld [vmem:[#allocation12 + $0x458] sm:$0xff]
    %v4352 = vld [vmem:[#allocation12 + $0x460] sm:$0xff]
    %v4353 = vld [vmem:[#allocation12 + $0x468] sm:$0xff]
    %v4354 = vld [vmem:[#allocation12 + $0x470] sm:$0xff]
    %v4355 = vld [vmem:[#allocation12 + $0x478] sm:$0xff]
    %v4356 = vld [vmem:[#allocation12 + $0x480] sm:$0xff]
    %v4357 = vld [vmem:[#allocation12 + $0x488] sm:$0xff]
    %v4358 = vld [vmem:[#allocation12 + $0x490] sm:$0xff]
    %v4359 = vld [vmem:[#allocation12 + $0x498] sm:$0xff]
    %v4360 = vld [vmem:[#allocation12 + $0x4a0] sm:$0xff]
    %v4361 = vld [vmem:[#allocation12 + $0x4a8] sm:$0xff]
    %v4362 = vld [vmem:[#allocation12 + $0x4b0] sm:$0xff]
    %v4363 = vld [vmem:[#allocation12 + $0x4b8] sm:$0xff]
    %v4364 = vld [vmem:[#allocation12 + $0x4c0] sm:$0xff]
    %v4365 = vld [vmem:[#allocation12 + $0x4c8] sm:$0xff]
    %v4366 = vld [vmem:[#allocation12 + $0x4d0] sm:$0xff]
    %v4367 = vld [vmem:[#allocation12 + $0x4d8] sm:$0xff]
    %v4368 = vld [vmem:[#allocation12 + $0x4e0] sm:$0xff]
    %v4369 = vld [vmem:[#allocation12 + $0x4e8] sm:$0xff]
    %v4370 = vld [vmem:[#allocation12 + $0x4f0] sm:$0xff]
    %v4371 = vld [vmem:[#allocation12 + $0x4f8] sm:$0xff]
    %v4372 = vld [vmem:[#allocation12 + $0x500] sm:$0xff]
    %v4373 = vld [vmem:[#allocation12 + $0x508] sm:$0xff]
    %v4374 = vld [vmem:[#allocation12 + $0x510] sm:$0xff]
    %v4375 = vld [vmem:[#allocation12 + $0x518] sm:$0xff]
    %v4376 = vld [vmem:[#allocation12 + $0x520] sm:$0xff]
    %v4377 = vld [vmem:[#allocation12 + $0x528] sm:$0xff]
    %v4378 = vld [vmem:[#allocation12 + $0x530] sm:$0xff]
    %v4379 = vld [vmem:[#allocation12 + $0x538] sm:$0xff]
    %v4380 = vld [vmem:[#allocation12 + $0x540] sm:$0xff]
    %v4381 = vld [vmem:[#allocation12 + $0x548] sm:$0xff]
    %v4382 = vld [vmem:[#allocation12 + $0x550] sm:$0xff]
    %v4383 = vld [vmem:[#allocation12 + $0x558] sm:$0xff]
    %v4384 = vld [vmem:[#allocation12 + $0x560] sm:$0xff]
    %v4385 = vld [vmem:[#allocation12 + $0x568] sm:$0xff]
    %v4386 = vld [vmem:[#allocation12 + $0x570] sm:$0xff]
    %v4387 = vld [vmem:[#allocation12 + $0x578] sm:$0xff]
    %v4388 = vld [vmem:[#allocation12 + $0x580] sm:$0xff]
    %v4389 = vld [vmem:[#allocation12 + $0x588] sm:$0xff]
    %v4390 = vld [vmem:[#allocation12 + $0x590] sm:$0xff]
    %v4391 = vld [vmem:[#allocation12 + $0x598] sm:$0xff]
    %v4392 = vld [vmem:[#allocation12 + $0x5a0] sm:$0xff]
    %v4393 = vld [vmem:[#allocation12 + $0x5a8] sm:$0xff]
    %v4394 = vld [vmem:[#allocation12 + $0x5b0] sm:$0xff]
    %v4395 = vld [vmem:[#allocation12 + $0x5b8] sm:$0xff]
    %v4396 = vld [vmem:[#allocation12 + $0x5c0] sm:$0xff]
    %v4397 = vld [vmem:[#allocation12 + $0x5c8] sm:$0xff]
    %v4398 = vld [vmem:[#allocation12 + $0x5d0] sm:$0xff]
    %v4399 = vld [vmem:[#allocation12 + $0x5d8] sm:$0xff]
    %v4400 = vld [vmem:[#allocation12 + $0x5e0] sm:$0xff]
    %v4401 = vld [vmem:[#allocation12 + $0x5e8] sm:$0xff]
    %v4402 = vld [vmem:[#allocation12 + $0x5f0] sm:$0xff]
    %v4403 = vld [vmem:[#allocation12 + $0x5f8] sm:$0xff]
    %v4404 = vld [vmem:[#allocation12 + $0x600] sm:$0xff]
    %v4405 = vld [vmem:[#allocation12 + $0x608] sm:$0xff]
    %v4406 = vld [vmem:[#allocation12 + $0x610] sm:$0xff]
    %v4407 = vld [vmem:[#allocation12 + $0x618] sm:$0xff]
    %v4408 = vld [vmem:[#allocation12 + $0x620] sm:$0xff]
    %v4409 = vld [vmem:[#allocation12 + $0x628] sm:$0xff]
    %v4410 = vld [vmem:[#allocation12 + $0x630] sm:$0xff]
    %v4411 = vld [vmem:[#allocation12 + $0x638] sm:$0xff]
    %v4412 = vld [vmem:[#allocation12 + $0x640] sm:$0xff]
    %v4413 = vld [vmem:[#allocation12 + $0x648] sm:$0xff]
    %v4414 = vld [vmem:[#allocation12 + $0x650] sm:$0xff]
    %v4415 = vld [vmem:[#allocation12 + $0x658] sm:$0xff]
    %v4416 = vld [vmem:[#allocation12 + $0x660] sm:$0xff]
    %v4417 = vld [vmem:[#allocation12 + $0x668] sm:$0xff]
    %v4418 = vld [vmem:[#allocation12 + $0x670] sm:$0xff]
    %v4419 = vld [vmem:[#allocation12 + $0x678] sm:$0xff]
    %v4420 = vld [vmem:[#allocation12 + $0x680] sm:$0xff]
    %v4421 = vld [vmem:[#allocation12 + $0x688] sm:$0xff]
    %v4422 = vld [vmem:[#allocation12 + $0x690] sm:$0xff]
    %v4423 = vld [vmem:[#allocation12 + $0x698] sm:$0xff]
    %v4424 = vld [vmem:[#allocation12 + $0x6a0] sm:$0xff]
    %v4425 = vld [vmem:[#allocation12 + $0x6a8] sm:$0xff]
    %v4426 = vld [vmem:[#allocation12 + $0x6b0] sm:$0xff]
    %v4427 = vld [vmem:[#allocation12 + $0x6b8] sm:$0xff]
    %v4428 = vld [vmem:[#allocation12 + $0x6c0] sm:$0xff]
    %v4429 = vld [vmem:[#allocation12 + $0x6c8] sm:$0xff]
    %v4430 = vld [vmem:[#allocation12 + $0x6d0] sm:$0xff]
    %v4431 = vld [vmem:[#allocation12 + $0x6d8] sm:$0xff]
    %v4432 = vld [vmem:[#allocation12 + $0x6e0] sm:$0xff]
    %v4433 = vld [vmem:[#allocation12 + $0x6e8] sm:$0xff]
    %v4434 = vld [vmem:[#allocation12 + $0x6f0] sm:$0xff]
    %v4435 = vld [vmem:[#allocation12 + $0x6f8] sm:$0xff]
    %v4436 = vld [vmem:[#allocation12 + $0x700] sm:$0xff]
    %v4437 = vld [vmem:[#allocation12 + $0x708] sm:$0xff]
    %v4438 = vld [vmem:[#allocation12 + $0x710] sm:$0xff]
    %v4439 = vld [vmem:[#allocation12 + $0x718] sm:$0xff]
    %v4440 = vld [vmem:[#allocation12 + $0x720] sm:$0xff]
    %v4441 = vld [vmem:[#allocation12 + $0x728] sm:$0xff]
    %v4442 = vld [vmem:[#allocation12 + $0x730] sm:$0xff]
    %v4443 = vld [vmem:[#allocation12 + $0x738] sm:$0xff]
    %v4444 = vld [vmem:[#allocation12 + $0x740] sm:$0xff]
    %v4445 = vld [vmem:[#allocation12 + $0x748] sm:$0xff]
    %v4446 = vld [vmem:[#allocation12 + $0x750] sm:$0xff]
    %v4447 = vld [vmem:[#allocation12 + $0x758] sm:$0xff]
    %v4448 = vld [vmem:[#allocation12 + $0x760] sm:$0xff]
    %v4449 = vld [vmem:[#allocation12 + $0x768] sm:$0xff]
    %v4450 = vld [vmem:[#allocation12 + $0x770] sm:$0xff]
    %v4451 = vld [vmem:[#allocation12 + $0x778] sm:$0xff]
    %v4452 = vld [vmem:[#allocation12 + $0x780] sm:$0xff]
    %v4453 = vld [vmem:[#allocation12 + $0x788] sm:$0xff]
    %v4454 = vld [vmem:[#allocation12 + $0x790] sm:$0xff]
    %v4455 = vld [vmem:[#allocation12 + $0x798] sm:$0xff]
    %v4456 = vld [vmem:[#allocation12 + $0x7a0] sm:$0xff]
    %v4457 = vld [vmem:[#allocation12 + $0x7a8] sm:$0xff]
    %v4458 = vld [vmem:[#allocation12 + $0x7b0] sm:$0xff]
    %v4459 = vld [vmem:[#allocation12 + $0x7b8] sm:$0xff]
    %v4460 = vld [vmem:[#allocation12 + $0x7c0] sm:$0xff]
    %v4461 = vld [vmem:[#allocation12 + $0x7c8] sm:$0xff]
    %v4462 = vld [vmem:[#allocation12 + $0x7d0] sm:$0xff]
    %v4463 = vld [vmem:[#allocation12 + $0x7d8] sm:$0xff]
    %v4464 = vld [vmem:[#allocation12 + $0x7e0] sm:$0xff]
    %v4465 = vld [vmem:[#allocation12 + $0x7e8] sm:$0xff]
    %v4466 = vld [vmem:[#allocation12 + $0x7f0] sm:$0xff]
    %v4467 = vld [vmem:[#allocation12 + $0x7f8] sm:$0xff]
    %v4468 = vld [vmem:[#allocation12 + $0x800] sm:$0xff]
    %v4469 = vld [vmem:[#allocation12 + $0x808] sm:$0xff]
    %v4470 = vld [vmem:[#allocation12 + $0x810] sm:$0xff]
    %v4471 = vld [vmem:[#allocation12 + $0x818] sm:$0xff]
    %v4472 = vld [vmem:[#allocation12 + $0x820] sm:$0xff]
    %v4473 = vld [vmem:[#allocation12 + $0x828] sm:$0xff]
    %v4474 = vld [vmem:[#allocation12 + $0x830] sm:$0xff]
    %v4475 = vld [vmem:[#allocation12 + $0x838] sm:$0xff]
    %v4476 = vld [vmem:[#allocation12 + $0x840] sm:$0xff]
    %v4477 = vld [vmem:[#allocation12 + $0x848] sm:$0xff]
    %v4478 = vld [vmem:[#allocation12 + $0x850] sm:$0xff]
    %v4479 = vld [vmem:[#allocation12 + $0x858] sm:$0xff]
    %v4480 = vld [vmem:[#allocation12 + $0x860] sm:$0xff]
    %v4481 = vld [vmem:[#allocation12 + $0x868] sm:$0xff]
    %v4482 = vld [vmem:[#allocation12 + $0x870] sm:$0xff]
    %v4483 = vld [vmem:[#allocation12 + $0x878] sm:$0xff]
    %v4484 = vld [vmem:[#allocation12 + $0x880] sm:$0xff]
    %v4485 = vld [vmem:[#allocation12 + $0x888] sm:$0xff]
    %v4486 = vld [vmem:[#allocation12 + $0x890] sm:$0xff]
    %v4487 = vld [vmem:[#allocation12 + $0x898] sm:$0xff]
    %v4488 = vld [vmem:[#allocation12 + $0x8a0] sm:$0xff]
    %v4489 = vld [vmem:[#allocation12 + $0x8a8] sm:$0xff]
    %v4490 = vld [vmem:[#allocation12 + $0x8b0] sm:$0xff]
    %v4491 = vld [vmem:[#allocation12 + $0x8b8] sm:$0xff]
    %v4492 = vld [vmem:[#allocation12 + $0x8c0] sm:$0xff]
    %v4493 = vld [vmem:[#allocation12 + $0x8c8] sm:$0xff]
    %v4494 = vld [vmem:[#allocation12 + $0x8d0] sm:$0xff]
    %v4495 = vld [vmem:[#allocation12 + $0x8d8] sm:$0xff]
    %v4496 = vld [vmem:[#allocation12 + $0x8e0] sm:$0xff]
    %v4497 = vld [vmem:[#allocation12 + $0x8e8] sm:$0xff]
    %v4498 = vld [vmem:[#allocation12 + $0x8f0] sm:$0xff]
    %v4499 = vld [vmem:[#allocation12 + $0x8f8] sm:$0xff]
    %v4500 = vld [vmem:[#allocation12 + $0x900] sm:$0xff]
    %v4501 = vld [vmem:[#allocation12 + $0x908] sm:$0xff]
    %v4502 = vld [vmem:[#allocation12 + $0x910] sm:$0xff]
    %v4503 = vld [vmem:[#allocation12 + $0x918] sm:$0xff]
    %v4504 = vld [vmem:[#allocation12 + $0x920] sm:$0xff]
    %v4505 = vld [vmem:[#allocation12 + $0x928] sm:$0xff]
    %v4506 = vld [vmem:[#allocation12 + $0x930] sm:$0xff]
    %v4507 = vld [vmem:[#allocation12 + $0x938] sm:$0xff]
    %v4508 = vld [vmem:[#allocation12 + $0x940] sm:$0xff]
    %v4509 = vld [vmem:[#allocation12 + $0x948] sm:$0xff]
    %v4510 = vld [vmem:[#allocation12 + $0x950] sm:$0xff]
    %v4511 = vld [vmem:[#allocation12 + $0x958] sm:$0xff]
    %v4512 = vld [vmem:[#allocation12 + $0x960] sm:$0xff]
    %v4513 = vld [vmem:[#allocation12 + $0x968] sm:$0xff]
    %v4514 = vld [vmem:[#allocation12 + $0x970] sm:$0xff]
    %v4515 = vld [vmem:[#allocation12 + $0x978] sm:$0xff]
    %v4516 = vld [vmem:[#allocation12 + $0x980] sm:$0xff]
    %v4517 = vld [vmem:[#allocation12 + $0x988] sm:$0xff]
    %v4518 = vld [vmem:[#allocation12 + $0x990] sm:$0xff]
    %v4519 = vld [vmem:[#allocation12 + $0x998] sm:$0xff]
    %v4520 = vld [vmem:[#allocation12 + $0x9a0] sm:$0xff]
    %v4521 = vld [vmem:[#allocation12 + $0x9a8] sm:$0xff]
    %v4522 = vld [vmem:[#allocation12 + $0x9b0] sm:$0xff]
    %v4523 = vld [vmem:[#allocation12 + $0x9b8] sm:$0xff]
    %v4524 = vld [vmem:[#allocation12 + $0x9c0] sm:$0xff]
    %v4525 = vld [vmem:[#allocation12 + $0x9c8] sm:$0xff]
    %v4526 = vld [vmem:[#allocation12 + $0x9d0] sm:$0xff]
    %v4527 = vld [vmem:[#allocation12 + $0x9d8] sm:$0xff]
    %v4528 = vld [vmem:[#allocation12 + $0x9e0] sm:$0xff]
    %v4529 = vld [vmem:[#allocation12 + $0x9e8] sm:$0xff]
    %v4530 = vld [vmem:[#allocation12 + $0x9f0] sm:$0xff]
    %v4531 = vld [vmem:[#allocation12 + $0x9f8] sm:$0xff]
    %v4532 = vld [vmem:[#allocation12 + $0xa00] sm:$0xff]
    %v4533 = vld [vmem:[#allocation12 + $0xa08] sm:$0xff]
    %v4534 = vld [vmem:[#allocation12 + $0xa10] sm:$0xff]
    %v4535 = vld [vmem:[#allocation12 + $0xa18] sm:$0xff]
    %v4536 = vld [vmem:[#allocation12 + $0xa20] sm:$0xff]
    %v4537 = vld [vmem:[#allocation12 + $0xa28] sm:$0xff]
    %v4538 = vld [vmem:[#allocation12 + $0xa30] sm:$0xff]
    %v4539 = vld [vmem:[#allocation12 + $0xa38] sm:$0xff]
    %v4540 = vld [vmem:[#allocation12 + $0xa40] sm:$0xff]
    %v4541 = vld [vmem:[#allocation12 + $0xa48] sm:$0xff]
    %v4542 = vld [vmem:[#allocation12 + $0xa50] sm:$0xff]
    %v4543 = vld [vmem:[#allocation12 + $0xa58] sm:$0xff]
    %v4544 = vld [vmem:[#allocation12 + $0xa60] sm:$0xff]
    %v4545 = vld [vmem:[#allocation12 + $0xa68] sm:$0xff]
    %v4546 = vld [vmem:[#allocation12 + $0xa70] sm:$0xff]
    %v4547 = vld [vmem:[#allocation12 + $0xa78] sm:$0xff]
    %v4548 = vld [vmem:[#allocation12 + $0xa80] sm:$0xff]
    %v4549 = vld [vmem:[#allocation12 + $0xa88] sm:$0xff]
    %v4550 = vld [vmem:[#allocation12 + $0xa90] sm:$0xff]
    %v4551 = vld [vmem:[#allocation12 + $0xa98] sm:$0xff]
    %v4552 = vld [vmem:[#allocation12 + $0xaa0] sm:$0xff]
    %v4553 = vld [vmem:[#allocation12 + $0xaa8] sm:$0xff]
    %v4554 = vld [vmem:[#allocation12 + $0xab0] sm:$0xff]
    %v4555 = vld [vmem:[#allocation12 + $0xab8] sm:$0xff]
    %v4556 = vld [vmem:[#allocation12 + $0xac0] sm:$0xff]
    %v4557 = vld [vmem:[#allocation12 + $0xac8] sm:$0xff]
    %v4558 = vld [vmem:[#allocation12 + $0xad0] sm:$0xff]
    %v4559 = vld [vmem:[#allocation12 + $0xad8] sm:$0xff]
    %v4560 = vld [vmem:[#allocation12 + $0xae0] sm:$0xff]
    %v4561 = vld [vmem:[#allocation12 + $0xae8] sm:$0xff]
    %v4562 = vld [vmem:[#allocation12 + $0xaf0] sm:$0xff]
    %v4563 = vld [vmem:[#allocation12 + $0xaf8] sm:$0xff]
    %v4564 = vld [vmem:[#allocation12 + $0xb00] sm:$0xff]
    %v4565 = vld [vmem:[#allocation12 + $0xb08] sm:$0xff]
    %v4566 = vld [vmem:[#allocation12 + $0xb10] sm:$0xff]
    %v4567 = vld [vmem:[#allocation12 + $0xb18] sm:$0xff]
    %v4568 = vld [vmem:[#allocation12 + $0xb20] sm:$0xff]
    %v4569 = vld [vmem:[#allocation12 + $0xb28] sm:$0xff]
    %v4570 = vld [vmem:[#allocation12 + $0xb30] sm:$0xff]
    %v4571 = vld [vmem:[#allocation12 + $0xb38] sm:$0xff]
    %v4572 = vld [vmem:[#allocation12 + $0xb40] sm:$0xff]
    %v4573 = vld [vmem:[#allocation12 + $0xb48] sm:$0xff]
    %v4574 = vld [vmem:[#allocation12 + $0xb50] sm:$0xff]
    %v4575 = vld [vmem:[#allocation12 + $0xb58] sm:$0xff]
    %v4576 = vld [vmem:[#allocation12 + $0xb60] sm:$0xff]
    %v4577 = vld [vmem:[#allocation12 + $0xb68] sm:$0xff]
    %v4578 = vld [vmem:[#allocation12 + $0xb70] sm:$0xff]
    %v4579 = vld [vmem:[#allocation12 + $0xb78] sm:$0xff]
    %v4580 = vld [vmem:[#allocation12 + $0xb80] sm:$0xff]
    %v4581 = vld [vmem:[#allocation12 + $0xb88] sm:$0xff]
    %v4582 = vld [vmem:[#allocation12 + $0xb90] sm:$0xff]
    %v4583 = vld [vmem:[#allocation12 + $0xb98] sm:$0xff]
    %v4584 = vld [vmem:[#allocation12 + $0xba0] sm:$0xff]
    %v4585 = vld [vmem:[#allocation12 + $0xba8] sm:$0xff]
    %v4586 = vld [vmem:[#allocation12 + $0xbb0] sm:$0xff]
    %v4587 = vld [vmem:[#allocation12 + $0xbb8] sm:$0xff]
    %v4588 = vld [vmem:[#allocation12 + $0xbc0] sm:$0xff]
    %v4589 = vld [vmem:[#allocation12 + $0xbc8] sm:$0xff]
    %v4590 = vld [vmem:[#allocation12 + $0xbd0] sm:$0xff]
    %v4591 = vld [vmem:[#allocation12 + $0xbd8] sm:$0xff]
    %v4592 = vld [vmem:[#allocation12 + $0xbe0] sm:$0xff]
    %v4593 = vld [vmem:[#allocation12 + $0xbe8] sm:$0xff]
    %v4594 = vld [vmem:[#allocation12 + $0xbf0] sm:$0xff]
    %v4595 = vld [vmem:[#allocation12 + $0xbf8] sm:$0xff]
    %v4596 = vld [vmem:[#allocation15] sm:$0xff]
    %v4597 = vld [vmem:[#allocation15 + $0x8] sm:$0xf]
    %v4598 = vld [vmem:[#allocation4] sm:$0xff]
    %v4599 = vld [vmem:[#allocation4 + $0x8] sm:$0xff]
    %v4600 = vld [vmem:[#allocation4 + $0x10] sm:$0xff]
    %v4601 = vld [vmem:[#allocation4 + $0x18] sm:$0xff]
    %v4602 = vpack.c.bf16 %v4598, %v4598
    %v4603 = vpack.c.bf16 %v4599, %v4599
    %v4604 = vpack.c.bf16 %v4600, %v4600
    %v4605 = vpack.c.bf16 %v4601, %v4601
    %v4608 = vlaneseq
    %v4609 = vshrl.u32 %v4608, 7
    %v4610 = vsub.s32 0, %v4609
    %v4611 = vrot.slane %v4596, %v4610
    %v4612 = vlaneseq
    %v4613 = vshrl.u32 %v4612, 7
    %v4614 = vsub.s32 1, %v4613
    %v4615 = vrot.slane %v4596, %v4614
    %v4616 = vlaneseq
    %v4617 = vshrl.u32 %v4616, 7
    %v4618 = vsub.s32 2, %v4617
    %v4619 = vrot.slane %v4596, %v4618
    %v4620 = vlaneseq
    %v4621 = vshrl.u32 %v4620, 7
    %v4622 = vsub.s32 3, %v4621
    %v4623 = vrot.slane %v4596, %v4622
    %v4624 = vlaneseq
    %v4625 = vshrl.u32 %v4624, 7
    %v4626 = vsub.s32 4, %v4625
    %v4627 = vrot.slane %v4596, %v4626
    %v4628 = vlaneseq
    %v4629 = vshrl.u32 %v4628, 7
    %v4630 = vsub.s32 5, %v4629
    %v4631 = vrot.slane %v4596, %v4630
    %v4632 = vlaneseq
    %v4633 = vshrl.u32 %v4632, 7
    %v4634 = vsub.s32 6, %v4633
    %v4635 = vrot.slane %v4596, %v4634
    %v4636 = vlaneseq
    %v4637 = vshrl.u32 %v4636, 7
    %v4638 = vsub.s32 7, %v4637
    %v4639 = vrot.slane %v4596, %v4638
    %v4640 = vlaneseq
    %v4641 = vshrl.u32 %v4640, 7
    %v4642 = vsub.s32 0, %v4641
    %v4643 = vrot.slane %v4597, %v4642
    %v4644 = vlaneseq
    %v4645 = vshrl.u32 %v4644, 7
    %v4646 = vsub.s32 1, %v4645
    %v4647 = vrot.slane %v4597, %v4646
    %v4648 = vlaneseq
    %v4649 = vshrl.u32 %v4648, 7
    %v4650 = vsub.s32 2, %v4649
    %v4651 = vrot.slane %v4597, %v4650
    %v4652 = vlaneseq
    %v4653 = vshrl.u32 %v4652, 7
    %v4654 = vsub.s32 3, %v4653
    %v4655 = vrot.slane %v4597, %v4654
    %v5052 = vunpack.c.l.b16 %v4212
    %v5053 = vunpack.c.h.b16 %v4212
    %v5054 = vunpack.c.l.b16 %v4213
    %v5055 = vunpack.c.h.b16 %v4213
    %v5056 = vunpack.c.l.b16 %v4214
    %v5057 = vunpack.c.h.b16 %v4214
    %v5058 = vunpack.c.l.b16 %v4215
    %v5059 = vunpack.c.h.b16 %v4215
    %v5060 = vunpack.c.l.b16 %v4216
    %v5061 = vunpack.c.h.b16 %v4216
    %v5062 = vunpack.c.l.b16 %v4217
    %v5063 = vunpack.c.h.b16 %v4217
    %v5064 = vunpack.c.l.b16 %v4218
    %v5065 = vunpack.c.h.b16 %v4218
    %v5066 = vunpack.c.l.b16 %v4219
    %v5067 = vunpack.c.h.b16 %v4219
    %v5068 = vunpack.c.l.b16 %v4220
    %v5069 = vunpack.c.h.b16 %v4220
    %v5070 = vunpack.c.l.b16 %v4221
    %v5071 = vunpack.c.h.b16 %v4221
    %v5072 = vunpack.c.l.b16 %v4222
    %v5073 = vunpack.c.h.b16 %v4222
    %v5074 = vunpack.c.l.b16 %v4223
    %v5075 = vunpack.c.h.b16 %v4223
    %v5076 = vunpack.c.l.b16 %v4224
    %v5077 = vunpack.c.h.b16 %v4224
    %v5078 = vunpack.c.l.b16 %v4225
    %v5079 = vunpack.c.h.b16 %v4225
    %v5080 = vunpack.c.l.b16 %v4226
    %v5081 = vunpack.c.h.b16 %v4226
    %v5082 = vunpack.c.l.b16 %v4227
    %v5083 = vunpack.c.h.b16 %v4227
    %v5084 = vunpack.c.l.b16 %v4228
    %v5085 = vunpack.c.h.b16 %v4228
    %v5086 = vunpack.c.l.b16 %v4229
    %v5087 = vunpack.c.h.b16 %v4229
    %v5088 = vunpack.c.l.b16 %v4230
    %v5089 = vunpack.c.h.b16 %v4230
    %v5090 = vunpack.c.l.b16 %v4231
    %v5091 = vunpack.c.h.b16 %v4231
    %v5092 = vunpack.c.l.b16 %v4232
    %v5093 = vunpack.c.h.b16 %v4232
    %v5094 = vunpack.c.l.b16 %v4233
    %v5095 = vunpack.c.h.b16 %v4233
    %v5096 = vunpack.c.l.b16 %v4234
    %v5097 = vunpack.c.h.b16 %v4234
    %v5098 = vunpack.c.l.b16 %v4235
    %v5099 = vunpack.c.h.b16 %v4235
    %v5100 = vunpack.c.l.b16 %v4236
    %v5101 = vunpack.c.h.b16 %v4236
    %v5102 = vunpack.c.l.b16 %v4237
    %v5103 = vunpack.c.h.b16 %v4237
    %v5104 = vunpack.c.l.b16 %v4238
    %v5105 = vunpack.c.h.b16 %v4238
    %v5106 = vunpack.c.l.b16 %v4239
    %v5107 = vunpack.c.h.b16 %v4239
    %v5108 = vunpack.c.l.b16 %v4240
    %v5109 = vunpack.c.h.b16 %v4240
    %v5110 = vunpack.c.l.b16 %v4241
    %v5111 = vunpack.c.h.b16 %v4241
    %v5112 = vunpack.c.l.b16 %v4242
    %v5113 = vunpack.c.h.b16 %v4242
    %v5114 = vunpack.c.l.b16 %v4243
    %v5115 = vunpack.c.h.b16 %v4243
    %v5116 = vunpack.c.l.b16 %v4244
    %v5117 = vunpack.c.h.b16 %v4244
    %v5118 = vunpack.c.l.b16 %v4245
    %v5119 = vunpack.c.h.b16 %v4245
    %v5120 = vunpack.c.l.b16 %v4246
    %v5121 = vunpack.c.h.b16 %v4246
    %v5122 = vunpack.c.l.b16 %v4247
    %v5123 = vunpack.c.h.b16 %v4247
    %v5124 = vunpack.c.l.b16 %v4248
    %v5125 = vunpack.c.h.b16 %v4248
    %v5126 = vunpack.c.l.b16 %v4249
    %v5127 = vunpack.c.h.b16 %v4249
    %v5128 = vunpack.c.l.b16 %v4250
    %v5129 = vunpack.c.h.b16 %v4250
    %v5130 = vunpack.c.l.b16 %v4251
    %v5131 = vunpack.c.h.b16 %v4251
    %v5132 = vunpack.c.l.b16 %v4252
    %v5133 = vunpack.c.h.b16 %v4252
    %v5134 = vunpack.c.l.b16 %v4253
    %v5135 = vunpack.c.h.b16 %v4253
    %v5136 = vunpack.c.l.b16 %v4254
    %v5137 = vunpack.c.h.b16 %v4254
    %v5138 = vunpack.c.l.b16 %v4255
    %v5139 = vunpack.c.h.b16 %v4255
    %v5140 = vunpack.c.l.b16 %v4256
    %v5141 = vunpack.c.h.b16 %v4256
    %v5142 = vunpack.c.l.b16 %v4257
    %v5143 = vunpack.c.h.b16 %v4257
    %v5144 = vunpack.c.l.b16 %v4258
    %v5145 = vunpack.c.h.b16 %v4258
    %v5146 = vunpack.c.l.b16 %v4259
    %v5147 = vunpack.c.h.b16 %v4259
    %v5148 = vunpack.c.l.b16 %v4260
    %v5149 = vunpack.c.h.b16 %v4260
    %v5150 = vunpack.c.l.b16 %v4261
    %v5151 = vunpack.c.h.b16 %v4261
    %v5152 = vunpack.c.l.b16 %v4262
    %v5153 = vunpack.c.h.b16 %v4262
    %v5154 = vunpack.c.l.b16 %v4263
    %v5155 = vunpack.c.h.b16 %v4263
    %v5156 = vunpack.c.l.b16 %v4264
    %v5157 = vunpack.c.h.b16 %v4264
    %v5158 = vunpack.c.l.b16 %v4265
    %v5159 = vunpack.c.h.b16 %v4265
    %v5160 = vunpack.c.l.b16 %v4266
    %v5161 = vunpack.c.h.b16 %v4266
    %v5162 = vunpack.c.l.b16 %v4267
    %v5163 = vunpack.c.h.b16 %v4267
    %v5164 = vunpack.c.l.b16 %v4268
    %v5165 = vunpack.c.h.b16 %v4268
    %v5166 = vunpack.c.l.b16 %v4269
    %v5167 = vunpack.c.h.b16 %v4269
    %v5168 = vunpack.c.l.b16 %v4270
    %v5169 = vunpack.c.h.b16 %v4270
    %v5170 = vunpack.c.l.b16 %v4271
    %v5171 = vunpack.c.h.b16 %v4271
    %v5172 = vunpack.c.l.b16 %v4272
    %v5173 = vunpack.c.h.b16 %v4272
    %v5174 = vunpack.c.l.b16 %v4273
    %v5175 = vunpack.c.h.b16 %v4273
    %v5176 = vunpack.c.l.b16 %v4274
    %v5177 = vunpack.c.h.b16 %v4274
    %v5178 = vunpack.c.l.b16 %v4275
    %v5179 = vunpack.c.h.b16 %v4275
    %v5180 = vunpack.c.l.b16 %v4276
    %v5181 = vunpack.c.h.b16 %v4276
    %v5182 = vunpack.c.l.b16 %v4277
    %v5183 = vunpack.c.h.b16 %v4277
    %v5184 = vunpack.c.l.b16 %v4278
    %v5185 = vunpack.c.h.b16 %v4278
    %v5186 = vunpack.c.l.b16 %v4279
    %v5187 = vunpack.c.h.b16 %v4279
    %v5188 = vunpack.c.l.b16 %v4280
    %v5189 = vunpack.c.h.b16 %v4280
    %v5190 = vunpack.c.l.b16 %v4281
    %v5191 = vunpack.c.h.b16 %v4281
    %v5192 = vunpack.c.l.b16 %v4282
    %v5193 = vunpack.c.h.b16 %v4282
    %v5194 = vunpack.c.l.b16 %v4283
    %v5195 = vunpack.c.h.b16 %v4283
    %v5196 = vunpack.c.l.b16 %v4284
    %v5197 = vunpack.c.h.b16 %v4284
    %v5198 = vunpack.c.l.b16 %v4285
    %v5199 = vunpack.c.h.b16 %v4285
    %v5200 = vunpack.c.l.b16 %v4286
    %v5201 = vunpack.c.h.b16 %v4286
    %v5202 = vunpack.c.l.b16 %v4287
    %v5203 = vunpack.c.h.b16 %v4287
    %v5204 = vunpack.c.l.b16 %v4288
    %v5205 = vunpack.c.h.b16 %v4288
    %v5206 = vunpack.c.l.b16 %v4289
    %v5207 = vunpack.c.h.b16 %v4289
    %v5208 = vunpack.c.l.b16 %v4290
    %v5209 = vunpack.c.h.b16 %v4290
    %v5210 = vunpack.c.l.b16 %v4291
    %v5211 = vunpack.c.h.b16 %v4291
    %v5212 = vunpack.c.l.b16 %v4292
    %v5213 = vunpack.c.h.b16 %v4292
    %v5214 = vunpack.c.l.b16 %v4293
    %v5215 = vunpack.c.h.b16 %v4293
    %v5216 = vunpack.c.l.b16 %v4294
    %v5217 = vunpack.c.h.b16 %v4294
    %v5218 = vunpack.c.l.b16 %v4295
    %v5219 = vunpack.c.h.b16 %v4295
    %v5220 = vunpack.c.l.b16 %v4296
    %v5221 = vunpack.c.h.b16 %v4296
    %v5222 = vunpack.c.l.b16 %v4297
    %v5223 = vunpack.c.h.b16 %v4297
    %v5224 = vunpack.c.l.b16 %v4298
    %v5225 = vunpack.c.h.b16 %v4298
    %v5226 = vunpack.c.l.b16 %v4299
    %v5227 = vunpack.c.h.b16 %v4299
    %v5228 = vunpack.c.l.b16 %v4300
    %v5229 = vunpack.c.h.b16 %v4300
    %v5230 = vunpack.c.l.b16 %v4301
    %v5231 = vunpack.c.h.b16 %v4301
    %v5232 = vunpack.c.l.b16 %v4302
    %v5233 = vunpack.c.h.b16 %v4302
    %v5234 = vunpack.c.l.b16 %v4303
    %v5235 = vunpack.c.h.b16 %v4303
    %v5236 = vunpack.c.l.b16 %v4304
    %v5237 = vunpack.c.h.b16 %v4304
    %v5238 = vunpack.c.l.b16 %v4305
    %v5239 = vunpack.c.h.b16 %v4305
    %v5240 = vunpack.c.l.b16 %v4306
    %v5241 = vunpack.c.h.b16 %v4306
    %v5242 = vunpack.c.l.b16 %v4307
    %v5243 = vunpack.c.h.b16 %v4307
    %v5244 = vunpack.c.l.b16 %v4308
    %v5245 = vunpack.c.h.b16 %v4308
    %v5246 = vunpack.c.l.b16 %v4309
    %v5247 = vunpack.c.h.b16 %v4309
    %v5248 = vunpack.c.l.b16 %v4310
    %v5249 = vunpack.c.h.b16 %v4310
    %v5250 = vunpack.c.l.b16 %v4311
    %v5251 = vunpack.c.h.b16 %v4311
    %v5252 = vunpack.c.l.b16 %v4312
    %v5253 = vunpack.c.h.b16 %v4312
    %v5254 = vunpack.c.l.b16 %v4313
    %v5255 = vunpack.c.h.b16 %v4313
    %v5256 = vunpack.c.l.b16 %v4314
    %v5257 = vunpack.c.h.b16 %v4314
    %v5258 = vunpack.c.l.b16 %v4315
    %v5259 = vunpack.c.h.b16 %v4315
    %v5260 = vunpack.c.l.b16 %v4316
    %v5261 = vunpack.c.h.b16 %v4316
    %v5262 = vunpack.c.l.b16 %v4317
    %v5263 = vunpack.c.h.b16 %v4317
    %v5264 = vunpack.c.l.b16 %v4318
    %v5265 = vunpack.c.h.b16 %v4318
    %v5266 = vunpack.c.l.b16 %v4319
    %v5267 = vunpack.c.h.b16 %v4319
    %v5268 = vunpack.c.l.b16 %v4320
    %v5269 = vunpack.c.h.b16 %v4320
    %v5270 = vunpack.c.l.b16 %v4321
    %v5271 = vunpack.c.h.b16 %v4321
    %v5272 = vunpack.c.l.b16 %v4322
    %v5273 = vunpack.c.h.b16 %v4322
    %v5274 = vunpack.c.l.b16 %v4323
    %v5275 = vunpack.c.h.b16 %v4323
    %v5276 = vunpack.c.l.b16 %v4324
    %v5277 = vunpack.c.h.b16 %v4324
    %v5278 = vunpack.c.l.b16 %v4325
    %v5279 = vunpack.c.h.b16 %v4325
    %v5280 = vunpack.c.l.b16 %v4326
    %v5281 = vunpack.c.h.b16 %v4326
    %v5282 = vunpack.c.l.b16 %v4327
    %v5283 = vunpack.c.h.b16 %v4327
    %v5284 = vunpack.c.l.b16 %v4328
    %v5285 = vunpack.c.h.b16 %v4328
    %v5286 = vunpack.c.l.b16 %v4329
    %v5287 = vunpack.c.h.b16 %v4329
    %v5288 = vunpack.c.l.b16 %v4330
    %v5289 = vunpack.c.h.b16 %v4330
    %v5290 = vunpack.c.l.b16 %v4331
    %v5291 = vunpack.c.h.b16 %v4331
    %v5292 = vunpack.c.l.b16 %v4332
    %v5293 = vunpack.c.h.b16 %v4332
    %v5294 = vunpack.c.l.b16 %v4333
    %v5295 = vunpack.c.h.b16 %v4333
    %v5296 = vunpack.c.l.b16 %v4334
    %v5297 = vunpack.c.h.b16 %v4334
    %v5298 = vunpack.c.l.b16 %v4335
    %v5299 = vunpack.c.h.b16 %v4335
    %v5300 = vunpack.c.l.b16 %v4336
    %v5301 = vunpack.c.h.b16 %v4336
    %v5302 = vunpack.c.l.b16 %v4337
    %v5303 = vunpack.c.h.b16 %v4337
    %v5304 = vunpack.c.l.b16 %v4338
    %v5305 = vunpack.c.h.b16 %v4338
    %v5306 = vunpack.c.l.b16 %v4339
    %v5307 = vunpack.c.h.b16 %v4339
    %v5308 = vunpack.c.l.b16 %v4340
    %v5309 = vunpack.c.h.b16 %v4340
    %v5310 = vunpack.c.l.b16 %v4341
    %v5311 = vunpack.c.h.b16 %v4341
    %v5312 = vunpack.c.l.b16 %v4342
    %v5313 = vunpack.c.h.b16 %v4342
    %v5314 = vunpack.c.l.b16 %v4343
    %v5315 = vunpack.c.h.b16 %v4343
    %v5316 = vunpack.c.l.b16 %v4344
    %v5317 = vunpack.c.h.b16 %v4344
    %v5318 = vunpack.c.l.b16 %v4345
    %v5319 = vunpack.c.h.b16 %v4345
    %v5320 = vunpack.c.l.b16 %v4346
    %v5321 = vunpack.c.h.b16 %v4346
    %v5322 = vunpack.c.l.b16 %v4347
    %v5323 = vunpack.c.h.b16 %v4347
    %v5324 = vunpack.c.l.b16 %v4348
    %v5325 = vunpack.c.h.b16 %v4348
    %v5326 = vunpack.c.l.b16 %v4349
    %v5327 = vunpack.c.h.b16 %v4349
    %v5328 = vunpack.c.l.b16 %v4350
    %v5329 = vunpack.c.h.b16 %v4350
    %v5330 = vunpack.c.l.b16 %v4351
    %v5331 = vunpack.c.h.b16 %v4351
    %v5332 = vunpack.c.l.b16 %v4352
    %v5333 = vunpack.c.h.b16 %v4352
    %v5334 = vunpack.c.l.b16 %v4353
    %v5335 = vunpack.c.h.b16 %v4353
    %v5336 = vunpack.c.l.b16 %v4354
    %v5337 = vunpack.c.h.b16 %v4354
    %v5338 = vunpack.c.l.b16 %v4355
    %v5339 = vunpack.c.h.b16 %v4355
    %v5340 = vunpack.c.l.b16 %v4356
    %v5341 = vunpack.c.h.b16 %v4356
    %v5342 = vunpack.c.l.b16 %v4357
    %v5343 = vunpack.c.h.b16 %v4357
    %v5344 = vunpack.c.l.b16 %v4358
    %v5345 = vunpack.c.h.b16 %v4358
    %v5346 = vunpack.c.l.b16 %v4359
    %v5347 = vunpack.c.h.b16 %v4359
    %v5348 = vunpack.c.l.b16 %v4360
    %v5349 = vunpack.c.h.b16 %v4360
    %v5350 = vunpack.c.l.b16 %v4361
    %v5351 = vunpack.c.h.b16 %v4361
    %v5352 = vunpack.c.l.b16 %v4362
    %v5353 = vunpack.c.h.b16 %v4362
    %v5354 = vunpack.c.l.b16 %v4363
    %v5355 = vunpack.c.h.b16 %v4363
    %v5356 = vunpack.c.l.b16 %v4364
    %v5357 = vunpack.c.h.b16 %v4364
    %v5358 = vunpack.c.l.b16 %v4365
    %v5359 = vunpack.c.h.b16 %v4365
    %v5360 = vunpack.c.l.b16 %v4366
    %v5361 = vunpack.c.h.b16 %v4366
    %v5362 = vunpack.c.l.b16 %v4367
    %v5363 = vunpack.c.h.b16 %v4367
    %v5364 = vunpack.c.l.b16 %v4368
    %v5365 = vunpack.c.h.b16 %v4368
    %v5366 = vunpack.c.l.b16 %v4369
    %v5367 = vunpack.c.h.b16 %v4369
    %v5368 = vunpack.c.l.b16 %v4370
    %v5369 = vunpack.c.h.b16 %v4370
    %v5370 = vunpack.c.l.b16 %v4371
    %v5371 = vunpack.c.h.b16 %v4371
    %v5372 = vunpack.c.l.b16 %v4372
    %v5373 = vunpack.c.h.b16 %v4372
    %v5374 = vunpack.c.l.b16 %v4373
    %v5375 = vunpack.c.h.b16 %v4373
    %v5376 = vunpack.c.l.b16 %v4374
    %v5377 = vunpack.c.h.b16 %v4374
    %v5378 = vunpack.c.l.b16 %v4375
    %v5379 = vunpack.c.h.b16 %v4375
    %v5380 = vunpack.c.l.b16 %v4376
    %v5381 = vunpack.c.h.b16 %v4376
    %v5382 = vunpack.c.l.b16 %v4377
    %v5383 = vunpack.c.h.b16 %v4377
    %v5384 = vunpack.c.l.b16 %v4378
    %v5385 = vunpack.c.h.b16 %v4378
    %v5386 = vunpack.c.l.b16 %v4379
    %v5387 = vunpack.c.h.b16 %v4379
    %v5388 = vunpack.c.l.b16 %v4380
    %v5389 = vunpack.c.h.b16 %v4380
    %v5390 = vunpack.c.l.b16 %v4381
    %v5391 = vunpack.c.h.b16 %v4381
    %v5392 = vunpack.c.l.b16 %v4382
    %v5393 = vunpack.c.h.b16 %v4382
    %v5394 = vunpack.c.l.b16 %v4383
    %v5395 = vunpack.c.h.b16 %v4383
    %v5396 = vunpack.c.l.b16 %v4384
    %v5397 = vunpack.c.h.b16 %v4384
    %v5398 = vunpack.c.l.b16 %v4385
    %v5399 = vunpack.c.h.b16 %v4385
    %v5400 = vunpack.c.l.b16 %v4386
    %v5401 = vunpack.c.h.b16 %v4386
    %v5402 = vunpack.c.l.b16 %v4387
    %v5403 = vunpack.c.h.b16 %v4387
    %v5404 = vunpack.c.l.b16 %v4388
    %v5405 = vunpack.c.h.b16 %v4388
    %v5406 = vunpack.c.l.b16 %v4389
    %v5407 = vunpack.c.h.b16 %v4389
    %v5408 = vunpack.c.l.b16 %v4390
    %v5409 = vunpack.c.h.b16 %v4390
    %v5410 = vunpack.c.l.b16 %v4391
    %v5411 = vunpack.c.h.b16 %v4391
    %v5412 = vunpack.c.l.b16 %v4392
    %v5413 = vunpack.c.h.b16 %v4392
    %v5414 = vunpack.c.l.b16 %v4393
    %v5415 = vunpack.c.h.b16 %v4393
    %v5416 = vunpack.c.l.b16 %v4394
    %v5417 = vunpack.c.h.b16 %v4394
    %v5418 = vunpack.c.l.b16 %v4395
    %v5419 = vunpack.c.h.b16 %v4395
    %v5420 = vunpack.c.l.b16 %v4396
    %v5421 = vunpack.c.h.b16 %v4396
    %v5422 = vunpack.c.l.b16 %v4397
    %v5423 = vunpack.c.h.b16 %v4397
    %v5424 = vunpack.c.l.b16 %v4398
    %v5425 = vunpack.c.h.b16 %v4398
    %v5426 = vunpack.c.l.b16 %v4399
    %v5427 = vunpack.c.h.b16 %v4399
    %v5428 = vunpack.c.l.b16 %v4400
    %v5429 = vunpack.c.h.b16 %v4400
    %v5430 = vunpack.c.l.b16 %v4401
    %v5431 = vunpack.c.h.b16 %v4401
    %v5432 = vunpack.c.l.b16 %v4402
    %v5433 = vunpack.c.h.b16 %v4402
    %v5434 = vunpack.c.l.b16 %v4403
    %v5435 = vunpack.c.h.b16 %v4403
    %v5436 = vunpack.c.l.b16 %v4404
    %v5437 = vunpack.c.h.b16 %v4404
    %v5438 = vunpack.c.l.b16 %v4405
    %v5439 = vunpack.c.h.b16 %v4405
    %v5440 = vunpack.c.l.b16 %v4406
    %v5441 = vunpack.c.h.b16 %v4406
    %v5442 = vunpack.c.l.b16 %v4407
    %v5443 = vunpack.c.h.b16 %v4407
    %v5444 = vunpack.c.l.b16 %v4408
    %v5445 = vunpack.c.h.b16 %v4408
    %v5446 = vunpack.c.l.b16 %v4409
    %v5447 = vunpack.c.h.b16 %v4409
    %v5448 = vunpack.c.l.b16 %v4410
    %v5449 = vunpack.c.h.b16 %v4410
    %v5450 = vunpack.c.l.b16 %v4411
    %v5451 = vunpack.c.h.b16 %v4411
    %v5452 = vunpack.c.l.b16 %v4412
    %v5453 = vunpack.c.h.b16 %v4412
    %v5454 = vunpack.c.l.b16 %v4413
    %v5455 = vunpack.c.h.b16 %v4413
    %v5456 = vunpack.c.l.b16 %v4414
    %v5457 = vunpack.c.h.b16 %v4414
    %v5458 = vunpack.c.l.b16 %v4415
    %v5459 = vunpack.c.h.b16 %v4415
    %v5460 = vunpack.c.l.b16 %v4416
    %v5461 = vunpack.c.h.b16 %v4416
    %v5462 = vunpack.c.l.b16 %v4417
    %v5463 = vunpack.c.h.b16 %v4417
    %v5464 = vunpack.c.l.b16 %v4418
    %v5465 = vunpack.c.h.b16 %v4418
    %v5466 = vunpack.c.l.b16 %v4419
    %v5467 = vunpack.c.h.b16 %v4419
    %v5468 = vunpack.c.l.b16 %v4420
    %v5469 = vunpack.c.h.b16 %v4420
    %v5470 = vunpack.c.l.b16 %v4421
    %v5471 = vunpack.c.h.b16 %v4421
    %v5472 = vunpack.c.l.b16 %v4422
    %v5473 = vunpack.c.h.b16 %v4422
    %v5474 = vunpack.c.l.b16 %v4423
    %v5475 = vunpack.c.h.b16 %v4423
    %v5476 = vunpack.c.l.b16 %v4424
    %v5477 = vunpack.c.h.b16 %v4424
    %v5478 = vunpack.c.l.b16 %v4425
    %v5479 = vunpack.c.h.b16 %v4425
    %v5480 = vunpack.c.l.b16 %v4426
    %v5481 = vunpack.c.h.b16 %v4426
    %v5482 = vunpack.c.l.b16 %v4427
    %v5483 = vunpack.c.h.b16 %v4427
    %v5484 = vunpack.c.l.b16 %v4428
    %v5485 = vunpack.c.h.b16 %v4428
    %v5486 = vunpack.c.l.b16 %v4429
    %v5487 = vunpack.c.h.b16 %v4429
    %v5488 = vunpack.c.l.b16 %v4430
    %v5489 = vunpack.c.h.b16 %v4430
    %v5490 = vunpack.c.l.b16 %v4431
    %v5491 = vunpack.c.h.b16 %v4431
    %v5492 = vunpack.c.l.b16 %v4432
    %v5493 = vunpack.c.h.b16 %v4432
    %v5494 = vunpack.c.l.b16 %v4433
    %v5495 = vunpack.c.h.b16 %v4433
    %v5496 = vunpack.c.l.b16 %v4434
    %v5497 = vunpack.c.h.b16 %v4434
    %v5498 = vunpack.c.l.b16 %v4435
    %v5499 = vunpack.c.h.b16 %v4435
    %v5500 = vunpack.c.l.b16 %v4436
    %v5501 = vunpack.c.h.b16 %v4436
    %v5502 = vunpack.c.l.b16 %v4437
    %v5503 = vunpack.c.h.b16 %v4437
    %v5504 = vunpack.c.l.b16 %v4438
    %v5505 = vunpack.c.h.b16 %v4438
    %v5506 = vunpack.c.l.b16 %v4439
    %v5507 = vunpack.c.h.b16 %v4439
    %v5508 = vunpack.c.l.b16 %v4440
    %v5509 = vunpack.c.h.b16 %v4440
    %v5510 = vunpack.c.l.b16 %v4441
    %v5511 = vunpack.c.h.b16 %v4441
    %v5512 = vunpack.c.l.b16 %v4442
    %v5513 = vunpack.c.h.b16 %v4442
    %v5514 = vunpack.c.l.b16 %v4443
    %v5515 = vunpack.c.h.b16 %v4443
    %v5516 = vunpack.c.l.b16 %v4444
    %v5517 = vunpack.c.h.b16 %v4444
    %v5518 = vunpack.c.l.b16 %v4445
    %v5519 = vunpack.c.h.b16 %v4445
    %v5520 = vunpack.c.l.b16 %v4446
    %v5521 = vunpack.c.h.b16 %v4446
    %v5522 = vunpack.c.l.b16 %v4447
    %v5523 = vunpack.c.h.b16 %v4447
    %v5524 = vunpack.c.l.b16 %v4448
    %v5525 = vunpack.c.h.b16 %v4448
    %v5526 = vunpack.c.l.b16 %v4449
    %v5527 = vunpack.c.h.b16 %v4449
    %v5528 = vunpack.c.l.b16 %v4450
    %v5529 = vunpack.c.h.b16 %v4450
    %v5530 = vunpack.c.l.b16 %v4451
    %v5531 = vunpack.c.h.b16 %v4451
    %v5532 = vunpack.c.l.b16 %v4452
    %v5533 = vunpack.c.h.b16 %v4452
    %v5534 = vunpack.c.l.b16 %v4453
    %v5535 = vunpack.c.h.b16 %v4453
    %v5536 = vunpack.c.l.b16 %v4454
    %v5537 = vunpack.c.h.b16 %v4454
    %v5538 = vunpack.c.l.b16 %v4455
    %v5539 = vunpack.c.h.b16 %v4455
    %v5540 = vunpack.c.l.b16 %v4456
    %v5541 = vunpack.c.h.b16 %v4456
    %v5542 = vunpack.c.l.b16 %v4457
    %v5543 = vunpack.c.h.b16 %v4457
    %v5544 = vunpack.c.l.b16 %v4458
    %v5545 = vunpack.c.h.b16 %v4458
    %v5546 = vunpack.c.l.b16 %v4459
    %v5547 = vunpack.c.h.b16 %v4459
    %v5548 = vunpack.c.l.b16 %v4460
    %v5549 = vunpack.c.h.b16 %v4460
    %v5550 = vunpack.c.l.b16 %v4461
    %v5551 = vunpack.c.h.b16 %v4461
    %v5552 = vunpack.c.l.b16 %v4462
    %v5553 = vunpack.c.h.b16 %v4462
    %v5554 = vunpack.c.l.b16 %v4463
    %v5555 = vunpack.c.h.b16 %v4463
    %v5556 = vunpack.c.l.b16 %v4464
    %v5557 = vunpack.c.h.b16 %v4464
    %v5558 = vunpack.c.l.b16 %v4465
    %v5559 = vunpack.c.h.b16 %v4465
    %v5560 = vunpack.c.l.b16 %v4466
    %v5561 = vunpack.c.h.b16 %v4466
    %v5562 = vunpack.c.l.b16 %v4467
    %v5563 = vunpack.c.h.b16 %v4467
    %v5564 = vunpack.c.l.b16 %v4468
    %v5565 = vunpack.c.h.b16 %v4468
    %v5566 = vunpack.c.l.b16 %v4469
    %v5567 = vunpack.c.h.b16 %v4469
    %v5568 = vunpack.c.l.b16 %v4470
    %v5569 = vunpack.c.h.b16 %v4470
    %v5570 = vunpack.c.l.b16 %v4471
    %v5571 = vunpack.c.h.b16 %v4471
    %v5572 = vunpack.c.l.b16 %v4472
    %v5573 = vunpack.c.h.b16 %v4472
    %v5574 = vunpack.c.l.b16 %v4473
    %v5575 = vunpack.c.h.b16 %v4473
    %v5576 = vunpack.c.l.b16 %v4474
    %v5577 = vunpack.c.h.b16 %v4474
    %v5578 = vunpack.c.l.b16 %v4475
    %v5579 = vunpack.c.h.b16 %v4475
    %v5580 = vunpack.c.l.b16 %v4476
    %v5581 = vunpack.c.h.b16 %v4476
    %v5582 = vunpack.c.l.b16 %v4477
    %v5583 = vunpack.c.h.b16 %v4477
    %v5584 = vunpack.c.l.b16 %v4478
    %v5585 = vunpack.c.h.b16 %v4478
    %v5586 = vunpack.c.l.b16 %v4479
    %v5587 = vunpack.c.h.b16 %v4479
    %v5588 = vunpack.c.l.b16 %v4480
    %v5589 = vunpack.c.h.b16 %v4480
    %v5590 = vunpack.c.l.b16 %v4481
    %v5591 = vunpack.c.h.b16 %v4481
    %v5592 = vunpack.c.l.b16 %v4482
    %v5593 = vunpack.c.h.b16 %v4482
    %v5594 = vunpack.c.l.b16 %v4483
    %v5595 = vunpack.c.h.b16 %v4483
    %v5596 = vunpack.c.l.b16 %v4484
    %v5597 = vunpack.c.h.b16 %v4484
    %v5598 = vunpack.c.l.b16 %v4485
    %v5599 = vunpack.c.h.b16 %v4485
    %v5600 = vunpack.c.l.b16 %v4486
    %v5601 = vunpack.c.h.b16 %v4486
    %v5602 = vunpack.c.l.b16 %v4487
    %v5603 = vunpack.c.h.b16 %v4487
    %v5604 = vunpack.c.l.b16 %v4488
    %v5605 = vunpack.c.h.b16 %v4488
    %v5606 = vunpack.c.l.b16 %v4489
    %v5607 = vunpack.c.h.b16 %v4489
    %v5608 = vunpack.c.l.b16 %v4490
    %v5609 = vunpack.c.h.b16 %v4490
    %v5610 = vunpack.c.l.b16 %v4491
    %v5611 = vunpack.c.h.b16 %v4491
    %v5612 = vunpack.c.l.b16 %v4492
    %v5613 = vunpack.c.h.b16 %v4492
    %v5614 = vunpack.c.l.b16 %v4493
    %v5615 = vunpack.c.h.b16 %v4493
    %v5616 = vunpack.c.l.b16 %v4494
    %v5617 = vunpack.c.h.b16 %v4494
    %v5618 = vunpack.c.l.b16 %v4495
    %v5619 = vunpack.c.h.b16 %v4495
    %v5620 = vunpack.c.l.b16 %v4496
    %v5621 = vunpack.c.h.b16 %v4496
    %v5622 = vunpack.c.l.b16 %v4497
    %v5623 = vunpack.c.h.b16 %v4497
    %v5624 = vunpack.c.l.b16 %v4498
    %v5625 = vunpack.c.h.b16 %v4498
    %v5626 = vunpack.c.l.b16 %v4499
    %v5627 = vunpack.c.h.b16 %v4499
    %v5628 = vunpack.c.l.b16 %v4500
    %v5629 = vunpack.c.h.b16 %v4500
    %v5630 = vunpack.c.l.b16 %v4501
    %v5631 = vunpack.c.h.b16 %v4501
    %v5632 = vunpack.c.l.b16 %v4502
    %v5633 = vunpack.c.h.b16 %v4502
    %v5634 = vunpack.c.l.b16 %v4503
    %v5635 = vunpack.c.h.b16 %v4503
    %v5636 = vunpack.c.l.b16 %v4504
    %v5637 = vunpack.c.h.b16 %v4504
    %v5638 = vunpack.c.l.b16 %v4505
    %v5639 = vunpack.c.h.b16 %v4505
    %v5640 = vunpack.c.l.b16 %v4506
    %v5641 = vunpack.c.h.b16 %v4506
    %v5642 = vunpack.c.l.b16 %v4507
    %v5643 = vunpack.c.h.b16 %v4507
    %v5644 = vunpack.c.l.b16 %v4508
    %v5645 = vunpack.c.h.b16 %v4508
    %v5646 = vunpack.c.l.b16 %v4509
    %v5647 = vunpack.c.h.b16 %v4509
    %v5648 = vunpack.c.l.b16 %v4510
    %v5649 = vunpack.c.h.b16 %v4510
    %v5650 = vunpack.c.l.b16 %v4511
    %v5651 = vunpack.c.h.b16 %v4511
    %v5652 = vunpack.c.l.b16 %v4512
    %v5653 = vunpack.c.h.b16 %v4512
    %v5654 = vunpack.c.l.b16 %v4513
    %v5655 = vunpack.c.h.b16 %v4513
    %v5656 = vunpack.c.l.b16 %v4514
    %v5657 = vunpack.c.h.b16 %v4514
    %v5658 = vunpack.c.l.b16 %v4515
    %v5659 = vunpack.c.h.b16 %v4515
    %v5660 = vunpack.c.l.b16 %v4516
    %v5661 = vunpack.c.h.b16 %v4516
    %v5662 = vunpack.c.l.b16 %v4517
    %v5663 = vunpack.c.h.b16 %v4517
    %v5664 = vunpack.c.l.b16 %v4518
    %v5665 = vunpack.c.h.b16 %v4518
    %v5666 = vunpack.c.l.b16 %v4519
    %v5667 = vunpack.c.h.b16 %v4519
    %v5668 = vunpack.c.l.b16 %v4520
    %v5669 = vunpack.c.h.b16 %v4520
    %v5670 = vunpack.c.l.b16 %v4521
    %v5671 = vunpack.c.h.b16 %v4521
    %v5672 = vunpack.c.l.b16 %v4522
    %v5673 = vunpack.c.h.b16 %v4522
    %v5674 = vunpack.c.l.b16 %v4523
    %v5675 = vunpack.c.h.b16 %v4523
    %v5676 = vunpack.c.l.b16 %v4524
    %v5677 = vunpack.c.h.b16 %v4524
    %v5678 = vunpack.c.l.b16 %v4525
    %v5679 = vunpack.c.h.b16 %v4525
    %v5680 = vunpack.c.l.b16 %v4526
    %v5681 = vunpack.c.h.b16 %v4526
    %v5682 = vunpack.c.l.b16 %v4527
    %v5683 = vunpack.c.h.b16 %v4527
    %v5684 = vunpack.c.l.b16 %v4528
    %v5685 = vunpack.c.h.b16 %v4528
    %v5686 = vunpack.c.l.b16 %v4529
    %v5687 = vunpack.c.h.b16 %v4529
    %v5688 = vunpack.c.l.b16 %v4530
    %v5689 = vunpack.c.h.b16 %v4530
    %v5690 = vunpack.c.l.b16 %v4531
    %v5691 = vunpack.c.h.b16 %v4531
    %v5692 = vunpack.c.l.b16 %v4532
    %v5693 = vunpack.c.h.b16 %v4532
    %v5694 = vunpack.c.l.b16 %v4533
    %v5695 = vunpack.c.h.b16 %v4533
    %v5696 = vunpack.c.l.b16 %v4534
    %v5697 = vunpack.c.h.b16 %v4534
    %v5698 = vunpack.c.l.b16 %v4535
    %v5699 = vunpack.c.h.b16 %v4535
    %v5700 = vunpack.c.l.b16 %v4536
    %v5701 = vunpack.c.h.b16 %v4536
    %v5702 = vunpack.c.l.b16 %v4537
    %v5703 = vunpack.c.h.b16 %v4537
    %v5704 = vunpack.c.l.b16 %v4538
    %v5705 = vunpack.c.h.b16 %v4538
    %v5706 = vunpack.c.l.b16 %v4539
    %v5707 = vunpack.c.h.b16 %v4539
    %v5708 = vunpack.c.l.b16 %v4540
    %v5709 = vunpack.c.h.b16 %v4540
    %v5710 = vunpack.c.l.b16 %v4541
    %v5711 = vunpack.c.h.b16 %v4541
    %v5712 = vunpack.c.l.b16 %v4542
    %v5713 = vunpack.c.h.b16 %v4542
    %v5714 = vunpack.c.l.b16 %v4543
    %v5715 = vunpack.c.h.b16 %v4543
    %v5716 = vunpack.c.l.b16 %v4544
    %v5717 = vunpack.c.h.b16 %v4544
    %v5718 = vunpack.c.l.b16 %v4545
    %v5719 = vunpack.c.h.b16 %v4545
    %v5720 = vunpack.c.l.b16 %v4546
    %v5721 = vunpack.c.h.b16 %v4546
    %v5722 = vunpack.c.l.b16 %v4547
    %v5723 = vunpack.c.h.b16 %v4547
    %v5724 = vunpack.c.l.b16 %v4548
    %v5725 = vunpack.c.h.b16 %v4548
    %v5726 = vunpack.c.l.b16 %v4549
    %v5727 = vunpack.c.h.b16 %v4549
    %v5728 = vunpack.c.l.b16 %v4550
    %v5729 = vunpack.c.h.b16 %v4550
    %v5730 = vunpack.c.l.b16 %v4551
    %v5731 = vunpack.c.h.b16 %v4551
    %v5732 = vunpack.c.l.b16 %v4552
    %v5733 = vunpack.c.h.b16 %v4552
    %v5734 = vunpack.c.l.b16 %v4553
    %v5735 = vunpack.c.h.b16 %v4553
    %v5736 = vunpack.c.l.b16 %v4554
    %v5737 = vunpack.c.h.b16 %v4554
    %v5738 = vunpack.c.l.b16 %v4555
    %v5739 = vunpack.c.h.b16 %v4555
    %v5740 = vunpack.c.l.b16 %v4556
    %v5741 = vunpack.c.h.b16 %v4556
    %v5742 = vunpack.c.l.b16 %v4557
    %v5743 = vunpack.c.h.b16 %v4557
    %v5744 = vunpack.c.l.b16 %v4558
    %v5745 = vunpack.c.h.b16 %v4558
    %v5746 = vunpack.c.l.b16 %v4559
    %v5747 = vunpack.c.h.b16 %v4559
    %v5748 = vunpack.c.l.b16 %v4560
    %v5749 = vunpack.c.h.b16 %v4560
    %v5750 = vunpack.c.l.b16 %v4561
    %v5751 = vunpack.c.h.b16 %v4561
    %v5752 = vunpack.c.l.b16 %v4562
    %v5753 = vunpack.c.h.b16 %v4562
    %v5754 = vunpack.c.l.b16 %v4563
    %v5755 = vunpack.c.h.b16 %v4563
    %v5756 = vunpack.c.l.b16 %v4564
    %v5757 = vunpack.c.h.b16 %v4564
    %v5758 = vunpack.c.l.b16 %v4565
    %v5759 = vunpack.c.h.b16 %v4565
    %v5760 = vunpack.c.l.b16 %v4566
    %v5761 = vunpack.c.h.b16 %v4566
    %v5762 = vunpack.c.l.b16 %v4567
    %v5763 = vunpack.c.h.b16 %v4567
    %v5764 = vunpack.c.l.b16 %v4568
    %v5765 = vunpack.c.h.b16 %v4568
    %v5766 = vunpack.c.l.b16 %v4569
    %v5767 = vunpack.c.h.b16 %v4569
    %v5768 = vunpack.c.l.b16 %v4570
    %v5769 = vunpack.c.h.b16 %v4570
    %v5770 = vunpack.c.l.b16 %v4571
    %v5771 = vunpack.c.h.b16 %v4571
    %v5772 = vunpack.c.l.b16 %v4572
    %v5773 = vunpack.c.h.b16 %v4572
    %v5774 = vunpack.c.l.b16 %v4573
    %v5775 = vunpack.c.h.b16 %v4573
    %v5776 = vunpack.c.l.b16 %v4574
    %v5777 = vunpack.c.h.b16 %v4574
    %v5778 = vunpack.c.l.b16 %v4575
    %v5779 = vunpack.c.h.b16 %v4575
    %v5780 = vunpack.c.l.b16 %v4576
    %v5781 = vunpack.c.h.b16 %v4576
    %v5782 = vunpack.c.l.b16 %v4577
    %v5783 = vunpack.c.h.b16 %v4577
    %v5784 = vunpack.c.l.b16 %v4578
    %v5785 = vunpack.c.h.b16 %v4578
    %v5786 = vunpack.c.l.b16 %v4579
    %v5787 = vunpack.c.h.b16 %v4579
    %v5788 = vunpack.c.l.b16 %v4580
    %v5789 = vunpack.c.h.b16 %v4580
    %v5790 = vunpack.c.l.b16 %v4581
    %v5791 = vunpack.c.h.b16 %v4581
    %v5792 = vunpack.c.l.b16 %v4582
    %v5793 = vunpack.c.h.b16 %v4582
    %v5794 = vunpack.c.l.b16 %v4583
    %v5795 = vunpack.c.h.b16 %v4583
    %v5796 = vunpack.c.l.b16 %v4584
    %v5797 = vunpack.c.h.b16 %v4584
    %v5798 = vunpack.c.l.b16 %v4585
    %v5799 = vunpack.c.h.b16 %v4585
    %v5800 = vunpack.c.l.b16 %v4586
    %v5801 = vunpack.c.h.b16 %v4586
    %v5802 = vunpack.c.l.b16 %v4587
    %v5803 = vunpack.c.h.b16 %v4587
    %v5804 = vunpack.c.l.b16 %v4588
    %v5805 = vunpack.c.h.b16 %v4588
    %v5806 = vunpack.c.l.b16 %v4589
    %v5807 = vunpack.c.h.b16 %v4589
    %v5808 = vunpack.c.l.b16 %v4590
    %v5809 = vunpack.c.h.b16 %v4590
    %v5810 = vunpack.c.l.b16 %v4591
    %v5811 = vunpack.c.h.b16 %v4591
    %v5812 = vunpack.c.l.b16 %v4592
    %v5813 = vunpack.c.h.b16 %v4592
    %v5814 = vunpack.c.l.b16 %v4593
    %v5815 = vunpack.c.h.b16 %v4593
    %v5816 = vunpack.c.l.b16 %v4594
    %v5817 = vunpack.c.h.b16 %v4594
    %v5818 = vunpack.c.l.b16 %v4595
    %v5819 = vunpack.c.h.b16 %v4595
    %v5820 = vpack.c.b16 %v5064, %v5052
    %v5821 = vpack.c.b16 %v5065, %v5053
    %v5822 = vpack.c.b16 %v5066, %v5054
    %v5823 = vpack.c.b16 %v5067, %v5055
    %v5824 = vpack.c.b16 %v5068, %v5056
    %v5825 = vpack.c.b16 %v5069, %v5057
    %v5826 = vpack.c.b16 %v5070, %v5058
    %v5827 = vpack.c.b16 %v5071, %v5059
    %v5828 = vpack.c.b16 %v5072, %v5060
    %v5829 = vpack.c.b16 %v5073, %v5061
    %v5830 = vpack.c.b16 %v5074, %v5062
    %v5831 = vpack.c.b16 %v5075, %v5063
    %v5832 = vpack.c.b16 %v5088, %v5076
    %v5833 = vpack.c.b16 %v5089, %v5077
    %v5834 = vpack.c.b16 %v5090, %v5078
    %v5835 = vpack.c.b16 %v5091, %v5079
    %v5836 = vpack.c.b16 %v5092, %v5080
    %v5837 = vpack.c.b16 %v5093, %v5081
    %v5838 = vpack.c.b16 %v5094, %v5082
    %v5839 = vpack.c.b16 %v5095, %v5083
    %v5840 = vpack.c.b16 %v5096, %v5084
    %v5841 = vpack.c.b16 %v5097, %v5085
    %v5842 = vpack.c.b16 %v5098, %v5086
    %v5843 = vpack.c.b16 %v5099, %v5087
    %v5844 = vpack.c.b16 %v5112, %v5100
    %v5845 = vpack.c.b16 %v5113, %v5101
    %v5846 = vpack.c.b16 %v5114, %v5102
    %v5847 = vpack.c.b16 %v5115, %v5103
    %v5848 = vpack.c.b16 %v5116, %v5104
    %v5849 = vpack.c.b16 %v5117, %v5105
    %v5850 = vpack.c.b16 %v5118, %v5106
    %v5851 = vpack.c.b16 %v5119, %v5107
    %v5852 = vpack.c.b16 %v5120, %v5108
    %v5853 = vpack.c.b16 %v5121, %v5109
    %v5854 = vpack.c.b16 %v5122, %v5110
    %v5855 = vpack.c.b16 %v5123, %v5111
    %v5856 = vpack.c.b16 %v5136, %v5124
    %v5857 = vpack.c.b16 %v5137, %v5125
    %v5858 = vpack.c.b16 %v5138, %v5126
    %v5859 = vpack.c.b16 %v5139, %v5127
    %v5860 = vpack.c.b16 %v5140, %v5128
    %v5861 = vpack.c.b16 %v5141, %v5129
    %v5862 = vpack.c.b16 %v5142, %v5130
    %v5863 = vpack.c.b16 %v5143, %v5131
    %v5864 = vpack.c.b16 %v5144, %v5132
    %v5865 = vpack.c.b16 %v5145, %v5133
    %v5866 = vpack.c.b16 %v5146, %v5134
    %v5867 = vpack.c.b16 %v5147, %v5135
    %v5868 = vpack.c.b16 %v5160, %v5148
    %v5869 = vpack.c.b16 %v5161, %v5149
    %v5870 = vpack.c.b16 %v5162, %v5150
    %v5871 = vpack.c.b16 %v5163, %v5151
    %v5872 = vpack.c.b16 %v5164, %v5152
    %v5873 = vpack.c.b16 %v5165, %v5153
    %v5874 = vpack.c.b16 %v5166, %v5154
    %v5875 = vpack.c.b16 %v5167, %v5155
    %v5876 = vpack.c.b16 %v5168, %v5156
    %v5877 = vpack.c.b16 %v5169, %v5157
    %v5878 = vpack.c.b16 %v5170, %v5158
    %v5879 = vpack.c.b16 %v5171, %v5159
    %v5880 = vpack.c.b16 %v5184, %v5172
    %v5881 = vpack.c.b16 %v5185, %v5173
    %v5882 = vpack.c.b16 %v5186, %v5174
    %v5883 = vpack.c.b16 %v5187, %v5175
    %v5884 = vpack.c.b16 %v5188, %v5176
    %v5885 = vpack.c.b16 %v5189, %v5177
    %v5886 = vpack.c.b16 %v5190, %v5178
    %v5887 = vpack.c.b16 %v5191, %v5179
    %v5888 = vpack.c.b16 %v5192, %v5180
    %v5889 = vpack.c.b16 %v5193, %v5181
    %v5890 = vpack.c.b16 %v5194, %v5182
    %v5891 = vpack.c.b16 %v5195, %v5183
    %v5892 = vpack.c.b16 %v5208, %v5196
    %v5893 = vpack.c.b16 %v5209, %v5197
    %v5894 = vpack.c.b16 %v5210, %v5198
    %v5895 = vpack.c.b16 %v5211, %v5199
    %v5896 = vpack.c.b16 %v5212, %v5200
    %v5897 = vpack.c.b16 %v5213, %v5201
    %v5898 = vpack.c.b16 %v5214, %v5202
    %v5899 = vpack.c.b16 %v5215, %v5203
    %v5900 = vpack.c.b16 %v5216, %v5204
    %v5901 = vpack.c.b16 %v5217, %v5205
    %v5902 = vpack.c.b16 %v5218, %v5206
    %v5903 = vpack.c.b16 %v5219, %v5207
    %v5904 = vpack.c.b16 %v5232, %v5220
    %v5905 = vpack.c.b16 %v5233, %v5221
    %v5906 = vpack.c.b16 %v5234, %v5222
    %v5907 = vpack.c.b16 %v5235, %v5223
    %v5908 = vpack.c.b16 %v5236, %v5224
    %v5909 = vpack.c.b16 %v5237, %v5225
    %v5910 = vpack.c.b16 %v5238, %v5226
    %v5911 = vpack.c.b16 %v5239, %v5227
    %v5912 = vpack.c.b16 %v5240, %v5228
    %v5913 = vpack.c.b16 %v5241, %v5229
    %v5914 = vpack.c.b16 %v5242, %v5230
    %v5915 = vpack.c.b16 %v5243, %v5231
    %v5916 = vpack.c.b16 %v5256, %v5244
    %v5917 = vpack.c.b16 %v5257, %v5245
    %v5918 = vpack.c.b16 %v5258, %v5246
    %v5919 = vpack.c.b16 %v5259, %v5247
    %v5920 = vpack.c.b16 %v5260, %v5248
    %v5921 = vpack.c.b16 %v5261, %v5249
    %v5922 = vpack.c.b16 %v5262, %v5250
    %v5923 = vpack.c.b16 %v5263, %v5251
    %v5924 = vpack.c.b16 %v5264, %v5252
    %v5925 = vpack.c.b16 %v5265, %v5253
    %v5926 = vpack.c.b16 %v5266, %v5254
    %v5927 = vpack.c.b16 %v5267, %v5255
    %v5928 = vpack.c.b16 %v5280, %v5268
    %v5929 = vpack.c.b16 %v5281, %v5269
    %v5930 = vpack.c.b16 %v5282, %v5270
    %v5931 = vpack.c.b16 %v5283, %v5271
    %v5932 = vpack.c.b16 %v5284, %v5272
    %v5933 = vpack.c.b16 %v5285, %v5273
    %v5934 = vpack.c.b16 %v5286, %v5274
    %v5935 = vpack.c.b16 %v5287, %v5275
    %v5936 = vpack.c.b16 %v5288, %v5276
    %v5937 = vpack.c.b16 %v5289, %v5277
    %v5938 = vpack.c.b16 %v5290, %v5278
    %v5939 = vpack.c.b16 %v5291, %v5279
    %v5940 = vpack.c.b16 %v5304, %v5292
    %v5941 = vpack.c.b16 %v5305, %v5293
    %v5942 = vpack.c.b16 %v5306, %v5294
    %v5943 = vpack.c.b16 %v5307, %v5295
    %v5944 = vpack.c.b16 %v5308, %v5296
    %v5945 = vpack.c.b16 %v5309, %v5297
    %v5946 = vpack.c.b16 %v5310, %v5298
    %v5947 = vpack.c.b16 %v5311, %v5299
    %v5948 = vpack.c.b16 %v5312, %v5300
    %v5949 = vpack.c.b16 %v5313, %v5301
    %v5950 = vpack.c.b16 %v5314, %v5302
    %v5951 = vpack.c.b16 %v5315, %v5303
    %v5952 = vpack.c.b16 %v5328, %v5316
    %v5953 = vpack.c.b16 %v5329, %v5317
    %v5954 = vpack.c.b16 %v5330, %v5318
    %v5955 = vpack.c.b16 %v5331, %v5319
    %v5956 = vpack.c.b16 %v5332, %v5320
    %v5957 = vpack.c.b16 %v5333, %v5321
    %v5958 = vpack.c.b16 %v5334, %v5322
    %v5959 = vpack.c.b16 %v5335, %v5323
    %v5960 = vpack.c.b16 %v5336, %v5324
    %v5961 = vpack.c.b16 %v5337, %v5325
    %v5962 = vpack.c.b16 %v5338, %v5326
    %v5963 = vpack.c.b16 %v5339, %v5327
    %v5964 = vpack.c.b16 %v5352, %v5340
    %v5965 = vpack.c.b16 %v5353, %v5341
    %v5966 = vpack.c.b16 %v5354, %v5342
    %v5967 = vpack.c.b16 %v5355, %v5343
    %v5968 = vpack.c.b16 %v5356, %v5344
    %v5969 = vpack.c.b16 %v5357, %v5345
    %v5970 = vpack.c.b16 %v5358, %v5346
    %v5971 = vpack.c.b16 %v5359, %v5347
    %v5972 = vpack.c.b16 %v5360, %v5348
    %v5973 = vpack.c.b16 %v5361, %v5349
    %v5974 = vpack.c.b16 %v5362, %v5350
    %v5975 = vpack.c.b16 %v5363, %v5351
    %v5976 = vpack.c.b16 %v5376, %v5364
    %v5977 = vpack.c.b16 %v5377, %v5365
    %v5978 = vpack.c.b16 %v5378, %v5366
    %v5979 = vpack.c.b16 %v5379, %v5367
    %v5980 = vpack.c.b16 %v5380, %v5368
    %v5981 = vpack.c.b16 %v5381, %v5369
    %v5982 = vpack.c.b16 %v5382, %v5370
    %v5983 = vpack.c.b16 %v5383, %v5371
    %v5984 = vpack.c.b16 %v5384, %v5372
    %v5985 = vpack.c.b16 %v5385, %v5373
    %v5986 = vpack.c.b16 %v5386, %v5374
    %v5987 = vpack.c.b16 %v5387, %v5375
    %v5988 = vpack.c.b16 %v5400, %v5388
    %v5989 = vpack.c.b16 %v5401, %v5389
    %v5990 = vpack.c.b16 %v5402, %v5390
    %v5991 = vpack.c.b16 %v5403, %v5391
    %v5992 = vpack.c.b16 %v5404, %v5392
    %v5993 = vpack.c.b16 %v5405, %v5393
    %v5994 = vpack.c.b16 %v5406, %v5394
    %v5995 = vpack.c.b16 %v5407, %v5395
    %v5996 = vpack.c.b16 %v5408, %v5396
    %v5997 = vpack.c.b16 %v5409, %v5397
    %v5998 = vpack.c.b16 %v5410, %v5398
    %v5999 = vpack.c.b16 %v5411, %v5399
    %v6000 = vpack.c.b16 %v5424, %v5412
    %v6001 = vpack.c.b16 %v5425, %v5413
    %v6002 = vpack.c.b16 %v5426, %v5414
    %v6003 = vpack.c.b16 %v5427, %v5415
    %v6004 = vpack.c.b16 %v5428, %v5416
    %v6005 = vpack.c.b16 %v5429, %v5417
    %v6006 = vpack.c.b16 %v5430, %v5418
    %v6007 = vpack.c.b16 %v5431, %v5419
    %v6008 = vpack.c.b16 %v5432, %v5420
    %v6009 = vpack.c.b16 %v5433, %v5421
    %v6010 = vpack.c.b16 %v5434, %v5422
    %v6011 = vpack.c.b16 %v5435, %v5423
    %v6012 = vpack.c.b16 %v5448, %v5436
    %v6013 = vpack.c.b16 %v5449, %v5437
    %v6014 = vpack.c.b16 %v5450, %v5438
    %v6015 = vpack.c.b16 %v5451, %v5439
    %v6016 = vpack.c.b16 %v5452, %v5440
    %v6017 = vpack.c.b16 %v5453, %v5441
    %v6018 = vpack.c.b16 %v5454, %v5442
    %v6019 = vpack.c.b16 %v5455, %v5443
    %v6020 = vpack.c.b16 %v5456, %v5444
    %v6021 = vpack.c.b16 %v5457, %v5445
    %v6022 = vpack.c.b16 %v5458, %v5446
    %v6023 = vpack.c.b16 %v5459, %v5447
    %v6024 = vpack.c.b16 %v5472, %v5460
    %v6025 = vpack.c.b16 %v5473, %v5461
    %v6026 = vpack.c.b16 %v5474, %v5462
    %v6027 = vpack.c.b16 %v5475, %v5463
    %v6028 = vpack.c.b16 %v5476, %v5464
    %v6029 = vpack.c.b16 %v5477, %v5465
    %v6030 = vpack.c.b16 %v5478, %v5466
    %v6031 = vpack.c.b16 %v5479, %v5467
    %v6032 = vpack.c.b16 %v5480, %v5468
    %v6033 = vpack.c.b16 %v5481, %v5469
    %v6034 = vpack.c.b16 %v5482, %v5470
    %v6035 = vpack.c.b16 %v5483, %v5471
    %v6036 = vpack.c.b16 %v5496, %v5484
    %v6037 = vpack.c.b16 %v5497, %v5485
    %v6038 = vpack.c.b16 %v5498, %v5486
    %v6039 = vpack.c.b16 %v5499, %v5487
    %v6040 = vpack.c.b16 %v5500, %v5488
    %v6041 = vpack.c.b16 %v5501, %v5489
    %v6042 = vpack.c.b16 %v5502, %v5490
    %v6043 = vpack.c.b16 %v5503, %v5491
    %v6044 = vpack.c.b16 %v5504, %v5492
    %v6045 = vpack.c.b16 %v5505, %v5493
    %v6046 = vpack.c.b16 %v5506, %v5494
    %v6047 = vpack.c.b16 %v5507, %v5495
    %v6048 = vpack.c.b16 %v5520, %v5508
    %v6049 = vpack.c.b16 %v5521, %v5509
    %v6050 = vpack.c.b16 %v5522, %v5510
    %v6051 = vpack.c.b16 %v5523, %v5511
    %v6052 = vpack.c.b16 %v5524, %v5512
    %v6053 = vpack.c.b16 %v5525, %v5513
    %v6054 = vpack.c.b16 %v5526, %v5514
    %v6055 = vpack.c.b16 %v5527, %v5515
    %v6056 = vpack.c.b16 %v5528, %v5516
    %v6057 = vpack.c.b16 %v5529, %v5517
    %v6058 = vpack.c.b16 %v5530, %v5518
    %v6059 = vpack.c.b16 %v5531, %v5519
    %v6060 = vpack.c.b16 %v5544, %v5532
    %v6061 = vpack.c.b16 %v5545, %v5533
    %v6062 = vpack.c.b16 %v5546, %v5534
    %v6063 = vpack.c.b16 %v5547, %v5535
    %v6064 = vpack.c.b16 %v5548, %v5536
    %v6065 = vpack.c.b16 %v5549, %v5537
    %v6066 = vpack.c.b16 %v5550, %v5538
    %v6067 = vpack.c.b16 %v5551, %v5539
    %v6068 = vpack.c.b16 %v5552, %v5540
    %v6069 = vpack.c.b16 %v5553, %v5541
    %v6070 = vpack.c.b16 %v5554, %v5542
    %v6071 = vpack.c.b16 %v5555, %v5543
    %v6072 = vpack.c.b16 %v5568, %v5556
    %v6073 = vpack.c.b16 %v5569, %v5557
    %v6074 = vpack.c.b16 %v5570, %v5558
    %v6075 = vpack.c.b16 %v5571, %v5559
    %v6076 = vpack.c.b16 %v5572, %v5560
    %v6077 = vpack.c.b16 %v5573, %v5561
    %v6078 = vpack.c.b16 %v5574, %v5562
    %v6079 = vpack.c.b16 %v5575, %v5563
    %v6080 = vpack.c.b16 %v5576, %v5564
    %v6081 = vpack.c.b16 %v5577, %v5565
    %v6082 = vpack.c.b16 %v5578, %v5566
    %v6083 = vpack.c.b16 %v5579, %v5567
    %v6084 = vpack.c.b16 %v5592, %v5580
    %v6085 = vpack.c.b16 %v5593, %v5581
    %v6086 = vpack.c.b16 %v5594, %v5582
    %v6087 = vpack.c.b16 %v5595, %v5583
    %v6088 = vpack.c.b16 %v5596, %v5584
    %v6089 = vpack.c.b16 %v5597, %v5585
    %v6090 = vpack.c.b16 %v5598, %v5586
    %v6091 = vpack.c.b16 %v5599, %v5587
    %v6092 = vpack.c.b16 %v5600, %v5588
    %v6093 = vpack.c.b16 %v5601, %v5589
    %v6094 = vpack.c.b16 %v5602, %v5590
    %v6095 = vpack.c.b16 %v5603, %v5591
    %v6096 = vpack.c.b16 %v5616, %v5604
    %v6097 = vpack.c.b16 %v5617, %v5605
    %v6098 = vpack.c.b16 %v5618, %v5606
    %v6099 = vpack.c.b16 %v5619, %v5607
    %v6100 = vpack.c.b16 %v5620, %v5608
    %v6101 = vpack.c.b16 %v5621, %v5609
    %v6102 = vpack.c.b16 %v5622, %v5610
    %v6103 = vpack.c.b16 %v5623, %v5611
    %v6104 = vpack.c.b16 %v5624, %v5612
    %v6105 = vpack.c.b16 %v5625, %v5613
    %v6106 = vpack.c.b16 %v5626, %v5614
    %v6107 = vpack.c.b16 %v5627, %v5615
    %v6108 = vpack.c.b16 %v5640, %v5628
    %v6109 = vpack.c.b16 %v5641, %v5629
    %v6110 = vpack.c.b16 %v5642, %v5630
    %v6111 = vpack.c.b16 %v5643, %v5631
    %v6112 = vpack.c.b16 %v5644, %v5632
    %v6113 = vpack.c.b16 %v5645, %v5633
    %v6114 = vpack.c.b16 %v5646, %v5634
    %v6115 = vpack.c.b16 %v5647, %v5635
    %v6116 = vpack.c.b16 %v5648, %v5636
    %v6117 = vpack.c.b16 %v5649, %v5637
    %v6118 = vpack.c.b16 %v5650, %v5638
    %v6119 = vpack.c.b16 %v5651, %v5639
    %v6120 = vpack.c.b16 %v5664, %v5652
    %v6121 = vpack.c.b16 %v5665, %v5653
    %v6122 = vpack.c.b16 %v5666, %v5654
    %v6123 = vpack.c.b16 %v5667, %v5655
    %v6124 = vpack.c.b16 %v5668, %v5656
    %v6125 = vpack.c.b16 %v5669, %v5657
    %v6126 = vpack.c.b16 %v5670, %v5658
    %v6127 = vpack.c.b16 %v5671, %v5659
    %v6128 = vpack.c.b16 %v5672, %v5660
    %v6129 = vpack.c.b16 %v5673, %v5661
    %v6130 = vpack.c.b16 %v5674, %v5662
    %v6131 = vpack.c.b16 %v5675, %v5663
    %v6132 = vpack.c.b16 %v5688, %v5676
    %v6133 = vpack.c.b16 %v5689, %v5677
    %v6134 = vpack.c.b16 %v5690, %v5678
    %v6135 = vpack.c.b16 %v5691, %v5679
    %v6136 = vpack.c.b16 %v5692, %v5680
    %v6137 = vpack.c.b16 %v5693, %v5681
    %v6138 = vpack.c.b16 %v5694, %v5682
    %v6139 = vpack.c.b16 %v5695, %v5683
    %v6140 = vpack.c.b16 %v5696, %v5684
    %v6141 = vpack.c.b16 %v5697, %v5685
    %v6142 = vpack.c.b16 %v5698, %v5686
    %v6143 = vpack.c.b16 %v5699, %v5687
    %v6144 = vpack.c.b16 %v5712, %v5700
    %v6145 = vpack.c.b16 %v5713, %v5701
    %v6146 = vpack.c.b16 %v5714, %v5702
    %v6147 = vpack.c.b16 %v5715, %v5703
    %v6148 = vpack.c.b16 %v5716, %v5704
    %v6149 = vpack.c.b16 %v5717, %v5705
    %v6150 = vpack.c.b16 %v5718, %v5706
    %v6151 = vpack.c.b16 %v5719, %v5707
    %v6152 = vpack.c.b16 %v5720, %v5708
    %v6153 = vpack.c.b16 %v5721, %v5709
    %v6154 = vpack.c.b16 %v5722, %v5710
    %v6155 = vpack.c.b16 %v5723, %v5711
    %v6156 = vpack.c.b16 %v5736, %v5724
    %v6157 = vpack.c.b16 %v5737, %v5725
    %v6158 = vpack.c.b16 %v5738, %v5726
    %v6159 = vpack.c.b16 %v5739, %v5727
    %v6160 = vpack.c.b16 %v5740, %v5728
    %v6161 = vpack.c.b16 %v5741, %v5729
    %v6162 = vpack.c.b16 %v5742, %v5730
    %v6163 = vpack.c.b16 %v5743, %v5731
    %v6164 = vpack.c.b16 %v5744, %v5732
    %v6165 = vpack.c.b16 %v5745, %v5733
    %v6166 = vpack.c.b16 %v5746, %v5734
    %v6167 = vpack.c.b16 %v5747, %v5735
    %v6168 = vpack.c.b16 %v5760, %v5748
    %v6169 = vpack.c.b16 %v5761, %v5749
    %v6170 = vpack.c.b16 %v5762, %v5750
    %v6171 = vpack.c.b16 %v5763, %v5751
    %v6172 = vpack.c.b16 %v5764, %v5752
    %v6173 = vpack.c.b16 %v5765, %v5753
    %v6174 = vpack.c.b16 %v5766, %v5754
    %v6175 = vpack.c.b16 %v5767, %v5755
    %v6176 = vpack.c.b16 %v5768, %v5756
    %v6177 = vpack.c.b16 %v5769, %v5757
    %v6178 = vpack.c.b16 %v5770, %v5758
    %v6179 = vpack.c.b16 %v5771, %v5759
    %v6180 = vpack.c.b16 %v5784, %v5772
    %v6181 = vpack.c.b16 %v5785, %v5773
    %v6182 = vpack.c.b16 %v5786, %v5774
    %v6183 = vpack.c.b16 %v5787, %v5775
    %v6184 = vpack.c.b16 %v5788, %v5776
    %v6185 = vpack.c.b16 %v5789, %v5777
    %v6186 = vpack.c.b16 %v5790, %v5778
    %v6187 = vpack.c.b16 %v5791, %v5779
    %v6188 = vpack.c.b16 %v5792, %v5780
    %v6189 = vpack.c.b16 %v5793, %v5781
    %v6190 = vpack.c.b16 %v5794, %v5782
    %v6191 = vpack.c.b16 %v5795, %v5783
    %v6192 = vpack.c.b16 %v5808, %v5796
    %v6193 = vpack.c.b16 %v5809, %v5797
    %v6194 = vpack.c.b16 %v5810, %v5798
    %v6195 = vpack.c.b16 %v5811, %v5799
    %v6196 = vpack.c.b16 %v5812, %v5800
    %v6197 = vpack.c.b16 %v5813, %v5801
    %v6198 = vpack.c.b16 %v5814, %v5802
    %v6199 = vpack.c.b16 %v5815, %v5803
    %v6200 = vpack.c.b16 %v5816, %v5804
    %v6201 = vpack.c.b16 %v5817, %v5805
    %v6202 = vpack.c.b16 %v5818, %v5806
    %v6203 = vpack.c.b16 %v5819, %v5807
    %6588 = vmatprep.subr.bf16.mxu0 %v5905
    %6589 = vmatpush1.bf16.msra.mxu0 %v5904
    %6590 = vmatprep.subr.bf16.mxu0 %v5893
    %6591 = vmatpush1.bf16.msra.mxu0 %v5892
    %6592 = vmatprep.subr.bf16.mxu0 %v5881
    %6593 = vmatpush1.bf16.msra.mxu0 %v5880
    %6594 = vmatprep.subr.bf16.mxu0 %v5869
    %6595 = vmatpush1.bf16.msra.mxu0 %v5868
    %6596 = vmatprep.subr.bf16.mxu0 %v5857
    %6597 = vmatpush1.bf16.msra.mxu0 %v5856
    %6598 = vmatprep.subr.bf16.mxu0 %v5845
    %6599 = vmatpush1.bf16.msra.mxu0 %v5844
    %6600 = vmatprep.subr.bf16.mxu0 %v5833
    %6601 = vmatpush1.bf16.msra.mxu0 %v5832
    %6602 = vmatprep.subr.bf16.mxu0 %v5821
    %6603 = vmatpush1.bf16.msra.mxu0 %v5820
    %6604 = vmatprep.subr.bf16.mxu0 %v6001
    %6605 = vmatpush2.bf16.msra.mxu0 %v6000
    %6606 = vmatprep.subr.bf16.mxu0 %v5989
    %6607 = vmatpush2.bf16.msra.mxu0 %v5988
    %6608 = vmatprep.subr.bf16.mxu0 %v5977
    %6609 = vmatpush2.bf16.msra.mxu0 %v5976
    %6610 = vmatprep.subr.bf16.mxu0 %v5965
    %6611 = vmatpush2.bf16.msra.mxu0 %v5964
    %6612 = vmatprep.subr.bf16.mxu0 %v5953
    %6613 = vmatpush2.bf16.msra.mxu0 %v5952
    %6614 = vmatprep.subr.bf16.mxu0 %v5941
    %6615 = vmatpush2.bf16.msra.mxu0 %v5940
    %6616 = vmatprep.subr.bf16.mxu0 %v5929
    %6617 = vmatpush2.bf16.msra.mxu0 %v5928
    %6618 = vmatprep.subr.bf16.mxu0 %v5917
    %6619 = vmatpush2.bf16.msra.mxu0 %v5916
    %6620 = vmatprep.mubr.bf16.mxu0 %v4603
    %6621 = vmatmul.mubr.bf16.gmra.mxu0 %v4602
    %v6622 = vpop.f32.mrf.mxu0
    %v6623 = vadd.f32 %v4611, %v6622
    %v6624 = vpop.f32.mrf.mxu0
    %v6625 = vadd.f32 %v4615, %v6624
    %v6626 = vpop.f32.mrf.mxu0
    %v6627 = vpop.f32.mrf.mxu0
    %6628 = vdwg.mxu0
    %6629 = vmatprep.subr.bf16.mxu0 %v6097
    %6630 = vmatpush1.bf16.msra.mxu0 %v6096
    %6631 = vmatprep.subr.bf16.mxu0 %v6085
    %6632 = vmatpush1.bf16.msra.mxu0 %v6084
    %6633 = vmatprep.subr.bf16.mxu0 %v6073
    %6634 = vmatpush1.bf16.msra.mxu0 %v6072
    %6635 = vmatprep.subr.bf16.mxu0 %v6061
    %6636 = vmatpush1.bf16.msra.mxu0 %v6060
    %6637 = vmatprep.subr.bf16.mxu0 %v6049
    %6638 = vmatpush1.bf16.msra.mxu0 %v6048
    %6639 = vmatprep.subr.bf16.mxu0 %v6037
    %6640 = vmatpush1.bf16.msra.mxu0 %v6036
    %6641 = vmatprep.subr.bf16.mxu0 %v6025
    %6642 = vmatpush1.bf16.msra.mxu0 %v6024
    %6643 = vmatprep.subr.bf16.mxu0 %v6013
    %6644 = vmatpush1.bf16.msra.mxu0 %v6012
    %6645 = vmatprep.subr.bf16.mxu0 %v6193
    %6646 = vmatpush2.bf16.msra.mxu0 %v6192
    %6647 = vmatprep.subr.bf16.mxu0 %v6181
    %6648 = vmatpush2.bf16.msra.mxu0 %v6180
    %6649 = vmatprep.subr.bf16.mxu0 %v6169
    %6650 = vmatpush2.bf16.msra.mxu0 %v6168
    %6651 = vmatprep.subr.bf16.mxu0 %v6157
    %6652 = vmatpush2.bf16.msra.mxu0 %v6156
    %6653 = vmatprep.subr.bf16.mxu0 %v6145
    %6654 = vmatpush2.bf16.msra.mxu0 %v6144
    %6655 = vmatprep.subr.bf16.mxu0 %v6133
    %6656 = vmatpush2.bf16.msra.mxu0 %v6132
    %6657 = vmatprep.subr.bf16.mxu0 %v6121
    %6658 = vmatpush2.bf16.msra.mxu0 %v6120
    %6659 = vmatprep.subr.bf16.mxu0 %v6109
    %6660 = vmatpush2.bf16.msra.mxu0 %v6108
    %6661 = vmatprep.mubr.bf16.mxu0 %v4605
    %6662 = vmatmul.mubr.bf16.gmra.mxu0 %v4604
    %v6663 = vpop.f32.mrf.mxu0
    %v6664 = vadd.f32 %v6623, %v6663
    %v6665 = vpop.f32.mrf.mxu0
    %v6666 = vadd.f32 %v6625, %v6665
    %v6667 = vpop.f32.mrf.mxu0
    %v6668 = vpop.f32.mrf.mxu0
    %6669 = vdwg.mxu0
    %6670 = vmatprep.subr.bf16.mxu0 %v5907
    %6671 = vmatpush1.bf16.msra.mxu0 %v5906
    %6672 = vmatprep.subr.bf16.mxu0 %v5895
    %6673 = vmatpush1.bf16.msra.mxu0 %v5894
    %6674 = vmatprep.subr.bf16.mxu0 %v5883
    %6675 = vmatpush1.bf16.msra.mxu0 %v5882
    %6676 = vmatprep.subr.bf16.mxu0 %v5871
    %6677 = vmatpush1.bf16.msra.mxu0 %v5870
    %6678 = vmatprep.subr.bf16.mxu0 %v5859
    %6679 = vmatpush1.bf16.msra.mxu0 %v5858
    %6680 = vmatprep.subr.bf16.mxu0 %v5847
    %6681 = vmatpush1.bf16.msra.mxu0 %v5846
    %6682 = vmatprep.subr.bf16.mxu0 %v5835
    %6683 = vmatpush1.bf16.msra.mxu0 %v5834
    %6684 = vmatprep.subr.bf16.mxu0 %v5823
    %6685 = vmatpush1.bf16.msra.mxu0 %v5822
    %6686 = vmatprep.subr.bf16.mxu0 %v6003
    %6687 = vmatpush2.bf16.msra.mxu0 %v6002
    %6688 = vmatprep.subr.bf16.mxu0 %v5991
    %6689 = vmatpush2.bf16.msra.mxu0 %v5990
    %6690 = vmatprep.subr.bf16.mxu0 %v5979
    %6691 = vmatpush2.bf16.msra.mxu0 %v5978
    %6692 = vmatprep.subr.bf16.mxu0 %v5967
    %6693 = vmatpush2.bf16.msra.mxu0 %v5966
    %6694 = vmatprep.subr.bf16.mxu0 %v5955
    %6695 = vmatpush2.bf16.msra.mxu0 %v5954
    %6696 = vmatprep.subr.bf16.mxu0 %v5943
    %6697 = vmatpush2.bf16.msra.mxu0 %v5942
    %6698 = vmatprep.subr.bf16.mxu0 %v5931
    %6699 = vmatpush2.bf16.msra.mxu0 %v5930
    %6700 = vmatprep.subr.bf16.mxu0 %v5919
    %6701 = vmatpush2.bf16.msra.mxu0 %v5918
    %6702 = vmatprep.mubr.bf16.mxu0 %v4603
    %6703 = vmatmul.mubr.bf16.gmra.mxu0 %v4602
    %v6704 = vpop.f32.mrf.mxu0
    %v6705 = vadd.f32 %v4619, %v6704
    %v6706 = vpop.f32.mrf.mxu0
    %v6707 = vadd.f32 %v4623, %v6706
    %v6708 = vpop.f32.mrf.mxu0
    %v6709 = vpop.f32.mrf.mxu0
    %6710 = vdwg.mxu0
    %6711 = vmatprep.subr.bf16.mxu0 %v6099
    %6712 = vmatpush1.bf16.msra.mxu0 %v6098
    %6713 = vmatprep.subr.bf16.mxu0 %v6087
    %6714 = vmatpush1.bf16.msra.mxu0 %v6086
    %6715 = vmatprep.subr.bf16.mxu0 %v6075
    %6716 = vmatpush1.bf16.msra.mxu0 %v6074
    %6717 = vmatprep.subr.bf16.mxu0 %v6063
    %6718 = vmatpush1.bf16.msra.mxu0 %v6062
    %6719 = vmatprep.subr.bf16.mxu0 %v6051
    %6720 = vmatpush1.bf16.msra.mxu0 %v6050
    %6721 = vmatprep.subr.bf16.mxu0 %v6039
    %6722 = vmatpush1.bf16.msra.mxu0 %v6038
    %6723 = vmatprep.subr.bf16.mxu0 %v6027
    %6724 = vmatpush1.bf16.msra.mxu0 %v6026
    %6725 = vmatprep.subr.bf16.mxu0 %v6015
    %6726 = vmatpush1.bf16.msra.mxu0 %v6014
    %6727 = vmatprep.subr.bf16.mxu0 %v6195
    %6728 = vmatpush2.bf16.msra.mxu0 %v6194
    %6729 = vmatprep.subr.bf16.mxu0 %v6183
    %6730 = vmatpush2.bf16.msra.mxu0 %v6182
    %6731 = vmatprep.subr.bf16.mxu0 %v6171
    %6732 = vmatpush2.bf16.msra.mxu0 %v6170
    %6733 = vmatprep.subr.bf16.mxu0 %v6159
    %6734 = vmatpush2.bf16.msra.mxu0 %v6158
    %6735 = vmatprep.subr.bf16.mxu0 %v6147
    %6736 = vmatpush2.bf16.msra.mxu0 %v6146
    %6737 = vmatprep.subr.bf16.mxu0 %v6135
    %6738 = vmatpush2.bf16.msra.mxu0 %v6134
    %6739 = vmatprep.subr.bf16.mxu0 %v6123
    %6740 = vmatpush2.bf16.msra.mxu0 %v6122
    %6741 = vmatprep.subr.bf16.mxu0 %v6111
    %6742 = vmatpush2.bf16.msra.mxu0 %v6110
    %6743 = vmatprep.mubr.bf16.mxu0 %v4605
    %6744 = vmatmul.mubr.bf16.gmra.mxu0 %v4604
    %v6745 = vpop.f32.mrf.mxu0
    %v6746 = vadd.f32 %v6705, %v6745
    %v6747 = vpop.f32.mrf.mxu0
    %v6748 = vadd.f32 %v6707, %v6747
    %v6749 = vpop.f32.mrf.mxu0
    %v6750 = vpop.f32.mrf.mxu0
    %6751 = vdwg.mxu0
    %6752 = vmatprep.subr.bf16.mxu0 %v5909
    %6753 = vmatpush1.bf16.msra.mxu0 %v5908
    %6754 = vmatprep.subr.bf16.mxu0 %v5897
    %6755 = vmatpush1.bf16.msra.mxu0 %v5896
    %6756 = vmatprep.subr.bf16.mxu0 %v5885
    %6757 = vmatpush1.bf16.msra.mxu0 %v5884
    %6758 = vmatprep.subr.bf16.mxu0 %v5873
    %6759 = vmatpush1.bf16.msra.mxu0 %v5872
    %6760 = vmatprep.subr.bf16.mxu0 %v5861
    %6761 = vmatpush1.bf16.msra.mxu0 %v5860
    %6762 = vmatprep.subr.bf16.mxu0 %v5849
    %6763 = vmatpush1.bf16.msra.mxu0 %v5848
    %6764 = vmatprep.subr.bf16.mxu0 %v5837
    %6765 = vmatpush1.bf16.msra.mxu0 %v5836
    %6766 = vmatprep.subr.bf16.mxu0 %v5825
    %6767 = vmatpush1.bf16.msra.mxu0 %v5824
    %6768 = vmatprep.subr.bf16.mxu0 %v6005
    %6769 = vmatpush2.bf16.msra.mxu0 %v6004
    %6770 = vmatprep.subr.bf16.mxu0 %v5993
    %6771 = vmatpush2.bf16.msra.mxu0 %v5992
    %6772 = vmatprep.subr.bf16.mxu0 %v5981
    %6773 = vmatpush2.bf16.msra.mxu0 %v5980
    %6774 = vmatprep.subr.bf16.mxu0 %v5969
    %6775 = vmatpush2.bf16.msra.mxu0 %v5968
    %6776 = vmatprep.subr.bf16.mxu0 %v5957
    %6777 = vmatpush2.bf16.msra.mxu0 %v5956
    %6778 = vmatprep.subr.bf16.mxu0 %v5945
    %6779 = vmatpush2.bf16.msra.mxu0 %v5944
    %6780 = vmatprep.subr.bf16.mxu0 %v5933
    %6781 = vmatpush2.bf16.msra.mxu0 %v5932
    %6782 = vmatprep.subr.bf16.mxu0 %v5921
    %6783 = vmatpush2.bf16.msra.mxu0 %v5920
    %6784 = vmatprep.mubr.bf16.mxu0 %v4603
    %6785 = vmatmul.mubr.bf16.gmra.mxu0 %v4602
    %v6786 = vpop.f32.mrf.mxu0
    %v6787 = vadd.f32 %v4627, %v6786
    %v6788 = vpop.f32.mrf.mxu0
    %v6789 = vadd.f32 %v4631, %v6788
    %v6790 = vpop.f32.mrf.mxu0
    %v6791 = vpop.f32.mrf.mxu0
    %6792 = vdwg.mxu0
    %6793 = vmatprep.subr.bf16.mxu0 %v6101
    %6794 = vmatpush1.bf16.msra.mxu0 %v6100
    %6795 = vmatprep.subr.bf16.mxu0 %v6089
    %6796 = vmatpush1.bf16.msra.mxu0 %v6088
    %6797 = vmatprep.subr.bf16.mxu0 %v6077
    %6798 = vmatpush1.bf16.msra.mxu0 %v6076
    %6799 = vmatprep.subr.bf16.mxu0 %v6065
    %6800 = vmatpush1.bf16.msra.mxu0 %v6064
    %6801 = vmatprep.subr.bf16.mxu0 %v6053
    %6802 = vmatpush1.bf16.msra.mxu0 %v6052
    %6803 = vmatprep.subr.bf16.mxu0 %v6041
    %6804 = vmatpush1.bf16.msra.mxu0 %v6040
    %6805 = vmatprep.subr.bf16.mxu0 %v6029
    %6806 = vmatpush1.bf16.msra.mxu0 %v6028
    %6807 = vmatprep.subr.bf16.mxu0 %v6017
    %6808 = vmatpush1.bf16.msra.mxu0 %v6016
    %6809 = vmatprep.subr.bf16.mxu0 %v6197
    %6810 = vmatpush2.bf16.msra.mxu0 %v6196
    %6811 = vmatprep.subr.bf16.mxu0 %v6185
    %6812 = vmatpush2.bf16.msra.mxu0 %v6184
    %6813 = vmatprep.subr.bf16.mxu0 %v6173
    %6814 = vmatpush2.bf16.msra.mxu0 %v6172
    %6815 = vmatprep.subr.bf16.mxu0 %v6161
    %6816 = vmatpush2.bf16.msra.mxu0 %v6160
    %6817 = vmatprep.subr.bf16.mxu0 %v6149
    %6818 = vmatpush2.bf16.msra.mxu0 %v6148
    %6819 = vmatprep.subr.bf16.mxu0 %v6137
    %6820 = vmatpush2.bf16.msra.mxu0 %v6136
    %6821 = vmatprep.subr.bf16.mxu0 %v6125
    %6822 = vmatpush2.bf16.msra.mxu0 %v6124
    %6823 = vmatprep.subr.bf16.mxu0 %v6113
    %6824 = vmatpush2.bf16.msra.mxu0 %v6112
    %6825 = vmatprep.mubr.bf16.mxu0 %v4605
    %6826 = vmatmul.mubr.bf16.gmra.mxu0 %v4604
    %v6827 = vpop.f32.mrf.mxu0
    %v6828 = vadd.f32 %v6787, %v6827
    %v6829 = vpop.f32.mrf.mxu0
    %v6830 = vadd.f32 %v6789, %v6829
    %v6831 = vpop.f32.mrf.mxu0
    %v6832 = vpop.f32.mrf.mxu0
    %6833 = vdwg.mxu0
    %6834 = vmatprep.subr.bf16.mxu0 %v5911
    %6835 = vmatpush1.bf16.msra.mxu0 %v5910
    %6836 = vmatprep.subr.bf16.mxu0 %v5899
    %6837 = vmatpush1.bf16.msra.mxu0 %v5898
    %6838 = vmatprep.subr.bf16.mxu0 %v5887
    %6839 = vmatpush1.bf16.msra.mxu0 %v5886
    %6840 = vmatprep.subr.bf16.mxu0 %v5875
    %6841 = vmatpush1.bf16.msra.mxu0 %v5874
    %6842 = vmatprep.subr.bf16.mxu0 %v5863
    %6843 = vmatpush1.bf16.msra.mxu0 %v5862
    %6844 = vmatprep.subr.bf16.mxu0 %v5851
    %6845 = vmatpush1.bf16.msra.mxu0 %v5850
    %6846 = vmatprep.subr.bf16.mxu0 %v5839
    %6847 = vmatpush1.bf16.msra.mxu0 %v5838
    %6848 = vmatprep.subr.bf16.mxu0 %v5827
    %6849 = vmatpush1.bf16.msra.mxu0 %v5826
    %6850 = vmatprep.subr.bf16.mxu0 %v6007
    %6851 = vmatpush2.bf16.msra.mxu0 %v6006
    %6852 = vmatprep.subr.bf16.mxu0 %v5995
    %6853 = vmatpush2.bf16.msra.mxu0 %v5994
    %6854 = vmatprep.subr.bf16.mxu0 %v5983
    %6855 = vmatpush2.bf16.msra.mxu0 %v5982
    %6856 = vmatprep.subr.bf16.mxu0 %v5971
    %6857 = vmatpush2.bf16.msra.mxu0 %v5970
    %6858 = vmatprep.subr.bf16.mxu0 %v5959
    %6859 = vmatpush2.bf16.msra.mxu0 %v5958
    %6860 = vmatprep.subr.bf16.mxu0 %v5947
    %6861 = vmatpush2.bf16.msra.mxu0 %v5946
    %6862 = vmatprep.subr.bf16.mxu0 %v5935
    %6863 = vmatpush2.bf16.msra.mxu0 %v5934
    %6864 = vmatprep.subr.bf16.mxu0 %v5923
    %6865 = vmatpush2.bf16.msra.mxu0 %v5922
    %6866 = vmatprep.mubr.bf16.mxu0 %v4603
    %6867 = vmatmul.mubr.bf16.gmra.mxu0 %v4602
    %v6868 = vpop.f32.mrf.mxu0
    %v6869 = vadd.f32 %v4635, %v6868
    %v6870 = vpop.f32.mrf.mxu0
    %v6871 = vadd.f32 %v4639, %v6870
    %v6872 = vpop.f32.mrf.mxu0
    %v6873 = vpop.f32.mrf.mxu0
    %6874 = vdwg.mxu0
    %6875 = vmatprep.subr.bf16.mxu0 %v6103
    %6876 = vmatpush1.bf16.msra.mxu0 %v6102
    %6877 = vmatprep.subr.bf16.mxu0 %v6091
    %6878 = vmatpush1.bf16.msra.mxu0 %v6090
    %6879 = vmatprep.subr.bf16.mxu0 %v6079
    %6880 = vmatpush1.bf16.msra.mxu0 %v6078
    %6881 = vmatprep.subr.bf16.mxu0 %v6067
    %6882 = vmatpush1.bf16.msra.mxu0 %v6066
    %6883 = vmatprep.subr.bf16.mxu0 %v6055
    %6884 = vmatpush1.bf16.msra.mxu0 %v6054
    %6885 = vmatprep.subr.bf16.mxu0 %v6043
    %6886 = vmatpush1.bf16.msra.mxu0 %v6042
    %6887 = vmatprep.subr.bf16.mxu0 %v6031
    %6888 = vmatpush1.bf16.msra.mxu0 %v6030
    %6889 = vmatprep.subr.bf16.mxu0 %v6019
    %6890 = vmatpush1.bf16.msra.mxu0 %v6018
    %6891 = vmatprep.subr.bf16.mxu0 %v6199
    %6892 = vmatpush2.bf16.msra.mxu0 %v6198
    %6893 = vmatprep.subr.bf16.mxu0 %v6187
    %6894 = vmatpush2.bf16.msra.mxu0 %v6186
    %6895 = vmatprep.subr.bf16.mxu0 %v6175
    %6896 = vmatpush2.bf16.msra.mxu0 %v6174
    %6897 = vmatprep.subr.bf16.mxu0 %v6163
    %6898 = vmatpush2.bf16.msra.mxu0 %v6162
    %6899 = vmatprep.subr.bf16.mxu0 %v6151
    %6900 = vmatpush2.bf16.msra.mxu0 %v6150
    %6901 = vmatprep.subr.bf16.mxu0 %v6139
    %6902 = vmatpush2.bf16.msra.mxu0 %v6138
    %6903 = vmatprep.subr.bf16.mxu0 %v6127
    %6904 = vmatpush2.bf16.msra.mxu0 %v6126
    %6905 = vmatprep.subr.bf16.mxu0 %v6115
    %6906 = vmatpush2.bf16.msra.mxu0 %v6114
    %6907 = vmatprep.mubr.bf16.mxu0 %v4605
    %6908 = vmatmul.mubr.bf16.gmra.mxu0 %v4604
    %v6909 = vpop.f32.mrf.mxu0
    %v6910 = vadd.f32 %v6869, %v6909
    %v6911 = vpop.f32.mrf.mxu0
    %v6912 = vadd.f32 %v6871, %v6911
    %v6913 = vpop.f32.mrf.mxu0
    %v6914 = vpop.f32.mrf.mxu0
    %6915 = vdwg.mxu0
    %6916 = vmatprep.subr.bf16.mxu0 %v5913
    %6917 = vmatpush1.bf16.msra.mxu0 %v5912
    %6918 = vmatprep.subr.bf16.mxu0 %v5901
    %6919 = vmatpush1.bf16.msra.mxu0 %v5900
    %6920 = vmatprep.subr.bf16.mxu0 %v5889
    %6921 = vmatpush1.bf16.msra.mxu0 %v5888
    %6922 = vmatprep.subr.bf16.mxu0 %v5877
    %6923 = vmatpush1.bf16.msra.mxu0 %v5876
    %6924 = vmatprep.subr.bf16.mxu0 %v5865
    %6925 = vmatpush1.bf16.msra.mxu0 %v5864
    %6926 = vmatprep.subr.bf16.mxu0 %v5853
    %6927 = vmatpush1.bf16.msra.mxu0 %v5852
    %6928 = vmatprep.subr.bf16.mxu0 %v5841
    %6929 = vmatpush1.bf16.msra.mxu0 %v5840
    %6930 = vmatprep.subr.bf16.mxu0 %v5829
    %6931 = vmatpush1.bf16.msra.mxu0 %v5828
    %6932 = vmatprep.subr.bf16.mxu0 %v6009
    %6933 = vmatpush2.bf16.msra.mxu0 %v6008
    %6934 = vmatprep.subr.bf16.mxu0 %v5997
    %6935 = vmatpush2.bf16.msra.mxu0 %v5996
    %6936 = vmatprep.subr.bf16.mxu0 %v5985
    %6937 = vmatpush2.bf16.msra.mxu0 %v5984
    %6938 = vmatprep.subr.bf16.mxu0 %v5973
    %6939 = vmatpush2.bf16.msra.mxu0 %v5972
    %6940 = vmatprep.subr.bf16.mxu0 %v5961
    %6941 = vmatpush2.bf16.msra.mxu0 %v5960
    %6942 = vmatprep.subr.bf16.mxu0 %v5949
    %6943 = vmatpush2.bf16.msra.mxu0 %v5948
    %6944 = vmatprep.subr.bf16.mxu0 %v5937
    %6945 = vmatpush2.bf16.msra.mxu0 %v5936
    %6946 = vmatprep.subr.bf16.mxu0 %v5925
    %6947 = vmatpush2.bf16.msra.mxu0 %v5924
    %6948 = vmatprep.mubr.bf16.mxu0 %v4603
    %6949 = vmatmul.mubr.bf16.gmra.mxu0 %v4602
    %v6950 = vpop.f32.mrf.mxu0
    %v6951 = vadd.f32 %v4643, %v6950
    %v6952 = vpop.f32.mrf.mxu0
    %v6953 = vadd.f32 %v4647, %v6952
    %v6954 = vpop.f32.mrf.mxu0
    %v6955 = vpop.f32.mrf.mxu0
    %6956 = vdwg.mxu0
    %6957 = vmatprep.subr.bf16.mxu0 %v6105
    %6958 = vmatpush1.bf16.msra.mxu0 %v6104
    %6959 = vmatprep.subr.bf16.mxu0 %v6093
    %6960 = vmatpush1.bf16.msra.mxu0 %v6092
    %6961 = vmatprep.subr.bf16.mxu0 %v6081
    %6962 = vmatpush1.bf16.msra.mxu0 %v6080
    %6963 = vmatprep.subr.bf16.mxu0 %v6069
    %6964 = vmatpush1.bf16.msra.mxu0 %v6068
    %6965 = vmatprep.subr.bf16.mxu0 %v6057
    %6966 = vmatpush1.bf16.msra.mxu0 %v6056
    %6967 = vmatprep.subr.bf16.mxu0 %v6045
    %6968 = vmatpush1.bf16.msra.mxu0 %v6044
    %6969 = vmatprep.subr.bf16.mxu0 %v6033
    %6970 = vmatpush1.bf16.msra.mxu0 %v6032
    %6971 = vmatprep.subr.bf16.mxu0 %v6021
    %6972 = vmatpush1.bf16.msra.mxu0 %v6020
    %6973 = vmatprep.subr.bf16.mxu0 %v6201
    %6974 = vmatpush2.bf16.msra.mxu0 %v6200
    %6975 = vmatprep.subr.bf16.mxu0 %v6189
    %6976 = vmatpush2.bf16.msra.mxu0 %v6188
    %6977 = vmatprep.subr.bf16.mxu0 %v6177
    %6978 = vmatpush2.bf16.msra.mxu0 %v6176
    %6979 = vmatprep.subr.bf16.mxu0 %v6165
    %6980 = vmatpush2.bf16.msra.mxu0 %v6164
    %6981 = vmatprep.subr.bf16.mxu0 %v6153
    %6982 = vmatpush2.bf16.msra.mxu0 %v6152
    %6983 = vmatprep.subr.bf16.mxu0 %v6141
    %6984 = vmatpush2.bf16.msra.mxu0 %v6140
    %6985 = vmatprep.subr.bf16.mxu0 %v6129
    %6986 = vmatpush2.bf16.msra.mxu0 %v6128
    %6987 = vmatprep.subr.bf16.mxu0 %v6117
    %6988 = vmatpush2.bf16.msra.mxu0 %v6116
    %6989 = vmatprep.mubr.bf16.mxu0 %v4605
    %6990 = vmatmul.mubr.bf16.gmra.mxu0 %v4604
    %v6991 = vpop.f32.mrf.mxu0
    %v6992 = vadd.f32 %v6951, %v6991
    %v6993 = vpop.f32.mrf.mxu0
    %v6994 = vadd.f32 %v6953, %v6993
    %v6995 = vpop.f32.mrf.mxu0
    %v6996 = vpop.f32.mrf.mxu0
    %6997 = vdwg.mxu0
    %6998 = vmatprep.subr.bf16.mxu0 %v5915
    %6999 = vmatpush1.bf16.msra.mxu0 %v5914
    %7000 = vmatprep.subr.bf16.mxu0 %v5903
    %7001 = vmatpush1.bf16.msra.mxu0 %v5902
    %7002 = vmatprep.subr.bf16.mxu0 %v5891
    %7003 = vmatpush1.bf16.msra.mxu0 %v5890
    %7004 = vmatprep.subr.bf16.mxu0 %v5879
    %7005 = vmatpush1.bf16.msra.mxu0 %v5878
    %7006 = vmatprep.subr.bf16.mxu0 %v5867
    %7007 = vmatpush1.bf16.msra.mxu0 %v5866
    %7008 = vmatprep.subr.bf16.mxu0 %v5855
    %7009 = vmatpush1.bf16.msra.mxu0 %v5854
    %7010 = vmatprep.subr.bf16.mxu0 %v5843
    %7011 = vmatpush1.bf16.msra.mxu0 %v5842
    %7012 = vmatprep.subr.bf16.mxu0 %v5831
    %7013 = vmatpush1.bf16.msra.mxu0 %v5830
    %7014 = vmatprep.subr.bf16.mxu0 %v6011
    %7015 = vmatpush2.bf16.msra.mxu0 %v6010
    %7016 = vmatprep.subr.bf16.mxu0 %v5999
    %7017 = vmatpush2.bf16.msra.mxu0 %v5998
    %7018 = vmatprep.subr.bf16.mxu0 %v5987
    %7019 = vmatpush2.bf16.msra.mxu0 %v5986
    %7020 = vmatprep.subr.bf16.mxu0 %v5975
    %7021 = vmatpush2.bf16.msra.mxu0 %v5974
    %7022 = vmatprep.subr.bf16.mxu0 %v5963
    %7023 = vmatpush2.bf16.msra.mxu0 %v5962
    %7024 = vmatprep.subr.bf16.mxu0 %v5951
    %7025 = vmatpush2.bf16.msra.mxu0 %v5950
    %7026 = vmatprep.subr.bf16.mxu0 %v5939
    %7027 = vmatpush2.bf16.msra.mxu0 %v5938
    %7028 = vmatprep.subr.bf16.mxu0 %v5927
    %7029 = vmatpush2.bf16.msra.mxu0 %v5926
    %7030 = vmatprep.mubr.bf16.mxu0 %v4603
    %7031 = vmatmul.mubr.bf16.gmra.mxu0 %v4602
    %v7032 = vpop.f32.mrf.mxu0
    %v7033 = vadd.f32 %v4651, %v7032
    %v7034 = vpop.f32.mrf.mxu0
    %v7035 = vadd.f32 %v4655, %v7034
    %v7036 = vpop.f32.mrf.mxu0
    %v7037 = vpop.f32.mrf.mxu0
    %7038 = vdwg.mxu0
    %7039 = vmatprep.subr.bf16.mxu0 %v6107
    %7040 = vmatpush1.bf16.msra.mxu0 %v6106
    %7041 = vmatprep.subr.bf16.mxu0 %v6095
    %7042 = vmatpush1.bf16.msra.mxu0 %v6094
    %7043 = vmatprep.subr.bf16.mxu0 %v6083
    %7044 = vmatpush1.bf16.msra.mxu0 %v6082
    %7045 = vmatprep.subr.bf16.mxu0 %v6071
    %7046 = vmatpush1.bf16.msra.mxu0 %v6070
    %7047 = vmatprep.subr.bf16.mxu0 %v6059
    %7048 = vmatpush1.bf16.msra.mxu0 %v6058
    %7049 = vmatprep.subr.bf16.mxu0 %v6047
    %7050 = vmatpush1.bf16.msra.mxu0 %v6046
    %7051 = vmatprep.subr.bf16.mxu0 %v6035
    %7052 = vmatpush1.bf16.msra.mxu0 %v6034
    %7053 = vmatprep.subr.bf16.mxu0 %v6023
    %7054 = vmatpush1.bf16.msra.mxu0 %v6022
    %7055 = vmatprep.subr.bf16.mxu0 %v6203
    %7056 = vmatpush2.bf16.msra.mxu0 %v6202
    %7057 = vmatprep.subr.bf16.mxu0 %v6191
    %7058 = vmatpush2.bf16.msra.mxu0 %v6190
    %7059 = vmatprep.subr.bf16.mxu0 %v6179
    %7060 = vmatpush2.bf16.msra.mxu0 %v6178
    %7061 = vmatprep.subr.bf16.mxu0 %v6167
    %7062 = vmatpush2.bf16.msra.mxu0 %v6166
    %7063 = vmatprep.subr.bf16.mxu0 %v6155
    %7064 = vmatpush2.bf16.msra.mxu0 %v6154
    %7065 = vmatprep.subr.bf16.mxu0 %v6143
    %7066 = vmatpush2.bf16.msra.mxu0 %v6142
    %7067 = vmatprep.subr.bf16.mxu0 %v6131
    %7068 = vmatpush2.bf16.msra.mxu0 %v6130
    %7069 = vmatprep.subr.bf16.mxu0 %v6119
    %7070 = vmatpush2.bf16.msra.mxu0 %v6118
    %7071 = vmatprep.mubr.bf16.mxu0 %v4605
    %7072 = vmatmul.mubr.bf16.gmra.mxu0 %v4604
    %v7073 = vpop.f32.mrf.mxu0
    %v7074 = vadd.f32 %v7033, %v7073
    %v7075 = vpop.f32.mrf.mxu0
    %v7076 = vadd.f32 %v7035, %v7075
    %v7077 = vpop.f32.mrf.mxu0
    %v7078 = vpop.f32.mrf.mxu0
    %7079 = vdwg.mxu0
    %v7080 = vadd.f32 %v3686, %v6664
    %v7081 = vadd.f32 %v3688, %v6666
    %v7082 = vadd.f32 %v3788, %v6746
    %v7083 = vadd.f32 %v3790, %v6748
    %v7084 = vxor.u32 %v7080, 2147483648
    %v7085 = vxor.u32 %v7081, 2147483648
    %v7086 = vxor.u32 %v7082, 2147483648
    %v7087 = vxor.u32 %v7083, 2147483648
    %v7088 = vmul.f32 %v7084, 1.442695
    %v7089 = vpow.pop %v7088
    %v7090 = vmul.f32 %v7085, 1.442695
    %v7091 = vpow.pop %v7090
    %v7092 = vmul.f32 %v7086, 1.442695
    %v7093 = vpow.pop %v7092
    %v7094 = vmul.f32 %v7087, 1.442695
    %v7095 = vpow.pop %v7094
    %v7096 = vadd.f32 %v7089, 1.0
    %v7097 = vadd.f32 %v7091, 1.0
    %v7098 = vadd.f32 %v7093, 1.0
    %v7099 = vadd.f32 %v7095, 1.0
    %v7100 = vrcp.pop %v7096
    %v7101 = vmul.f32 1.0, %v7100
    %v7102 = vrcp.pop %v7097
    %v7103 = vmul.f32 1.0, %v7102
    %v7104 = vrcp.pop %v7098
    %v7105 = vmul.f32 1.0, %v7104
    %v7106 = vrcp.pop %v7099
    %v7107 = vmul.f32 1.0, %v7106
    %v7108 = vadd.f32 %v3890, %v6828
    %v7109 = vadd.f32 %v3892, %v6830
    %v7110 = vadd.f32 %v3992, %v6910
    %v7111 = vadd.f32 %v3994, %v6912
    %v7112 = vxor.u32 %v7108, 2147483648
    %v7113 = vxor.u32 %v7109, 2147483648
    %v7114 = vxor.u32 %v7110, 2147483648
    %v7115 = vxor.u32 %v7111, 2147483648
    %v7116 = vmul.f32 %v7112, 1.442695
    %v7117 = vpow.pop %v7116
    %v7118 = vmul.f32 %v7113, 1.442695
    %v7119 = vpow.pop %v7118
    %v7120 = vmul.f32 %v7114, 1.442695
    %v7121 = vpow.pop %v7120
    %v7122 = vmul.f32 %v7115, 1.442695
    %v7123 = vpow.pop %v7122
    %v7124 = vadd.f32 %v7117, 1.0
    %v7125 = vadd.f32 %v7119, 1.0
    %v7126 = vadd.f32 %v7121, 1.0
    %v7127 = vadd.f32 %v7123, 1.0
    %v7128 = vrcp.pop %v7124
    %v7129 = vmul.f32 1.0, %v7128
    %v7130 = vrcp.pop %v7125
    %v7131 = vmul.f32 1.0, %v7130
    %v7132 = vrcp.pop %v7126
    %v7133 = vmul.f32 1.0, %v7132
    %v7134 = vrcp.pop %v7127
    %v7135 = vmul.f32 1.0, %v7134
    %v7136 = vmul.f32 %v7101, %v6992
    %v7137 = vmul.f32 %v7103, %v6994
    %v7138 = vmul.f32 %v7105, %v7074
    %v7139 = vmul.f32 %v7107, %v7076
    %v7140 = vadd.f32 %v4094, %v7136
    %v7141 = vadd.f32 %v4096, %v7137
    %v7142 = vadd.f32 %v4196, %v7138
    %v7143 = vadd.f32 %v4198, %v7139
    %v7144 = vtanh.pop %v7140
    %v7145 = vtanh.pop %v7141
    %v7146 = vtanh.pop %v7142
    %v7147 = vtanh.pop %v7143
    %v7148 = vsub.f32 1.0, %v7129
    %v7149 = vsub.f32 1.0, %v7131
    %v7150 = vsub.f32 1.0, %v7133
    %v7151 = vsub.f32 1.0, %v7135
    %v7152 = vmul.f32 %v7148, %v7144
    %v7153 = vmul.f32 %v7149, %v7145
    %v7154 = vmul.f32 %v7150, %v7146
    %v7155 = vmul.f32 %v7151, %v7147
    %v7156 = vmul.f32 %v7129, %v4598
    %v7157 = vmul.f32 %v7131, %v4599
    %v7158 = vmul.f32 %v7133, %v4600
    %v7159 = vmul.f32 %v7135, %v4601
    %v7160 = vadd.f32 %v7152, %v7156
    %v7161 = vadd.f32 %v7153, %v7157
    %v7162 = vadd.f32 %v7154, %v7158
    %v7163 = vadd.f32 %v7155, %v7159
    %v7164 = vpack.c.bf16 %v7160, %v7160
    %v7165 = vpack.c.bf16 %v7161, %v7161
    %v7166 = vpack.c.bf16 %v7162, %v7162
    %v7167 = vpack.c.bf16 %v7163, %v7163
    %7168 = vmatprep.subr.bf16.mxu0 %v5905
    %7169 = vmatpush1.bf16.msra.mxu0 %v5904
    %7170 = vmatprep.subr.bf16.mxu0 %v5893
    %7171 = vmatpush1.bf16.msra.mxu0 %v5892
    %7172 = vmatprep.subr.bf16.mxu0 %v5881
    %7173 = vmatpush1.bf16.msra.mxu0 %v5880
    %7174 = vmatprep.subr.bf16.mxu0 %v5869
    %7175 = vmatpush1.bf16.msra.mxu0 %v5868
    %7176 = vmatprep.subr.bf16.mxu0 %v5857
    %7177 = vmatpush1.bf16.msra.mxu0 %v5856
    %7178 = vmatprep.subr.bf16.mxu0 %v5845
    %7179 = vmatpush1.bf16.msra.mxu0 %v5844
    %7180 = vmatprep.subr.bf16.mxu0 %v5833
    %7181 = vmatpush1.bf16.msra.mxu0 %v5832
    %7182 = vmatprep.subr.bf16.mxu0 %v5821
    %7183 = vmatpush1.bf16.msra.mxu0 %v5820
    %7184 = vmatprep.subr.bf16.mxu0 %v6001
    %7185 = vmatpush2.bf16.msra.mxu0 %v6000
    %7186 = vmatprep.subr.bf16.mxu0 %v5989
    %7187 = vmatpush2.bf16.msra.mxu0 %v5988
    %7188 = vmatprep.subr.bf16.mxu0 %v5977
    %7189 = vmatpush2.bf16.msra.mxu0 %v5976
    %7190 = vmatprep.subr.bf16.mxu0 %v5965
    %7191 = vmatpush2.bf16.msra.mxu0 %v5964
    %7192 = vmatprep.subr.bf16.mxu0 %v5953
    %7193 = vmatpush2.bf16.msra.mxu0 %v5952
    %7194 = vmatprep.subr.bf16.mxu0 %v5941
    %7195 = vmatpush2.bf16.msra.mxu0 %v5940
    %7196 = vmatprep.subr.bf16.mxu0 %v5929
    %7197 = vmatpush2.bf16.msra.mxu0 %v5928
    %7198 = vmatprep.subr.bf16.mxu0 %v5917
    %7199 = vmatpush2.bf16.msra.mxu0 %v5916
    %7200 = vmatprep.mubr.bf16.mxu0 %v7165
    %7201 = vmatmul.mubr.bf16.gmra.mxu0 %v7164
    %v7202 = vpop.f32.mrf.mxu0
    %v7203 = vadd.f32 %v4611, %v7202
    %v7204 = vpop.f32.mrf.mxu0
    %v7205 = vadd.f32 %v4615, %v7204
    %v7206 = vpop.f32.mrf.mxu0
    %v7207 = vpop.f32.mrf.mxu0
    %7208 = vdwg.mxu0
    %7209 = vmatprep.subr.bf16.mxu0 %v6097
    %7210 = vmatpush1.bf16.msra.mxu0 %v6096
    %7211 = vmatprep.subr.bf16.mxu0 %v6085
    %7212 = vmatpush1.bf16.msra.mxu0 %v6084
    %7213 = vmatprep.subr.bf16.mxu0 %v6073
    %7214 = vmatpush1.bf16.msra.mxu0 %v6072
    %7215 = vmatprep.subr.bf16.mxu0 %v6061
    %7216 = vmatpush1.bf16.msra.mxu0 %v6060
    %7217 = vmatprep.subr.bf16.mxu0 %v6049
    %7218 = vmatpush1.bf16.msra.mxu0 %v6048
    %7219 = vmatprep.subr.bf16.mxu0 %v6037
    %7220 = vmatpush1.bf16.msra.mxu0 %v6036
    %7221 = vmatprep.subr.bf16.mxu0 %v6025
    %7222 = vmatpush1.bf16.msra.mxu0 %v6024
    %7223 = vmatprep.subr.bf16.mxu0 %v6013
    %7224 = vmatpush1.bf16.msra.mxu0 %v6012
    %7225 = vmatprep.subr.bf16.mxu0 %v6193
    %7226 = vmatpush2.bf16.msra.mxu0 %v6192
    %7227 = vmatprep.subr.bf16.mxu0 %v6181
    %7228 = vmatpush2.bf16.msra.mxu0 %v6180
    %7229 = vmatprep.subr.bf16.mxu0 %v6169
    %7230 = vmatpush2.bf16.msra.mxu0 %v6168
    %7231 = vmatprep.subr.bf16.mxu0 %v6157
    %7232 = vmatpush2.bf16.msra.mxu0 %v6156
    %7233 = vmatprep.subr.bf16.mxu0 %v6145
    %7234 = vmatpush2.bf16.msra.mxu0 %v6144
    %7235 = vmatprep.subr.bf16.mxu0 %v6133
    %7236 = vmatpush2.bf16.msra.mxu0 %v6132
    %7237 = vmatprep.subr.bf16.mxu0 %v6121
    %7238 = vmatpush2.bf16.msra.mxu0 %v6120
    %7239 = vmatprep.subr.bf16.mxu0 %v6109
    %7240 = vmatpush2.bf16.msra.mxu0 %v6108
    %7241 = vmatprep.mubr.bf16.mxu0 %v7167
    %7242 = vmatmul.mubr.bf16.gmra.mxu0 %v7166
    %v7243 = vpop.f32.mrf.mxu0
    %v7244 = vadd.f32 %v7203, %v7243
    %v7245 = vpop.f32.mrf.mxu0
    %v7246 = vadd.f32 %v7205, %v7245
    %v7247 = vpop.f32.mrf.mxu0
    %v7248 = vpop.f32.mrf.mxu0
    %7249 = vdwg.mxu0
    %7250 = vmatprep.subr.bf16.mxu0 %v5907
    %7251 = vmatpush1.bf16.msra.mxu0 %v5906
    %7252 = vmatprep.subr.bf16.mxu0 %v5895
    %7253 = vmatpush1.bf16.msra.mxu0 %v5894
    %7254 = vmatprep.subr.bf16.mxu0 %v5883
    %7255 = vmatpush1.bf16.msra.mxu0 %v5882
    %7256 = vmatprep.subr.bf16.mxu0 %v5871
    %7257 = vmatpush1.bf16.msra.mxu0 %v5870
    %7258 = vmatprep.subr.bf16.mxu0 %v5859
    %7259 = vmatpush1.bf16.msra.mxu0 %v5858
    %7260 = vmatprep.subr.bf16.mxu0 %v5847
    %7261 = vmatpush1.bf16.msra.mxu0 %v5846
    %7262 = vmatprep.subr.bf16.mxu0 %v5835
    %7263 = vmatpush1.bf16.msra.mxu0 %v5834
    %7264 = vmatprep.subr.bf16.mxu0 %v5823
    %7265 = vmatpush1.bf16.msra.mxu0 %v5822
    %7266 = vmatprep.subr.bf16.mxu0 %v6003
    %7267 = vmatpush2.bf16.msra.mxu0 %v6002
    %7268 = vmatprep.subr.bf16.mxu0 %v5991
    %7269 = vmatpush2.bf16.msra.mxu0 %v5990
    %7270 = vmatprep.subr.bf16.mxu0 %v5979
    %7271 = vmatpush2.bf16.msra.mxu0 %v5978
    %7272 = vmatprep.subr.bf16.mxu0 %v5967
    %7273 = vmatpush2.bf16.msra.mxu0 %v5966
    %7274 = vmatprep.subr.bf16.mxu0 %v5955
    %7275 = vmatpush2.bf16.msra.mxu0 %v5954
    %7276 = vmatprep.subr.bf16.mxu0 %v5943
    %7277 = vmatpush2.bf16.msra.mxu0 %v5942
    %7278 = vmatprep.subr.bf16.mxu0 %v5931
    %7279 = vmatpush2.bf16.msra.mxu0 %v5930
    %7280 = vmatprep.subr.bf16.mxu0 %v5919
    %7281 = vmatpush2.bf16.msra.mxu0 %v5918
    %7282 = vmatprep.mubr.bf16.mxu0 %v7165
    %7283 = vmatmul.mubr.bf16.gmra.mxu0 %v7164
    %v7284 = vpop.f32.mrf.mxu0
    %v7285 = vadd.f32 %v4619, %v7284
    %v7286 = vpop.f32.mrf.mxu0
    %v7287 = vadd.f32 %v4623, %v7286
    %v7288 = vpop.f32.mrf.mxu0
    %v7289 = vpop.f32.mrf.mxu0
    %7290 = vdwg.mxu0
    %7291 = vmatprep.subr.bf16.mxu0 %v6099
    %7292 = vmatpush1.bf16.msra.mxu0 %v6098
    %7293 = vmatprep.subr.bf16.mxu0 %v6087
    %7294 = vmatpush1.bf16.msra.mxu0 %v6086
    %7295 = vmatprep.subr.bf16.mxu0 %v6075
    %7296 = vmatpush1.bf16.msra.mxu0 %v6074
    %7297 = vmatprep.subr.bf16.mxu0 %v6063
    %7298 = vmatpush1.bf16.msra.mxu0 %v6062
    %7299 = vmatprep.subr.bf16.mxu0 %v6051
    %7300 = vmatpush1.bf16.msra.mxu0 %v6050
    %7301 = vmatprep.subr.bf16.mxu0 %v6039
    %7302 = vmatpush1.bf16.msra.mxu0 %v6038
    %7303 = vmatprep.subr.bf16.mxu0 %v6027
    %7304 = vmatpush1.bf16.msra.mxu0 %v6026
    %7305 = vmatprep.subr.bf16.mxu0 %v6015
    %7306 = vmatpush1.bf16.msra.mxu0 %v6014
    %7307 = vmatprep.subr.bf16.mxu0 %v6195
    %7308 = vmatpush2.bf16.msra.mxu0 %v6194
    %7309 = vmatprep.subr.bf16.mxu0 %v6183
    %7310 = vmatpush2.bf16.msra.mxu0 %v6182
    %7311 = vmatprep.subr.bf16.mxu0 %v6171
    %7312 = vmatpush2.bf16.msra.mxu0 %v6170
    %7313 = vmatprep.subr.bf16.mxu0 %v6159
    %7314 = vmatpush2.bf16.msra.mxu0 %v6158
    %7315 = vmatprep.subr.bf16.mxu0 %v6147
    %7316 = vmatpush2.bf16.msra.mxu0 %v6146
    %7317 = vmatprep.subr.bf16.mxu0 %v6135
    %7318 = vmatpush2.bf16.msra.mxu0 %v6134
    %7319 = vmatprep.subr.bf16.mxu0 %v6123
    %7320 = vmatpush2.bf16.msra.mxu0 %v6122
    %7321 = vmatprep.subr.bf16.mxu0 %v6111
    %7322 = vmatpush2.bf16.msra.mxu0 %v6110
    %7323 = vmatprep.mubr.bf16.mxu0 %v7167
    %7324 = vmatmul.mubr.bf16.gmra.mxu0 %v7166
    %v7325 = vpop.f32.mrf.mxu0
    %v7326 = vadd.f32 %v7285, %v7325
    %v7327 = vpop.f32.mrf.mxu0
    %v7328 = vadd.f32 %v7287, %v7327
    %v7329 = vpop.f32.mrf.mxu0
    %v7330 = vpop.f32.mrf.mxu0
    %7331 = vdwg.mxu0
    %7332 = vmatprep.subr.bf16.mxu0 %v5909
    %7333 = vmatpush1.bf16.msra.mxu0 %v5908
    %7334 = vmatprep.subr.bf16.mxu0 %v5897
    %7335 = vmatpush1.bf16.msra.mxu0 %v5896
    %7336 = vmatprep.subr.bf16.mxu0 %v5885
    %7337 = vmatpush1.bf16.msra.mxu0 %v5884
    %7338 = vmatprep.subr.bf16.mxu0 %v5873
    %7339 = vmatpush1.bf16.msra.mxu0 %v5872
    %7340 = vmatprep.subr.bf16.mxu0 %v5861
    %7341 = vmatpush1.bf16.msra.mxu0 %v5860
    %7342 = vmatprep.subr.bf16.mxu0 %v5849
    %7343 = vmatpush1.bf16.msra.mxu0 %v5848
    %7344 = vmatprep.subr.bf16.mxu0 %v5837
    %7345 = vmatpush1.bf16.msra.mxu0 %v5836
    %7346 = vmatprep.subr.bf16.mxu0 %v5825
    %7347 = vmatpush1.bf16.msra.mxu0 %v5824
    %7348 = vmatprep.subr.bf16.mxu0 %v6005
    %7349 = vmatpush2.bf16.msra.mxu0 %v6004
    %7350 = vmatprep.subr.bf16.mxu0 %v5993
    %7351 = vmatpush2.bf16.msra.mxu0 %v5992
    %7352 = vmatprep.subr.bf16.mxu0 %v5981
    %7353 = vmatpush2.bf16.msra.mxu0 %v5980
    %7354 = vmatprep.subr.bf16.mxu0 %v5969
    %7355 = vmatpush2.bf16.msra.mxu0 %v5968
    %7356 = vmatprep.subr.bf16.mxu0 %v5957
    %7357 = vmatpush2.bf16.msra.mxu0 %v5956
    %7358 = vmatprep.subr.bf16.mxu0 %v5945
    %7359 = vmatpush2.bf16.msra.mxu0 %v5944
    %7360 = vmatprep.subr.bf16.mxu0 %v5933
    %7361 = vmatpush2.bf16.msra.mxu0 %v5932
    %7362 = vmatprep.subr.bf16.mxu0 %v5921
    %7363 = vmatpush2.bf16.msra.mxu0 %v5920
    %7364 = vmatprep.mubr.bf16.mxu0 %v7165
    %7365 = vmatmul.mubr.bf16.gmra.mxu0 %v7164
    %v7366 = vpop.f32.mrf.mxu0
    %v7367 = vadd.f32 %v4627, %v7366
    %v7368 = vpop.f32.mrf.mxu0
    %v7369 = vadd.f32 %v4631, %v7368
    %v7370 = vpop.f32.mrf.mxu0
    %v7371 = vpop.f32.mrf.mxu0
    %7372 = vdwg.mxu0
    %7373 = vmatprep.subr.bf16.mxu0 %v6101
    %7374 = vmatpush1.bf16.msra.mxu0 %v6100
    %7375 = vmatprep.subr.bf16.mxu0 %v6089
    %7376 = vmatpush1.bf16.msra.mxu0 %v6088
    %7377 = vmatprep.subr.bf16.mxu0 %v6077
    %7378 = vmatpush1.bf16.msra.mxu0 %v6076
    %7379 = vmatprep.subr.bf16.mxu0 %v6065
    %7380 = vmatpush1.bf16.msra.mxu0 %v6064
    %7381 = vmatprep.subr.bf16.mxu0 %v6053
    %7382 = vmatpush1.bf16.msra.mxu0 %v6052
    %7383 = vmatprep.subr.bf16.mxu0 %v6041
    %7384 = vmatpush1.bf16.msra.mxu0 %v6040
    %7385 = vmatprep.subr.bf16.mxu0 %v6029
    %7386 = vmatpush1.bf16.msra.mxu0 %v6028
    %7387 = vmatprep.subr.bf16.mxu0 %v6017
    %7388 = vmatpush1.bf16.msra.mxu0 %v6016
    %7389 = vmatprep.subr.bf16.mxu0 %v6197
    %7390 = vmatpush2.bf16.msra.mxu0 %v6196
    %7391 = vmatprep.subr.bf16.mxu0 %v6185
    %7392 = vmatpush2.bf16.msra.mxu0 %v6184
    %7393 = vmatprep.subr.bf16.mxu0 %v6173
    %7394 = vmatpush2.bf16.msra.mxu0 %v6172
    %7395 = vmatprep.subr.bf16.mxu0 %v6161
    %7396 = vmatpush2.bf16.msra.mxu0 %v6160
    %7397 = vmatprep.subr.bf16.mxu0 %v6149
    %7398 = vmatpush2.bf16.msra.mxu0 %v6148
    %7399 = vmatprep.subr.bf16.mxu0 %v6137
    %7400 = vmatpush2.bf16.msra.mxu0 %v6136
    %7401 = vmatprep.subr.bf16.mxu0 %v6125
    %7402 = vmatpush2.bf16.msra.mxu0 %v6124
    %7403 = vmatprep.subr.bf16.mxu0 %v6113
    %7404 = vmatpush2.bf16.msra.mxu0 %v6112
    %7405 = vmatprep.mubr.bf16.mxu0 %v7167
    %7406 = vmatmul.mubr.bf16.gmra.mxu0 %v7166
    %v7407 = vpop.f32.mrf.mxu0
    %v7408 = vadd.f32 %v7367, %v7407
    %v7409 = vpop.f32.mrf.mxu0
    %v7410 = vadd.f32 %v7369, %v7409
    %v7411 = vpop.f32.mrf.mxu0
    %v7412 = vpop.f32.mrf.mxu0
    %7413 = vdwg.mxu0
    %7414 = vmatprep.subr.bf16.mxu0 %v5911
    %7415 = vmatpush1.bf16.msra.mxu0 %v5910
    %7416 = vmatprep.subr.bf16.mxu0 %v5899
    %7417 = vmatpush1.bf16.msra.mxu0 %v5898
    %7418 = vmatprep.subr.bf16.mxu0 %v5887
    %7419 = vmatpush1.bf16.msra.mxu0 %v5886
    %7420 = vmatprep.subr.bf16.mxu0 %v5875
    %7421 = vmatpush1.bf16.msra.mxu0 %v5874
    %7422 = vmatprep.subr.bf16.mxu0 %v5863
    %7423 = vmatpush1.bf16.msra.mxu0 %v5862
    %7424 = vmatprep.subr.bf16.mxu0 %v5851
    %7425 = vmatpush1.bf16.msra.mxu0 %v5850
    %7426 = vmatprep.subr.bf16.mxu0 %v5839
    %7427 = vmatpush1.bf16.msra.mxu0 %v5838
    %7428 = vmatprep.subr.bf16.mxu0 %v5827
    %7429 = vmatpush1.bf16.msra.mxu0 %v5826
    %7430 = vmatprep.subr.bf16.mxu0 %v6007
    %7431 = vmatpush2.bf16.msra.mxu0 %v6006
    %7432 = vmatprep.subr.bf16.mxu0 %v5995
    %7433 = vmatpush2.bf16.msra.mxu0 %v5994
    %7434 = vmatprep.subr.bf16.mxu0 %v5983
    %7435 = vmatpush2.bf16.msra.mxu0 %v5982
    %7436 = vmatprep.subr.bf16.mxu0 %v5971
    %7437 = vmatpush2.bf16.msra.mxu0 %v5970
    %7438 = vmatprep.subr.bf16.mxu0 %v5959
    %7439 = vmatpush2.bf16.msra.mxu0 %v5958
    %7440 = vmatprep.subr.bf16.mxu0 %v5947
    %7441 = vmatpush2.bf16.msra.mxu0 %v5946
    %7442 = vmatprep.subr.bf16.mxu0 %v5935
    %7443 = vmatpush2.bf16.msra.mxu0 %v5934
    %7444 = vmatprep.subr.bf16.mxu0 %v5923
    %7445 = vmatpush2.bf16.msra.mxu0 %v5922
    %7446 = vmatprep.mubr.bf16.mxu0 %v7165
    %7447 = vmatmul.mubr.bf16.gmra.mxu0 %v7164
    %v7448 = vpop.f32.mrf.mxu0
    %v7449 = vadd.f32 %v4635, %v7448
    %v7450 = vpop.f32.mrf.mxu0
    %v7451 = vadd.f32 %v4639, %v7450
    %v7452 = vpop.f32.mrf.mxu0
    %v7453 = vpop.f32.mrf.mxu0
    %7454 = vdwg.mxu0
    %7455 = vmatprep.subr.bf16.mxu0 %v6103
    %7456 = vmatpush1.bf16.msra.mxu0 %v6102
    %7457 = vmatprep.subr.bf16.mxu0 %v6091
    %7458 = vmatpush1.bf16.msra.mxu0 %v6090
    %7459 = vmatprep.subr.bf16.mxu0 %v6079
    %7460 = vmatpush1.bf16.msra.mxu0 %v6078
    %7461 = vmatprep.subr.bf16.mxu0 %v6067
    %7462 = vmatpush1.bf16.msra.mxu0 %v6066
    %7463 = vmatprep.subr.bf16.mxu0 %v6055
    %7464 = vmatpush1.bf16.msra.mxu0 %v6054
    %7465 = vmatprep.subr.bf16.mxu0 %v6043
    %7466 = vmatpush1.bf16.msra.mxu0 %v6042
    %7467 = vmatprep.subr.bf16.mxu0 %v6031
    %7468 = vmatpush1.bf16.msra.mxu0 %v6030
    %7469 = vmatprep.subr.bf16.mxu0 %v6019
    %7470 = vmatpush1.bf16.msra.mxu0 %v6018
    %7471 = vmatprep.subr.bf16.mxu0 %v6199
    %7472 = vmatpush2.bf16.msra.mxu0 %v6198
    %7473 = vmatprep.subr.bf16.mxu0 %v6187
    %7474 = vmatpush2.bf16.msra.mxu0 %v6186
    %7475 = vmatprep.subr.bf16.mxu0 %v6175
    %7476 = vmatpush2.bf16.msra.mxu0 %v6174
    %7477 = vmatprep.subr.bf16.mxu0 %v6163
    %7478 = vmatpush2.bf16.msra.mxu0 %v6162
    %7479 = vmatprep.subr.bf16.mxu0 %v6151
    %7480 = vmatpush2.bf16.msra.mxu0 %v6150
    %7481 = vmatprep.subr.bf16.mxu0 %v6139
    %7482 = vmatpush2.bf16.msra.mxu0 %v6138
    %7483 = vmatprep.subr.bf16.mxu0 %v6127
    %7484 = vmatpush2.bf16.msra.mxu0 %v6126
    %7485 = vmatprep.subr.bf16.mxu0 %v6115
    %7486 = vmatpush2.bf16.msra.mxu0 %v6114
    %7487 = vmatprep.mubr.bf16.mxu0 %v7167
    %7488 = vmatmul.mubr.bf16.gmra.mxu0 %v7166
    %v7489 = vpop.f32.mrf.mxu0
    %v7490 = vadd.f32 %v7449, %v7489
    %v7491 = vpop.f32.mrf.mxu0
    %v7492 = vadd.f32 %v7451, %v7491
    %v7493 = vpop.f32.mrf.mxu0
    %v7494 = vpop.f32.mrf.mxu0
    %7495 = vdwg.mxu0
    %7496 = vmatprep.subr.bf16.mxu0 %v5913
    %7497 = vmatpush1.bf16.msra.mxu0 %v5912
    %7498 = vmatprep.subr.bf16.mxu0 %v5901
    %7499 = vmatpush1.bf16.msra.mxu0 %v5900
    %7500 = vmatprep.subr.bf16.mxu0 %v5889
    %7501 = vmatpush1.bf16.msra.mxu0 %v5888
    %7502 = vmatprep.subr.bf16.mxu0 %v5877
    %7503 = vmatpush1.bf16.msra.mxu0 %v5876
    %7504 = vmatprep.subr.bf16.mxu0 %v5865
    %7505 = vmatpush1.bf16.msra.mxu0 %v5864
    %7506 = vmatprep.subr.bf16.mxu0 %v5853
    %7507 = vmatpush1.bf16.msra.mxu0 %v5852
    %7508 = vmatprep.subr.bf16.mxu0 %v5841
    %7509 = vmatpush1.bf16.msra.mxu0 %v5840
    %7510 = vmatprep.subr.bf16.mxu0 %v5829
    %7511 = vmatpush1.bf16.msra.mxu0 %v5828
    %7512 = vmatprep.subr.bf16.mxu0 %v6009
    %7513 = vmatpush2.bf16.msra.mxu0 %v6008
    %7514 = vmatprep.subr.bf16.mxu0 %v5997
    %7515 = vmatpush2.bf16.msra.mxu0 %v5996
    %7516 = vmatprep.subr.bf16.mxu0 %v5985
    %7517 = vmatpush2.bf16.msra.mxu0 %v5984
    %7518 = vmatprep.subr.bf16.mxu0 %v5973
    %7519 = vmatpush2.bf16.msra.mxu0 %v5972
    %7520 = vmatprep.subr.bf16.mxu0 %v5961
    %7521 = vmatpush2.bf16.msra.mxu0 %v5960
    %7522 = vmatprep.subr.bf16.mxu0 %v5949
    %7523 = vmatpush2.bf16.msra.mxu0 %v5948
    %7524 = vmatprep.subr.bf16.mxu0 %v5937
    %7525 = vmatpush2.bf16.msra.mxu0 %v5936
    %7526 = vmatprep.subr.bf16.mxu0 %v5925
    %7527 = vmatpush2.bf16.msra.mxu0 %v5924
    %7528 = vmatprep.mubr.bf16.mxu0 %v7165
    %7529 = vmatmul.mubr.bf16.gmra.mxu0 %v7164
    %v7530 = vpop.f32.mrf.mxu0
    %v7531 = vadd.f32 %v4643, %v7530
    %v7532 = vpop.f32.mrf.mxu0
    %v7533 = vadd.f32 %v4647, %v7532
    %v7534 = vpop.f32.mrf.mxu0
    %v7535 = vpop.f32.mrf.mxu0
    %7536 = vdwg.mxu0
    %7537 = vmatprep.subr.bf16.mxu0 %v6105
    %7538 = vmatpush1.bf16.msra.mxu0 %v6104
    %7539 = vmatprep.subr.bf16.mxu0 %v6093
    %7540 = vmatpush1.bf16.msra.mxu0 %v6092
    %7541 = vmatprep.subr.bf16.mxu0 %v6081
    %7542 = vmatpush1.bf16.msra.mxu0 %v6080
    %7543 = vmatprep.subr.bf16.mxu0 %v6069
    %7544 = vmatpush1.bf16.msra.mxu0 %v6068
    %7545 = vmatprep.subr.bf16.mxu0 %v6057
    %7546 = vmatpush1.bf16.msra.mxu0 %v6056
    %7547 = vmatprep.subr.bf16.mxu0 %v6045
    %7548 = vmatpush1.bf16.msra.mxu0 %v6044
    %7549 = vmatprep.subr.bf16.mxu0 %v6033
    %7550 = vmatpush1.bf16.msra.mxu0 %v6032
    %7551 = vmatprep.subr.bf16.mxu0 %v6021
    %7552 = vmatpush1.bf16.msra.mxu0 %v6020
    %7553 = vmatprep.subr.bf16.mxu0 %v6201
    %7554 = vmatpush2.bf16.msra.mxu0 %v6200
    %7555 = vmatprep.subr.bf16.mxu0 %v6189
    %7556 = vmatpush2.bf16.msra.mxu0 %v6188
    %7557 = vmatprep.subr.bf16.mxu0 %v6177
    %7558 = vmatpush2.bf16.msra.mxu0 %v6176
    %7559 = vmatprep.subr.bf16.mxu0 %v6165
    %7560 = vmatpush2.bf16.msra.mxu0 %v6164
    %7561 = vmatprep.subr.bf16.mxu0 %v6153
    %7562 = vmatpush2.bf16.msra.mxu0 %v6152
    %7563 = vmatprep.subr.bf16.mxu0 %v6141
    %7564 = vmatpush2.bf16.msra.mxu0 %v6140
    %7565 = vmatprep.subr.bf16.mxu0 %v6129
    %7566 = vmatpush2.bf16.msra.mxu0 %v6128
    %7567 = vmatprep.subr.bf16.mxu0 %v6117
    %7568 = vmatpush2.bf16.msra.mxu0 %v6116
    %7569 = vmatprep.mubr.bf16.mxu0 %v7167
    %7570 = vmatmul.mubr.bf16.gmra.mxu0 %v7166
    %v7571 = vpop.f32.mrf.mxu0
    %v7572 = vadd.f32 %v7531, %v7571
    %v7573 = vpop.f32.mrf.mxu0
    %v7574 = vadd.f32 %v7533, %v7573
    %v7575 = vpop.f32.mrf.mxu0
    %v7576 = vpop.f32.mrf.mxu0
    %7577 = vdwg.mxu0
    %7578 = vmatprep.subr.bf16.mxu0 %v5915
    %7579 = vmatpush1.bf16.msra.mxu0 %v5914
    %7580 = vmatprep.subr.bf16.mxu0 %v5903
    %7581 = vmatpush1.bf16.msra.mxu0 %v5902
    %7582 = vmatprep.subr.bf16.mxu0 %v5891
    %7583 = vmatpush1.bf16.msra.mxu0 %v5890
    %7584 = vmatprep.subr.bf16.mxu0 %v5879
    %7585 = vmatpush1.bf16.msra.mxu0 %v5878
    %7586 = vmatprep.subr.bf16.mxu0 %v5867
    %7587 = vmatpush1.bf16.msra.mxu0 %v5866
    %7588 = vmatprep.subr.bf16.mxu0 %v5855
    %7589 = vmatpush1.bf16.msra.mxu0 %v5854
    %7590 = vmatprep.subr.bf16.mxu0 %v5843
    %7591 = vmatpush1.bf16.msra.mxu0 %v5842
    %7592 = vmatprep.subr.bf16.mxu0 %v5831
    %7593 = vmatpush1.bf16.msra.mxu0 %v5830
    %7594 = vmatprep.subr.bf16.mxu0 %v6011
    %7595 = vmatpush2.bf16.msra.mxu0 %v6010
    %7596 = vmatprep.subr.bf16.mxu0 %v5999
    %7597 = vmatpush2.bf16.msra.mxu0 %v5998
    %7598 = vmatprep.subr.bf16.mxu0 %v5987
    %7599 = vmatpush2.bf16.msra.mxu0 %v5986
    %7600 = vmatprep.subr.bf16.mxu0 %v5975
    %7601 = vmatpush2.bf16.msra.mxu0 %v5974
    %7602 = vmatprep.subr.bf16.mxu0 %v5963
    %7603 = vmatpush2.bf16.msra.mxu0 %v5962
    %7604 = vmatprep.subr.bf16.mxu0 %v5951
    %7605 = vmatpush2.bf16.msra.mxu0 %v5950
    %7606 = vmatprep.subr.bf16.mxu0 %v5939
    %7607 = vmatpush2.bf16.msra.mxu0 %v5938
    %7608 = vmatprep.subr.bf16.mxu0 %v5927
    %7609 = vmatpush2.bf16.msra.mxu0 %v5926
    %7610 = vmatprep.mubr.bf16.mxu0 %v7165
    %7611 = vmatmul.mubr.bf16.gmra.mxu0 %v7164
    %v7612 = vpop.f32.mrf.mxu0
    %v7613 = vadd.f32 %v4651, %v7612
    %v7614 = vpop.f32.mrf.mxu0
    %v7615 = vadd.f32 %v4655, %v7614
    %v7616 = vpop.f32.mrf.mxu0
    %v7617 = vpop.f32.mrf.mxu0
    %7618 = vdwg.mxu0
    %7619 = vmatprep.subr.bf16.mxu0 %v6107
    %7620 = vmatpush1.bf16.msra.mxu0 %v6106
    %7621 = vmatprep.subr.bf16.mxu0 %v6095
    %7622 = vmatpush1.bf16.msra.mxu0 %v6094
    %7623 = vmatprep.subr.bf16.mxu0 %v6083
    %7624 = vmatpush1.bf16.msra.mxu0 %v6082
    %7625 = vmatprep.subr.bf16.mxu0 %v6071
    %7626 = vmatpush1.bf16.msra.mxu0 %v6070
    %7627 = vmatprep.subr.bf16.mxu0 %v6059
    %7628 = vmatpush1.bf16.msra.mxu0 %v6058
    %7629 = vmatprep.subr.bf16.mxu0 %v6047
    %7630 = vmatpush1.bf16.msra.mxu0 %v6046
    %7631 = vmatprep.subr.bf16.mxu0 %v6035
    %7632 = vmatpush1.bf16.msra.mxu0 %v6034
    %7633 = vmatprep.subr.bf16.mxu0 %v6023
    %7634 = vmatpush1.bf16.msra.mxu0 %v6022
    %7635 = vmatprep.subr.bf16.mxu0 %v6203
    %7636 = vmatpush2.bf16.msra.mxu0 %v6202
    %7637 = vmatprep.subr.bf16.mxu0 %v6191
    %7638 = vmatpush2.bf16.msra.mxu0 %v6190
    %7639 = vmatprep.subr.bf16.mxu0 %v6179
    %7640 = vmatpush2.bf16.msra.mxu0 %v6178
    %7641 = vmatprep.subr.bf16.mxu0 %v6167
    %7642 = vmatpush2.bf16.msra.mxu0 %v6166
    %7643 = vmatprep.subr.bf16.mxu0 %v6155
    %7644 = vmatpush2.bf16.msra.mxu0 %v6154
    %7645 = vmatprep.subr.bf16.mxu0 %v6143
    %7646 = vmatpush2.bf16.msra.mxu0 %v6142
    %7647 = vmatprep.subr.bf16.mxu0 %v6131
    %7648 = vmatpush2.bf16.msra.mxu0 %v6130
    %7649 = vmatprep.subr.bf16.mxu0 %v6119
    %7650 = vmatpush2.bf16.msra.mxu0 %v6118
    %7651 = vmatprep.mubr.bf16.mxu0 %v7167
    %7652 = vmatmul.mubr.bf16.gmra.mxu0 %v7166
    %v7653 = vpop.f32.mrf.mxu0
    %v7654 = vadd.f32 %v7613, %v7653
    %v7655 = vpop.f32.mrf.mxu0
    %v7656 = vadd.f32 %v7615, %v7655
    %v7657 = vpop.f32.mrf.mxu0
    %v7658 = vpop.f32.mrf.mxu0
    %7659 = vdwg.mxu0
    %v7660 = vadd.f32 %v3690, %v7244
    %v7661 = vadd.f32 %v3692, %v7246
    %v7662 = vadd.f32 %v3792, %v7326
    %v7663 = vadd.f32 %v3794, %v7328
    %v7664 = vxor.u32 %v7660, 2147483648
    %v7665 = vxor.u32 %v7661, 2147483648
    %v7666 = vxor.u32 %v7662, 2147483648
    %v7667 = vxor.u32 %v7663, 2147483648
    %v7668 = vmul.f32 %v7664, 1.442695
    %v7669 = vpow.pop %v7668
    %v7670 = vmul.f32 %v7665, 1.442695
    %v7671 = vpow.pop %v7670
    %v7672 = vmul.f32 %v7666, 1.442695
    %v7673 = vpow.pop %v7672
    %v7674 = vmul.f32 %v7667, 1.442695
    %v7675 = vpow.pop %v7674
    %v7676 = vadd.f32 %v7669, 1.0
    %v7677 = vadd.f32 %v7671, 1.0
    %v7678 = vadd.f32 %v7673, 1.0
    %v7679 = vadd.f32 %v7675, 1.0
    %v7680 = vrcp.pop %v7676
    %v7681 = vmul.f32 1.0, %v7680
    %v7682 = vrcp.pop %v7677
    %v7683 = vmul.f32 1.0, %v7682
    %v7684 = vrcp.pop %v7678
    %v7685 = vmul.f32 1.0, %v7684
    %v7686 = vrcp.pop %v7679
    %v7687 = vmul.f32 1.0, %v7686
    %v7688 = vadd.f32 %v3894, %v7408
    %v7689 = vadd.f32 %v3896, %v7410
    %v7690 = vadd.f32 %v3996, %v7490
    %v7691 = vadd.f32 %v3998, %v7492
    %v7692 = vxor.u32 %v7688, 2147483648
    %v7693 = vxor.u32 %v7689, 2147483648
    %v7694 = vxor.u32 %v7690, 2147483648
    %v7695 = vxor.u32 %v7691, 2147483648
    %v7696 = vmul.f32 %v7692, 1.442695
    %v7697 = vpow.pop %v7696
    %v7698 = vmul.f32 %v7693, 1.442695
    %v7699 = vpow.pop %v7698
    %v7700 = vmul.f32 %v7694, 1.442695
    %v7701 = vpow.pop %v7700
    %v7702 = vmul.f32 %v7695, 1.442695
    %v7703 = vpow.pop %v7702
    %v7704 = vadd.f32 %v7697, 1.0
    %v7705 = vadd.f32 %v7699, 1.0
    %v7706 = vadd.f32 %v7701, 1.0
    %v7707 = vadd.f32 %v7703, 1.0
    %v7708 = vrcp.pop %v7704
    %v7709 = vmul.f32 1.0, %v7708
    %v7710 = vrcp.pop %v7705
    %v7711 = vmul.f32 1.0, %v7710
    %v7712 = vrcp.pop %v7706
    %v7713 = vmul.f32 1.0, %v7712
    %v7714 = vrcp.pop %v7707
    %v7715 = vmul.f32 1.0, %v7714
    %v7716 = vmul.f32 %v7681, %v7572
    %v7717 = vmul.f32 %v7683, %v7574
    %v7718 = vmul.f32 %v7685, %v7654
    %v7719 = vmul.f32 %v7687, %v7656
    %v7720 = vadd.f32 %v4098, %v7716
    %v7721 = vadd.f32 %v4100, %v7717
    %v7722 = vadd.f32 %v4200, %v7718
    %v7723 = vadd.f32 %v4202, %v7719
    %v7724 = vtanh.pop %v7720
    %v7725 = vtanh.pop %v7721
    %v7726 = vtanh.pop %v7722
    %v7727 = vtanh.pop %v7723
    %v7728 = vsub.f32 1.0, %v7709
    %v7729 = vsub.f32 1.0, %v7711
    %v7730 = vsub.f32 1.0, %v7713
    %v7731 = vsub.f32 1.0, %v7715
    %v7732 = vmul.f32 %v7728, %v7724
    %v7733 = vmul.f32 %v7729, %v7725
    %v7734 = vmul.f32 %v7730, %v7726
    %v7735 = vmul.f32 %v7731, %v7727
    %v7736 = vmul.f32 %v7709, %v7160
    %v7737 = vmul.f32 %v7711, %v7161
    %v7738 = vmul.f32 %v7713, %v7162
    %v7739 = vmul.f32 %v7715, %v7163
    %v7740 = vadd.f32 %v7732, %v7736
    %v7741 = vadd.f32 %v7733, %v7737
    %v7742 = vadd.f32 %v7734, %v7738
    %v7743 = vadd.f32 %v7735, %v7739
    %v7744 = vpack.c.bf16 %v7740, %v7740
    %v7745 = vpack.c.bf16 %v7741, %v7741
    %v7746 = vpack.c.bf16 %v7742, %v7742
    %v7747 = vpack.c.bf16 %v7743, %v7743
    %7748 = vmatprep.subr.bf16.mxu0 %v5905
    %7749 = vmatpush1.bf16.msra.mxu0 %v5904
    %7750 = vmatprep.subr.bf16.mxu0 %v5893
    %7751 = vmatpush1.bf16.msra.mxu0 %v5892
    %7752 = vmatprep.subr.bf16.mxu0 %v5881
    %7753 = vmatpush1.bf16.msra.mxu0 %v5880
    %7754 = vmatprep.subr.bf16.mxu0 %v5869
    %7755 = vmatpush1.bf16.msra.mxu0 %v5868
    %7756 = vmatprep.subr.bf16.mxu0 %v5857
    %7757 = vmatpush1.bf16.msra.mxu0 %v5856
    %7758 = vmatprep.subr.bf16.mxu0 %v5845
    %7759 = vmatpush1.bf16.msra.mxu0 %v5844
    %7760 = vmatprep.subr.bf16.mxu0 %v5833
    %7761 = vmatpush1.bf16.msra.mxu0 %v5832
    %7762 = vmatprep.subr.bf16.mxu0 %v5821
    %7763 = vmatpush1.bf16.msra.mxu0 %v5820
    %7764 = vmatprep.subr.bf16.mxu0 %v6001
    %7765 = vmatpush2.bf16.msra.mxu0 %v6000
    %7766 = vmatprep.subr.bf16.mxu0 %v5989
    %7767 = vmatpush2.bf16.msra.mxu0 %v5988
    %7768 = vmatprep.subr.bf16.mxu0 %v5977
    %7769 = vmatpush2.bf16.msra.mxu0 %v5976
    %7770 = vmatprep.subr.bf16.mxu0 %v5965
    %7771 = vmatpush2.bf16.msra.mxu0 %v5964
    %7772 = vmatprep.subr.bf16.mxu0 %v5953
    %7773 = vmatpush2.bf16.msra.mxu0 %v5952
    %7774 = vmatprep.subr.bf16.mxu0 %v5941
    %7775 = vmatpush2.bf16.msra.mxu0 %v5940
    %7776 = vmatprep.subr.bf16.mxu0 %v5929
    %7777 = vmatpush2.bf16.msra.mxu0 %v5928
    %7778 = vmatprep.subr.bf16.mxu0 %v5917
    %7779 = vmatpush2.bf16.msra.mxu0 %v5916
    %7780 = vmatprep.mubr.bf16.mxu0 %v7745
    %7781 = vmatmul.mubr.bf16.gmra.mxu0 %v7744
    %v7782 = vpop.f32.mrf.mxu0
    %v7783 = vadd.f32 %v4611, %v7782
    %v7784 = vpop.f32.mrf.mxu0
    %v7785 = vadd.f32 %v4615, %v7784
    %v7786 = vpop.f32.mrf.mxu0
    %v7787 = vpop.f32.mrf.mxu0
    %7788 = vdwg.mxu0
    %7789 = vmatprep.subr.bf16.mxu0 %v6097
    %7790 = vmatpush1.bf16.msra.mxu0 %v6096
    %7791 = vmatprep.subr.bf16.mxu0 %v6085
    %7792 = vmatpush1.bf16.msra.mxu0 %v6084
    %7793 = vmatprep.subr.bf16.mxu0 %v6073
    %7794 = vmatpush1.bf16.msra.mxu0 %v6072
    %7795 = vmatprep.subr.bf16.mxu0 %v6061
    %7796 = vmatpush1.bf16.msra.mxu0 %v6060
    %7797 = vmatprep.subr.bf16.mxu0 %v6049
    %7798 = vmatpush1.bf16.msra.mxu0 %v6048
    %7799 = vmatprep.subr.bf16.mxu0 %v6037
    %7800 = vmatpush1.bf16.msra.mxu0 %v6036
    %7801 = vmatprep.subr.bf16.mxu0 %v6025
    %7802 = vmatpush1.bf16.msra.mxu0 %v6024
    %7803 = vmatprep.subr.bf16.mxu0 %v6013
    %7804 = vmatpush1.bf16.msra.mxu0 %v6012
    %7805 = vmatprep.subr.bf16.mxu0 %v6193
    %7806 = vmatpush2.bf16.msra.mxu0 %v6192
    %7807 = vmatprep.subr.bf16.mxu0 %v6181
    %7808 = vmatpush2.bf16.msra.mxu0 %v6180
    %7809 = vmatprep.subr.bf16.mxu0 %v6169
    %7810 = vmatpush2.bf16.msra.mxu0 %v6168
    %7811 = vmatprep.subr.bf16.mxu0 %v6157
    %7812 = vmatpush2.bf16.msra.mxu0 %v6156
    %7813 = vmatprep.subr.bf16.mxu0 %v6145
    %7814 = vmatpush2.bf16.msra.mxu0 %v6144
    %7815 = vmatprep.subr.bf16.mxu0 %v6133
    %7816 = vmatpush2.bf16.msra.mxu0 %v6132
    %7817 = vmatprep.subr.bf16.mxu0 %v6121
    %7818 = vmatpush2.bf16.msra.mxu0 %v6120
    %7819 = vmatprep.subr.bf16.mxu0 %v6109
    %7820 = vmatpush2.bf16.msra.mxu0 %v6108
    %7821 = vmatprep.mubr.bf16.mxu0 %v7747
    %7822 = vmatmul.mubr.bf16.gmra.mxu0 %v7746
    %v7823 = vpop.f32.mrf.mxu0
    %v7824 = vadd.f32 %v7783, %v7823
    %v7825 = vpop.f32.mrf.mxu0
    %v7826 = vadd.f32 %v7785, %v7825
    %v7827 = vpop.f32.mrf.mxu0
    %v7828 = vpop.f32.mrf.mxu0
    %7829 = vdwg.mxu0
    %7830 = vmatprep.subr.bf16.mxu0 %v5907
    %7831 = vmatpush1.bf16.msra.mxu0 %v5906
    %7832 = vmatprep.subr.bf16.mxu0 %v5895
    %7833 = vmatpush1.bf16.msra.mxu0 %v5894
    %7834 = vmatprep.subr.bf16.mxu0 %v5883
    %7835 = vmatpush1.bf16.msra.mxu0 %v5882
    %7836 = vmatprep.subr.bf16.mxu0 %v5871
    %7837 = vmatpush1.bf16.msra.mxu0 %v5870
    %7838 = vmatprep.subr.bf16.mxu0 %v5859
    %7839 = vmatpush1.bf16.msra.mxu0 %v5858
    %7840 = vmatprep.subr.bf16.mxu0 %v5847
    %7841 = vmatpush1.bf16.msra.mxu0 %v5846
    %7842 = vmatprep.subr.bf16.mxu0 %v5835
    %7843 = vmatpush1.bf16.msra.mxu0 %v5834
    %7844 = vmatprep.subr.bf16.mxu0 %v5823
    %7845 = vmatpush1.bf16.msra.mxu0 %v5822
    %7846 = vmatprep.subr.bf16.mxu0 %v6003
    %7847 = vmatpush2.bf16.msra.mxu0 %v6002
    %7848 = vmatprep.subr.bf16.mxu0 %v5991
    %7849 = vmatpush2.bf16.msra.mxu0 %v5990
    %7850 = vmatprep.subr.bf16.mxu0 %v5979
    %7851 = vmatpush2.bf16.msra.mxu0 %v5978
    %7852 = vmatprep.subr.bf16.mxu0 %v5967
    %7853 = vmatpush2.bf16.msra.mxu0 %v5966
    %7854 = vmatprep.subr.bf16.mxu0 %v5955
    %7855 = vmatpush2.bf16.msra.mxu0 %v5954
    %7856 = vmatprep.subr.bf16.mxu0 %v5943
    %7857 = vmatpush2.bf16.msra.mxu0 %v5942
    %7858 = vmatprep.subr.bf16.mxu0 %v5931
    %7859 = vmatpush2.bf16.msra.mxu0 %v5930
    %7860 = vmatprep.subr.bf16.mxu0 %v5919
    %7861 = vmatpush2.bf16.msra.mxu0 %v5918
    %7862 = vmatprep.mubr.bf16.mxu0 %v7745
    %7863 = vmatmul.mubr.bf16.gmra.mxu0 %v7744
    %v7864 = vpop.f32.mrf.mxu0
    %v7865 = vadd.f32 %v4619, %v7864
    %v7866 = vpop.f32.mrf.mxu0
    %v7867 = vadd.f32 %v4623, %v7866
    %v7868 = vpop.f32.mrf.mxu0
    %v7869 = vpop.f32.mrf.mxu0
    %7870 = vdwg.mxu0
    %7871 = vmatprep.subr.bf16.mxu0 %v6099
    %7872 = vmatpush1.bf16.msra.mxu0 %v6098
    %7873 = vmatprep.subr.bf16.mxu0 %v6087
    %7874 = vmatpush1.bf16.msra.mxu0 %v6086
    %7875 = vmatprep.subr.bf16.mxu0 %v6075
    %7876 = vmatpush1.bf16.msra.mxu0 %v6074
    %7877 = vmatprep.subr.bf16.mxu0 %v6063
    %7878 = vmatpush1.bf16.msra.mxu0 %v6062
    %7879 = vmatprep.subr.bf16.mxu0 %v6051
    %7880 = vmatpush1.bf16.msra.mxu0 %v6050
    %7881 = vmatprep.subr.bf16.mxu0 %v6039
    %7882 = vmatpush1.bf16.msra.mxu0 %v6038
    %7883 = vmatprep.subr.bf16.mxu0 %v6027
    %7884 = vmatpush1.bf16.msra.mxu0 %v6026
    %7885 = vmatprep.subr.bf16.mxu0 %v6015
    %7886 = vmatpush1.bf16.msra.mxu0 %v6014
    %7887 = vmatprep.subr.bf16.mxu0 %v6195
    %7888 = vmatpush2.bf16.msra.mxu0 %v6194
    %7889 = vmatprep.subr.bf16.mxu0 %v6183
    %7890 = vmatpush2.bf16.msra.mxu0 %v6182
    %7891 = vmatprep.subr.bf16.mxu0 %v6171
    %7892 = vmatpush2.bf16.msra.mxu0 %v6170
    %7893 = vmatprep.subr.bf16.mxu0 %v6159
    %7894 = vmatpush2.bf16.msra.mxu0 %v6158
    %7895 = vmatprep.subr.bf16.mxu0 %v6147
    %7896 = vmatpush2.bf16.msra.mxu0 %v6146
    %7897 = vmatprep.subr.bf16.mxu0 %v6135
    %7898 = vmatpush2.bf16.msra.mxu0 %v6134
    %7899 = vmatprep.subr.bf16.mxu0 %v6123
    %7900 = vmatpush2.bf16.msra.mxu0 %v6122
    %7901 = vmatprep.subr.bf16.mxu0 %v6111
    %7902 = vmatpush2.bf16.msra.mxu0 %v6110
    %7903 = vmatprep.mubr.bf16.mxu0 %v7747
    %7904 = vmatmul.mubr.bf16.gmra.mxu0 %v7746
    %v7905 = vpop.f32.mrf.mxu0
    %v7906 = vadd.f32 %v7865, %v7905
    %v7907 = vpop.f32.mrf.mxu0
    %v7908 = vadd.f32 %v7867, %v7907
    %v7909 = vpop.f32.mrf.mxu0
    %v7910 = vpop.f32.mrf.mxu0
    %7911 = vdwg.mxu0
    %7912 = vmatprep.subr.bf16.mxu0 %v5909
    %7913 = vmatpush1.bf16.msra.mxu0 %v5908
    %7914 = vmatprep.subr.bf16.mxu0 %v5897
    %7915 = vmatpush1.bf16.msra.mxu0 %v5896
    %7916 = vmatprep.subr.bf16.mxu0 %v5885
    %7917 = vmatpush1.bf16.msra.mxu0 %v5884
    %7918 = vmatprep.subr.bf16.mxu0 %v5873
    %7919 = vmatpush1.bf16.msra.mxu0 %v5872
    %7920 = vmatprep.subr.bf16.mxu0 %v5861
    %7921 = vmatpush1.bf16.msra.mxu0 %v5860
    %7922 = vmatprep.subr.bf16.mxu0 %v5849
    %7923 = vmatpush1.bf16.msra.mxu0 %v5848
    %7924 = vmatprep.subr.bf16.mxu0 %v5837
    %7925 = vmatpush1.bf16.msra.mxu0 %v5836
    %7926 = vmatprep.subr.bf16.mxu0 %v5825
    %7927 = vmatpush1.bf16.msra.mxu0 %v5824
    %7928 = vmatprep.subr.bf16.mxu0 %v6005
    %7929 = vmatpush2.bf16.msra.mxu0 %v6004
    %7930 = vmatprep.subr.bf16.mxu0 %v5993
    %7931 = vmatpush2.bf16.msra.mxu0 %v5992
    %7932 = vmatprep.subr.bf16.mxu0 %v5981
    %7933 = vmatpush2.bf16.msra.mxu0 %v5980
    %7934 = vmatprep.subr.bf16.mxu0 %v5969
    %7935 = vmatpush2.bf16.msra.mxu0 %v5968
    %7936 = vmatprep.subr.bf16.mxu0 %v5957
    %7937 = vmatpush2.bf16.msra.mxu0 %v5956
    %7938 = vmatprep.subr.bf16.mxu0 %v5945
    %7939 = vmatpush2.bf16.msra.mxu0 %v5944
    %7940 = vmatprep.subr.bf16.mxu0 %v5933
    %7941 = vmatpush2.bf16.msra.mxu0 %v5932
    %7942 = vmatprep.subr.bf16.mxu0 %v5921
    %7943 = vmatpush2.bf16.msra.mxu0 %v5920
    %7944 = vmatprep.mubr.bf16.mxu0 %v7745
    %7945 = vmatmul.mubr.bf16.gmra.mxu0 %v7744
    %v7946 = vpop.f32.mrf.mxu0
    %v7947 = vadd.f32 %v4627, %v7946
    %v7948 = vpop.f32.mrf.mxu0
    %v7949 = vadd.f32 %v4631, %v7948
    %v7950 = vpop.f32.mrf.mxu0
    %v7951 = vpop.f32.mrf.mxu0
    %7952 = vdwg.mxu0
    %7953 = vmatprep.subr.bf16.mxu0 %v6101
    %7954 = vmatpush1.bf16.msra.mxu0 %v6100
    %7955 = vmatprep.subr.bf16.mxu0 %v6089
    %7956 = vmatpush1.bf16.msra.mxu0 %v6088
    %7957 = vmatprep.subr.bf16.mxu0 %v6077
    %7958 = vmatpush1.bf16.msra.mxu0 %v6076
    %7959 = vmatprep.subr.bf16.mxu0 %v6065
    %7960 = vmatpush1.bf16.msra.mxu0 %v6064
    %7961 = vmatprep.subr.bf16.mxu0 %v6053
    %7962 = vmatpush1.bf16.msra.mxu0 %v6052
    %7963 = vmatprep.subr.bf16.mxu0 %v6041
    %7964 = vmatpush1.bf16.msra.mxu0 %v6040
    %7965 = vmatprep.subr.bf16.mxu0 %v6029
    %7966 = vmatpush1.bf16.msra.mxu0 %v6028
    %7967 = vmatprep.subr.bf16.mxu0 %v6017
    %7968 = vmatpush1.bf16.msra.mxu0 %v6016
    %7969 = vmatprep.subr.bf16.mxu0 %v6197
    %7970 = vmatpush2.bf16.msra.mxu0 %v6196
    %7971 = vmatprep.subr.bf16.mxu0 %v6185
    %7972 = vmatpush2.bf16.msra.mxu0 %v6184
    %7973 = vmatprep.subr.bf16.mxu0 %v6173
    %7974 = vmatpush2.bf16.msra.mxu0 %v6172
    %7975 = vmatprep.subr.bf16.mxu0 %v6161
    %7976 = vmatpush2.bf16.msra.mxu0 %v6160
    %7977 = vmatprep.subr.bf16.mxu0 %v6149
    %7978 = vmatpush2.bf16.msra.mxu0 %v6148
    %7979 = vmatprep.subr.bf16.mxu0 %v6137
    %7980 = vmatpush2.bf16.msra.mxu0 %v6136
    %7981 = vmatprep.subr.bf16.mxu0 %v6125
    %7982 = vmatpush2.bf16.msra.mxu0 %v6124
    %7983 = vmatprep.subr.bf16.mxu0 %v6113
    %7984 = vmatpush2.bf16.msra.mxu0 %v6112
    %7985 = vmatprep.mubr.bf16.mxu0 %v7747
    %7986 = vmatmul.mubr.bf16.gmra.mxu0 %v7746
    %v7987 = vpop.f32.mrf.mxu0
    %v7988 = vadd.f32 %v7947, %v7987
    %v7989 = vpop.f32.mrf.mxu0
    %v7990 = vadd.f32 %v7949, %v7989
    %v7991 = vpop.f32.mrf.mxu0
    %v7992 = vpop.f32.mrf.mxu0
    %7993 = vdwg.mxu0
    %7994 = vmatprep.subr.bf16.mxu0 %v5911
    %7995 = vmatpush1.bf16.msra.mxu0 %v5910
    %7996 = vmatprep.subr.bf16.mxu0 %v5899
    %7997 = vmatpush1.bf16.msra.mxu0 %v5898
    %7998 = vmatprep.subr.bf16.mxu0 %v5887
    %7999 = vmatpush1.bf16.msra.mxu0 %v5886
    %8000 = vmatprep.subr.bf16.mxu0 %v5875
    %8001 = vmatpush1.bf16.msra.mxu0 %v5874
    %8002 = vmatprep.subr.bf16.mxu0 %v5863
    %8003 = vmatpush1.bf16.msra.mxu0 %v5862
    %8004 = vmatprep.subr.bf16.mxu0 %v5851
    %8005 = vmatpush1.bf16.msra.mxu0 %v5850
    %8006 = vmatprep.subr.bf16.mxu0 %v5839
    %8007 = vmatpush1.bf16.msra.mxu0 %v5838
    %8008 = vmatprep.subr.bf16.mxu0 %v5827
    %8009 = vmatpush1.bf16.msra.mxu0 %v5826
    %8010 = vmatprep.subr.bf16.mxu0 %v6007
    %8011 = vmatpush2.bf16.msra.mxu0 %v6006
    %8012 = vmatprep.subr.bf16.mxu0 %v5995
    %8013 = vmatpush2.bf16.msra.mxu0 %v5994
    %8014 = vmatprep.subr.bf16.mxu0 %v5983
    %8015 = vmatpush2.bf16.msra.mxu0 %v5982
    %8016 = vmatprep.subr.bf16.mxu0 %v5971
    %8017 = vmatpush2.bf16.msra.mxu0 %v5970
    %8018 = vmatprep.subr.bf16.mxu0 %v5959
    %8019 = vmatpush2.bf16.msra.mxu0 %v5958
    %8020 = vmatprep.subr.bf16.mxu0 %v5947
    %8021 = vmatpush2.bf16.msra.mxu0 %v5946
    %8022 = vmatprep.subr.bf16.mxu0 %v5935
    %8023 = vmatpush2.bf16.msra.mxu0 %v5934
    %8024 = vmatprep.subr.bf16.mxu0 %v5923
    %8025 = vmatpush2.bf16.msra.mxu0 %v5922
    %8026 = vmatprep.mubr.bf16.mxu0 %v7745
    %8027 = vmatmul.mubr.bf16.gmra.mxu0 %v7744
    %v8028 = vpop.f32.mrf.mxu0
    %v8029 = vadd.f32 %v4635, %v8028
    %v8030 = vpop.f32.mrf.mxu0
    %v8031 = vadd.f32 %v4639, %v8030
    %v8032 = vpop.f32.mrf.mxu0
    %v8033 = vpop.f32.mrf.mxu0
    %8034 = vdwg.mxu0
    %8035 = vmatprep.subr.bf16.mxu0 %v6103
    %8036 = vmatpush1.bf16.msra.mxu0 %v6102
    %8037 = vmatprep.subr.bf16.mxu0 %v6091
    %8038 = vmatpush1.bf16.msra.mxu0 %v6090
    %8039 = vmatprep.subr.bf16.mxu0 %v6079
    %8040 = vmatpush1.bf16.msra.mxu0 %v6078
    %8041 = vmatprep.subr.bf16.mxu0 %v6067
    %8042 = vmatpush1.bf16.msra.mxu0 %v6066
    %8043 = vmatprep.subr.bf16.mxu0 %v6055
    %8044 = vmatpush1.bf16.msra.mxu0 %v6054
    %8045 = vmatprep.subr.bf16.mxu0 %v6043
    %8046 = vmatpush1.bf16.msra.mxu0 %v6042
    %8047 = vmatprep.subr.bf16.mxu0 %v6031
    %8048 = vmatpush1.bf16.msra.mxu0 %v6030
    %8049 = vmatprep.subr.bf16.mxu0 %v6019
    %8050 = vmatpush1.bf16.msra.mxu0 %v6018
    %8051 = vmatprep.subr.bf16.mxu0 %v6199
    %8052 = vmatpush2.bf16.msra.mxu0 %v6198
    %8053 = vmatprep.subr.bf16.mxu0 %v6187
    %8054 = vmatpush2.bf16.msra.mxu0 %v6186
    %8055 = vmatprep.subr.bf16.mxu0 %v6175
    %8056 = vmatpush2.bf16.msra.mxu0 %v6174
    %8057 = vmatprep.subr.bf16.mxu0 %v6163
    %8058 = vmatpush2.bf16.msra.mxu0 %v6162
    %8059 = vmatprep.subr.bf16.mxu0 %v6151
    %8060 = vmatpush2.bf16.msra.mxu0 %v6150
    %8061 = vmatprep.subr.bf16.mxu0 %v6139
    %8062 = vmatpush2.bf16.msra.mxu0 %v6138
    %8063 = vmatprep.subr.bf16.mxu0 %v6127
    %8064 = vmatpush2.bf16.msra.mxu0 %v6126
    %8065 = vmatprep.subr.bf16.mxu0 %v6115
    %8066 = vmatpush2.bf16.msra.mxu0 %v6114
    %8067 = vmatprep.mubr.bf16.mxu0 %v7747
    %8068 = vmatmul.mubr.bf16.gmra.mxu0 %v7746
    %v8069 = vpop.f32.mrf.mxu0
    %v8070 = vadd.f32 %v8029, %v8069
    %v8071 = vpop.f32.mrf.mxu0
    %v8072 = vadd.f32 %v8031, %v8071
    %v8073 = vpop.f32.mrf.mxu0
    %v8074 = vpop.f32.mrf.mxu0
    %8075 = vdwg.mxu0
    %8076 = vmatprep.subr.bf16.mxu0 %v5913
    %8077 = vmatpush1.bf16.msra.mxu0 %v5912
    %8078 = vmatprep.subr.bf16.mxu0 %v5901
    %8079 = vmatpush1.bf16.msra.mxu0 %v5900
    %8080 = vmatprep.subr.bf16.mxu0 %v5889
    %8081 = vmatpush1.bf16.msra.mxu0 %v5888
    %8082 = vmatprep.subr.bf16.mxu0 %v5877
    %8083 = vmatpush1.bf16.msra.mxu0 %v5876
    %8084 = vmatprep.subr.bf16.mxu0 %v5865
    %8085 = vmatpush1.bf16.msra.mxu0 %v5864
    %8086 = vmatprep.subr.bf16.mxu0 %v5853
    %8087 = vmatpush1.bf16.msra.mxu0 %v5852
    %8088 = vmatprep.subr.bf16.mxu0 %v5841
    %8089 = vmatpush1.bf16.msra.mxu0 %v5840
    %8090 = vmatprep.subr.bf16.mxu0 %v5829
    %8091 = vmatpush1.bf16.msra.mxu0 %v5828
    %8092 = vmatprep.subr.bf16.mxu0 %v6009
    %8093 = vmatpush2.bf16.msra.mxu0 %v6008
    %8094 = vmatprep.subr.bf16.mxu0 %v5997
    %8095 = vmatpush2.bf16.msra.mxu0 %v5996
    %8096 = vmatprep.subr.bf16.mxu0 %v5985
    %8097 = vmatpush2.bf16.msra.mxu0 %v5984
    %8098 = vmatprep.subr.bf16.mxu0 %v5973
    %8099 = vmatpush2.bf16.msra.mxu0 %v5972
    %8100 = vmatprep.subr.bf16.mxu0 %v5961
    %8101 = vmatpush2.bf16.msra.mxu0 %v5960
    %8102 = vmatprep.subr.bf16.mxu0 %v5949
    %8103 = vmatpush2.bf16.msra.mxu0 %v5948
    %8104 = vmatprep.subr.bf16.mxu0 %v5937
    %8105 = vmatpush2.bf16.msra.mxu0 %v5936
    %8106 = vmatprep.subr.bf16.mxu0 %v5925
    %8107 = vmatpush2.bf16.msra.mxu0 %v5924
    %8108 = vmatprep.mubr.bf16.mxu0 %v7745
    %8109 = vmatmul.mubr.bf16.gmra.mxu0 %v7744
    %v8110 = vpop.f32.mrf.mxu0
    %v8111 = vadd.f32 %v4643, %v8110
    %v8112 = vpop.f32.mrf.mxu0
    %v8113 = vadd.f32 %v4647, %v8112
    %v8114 = vpop.f32.mrf.mxu0
    %v8115 = vpop.f32.mrf.mxu0
    %8116 = vdwg.mxu0
    %8117 = vmatprep.subr.bf16.mxu0 %v6105
    %8118 = vmatpush1.bf16.msra.mxu0 %v6104
    %8119 = vmatprep.subr.bf16.mxu0 %v6093
    %8120 = vmatpush1.bf16.msra.mxu0 %v6092
    %8121 = vmatprep.subr.bf16.mxu0 %v6081
    %8122 = vmatpush1.bf16.msra.mxu0 %v6080
    %8123 = vmatprep.subr.bf16.mxu0 %v6069
    %8124 = vmatpush1.bf16.msra.mxu0 %v6068
    %8125 = vmatprep.subr.bf16.mxu0 %v6057
    %8126 = vmatpush1.bf16.msra.mxu0 %v6056
    %8127 = vmatprep.subr.bf16.mxu0 %v6045
    %8128 = vmatpush1.bf16.msra.mxu0 %v6044
    %8129 = vmatprep.subr.bf16.mxu0 %v6033
    %8130 = vmatpush1.bf16.msra.mxu0 %v6032
    %8131 = vmatprep.subr.bf16.mxu0 %v6021
    %8132 = vmatpush1.bf16.msra.mxu0 %v6020
    %8133 = vmatprep.subr.bf16.mxu0 %v6201
    %8134 = vmatpush2.bf16.msra.mxu0 %v6200
    %8135 = vmatprep.subr.bf16.mxu0 %v6189
    %8136 = vmatpush2.bf16.msra.mxu0 %v6188
    %8137 = vmatprep.subr.bf16.mxu0 %v6177
    %8138 = vmatpush2.bf16.msra.mxu0 %v6176
    %8139 = vmatprep.subr.bf16.mxu0 %v6165
    %8140 = vmatpush2.bf16.msra.mxu0 %v6164
    %8141 = vmatprep.subr.bf16.mxu0 %v6153
    %8142 = vmatpush2.bf16.msra.mxu0 %v6152
    %8143 = vmatprep.subr.bf16.mxu0 %v6141
    %8144 = vmatpush2.bf16.msra.mxu0 %v6140
    %8145 = vmatprep.subr.bf16.mxu0 %v6129
    %8146 = vmatpush2.bf16.msra.mxu0 %v6128
    %8147 = vmatprep.subr.bf16.mxu0 %v6117
    %8148 = vmatpush2.bf16.msra.mxu0 %v6116
    %8149 = vmatprep.mubr.bf16.mxu0 %v7747
    %8150 = vmatmul.mubr.bf16.gmra.mxu0 %v7746
    %v8151 = vpop.f32.mrf.mxu0
    %v8152 = vadd.f32 %v8111, %v8151
    %v8153 = vpop.f32.mrf.mxu0
    %v8154 = vadd.f32 %v8113, %v8153
    %v8155 = vpop.f32.mrf.mxu0
    %v8156 = vpop.f32.mrf.mxu0
    %8157 = vdwg.mxu0
    %8158 = vmatprep.subr.bf16.mxu0 %v5915
    %8159 = vmatpush1.bf16.msra.mxu0 %v5914
    %8160 = vmatprep.subr.bf16.mxu0 %v5903
    %8161 = vmatpush1.bf16.msra.mxu0 %v5902
    %8162 = vmatprep.subr.bf16.mxu0 %v5891
    %8163 = vmatpush1.bf16.msra.mxu0 %v5890
    %8164 = vmatprep.subr.bf16.mxu0 %v5879
    %8165 = vmatpush1.bf16.msra.mxu0 %v5878
    %8166 = vmatprep.subr.bf16.mxu0 %v5867
    %8167 = vmatpush1.bf16.msra.mxu0 %v5866
    %8168 = vmatprep.subr.bf16.mxu0 %v5855
    %8169 = vmatpush1.bf16.msra.mxu0 %v5854
    %8170 = vmatprep.subr.bf16.mxu0 %v5843
    %8171 = vmatpush1.bf16.msra.mxu0 %v5842
    %8172 = vmatprep.subr.bf16.mxu0 %v5831
    %8173 = vmatpush1.bf16.msra.mxu0 %v5830
    %8174 = vmatprep.subr.bf16.mxu0 %v6011
    %8175 = vmatpush2.bf16.msra.mxu0 %v6010
    %8176 = vmatprep.subr.bf16.mxu0 %v5999
    %8177 = vmatpush2.bf16.msra.mxu0 %v5998
    %8178 = vmatprep.subr.bf16.mxu0 %v5987
    %8179 = vmatpush2.bf16.msra.mxu0 %v5986
    %8180 = vmatprep.subr.bf16.mxu0 %v5975
    %8181 = vmatpush2.bf16.msra.mxu0 %v5974
    %8182 = vmatprep.subr.bf16.mxu0 %v5963
    %8183 = vmatpush2.bf16.msra.mxu0 %v5962
    %8184 = vmatprep.subr.bf16.mxu0 %v5951
    %8185 = vmatpush2.bf16.msra.mxu0 %v5950
    %8186 = vmatprep.subr.bf16.mxu0 %v5939
    %8187 = vmatpush2.bf16.msra.mxu0 %v5938
    %8188 = vmatprep.subr.bf16.mxu0 %v5927
    %8189 = vmatpush2.bf16.msra.mxu0 %v5926
    %8190 = vmatprep.mubr.bf16.mxu0 %v7745
    %8191 = vmatmul.mubr.bf16.gmra.mxu0 %v7744
    %v8192 = vpop.f32.mrf.mxu0
    %v8193 = vadd.f32 %v4651, %v8192
    %v8194 = vpop.f32.mrf.mxu0
    %v8195 = vadd.f32 %v4655, %v8194
    %v8196 = vpop.f32.mrf.mxu0
    %v8197 = vpop.f32.mrf.mxu0
    %8198 = vdwg.mxu0
    %8199 = vmatprep.subr.bf16.mxu0 %v6107
    %8200 = vmatpush1.bf16.msra.mxu0 %v6106
    %8201 = vmatprep.subr.bf16.mxu0 %v6095
    %8202 = vmatpush1.bf16.msra.mxu0 %v6094
    %8203 = vmatprep.subr.bf16.mxu0 %v6083
    %8204 = vmatpush1.bf16.msra.mxu0 %v6082
    %8205 = vmatprep.subr.bf16.mxu0 %v6071
    %8206 = vmatpush1.bf16.msra.mxu0 %v6070
    %8207 = vmatprep.subr.bf16.mxu0 %v6059
    %8208 = vmatpush1.bf16.msra.mxu0 %v6058
    %8209 = vmatprep.subr.bf16.mxu0 %v6047
    %8210 = vmatpush1.bf16.msra.mxu0 %v6046
    %8211 = vmatprep.subr.bf16.mxu0 %v6035
    %8212 = vmatpush1.bf16.msra.mxu0 %v6034
    %8213 = vmatprep.subr.bf16.mxu0 %v6023
    %8214 = vmatpush1.bf16.msra.mxu0 %v6022
    %8215 = vmatprep.subr.bf16.mxu0 %v6203
    %8216 = vmatpush2.bf16.msra.mxu0 %v6202
    %8217 = vmatprep.subr.bf16.mxu0 %v6191
    %8218 = vmatpush2.bf16.msra.mxu0 %v6190
    %8219 = vmatprep.subr.bf16.mxu0 %v6179
    %8220 = vmatpush2.bf16.msra.mxu0 %v6178
    %8221 = vmatprep.subr.bf16.mxu0 %v6167
    %8222 = vmatpush2.bf16.msra.mxu0 %v6166
    %8223 = vmatprep.subr.bf16.mxu0 %v6155
    %8224 = vmatpush2.bf16.msra.mxu0 %v6154
    %8225 = vmatprep.subr.bf16.mxu0 %v6143
    %8226 = vmatpush2.bf16.msra.mxu0 %v6142
    %8227 = vmatprep.subr.bf16.mxu0 %v6131
    %8228 = vmatpush2.bf16.msra.mxu0 %v6130
    %8229 = vmatprep.subr.bf16.mxu0 %v6119
    %8230 = vmatpush2.bf16.msra.mxu0 %v6118
    %8231 = vmatprep.mubr.bf16.mxu0 %v7747
    %8232 = vmatmul.mubr.bf16.gmra.mxu0 %v7746
    %v8233 = vpop.f32.mrf.mxu0
    %v8234 = vadd.f32 %v8193, %v8233
    %v8235 = vpop.f32.mrf.mxu0
    %v8236 = vadd.f32 %v8195, %v8235
    %v8237 = vpop.f32.mrf.mxu0
    %v8238 = vpop.f32.mrf.mxu0
    %8239 = vdwg.mxu0
    %v8240 = vadd.f32 %v3696, %v7824
    %v8241 = vadd.f32 %v3698, %v7826
    %v8242 = vadd.f32 %v3798, %v7906
    %v8243 = vadd.f32 %v3800, %v7908
    %v8244 = vxor.u32 %v8240, 2147483648
    %v8245 = vxor.u32 %v8241, 2147483648
    %v8246 = vxor.u32 %v8242, 2147483648
    %v8247 = vxor.u32 %v8243, 2147483648
    %v8248 = vmul.f32 %v8244, 1.442695
    %v8249 = vpow.pop %v8248
    %v8250 = vmul.f32 %v8245, 1.442695
    %v8251 = vpow.pop %v8250
    %v8252 = vmul.f32 %v8246, 1.442695
    %v8253 = vpow.pop %v8252
    %v8254 = vmul.f32 %v8247, 1.442695
    %v8255 = vpow.pop %v8254
    %v8256 = vadd.f32 %v8249, 1.0
    %v8257 = vadd.f32 %v8251, 1.0
    %v8258 = vadd.f32 %v8253, 1.0
    %v8259 = vadd.f32 %v8255, 1.0
    %v8260 = vrcp.pop %v8256
    %v8261 = vmul.f32 1.0, %v8260
    %v8262 = vrcp.pop %v8257
    %v8263 = vmul.f32 1.0, %v8262
    %v8264 = vrcp.pop %v8258
    %v8265 = vmul.f32 1.0, %v8264
    %v8266 = vrcp.pop %v8259
    %v8267 = vmul.f32 1.0, %v8266
    %v8268 = vadd.f32 %v3900, %v7988
    %v8269 = vadd.f32 %v3902, %v7990
    %v8270 = vadd.f32 %v4002, %v8070
    %v8271 = vadd.f32 %v4004, %v8072
    %v8272 = vxor.u32 %v8268, 2147483648
    %v8273 = vxor.u32 %v8269, 2147483648
    %v8274 = vxor.u32 %v8270, 2147483648
    %v8275 = vxor.u32 %v8271, 2147483648
    %v8276 = vmul.f32 %v8272, 1.442695
    %v8277 = vpow.pop %v8276
    %v8278 = vmul.f32 %v8273, 1.442695
    %v8279 = vpow.pop %v8278
    %v8280 = vmul.f32 %v8274, 1.442695
    %v8281 = vpow.pop %v8280
    %v8282 = vmul.f32 %v8275, 1.442695
    %v8283 = vpow.pop %v8282
    %v8284 = vadd.f32 %v8277, 1.0
    %v8285 = vadd.f32 %v8279, 1.0
    %v8286 = vadd.f32 %v8281, 1.0
    %v8287 = vadd.f32 %v8283, 1.0
    %v8288 = vrcp.pop %v8284
    %v8289 = vmul.f32 1.0, %v8288
    %v8290 = vrcp.pop %v8285
    %v8291 = vmul.f32 1.0, %v8290
    %v8292 = vrcp.pop %v8286
    %v8293 = vmul.f32 1.0, %v8292
    %v8294 = vrcp.pop %v8287
    %v8295 = vmul.f32 1.0, %v8294
    %v8296 = vmul.f32 %v8261, %v8152
    %v8297 = vmul.f32 %v8263, %v8154
    %v8298 = vmul.f32 %v8265, %v8234
    %v8299 = vmul.f32 %v8267, %v8236
    %v8300 = vadd.f32 %v4104, %v8296
    %v8301 = vadd.f32 %v4106, %v8297
    %v8302 = vadd.f32 %v4206, %v8298
    %v8303 = vadd.f32 %v4208, %v8299
    %v8304 = vtanh.pop %v8300
    %v8305 = vtanh.pop %v8301
    %v8306 = vtanh.pop %v8302
    %v8307 = vtanh.pop %v8303
    %v8308 = vsub.f32 1.0, %v8289
    %v8309 = vsub.f32 1.0, %v8291
    %v8310 = vsub.f32 1.0, %v8293
    %v8311 = vsub.f32 1.0, %v8295
    %v8312 = vmul.f32 %v8308, %v8304
    %v8313 = vmul.f32 %v8309, %v8305
    %v8314 = vmul.f32 %v8310, %v8306
    %v8315 = vmul.f32 %v8311, %v8307
    %v8316 = vmul.f32 %v8289, %v7740
    %v8317 = vmul.f32 %v8291, %v7741
    %v8318 = vmul.f32 %v8293, %v7742
    %v8319 = vmul.f32 %v8295, %v7743
    %v8320 = vadd.f32 %v8312, %v8316
    %v8321 = vadd.f32 %v8313, %v8317
    %v8322 = vadd.f32 %v8314, %v8318
    %v8323 = vadd.f32 %v8315, %v8319
    %v8324 = vpack.c.bf16 %v8320, %v8320
    %v8325 = vpack.c.bf16 %v8321, %v8321
    %v8326 = vpack.c.bf16 %v8322, %v8322
    %v8327 = vpack.c.bf16 %v8323, %v8323
    %v8328 = vld [vmem:[#allocation19] sm:$0xf]
    %v8329 = vld [vmem:[#allocation19 + $0x4] sm:$0xf]
    %v8330 = vld [vmem:[#allocation19 + $0x8] sm:$0xf]
    %v8331 = vld [vmem:[#allocation19 + $0xc] sm:$0xf]
    %v8332 = vld [vmem:[#allocation19 + $0x10] sm:$0xf]
    %v8333 = vld [vmem:[#allocation19 + $0x14] sm:$0xf]
    %v8334 = vld [vmem:[#allocation19 + $0x18] sm:$0xf]
    %v8335 = vld [vmem:[#allocation19 + $0x1c] sm:$0xf]
    %v8336 = vld [vmem:[#allocation19 + $0x20] sm:$0xf]
    %v8337 = vld [vmem:[#allocation19 + $0x24] sm:$0xf]
    %v8338 = vld [vmem:[#allocation19 + $0x28] sm:$0xf]
    %v8339 = vld [vmem:[#allocation19 + $0x2c] sm:$0xf]
    %v8340 = vld [vmem:[#allocation19 + $0x30] sm:$0xf]
    %v8341 = vld [vmem:[#allocation19 + $0x34] sm:$0xf]
    %v8342 = vld [vmem:[#allocation19 + $0x38] sm:$0xf]
    %v8343 = vld [vmem:[#allocation19 + $0x3c] sm:$0xf]
    %v8344 = vld [vmem:[#allocation19 + $0x40] sm:$0xf]
    %v8345 = vld [vmem:[#allocation19 + $0x44] sm:$0xf]
    %v8346 = vld [vmem:[#allocation19 + $0x48] sm:$0xf]
    %v8347 = vld [vmem:[#allocation19 + $0x4c] sm:$0xf]
    %v8348 = vld [vmem:[#allocation19 + $0x50] sm:$0xf]
    %v8349 = vld [vmem:[#allocation19 + $0x54] sm:$0xf]
    %v8350 = vld [vmem:[#allocation19 + $0x58] sm:$0xf]
    %v8351 = vld [vmem:[#allocation19 + $0x5c] sm:$0xf]
    %v8352 = vld [vmem:[#allocation19 + $0x60] sm:$0xf]
    %v8353 = vld [vmem:[#allocation19 + $0x64] sm:$0xf]
    %v8354 = vld [vmem:[#allocation19 + $0x68] sm:$0xf]
    %v8355 = vld [vmem:[#allocation19 + $0x6c] sm:$0xf]
    %v8356 = vld [vmem:[#allocation19 + $0x70] sm:$0xf]
    %v8357 = vld [vmem:[#allocation19 + $0x74] sm:$0xf]
    %v8358 = vld [vmem:[#allocation19 + $0x78] sm:$0xf]
    %v8359 = vld [vmem:[#allocation19 + $0x7c] sm:$0xf]
    %v8360 = vld [vmem:[#allocation19 + $0x80] sm:$0xf]
    %v8361 = vld [vmem:[#allocation19 + $0x84] sm:$0xf]
    %v8362 = vld [vmem:[#allocation19 + $0x88] sm:$0xf]
    %v8363 = vld [vmem:[#allocation19 + $0x8c] sm:$0xf]
    %v8364 = vld [vmem:[#allocation19 + $0x90] sm:$0xf]
    %v8365 = vld [vmem:[#allocation19 + $0x94] sm:$0xf]
    %v8366 = vld [vmem:[#allocation19 + $0x98] sm:$0xf]
    %v8367 = vld [vmem:[#allocation19 + $0x9c] sm:$0xf]
    %v8368 = vld [vmem:[#allocation19 + $0xa0] sm:$0xf]
    %v8369 = vld [vmem:[#allocation19 + $0xa4] sm:$0xf]
    %v8370 = vld [vmem:[#allocation19 + $0xa8] sm:$0xf]
    %v8371 = vld [vmem:[#allocation19 + $0xac] sm:$0xf]
    %v8372 = vld [vmem:[#allocation19 + $0xb0] sm:$0xf]
    %v8373 = vld [vmem:[#allocation19 + $0xb4] sm:$0xf]
    %v8374 = vld [vmem:[#allocation19 + $0xb8] sm:$0xf]
    %v8375 = vld [vmem:[#allocation19 + $0xbc] sm:$0xf]
    %v8376 = vld [vmem:[#allocation19 + $0xc0] sm:$0xf]
    %v8377 = vld [vmem:[#allocation19 + $0xc4] sm:$0xf]
    %v8378 = vld [vmem:[#allocation19 + $0xc8] sm:$0xf]
    %v8379 = vld [vmem:[#allocation19 + $0xcc] sm:$0xf]
    %v8380 = vld [vmem:[#allocation19 + $0xd0] sm:$0xf]
    %v8381 = vld [vmem:[#allocation19 + $0xd4] sm:$0xf]
    %v8382 = vld [vmem:[#allocation19 + $0xd8] sm:$0xf]
    %v8383 = vld [vmem:[#allocation19 + $0xdc] sm:$0xf]
    %v8384 = vld [vmem:[#allocation19 + $0xe0] sm:$0xf]
    %v8385 = vld [vmem:[#allocation19 + $0xe4] sm:$0xf]
    %v8386 = vld [vmem:[#allocation19 + $0xe8] sm:$0xf]
    %v8387 = vld [vmem:[#allocation19 + $0xec] sm:$0xf]
    %v8388 = vld [vmem:[#allocation19 + $0xf0] sm:$0xf]
    %v8389 = vld [vmem:[#allocation19 + $0xf4] sm:$0xf]
    %v8390 = vld [vmem:[#allocation19 + $0xf8] sm:$0xf]
    %v8391 = vld [vmem:[#allocation19 + $0xfc] sm:$0xf]
    %v8392 = vld [vmem:[#allocation21] sm:$0x1]
    %v8394 = vlaneseq
    %v8395 = vshrl.u32 %v8394, 7
    %v8396 = vsub.s32 0, %v8395
    %v8397 = vrot.slane %v8392, %v8396
    %v8463 = vunpack.c.l.b16 %v8328
    %v8464 = vunpack.c.l.b16 %v8329
    %v8465 = vunpack.c.l.b16 %v8330
    %v8466 = vunpack.c.l.b16 %v8331
    %v8467 = vunpack.c.l.b16 %v8332
    %v8468 = vunpack.c.l.b16 %v8333
    %v8469 = vunpack.c.l.b16 %v8334
    %v8470 = vunpack.c.l.b16 %v8335
    %v8471 = vunpack.c.l.b16 %v8336
    %v8472 = vunpack.c.l.b16 %v8337
    %v8473 = vunpack.c.l.b16 %v8338
    %v8474 = vunpack.c.l.b16 %v8339
    %v8475 = vunpack.c.l.b16 %v8340
    %v8476 = vunpack.c.l.b16 %v8341
    %v8477 = vunpack.c.l.b16 %v8342
    %v8478 = vunpack.c.l.b16 %v8343
    %v8479 = vunpack.c.l.b16 %v8344
    %v8480 = vunpack.c.l.b16 %v8345
    %v8481 = vunpack.c.l.b16 %v8346
    %v8482 = vunpack.c.l.b16 %v8347
    %v8483 = vunpack.c.l.b16 %v8348
    %v8484 = vunpack.c.l.b16 %v8349
    %v8485 = vunpack.c.l.b16 %v8350
    %v8486 = vunpack.c.l.b16 %v8351
    %v8487 = vunpack.c.l.b16 %v8352
    %v8488 = vunpack.c.l.b16 %v8353
    %v8489 = vunpack.c.l.b16 %v8354
    %v8490 = vunpack.c.l.b16 %v8355
    %v8491 = vunpack.c.l.b16 %v8356
    %v8492 = vunpack.c.l.b16 %v8357
    %v8493 = vunpack.c.l.b16 %v8358
    %v8494 = vunpack.c.l.b16 %v8359
    %v8495 = vunpack.c.l.b16 %v8360
    %v8496 = vunpack.c.l.b16 %v8361
    %v8497 = vunpack.c.l.b16 %v8362
    %v8498 = vunpack.c.l.b16 %v8363
    %v8499 = vunpack.c.l.b16 %v8364
    %v8500 = vunpack.c.l.b16 %v8365
    %v8501 = vunpack.c.l.b16 %v8366
    %v8502 = vunpack.c.l.b16 %v8367
    %v8503 = vunpack.c.l.b16 %v8368
    %v8504 = vunpack.c.l.b16 %v8369
    %v8505 = vunpack.c.l.b16 %v8370
    %v8506 = vunpack.c.l.b16 %v8371
    %v8507 = vunpack.c.l.b16 %v8372
    %v8508 = vunpack.c.l.b16 %v8373
    %v8509 = vunpack.c.l.b16 %v8374
    %v8510 = vunpack.c.l.b16 %v8375
    %v8511 = vunpack.c.l.b16 %v8376
    %v8512 = vunpack.c.l.b16 %v8377
    %v8513 = vunpack.c.l.b16 %v8378
    %v8514 = vunpack.c.l.b16 %v8379
    %v8515 = vunpack.c.l.b16 %v8380
    %v8516 = vunpack.c.l.b16 %v8381
    %v8517 = vunpack.c.l.b16 %v8382
    %v8518 = vunpack.c.l.b16 %v8383
    %v8519 = vunpack.c.l.b16 %v8384
    %v8520 = vunpack.c.l.b16 %v8385
    %v8521 = vunpack.c.l.b16 %v8386
    %v8522 = vunpack.c.l.b16 %v8387
    %v8523 = vunpack.c.l.b16 %v8388
    %v8524 = vunpack.c.l.b16 %v8389
    %v8525 = vunpack.c.l.b16 %v8390
    %v8526 = vunpack.c.l.b16 %v8391
    %v8527 = vpack.c.b16 %v8464, %v8463
    %v8528 = vpack.c.b16 %v8466, %v8465
    %v8529 = vpack.c.b16 %v8468, %v8467
    %v8530 = vpack.c.b16 %v8470, %v8469
    %v8531 = vpack.c.b16 %v8472, %v8471
    %v8532 = vpack.c.b16 %v8474, %v8473
    %v8533 = vpack.c.b16 %v8476, %v8475
    %v8534 = vpack.c.b16 %v8478, %v8477
    %v8535 = vpack.c.b16 %v8480, %v8479
    %v8536 = vpack.c.b16 %v8482, %v8481
    %v8537 = vpack.c.b16 %v8484, %v8483
    %v8538 = vpack.c.b16 %v8486, %v8485
    %v8539 = vpack.c.b16 %v8488, %v8487
    %v8540 = vpack.c.b16 %v8490, %v8489
    %v8541 = vpack.c.b16 %v8492, %v8491
    %v8542 = vpack.c.b16 %v8494, %v8493
    %v8543 = vpack.c.b16 %v8496, %v8495
    %v8544 = vpack.c.b16 %v8498, %v8497
    %v8545 = vpack.c.b16 %v8500, %v8499
    %v8546 = vpack.c.b16 %v8502, %v8501
    %v8547 = vpack.c.b16 %v8504, %v8503
    %v8548 = vpack.c.b16 %v8506, %v8505
    %v8549 = vpack.c.b16 %v8508, %v8507
    %v8550 = vpack.c.b16 %v8510, %v8509
    %v8551 = vpack.c.b16 %v8512, %v8511
    %v8552 = vpack.c.b16 %v8514, %v8513
    %v8553 = vpack.c.b16 %v8516, %v8515
    %v8554 = vpack.c.b16 %v8518, %v8517
    %v8555 = vpack.c.b16 %v8520, %v8519
    %v8556 = vpack.c.b16 %v8522, %v8521
    %v8557 = vpack.c.b16 %v8524, %v8523
    %v8558 = vpack.c.b16 %v8526, %v8525
    %8591 = vmatprep.subr.bf16.mxu0 0
    %8592 = vmatpush1.bf16.msra.mxu0 %v8534
    %8593 = vmatprep.subr.bf16.mxu0 0
    %8594 = vmatpush1.bf16.msra.mxu0 %v8533
    %8595 = vmatprep.subr.bf16.mxu0 0
    %8596 = vmatpush1.bf16.msra.mxu0 %v8532
    %8597 = vmatprep.subr.bf16.mxu0 0
    %8598 = vmatpush1.bf16.msra.mxu0 %v8531
    %8599 = vmatprep.subr.bf16.mxu0 0
    %8600 = vmatpush1.bf16.msra.mxu0 %v8530
    %8601 = vmatprep.subr.bf16.mxu0 0
    %8602 = vmatpush1.bf16.msra.mxu0 %v8529
    %8603 = vmatprep.subr.bf16.mxu0 0
    %8604 = vmatpush1.bf16.msra.mxu0 %v8528
    %8605 = vmatprep.subr.bf16.mxu0 0
    %8606 = vmatpush1.bf16.msra.mxu0 %v8527
    %8607 = vmatprep.subr.bf16.mxu0 0
    %8608 = vmatpush2.bf16.msra.mxu0 %v8542
    %8609 = vmatprep.subr.bf16.mxu0 0
    %8610 = vmatpush2.bf16.msra.mxu0 %v8541
    %8611 = vmatprep.subr.bf16.mxu0 0
    %8612 = vmatpush2.bf16.msra.mxu0 %v8540
    %8613 = vmatprep.subr.bf16.mxu0 0
    %8614 = vmatpush2.bf16.msra.mxu0 %v8539
    %8615 = vmatprep.subr.bf16.mxu0 0
    %8616 = vmatpush2.bf16.msra.mxu0 %v8538
    %8617 = vmatprep.subr.bf16.mxu0 0
    %8618 = vmatpush2.bf16.msra.mxu0 %v8537
    %8619 = vmatprep.subr.bf16.mxu0 0
    %8620 = vmatpush2.bf16.msra.mxu0 %v8536
    %8621 = vmatprep.subr.bf16.mxu0 0
    %8622 = vmatpush2.bf16.msra.mxu0 %v8535
    %8623 = vmatprep.mubr.bf16.mxu0 %v8325
    %8624 = vmatmul.mubr.bf16.gmra.mxu0 %v8324
    %v8625 = vpop.f32.mrf.mxu0
    %v8626 = vadd.f32 %v8397, %v8625
    %v8627 = vpop.f32.mrf.mxu0
    %v8628 = vpop.f32.mrf.mxu0
    %v8629 = vpop.f32.mrf.mxu0
    %8630 = vdwg.mxu0
    %8631 = vmatprep.subr.bf16.mxu0 0
    %8632 = vmatpush1.bf16.msra.mxu0 %v8550
    %8633 = vmatprep.subr.bf16.mxu0 0
    %8634 = vmatpush1.bf16.msra.mxu0 %v8549
    %8635 = vmatprep.subr.bf16.mxu0 0
    %8636 = vmatpush1.bf16.msra.mxu0 %v8548
    %8637 = vmatprep.subr.bf16.mxu0 0
    %8638 = vmatpush1.bf16.msra.mxu0 %v8547
    %8639 = vmatprep.subr.bf16.mxu0 0
    %8640 = vmatpush1.bf16.msra.mxu0 %v8546
    %8641 = vmatprep.subr.bf16.mxu0 0
    %8642 = vmatpush1.bf16.msra.mxu0 %v8545
    %8643 = vmatprep.subr.bf16.mxu0 0
    %8644 = vmatpush1.bf16.msra.mxu0 %v8544
    %8645 = vmatprep.subr.bf16.mxu0 0
    %8646 = vmatpush1.bf16.msra.mxu0 %v8543
    %8647 = vmatprep.subr.bf16.mxu0 0
    %8648 = vmatpush2.bf16.msra.mxu0 %v8558
    %8649 = vmatprep.subr.bf16.mxu0 0
    %8650 = vmatpush2.bf16.msra.mxu0 %v8557
    %8651 = vmatprep.subr.bf16.mxu0 0
    %8652 = vmatpush2.bf16.msra.mxu0 %v8556
    %8653 = vmatprep.subr.bf16.mxu0 0
    %8654 = vmatpush2.bf16.msra.mxu0 %v8555
    %8655 = vmatprep.subr.bf16.mxu0 0
    %8656 = vmatpush2.bf16.msra.mxu0 %v8554
    %8657 = vmatprep.subr.bf16.mxu0 0
    %8658 = vmatpush2.bf16.msra.mxu0 %v8553
    %8659 = vmatprep.subr.bf16.mxu0 0
    %8660 = vmatpush2.bf16.msra.mxu0 %v8552
    %8661 = vmatprep.subr.bf16.mxu0 0
    %8662 = vmatpush2.bf16.msra.mxu0 %v8551
    %8663 = vmatprep.mubr.bf16.mxu0 %v8327
    %8664 = vmatmul.mubr.bf16.gmra.mxu0 %v8326
    %v8665 = vpop.f32.mrf.mxu0
    %v8666 = vadd.f32 %v8626, %v8665
    %v8667 = vpop.f32.mrf.mxu0
    %v8668 = vpop.f32.mrf.mxu0
    %v8669 = vpop.f32.mrf.mxu0
    %8670 = vdwg.mxu0
    %v8671 = vmax.f32 %v8666, 0.0
    %v8680 = vsel %vm1744, %v1465, %v1459
    %v8681 = vsel %vm1746, %v1471, %v8680
    %v8682 = vsel %vm1748, %v1477, %v8681
    %v8683 = vsel %vm1750, %v1483, %v8682
    %v8684 = vsel %vm1752, %v1489, %v8683
    %v8685 = vsel %vm1754, %v1495, %v8684
    %v8686 = vsel %vm1756, %v1501, %v8685
    %v8688 = vld [vmem:[#allocation22] sm:$0x3]
    %v8690 = vlaneseq
    %v8691 = vshrl.u32 %v8690, 7
    %v8692 = vsub.s32 0, %v8691
    %v8693 = vrot.slane %v8688, %v8692
    %v8694 = vlaneseq
    %v8695 = vshrl.u32 %v8694, 7
    %v8696 = vsub.s32 1, %v8695
    %v8697 = vrot.slane %v8688, %v8696
    %v8700 = vmul.f32 %v8671, %v8693
    %v8701 = vmul.f32 %v8686, %v8697
    %v8702 = vadd.f32 %v8700, %v8701
    %8703 = vadd.xlane.f32.xlu0 %v8702
    %v8704 = vpop.xlane.xlu0 %8703
    %v8705 = vld [vmem:[#allocation2] sm:$0x1]
    %v8707 = vlaneseq
    %v8708 = vshrl.u32 %v8707, 7
    %v8709 = vsub.s32 0, %v8708
    %v8710 = vrot.slane %v8705, %v8709
    %v8712 = vadd.f32 %v8704, %v8710
    %v8713 = vmax.f32 %v8712, 0.0
    %v8714 = vld [vmem:[#allocation24] sm:$0x1]
    %v8716 = vlaneseq
    %v8717 = vshrl.u32 %v8716, 7
    %v8718 = vsub.s32 0, %v8717
    %v8719 = vrot.slane %v8714, %v8718
    %v8721 = vmul.f32 %v8671, %v8719
    %8722 = vadd.xlane.f32.xlu0 %v8721
    %v8723 = vpop.xlane.xlu0 %8722
    %v8724 = vld [vmem:[#allocation25] sm:$0x1]
    %v8726 = vlaneseq
    %v8727 = vshrl.u32 %v8726, 7
    %v8728 = vsub.s32 0, %v8727
    %v8729 = vrot.slane %v8724, %v8728
    %v8731 = vmul.f32 %v1350, %v8729
    %v8732 = vmul.f32 %v1351, %v8729
    %v8733 = vmul.f32 %v1352, %v8729
    %v8734 = vmul.f32 %v1353, %v8729
    %v8735 = vmul.f32 %v1354, %v8729
    %v8736 = vmul.f32 %v1355, %v8729
    %v8737 = vmul.f32 %v1356, %v8729
    %v8738 = vmul.f32 %v1357, %v8729
    %8739 = vadd.xlane.f32.xlu0 %v8731
    %v8740 = vpop.xlane.xlu0 %8739
    %8741 = vadd.xlane.f32.xlu0 %v8732
    %v8742 = vpop.xlane.xlu0 %8741
    %8743 = vadd.xlane.f32.xlu0 %v8733
    %v8744 = vpop.xlane.xlu0 %8743
    %8745 = vadd.xlane.f32.xlu0 %v8734
    %v8746 = vpop.xlane.xlu0 %8745
    %8747 = vadd.xlane.f32.xlu0 %v8735
    %v8748 = vpop.xlane.xlu0 %8747
    %8749 = vadd.xlane.f32.xlu0 %v8736
    %v8750 = vpop.xlane.xlu0 %8749
    %8751 = vadd.xlane.f32.xlu0 %v8737
    %v8752 = vpop.xlane.xlu0 %8751
    %8753 = vadd.xlane.f32.xlu0 %v8738
    %v8754 = vpop.xlane.xlu0 %8753
    %v8756 = vlaneseq
    %v8757 = vshrl.u32 %v8756, 7
    %v8758 = vsub.s32 0, %v8757
    %v8759 = vrot.slane %v8723, %v8758
    %v8760 = vlaneseq
    %v8761 = vshrl.u32 %v8760, 7
    %v8762 = vsub.s32 1, %v8761
    %v8763 = vrot.slane %v8723, %v8762
    %v8764 = vlaneseq
    %v8765 = vshrl.u32 %v8764, 7
    %v8766 = vsub.s32 2, %v8765
    %v8767 = vrot.slane %v8723, %v8766
    %v8768 = vlaneseq
    %v8769 = vshrl.u32 %v8768, 7
    %v8770 = vsub.s32 3, %v8769
    %v8771 = vrot.slane %v8723, %v8770
    %v8772 = vlaneseq
    %v8773 = vshrl.u32 %v8772, 7
    %v8774 = vsub.s32 4, %v8773
    %v8775 = vrot.slane %v8723, %v8774
    %v8776 = vlaneseq
    %v8777 = vshrl.u32 %v8776, 7
    %v8778 = vsub.s32 5, %v8777
    %v8779 = vrot.slane %v8723, %v8778
    %v8780 = vlaneseq
    %v8781 = vshrl.u32 %v8780, 7
    %v8782 = vsub.s32 6, %v8781
    %v8783 = vrot.slane %v8723, %v8782
    %v8784 = vlaneseq
    %v8785 = vshrl.u32 %v8784, 7
    %v8786 = vsub.s32 7, %v8785
    %v8787 = vrot.slane %v8723, %v8786
    %v8796 = vadd.f32 %v8740, %v8759
    %v8797 = vadd.f32 %v8742, %v8763
    %v8798 = vadd.f32 %v8744, %v8767
    %v8799 = vadd.f32 %v8746, %v8771
    %v8800 = vadd.f32 %v8748, %v8775
    %v8801 = vadd.f32 %v8750, %v8779
    %v8802 = vadd.f32 %v8752, %v8783
    %v8803 = vadd.f32 %v8754, %v8787
    %v8804 = vld [vmem:[#allocation3] sm:$0x1]
    %v8806 = vlaneseq
    %v8807 = vshrl.u32 %v8806, 7
    %v8808 = vsub.s32 0, %v8807
    %v8809 = vrot.slane %v8804, %v8808
    %8810 = vset.pattern.permute.xlu0 0
    %8811 = vperm.xlu0 %8810, %v8809
    %v8812 = vpop.permute.xlu0 %8811
    %v8814 = vadd.f32 %v8796, %v8812
    %v8815 = vadd.f32 %v8797, %v8812
    %v8816 = vadd.f32 %v8798, %v8812
    %v8817 = vadd.f32 %v8799, %v8812
    %v8818 = vadd.f32 %v8800, %v8812
    %v8819 = vadd.f32 %v8801, %v8812
    %v8820 = vadd.f32 %v8802, %v8812
    %v8821 = vadd.f32 %v8803, %v8812
    %v8822 = vmax.f32 %v8814, 0.0
    %v8823 = vmax.f32 %v8815, 0.0
    %v8824 = vmax.f32 %v8816, 0.0
    %v8825 = vmax.f32 %v8817, 0.0
    %v8826 = vmax.f32 %v8818, 0.0
    %v8827 = vmax.f32 %v8819, 0.0
    %v8828 = vmax.f32 %v8820, 0.0
    %v8829 = vmax.f32 %v8821, 0.0
    %8838 = vset.pattern.permute.xlu0 0
    %8839 = vperm.xlu0 %8838, %v8822
    %v8840 = vpop.permute.xlu0 %8839
    %8841 = vset.pattern.permute.xlu0 0
    %8842 = vperm.xlu0 %8841, %v8823
    %v8843 = vpop.permute.xlu0 %8842
    %8844 = vset.pattern.permute.xlu0 0
    %8845 = vperm.xlu0 %8844, %v8824
    %v8846 = vpop.permute.xlu0 %8845
    %8847 = vset.pattern.permute.xlu0 0
    %8848 = vperm.xlu0 %8847, %v8825
    %v8849 = vpop.permute.xlu0 %8848
    %8850 = vset.pattern.permute.xlu0 0
    %8851 = vperm.xlu0 %8850, %v8826
    %v8852 = vpop.permute.xlu0 %8851
    %8853 = vset.pattern.permute.xlu0 0
    %8854 = vperm.xlu0 %8853, %v8827
    %v8855 = vpop.permute.xlu0 %8854
    %8856 = vset.pattern.permute.xlu0 0
    %8857 = vperm.xlu0 %8856, %v8828
    %v8858 = vpop.permute.xlu0 %8857
    %8859 = vset.pattern.permute.xlu0 0
    %8860 = vperm.xlu0 %8859, %v8829
    %v8861 = vpop.permute.xlu0 %8860
    %v8862 = vlaneseq
    %v8863 = vand.u32 %v8862, 127
    %v8864 = vadd.s32 %v8863, 4294967295
    %v8865 = vlaneseq
    %v8866 = vshrl.u32 %v8865, 7
    %v8867 = vsub.s32 %v8864, %v8866
    %v8868 = vrot.slane %v8840, %v8867
    %v8869 = vlaneseq
    %v8870 = vshrl.u32 %v8869, 7
    %v8871 = vsub.s32 %v8864, %v8870
    %v8872 = vrot.slane %v8843, %v8871
    %v8873 = vlaneseq
    %v8874 = vshrl.u32 %v8873, 7
    %v8875 = vsub.s32 %v8864, %v8874
    %v8876 = vrot.slane %v8846, %v8875
    %v8877 = vlaneseq
    %v8878 = vshrl.u32 %v8877, 7
    %v8879 = vsub.s32 %v8864, %v8878
    %v8880 = vrot.slane %v8849, %v8879
    %v8881 = vlaneseq
    %v8882 = vshrl.u32 %v8881, 7
    %v8883 = vsub.s32 %v8864, %v8882
    %v8884 = vrot.slane %v8852, %v8883
    %v8885 = vlaneseq
    %v8886 = vshrl.u32 %v8885, 7
    %v8887 = vsub.s32 %v8864, %v8886
    %v8888 = vrot.slane %v8855, %v8887
    %v8889 = vlaneseq
    %v8890 = vshrl.u32 %v8889, 7
    %v8891 = vsub.s32 %v8864, %v8890
    %v8892 = vrot.slane %v8858, %v8891
    %v8893 = vlaneseq
    %v8894 = vshrl.u32 %v8893, 7
    %v8895 = vsub.s32 %v8864, %v8894
    %v8896 = vrot.slane %v8861, %v8895
    %v8897 = vsel %vm1744, %v8872, %v8868
    %v8898 = vsel %vm1746, %v8876, %v8897
    %v8899 = vsel %vm1748, %v8880, %v8898
    %v8900 = vsel %vm1750, %v8884, %v8899
    %v8901 = vsel %vm1752, %v8888, %v8900
    %v8902 = vsel %vm1754, %v8892, %v8901
    %v8903 = vsel %vm1756, %v8896, %v8902
    %vm8905 = vcmask 7168
    %v8906 = vsel %vm8905, %v8713, %v8903
    %vm8907 = vcmask 72704
    %v8908 = vsel %vm8907, %v8906, 0.0
    %8909 = vst [vmem:[#allocation27] sm:$0xff] %v8908
    // Predicated region
    $region126: #{tpu_custom_call.1} parent=1 // pred_check
      _
    $region127: #{tpu_custom_call.1} parent=1 // pred_check_branch
      %8911 = sbr.rel (0) target = $region129
    $region128: #{tpu_custom_call.1} parent=1 // pred_region
      %s8913 = ssub.s32 128, 128
      %8914 = vsyncadd [#allocation6], %s8913
      %s8916 = sshll.u32 [#allocation27], 4
      %s8917 = int_to_ptr.vmem [resolvable:$true] %s8916
      %8919 = dma.vmem_to_hbm [thread:$0]  %s8917, 128, %s17, [#allocation6]
    $region129: #{tpu_custom_call.1} parent=1 // pred_fallthru
      _
    // Predicated region
    $region130: #{tpu_custom_call.1} parent=1 // pred_check
      _
    $region131: #{tpu_custom_call.1} parent=1 // pred_check_branch
      %8921 = sbr.rel (0) target = $region133
    $region132: #{tpu_custom_call.1} parent=1 // pred_region
      %8922 = dma.done [#allocation6], 128
    $region133: #{tpu_custom_call.1} parent=1 // pred_fallthru
      _
    %8923 = vsyncpa [#allocation5], 1
    %8924 = vsyncpa [#allocation8], 1
    %8925 = vsyncpa [#allocation11], 1
    %8926 = vsyncpa [#allocation14], 1
    %8927 = vsyncpa [#allocation17], 1
    %8928 = vsyncpa [#allocation20], 1
    %8929 = vsyncpa [#allocation23], 1
    %8930 = vsyncpa [#allocation26], 1
    %8931 = vsyncpa [#allocation6], 1

</llo_original>
